<compile_context>
chip_gen: v7x
topology: tpu7x:2x2x1
jax: 0.10.0
libtpu: 0.0.40
codegen_flags: <defaults>
</compile_context>

<pallas_src>
import functools

import jax
import jax.numpy as jnp
from jax import lax
from jax.experimental import pallas as pl
from jax.experimental.pallas import tpu as pltpu


# ------------------------------ tile helpers ---------------------------------

def _pick_tile(n, base, cap):
    """Largest multiple of `base` that divides n and is <= cap."""
    assert n % base == 0, f"dim {n} must be a multiple of {base}"
    best = base
    d = base
    while d <= min(cap, n):
        if n % d == 0:
            best = d
        d += base
    return best


def _pick_ln_tile(L, FJ, itemsize, budget=2 * 1024 * 1024):
    cap = max(128, (budget // max(FJ * itemsize, 1)) // 128 * 128)
    return _pick_tile(L, 128, cap)


# ----------------------- Linear (tiled M/N/K matmul) --------------------------

def _matmul_kernel(x_ref, w_ref, b_ref, o_ref, acc_ref):
    k = pl.program_id(2)

    @pl.when(k == 0)
    def _():
        acc_ref[...] = jnp.zeros_like(acc_ref)

    acc_ref[...] += jnp.dot(x_ref[...], w_ref[...],
                            preferred_element_type=jnp.float32)

    @pl.when(k == pl.num_programs(2) - 1)
    def _():
        o_ref[...] = (acc_ref[...] + b_ref[...]).astype(o_ref.dtype)


def pallas_linear(x2d, w, b, *, tm_max=256, tn_max=256, tk_max=512,
                  out_dtype=jnp.bfloat16):
    """y = x2d[:, :K] @ w + b.

    x2d: (M, >=K) bf16, w: (K, N) bf16, b: (N,) f32 -> (M, N) out_dtype.
    Only the first K columns of x2d are read (K = w.shape[0]).
    """
    M = x2d.shape[0]
    K, N = w.shape
    tm = min(tm_max, ((M + 7) // 8) * 8)
    tn = _pick_tile(N, 128, tn_max)
    tk = _pick_tile(K, 128, tk_max)
    grid = (pl.cdiv(M, tm), N // tn, K // tk)
    return pl.pallas_call(
        _matmul_kernel,
        out_shape=jax.ShapeDtypeStruct((M, N), out_dtype),
        grid=grid,
        in_specs=[
            pl.BlockSpec((tm, tk), lambda i, j, k: (i, k)),
            pl.BlockSpec((tk, tn), lambda i, j, k: (k, j)),
            pl.BlockSpec((1, tn), lambda i, j, k: (0, j)),
        ],
        out_specs=pl.BlockSpec((tm, tn), lambda i, j, k: (i, j)),
        scratch_shapes=[pltpu.VMEM((tm, tn), jnp.float32)],
        compiler_params=pltpu.CompilerParams(
            dimension_semantics=("parallel", "parallel", "arbitrary")),
    )(x2d, w, b.reshape(1, N).astype(jnp.float32))


# ------------------ LayerNorm pass 1: per-batch sum / sumsq -------------------

def _ln_stats_kernel(y_ref, mean_ref, rstd_ref, acc_sm, *, eps, inv_count):
    j = pl.program_id(1)

    @pl.when(j == 0)
    def _():
        acc_sm[0] = jnp.float32(0.0)
        acc_sm[1] = jnp.float32(0.0)

    x = y_ref[0].astype(jnp.float32)            # (FJ, tc)
    acc_sm[0] += jnp.sum(x)
    acc_sm[1] += jnp.sum(x * x)

    @pl.when(j == pl.num_programs(1) - 1)
    def _():
        mean = acc_sm[0] * inv_count
        var = acc_sm[1] * inv_count - mean * mean      # biased var (PyTorch LN)
        var = jnp.maximum(var, 0.0)
        rstd = lax.rsqrt(var + eps)
        mean_ref[0] = jnp.full((8, 128), mean, jnp.float32)
        rstd_ref[0] = jnp.full((8, 128), rstd, jnp.float32)


def ln_stats(y3d, *, eps=1e-5):
    """y3d: (B, FJ, L) -> per-batch mean/rstd broadcast into (B, 8, 128) tiles."""
    B, FJ, L = y3d.shape
    tc = _pick_ln_tile(L, FJ, jnp.dtype(y3d.dtype).itemsize)
    inv_count = 1.0 / float(FJ * L)
    kern = functools.partial(_ln_stats_kernel, eps=eps, inv_count=inv_count)
    return pl.pallas_call(
        kern,
        out_shape=(jax.ShapeDtypeStruct((B, 8, 128), jnp.float32),
                   jax.ShapeDtypeStruct((B, 8, 128), jnp.float32)),
        grid=(B, L // tc),
        in_specs=[pl.BlockSpec((1, FJ, tc), lambda b, j: (b, 0, j))],
        out_specs=(pl.BlockSpec((1, 8, 128), lambda b, j: (b, 0, 0)),
                   pl.BlockSpec((1, 8, 128), lambda b, j: (b, 0, 0))),
        scratch_shapes=[pltpu.SMEM((2,), jnp.float32)],
        compiler_params=pltpu.CompilerParams(
            dimension_semantics=("parallel", "arbitrary")),
    )(y3d)


# ----- LayerNorm pass 2: apply (+PReLU), scatter into the concat buffer -------

def _ln_apply_kernel(y_ref, mean_ref, rstd_ref, g_ref, b_ref, a_ref,
                     _hfull_hbm, o_ref, *, apply_prelu):
    x = y_ref[0].astype(jnp.float32)            # (FJ, tc)
    mean = mean_ref[0, 0, 0]
    rstd = rstd_ref[0, 0, 0]
    y = (x - mean) * rstd * g_ref[...].astype(jnp.float32) \
        + b_ref[...].astype(jnp.float32)
    if apply_prelu:
        a = a_ref[0]                            # nn.PReLU() scalar weight
        y = jnp.where(y >= 0.0, y, a * y)
    o_ref[0] = y.astype(o_ref.dtype)


def ln_apply_into(y3d, mean_t, rstd_t, gamma, beta, prelu_a, h_full, *,
                  col_offset, apply_prelu):
    """Normalize y3d (B, FJ, L) and write it into h_full[:, :, col_offset:+L].

    h_full is aliased in-place (input_output_aliases), so no concat copies.
    """
    B, FJ, L = y3d.shape
    tc = _pick_ln_tile(L, FJ, jnp.dtype(y3d.dtype).itemsize)
    assert col_offset % tc == 0
    off_blk = col_offset // tc
    g2 = gamma.reshape(FJ, L)
    b2 = beta.reshape(FJ, L)
    kern = functools.partial(_ln_apply_kernel, apply_prelu=apply_prelu)
    return pl.pallas_call(
        kern,
        out_shape=jax.ShapeDtypeStruct(h_full.shape, h_full.dtype),
        grid=(B, L // tc),
        in_specs=[
            pl.BlockSpec((1, FJ, tc), lambda b, j: (b, 0, j)),       # y
            pl.BlockSpec((1, 8, 128), lambda b, j: (b, 0, 0)),       # mean
            pl.BlockSpec((1, 8, 128), lambda b, j: (b, 0, 0)),       # rstd
            pl.BlockSpec((FJ, tc), lambda b, j: (0, j)),             # gamma
            pl.BlockSpec((FJ, tc), lambda b, j: (0, j)),             # beta
            pl.BlockSpec(memory_space=pltpu.MemorySpace.SMEM),       # prelu_a
            pl.BlockSpec(memory_space=pl.ANY),                       # h_full (alias)
        ],
        out_specs=pl.BlockSpec((1, FJ, tc),
                               lambda b, j: (b, 0, j + off_blk)),
        input_output_aliases={6: 0},
        compiler_params=pltpu.CompilerParams(
            dimension_semantics=("parallel", "parallel")),
    )(y3d, mean_t, rstd_t, g2, b2, prelu_a.astype(jnp.float32), h_full)


# ------------------------------- DenseFC forward ------------------------------

def dense_fc_forward(x, params, *, F, J, L, num_stage):
    assert L % 128 == 0, "linear_size must be a multiple of 128"
    B = x.shape[0]
    FJ = F * J
    M = B * FJ
    Ltot = L * (num_stage + 1)
    zero_a = jnp.zeros((1,), jnp.float32)

    # dense_in: K = in_channel (tiny) -> plain XLA matmul, then Pallas LayerNorm.
    x2d = x.reshape(M, -1).astype(jnp.float32)
    y0 = (x2d @ params["w_in"] + params["b_in"]).astype(jnp.bfloat16)
    y0 = y0.reshape(B, FJ, L)

    h_full = jnp.zeros((B, FJ, Ltot), jnp.bfloat16)      # preallocated concat buffer
    mean_t, rstd_t = ln_stats(y0)
    h_full = ln_apply_into(y0, mean_t, rstd_t,
                           params["ln_in_g"], params["ln_in_b"], zero_a,
                           h_full, col_offset=0, apply_prelu=False)

    # dense stages: Linear(L*(1+i), L) + LayerNorm + PReLU (+ Dropout), "concat"
    # is realized by writing into the next channel slice of h_full.
    for i in range(num_stage):
        col = L * (1 + i)
        y_raw = pallas_linear(h_full.reshape(M, Ltot),
                              params[f"w_{i}"], params[f"b_{i}"])
        y_raw = y_raw.reshape(B, FJ, L)
        mean_t, rstd_t = ln_stats(y_raw)
        # TODO(synk): training-mode Dropout(p=0.5) not implemented; eval-mode identity.
        h_full = ln_apply_into(y_raw, mean_t, rstd_t,
                               params[f"ln_g_{i}"], params[f"ln_b_{i}"],
                               params[f"prelu_{i}"],
                               h_full, col_offset=col, apply_prelu=True)

    # dense_out: N = out_channel (tiny) -> plain XLA matmul.
    out = jnp.dot(h_full.reshape(M, Ltot).astype(jnp.float32),
                  params["w_out"]) + params["b_out"]
    return out.reshape(B, F, J, -1)


# ------------------------------- parameter init -------------------------------

def init_params(key, in_ch, out_ch, F, J, L, num_stage):
    params = {}
    keys = iter(jax.random.split(key, 2 * (num_stage + 2)))

    def linear_init(fan_in, fan_out, w_dtype):
        bound = 1.0 / (fan_in ** 0.5)
        w = jax.random.uniform(next(keys), (fan_in, fan_out), jnp.float32,
                               -bound, bound).astype(w_dtype)
        b = jax.random.uniform(next(keys), (fan_out,), jnp.float32,
                               -bound, bound)
        return w, b

    # Boundary layers stay f32 (plain XLA matmuls).
    params["w_in"], params["b_in"] = linear_init(in_ch, L, jnp.float32)
    params["ln_in_g"] = jnp.ones((F, J, L), jnp.bfloat16)
    params["ln_in_b"] = jnp.zeros((F, J, L), jnp.bfloat16)

    for i in range(num_stage):
        # Stage weights in bf16 for the MXU; f32 bias added on the f32 accumulator.
        params[f"w_{i}"], params[f"b_{i}"] = linear_init(L * (1 + i), L,
                                                         jnp.bfloat16)
        params[f"ln_g_{i}"] = jnp.ones((F, J, L), jnp.bfloat16)
        params[f"ln_b_{i}"] = jnp.zeros((F, J, L), jnp.bfloat16)
        params[f"prelu_{i}"] = jnp.full((1,), 0.25, jnp.float32)

    params["w_out"], params["b_out"] = linear_init(L * (num_stage + 1), out_ch,
                                                   jnp.float32)
    return params


if __name__ == "__main__":
    B, F, J = 2, 6, 17            # real module uses F=243, J=17; scaled down
    in_ch, out_ch = 2, 3
    L, num_stage = 128, 3         # real module default linear_size=1024; scaled down

    key = jax.random.PRNGKey(0)
    kx, kp = jax.random.split(key)
    x = jax.random.normal(kx, (B, F, J, in_ch), dtype=jnp.float32)
    params = init_params(kp, in_ch, out_ch, F, J, L, num_stage)

    fwd = jax.jit(functools.partial(dense_fc_forward, F=F, J=J, L=L,
                                    num_stage=num_stage))
    out = jax.block_until_ready(fwd(x, params))
    assert out.shape == (B, F, J, out_ch)
    assert bool(jnp.all(jnp.isfinite(out)))
    print("KERNEL_OK")
</pallas_src>

<mosaic_0001>
module attributes {stable_mosaic.version = 11 : i64} {
  func.func @_ln_stats_kernel(%arg0: i32, %arg1: i32, %arg2: memref<1x102x128xbf16, #tpu.memory_space<vmem>>, %arg3: memref<1x8x128xf32, #tpu.memory_space<vmem>>, %arg4: memref<1x8x128xf32, #tpu.memory_space<vmem>>, %arg5: memref<2xf32, #tpu.memory_space<smem>>) attributes {dimension_semantics = [#tpu.dimension_semantics<parallel>, #tpu.dimension_semantics<arbitrary>], iteration_bounds = array<i64: 2, 1>, scalar_prefetch = 0 : i64, scratch_operands = 1 : i64, tpu.core_type = #tpu.core_type<tc>, window_params = [{transform_indices = @transform_0, window_bounds = array<i64: 1, 102, 128>}, {transform_indices = @transform_1, window_bounds = array<i64: 1, 8, 128>}, {transform_indices = @transform_2, window_bounds = array<i64: 1, 8, 128>}]} {
    %c0_i32 = arith.constant 0 : i32
    %0 = arith.cmpi eq, %arg1, %c0_i32 : i32
    %1 = arith.extui %0 : i1 to i32
    %c0_i32_0 = arith.constant 0 : i32
    %2 = arith.cmpi ne, %1, %c0_i32_0 : i32
    scf.if %2 {
      %cst_9 = arith.constant 0.000000e+00 : f32
      %c0_10 = arith.constant 0 : index
      %24 = memref.load %arg5[%c0_10] : memref<2xf32, #tpu.memory_space<smem>>
      memref.store %cst_9, %arg5[%c0_10] : memref<2xf32, #tpu.memory_space<smem>>
      %cst_11 = arith.constant 0.000000e+00 : f32
      %c1_12 = arith.constant 1 : index
      %25 = memref.load %arg5[%c1_12] : memref<2xf32, #tpu.memory_space<smem>>
      memref.store %cst_11, %arg5[%c1_12] : memref<2xf32, #tpu.memory_space<smem>>
    } else {
    }
    %c0 = arith.constant 0 : index
    %c0_1 = arith.constant 0 : index
    %c0_2 = arith.constant 0 : index
    %3 = vector.load %arg2[%c0, %c0_1, %c0_2] : memref<1x102x128xbf16, #tpu.memory_space<vmem>>, vector<1x102x128xbf16>
    %4 = vector.shape_cast %3 : vector<1x102x128xbf16> to vector<102x128xbf16>
    %5 = arith.extf %4 : vector<102x128xbf16> to vector<102x128xf32>
    %c0_3 = arith.constant 0 : index
    %6 = memref.load %arg5[%c0_3] : memref<2xf32, #tpu.memory_space<smem>>
    %7 = vector.shape_cast %5 : vector<102x128xf32> to vector<1x102x128xf32>
    %cst = arith.constant dense<0.000000e+00> : vector<1xf32>
    %8 = vector.multi_reduction <add>, %7, %cst [1, 2] : vector<1x102x128xf32> to vector<1xf32>
    %9 = vector.shape_cast %8 : vector<1xf32> to vector<1x1x1xf32>
    %10 = vector.extract %9[0, 0, 0] : f32 from vector<1x1x1xf32>
    %11 = arith.addf %6, %10 : f32
    %c0_4 = arith.constant 0 : index
    %12 = memref.load %arg5[%c0_4] : memref<2xf32, #tpu.memory_space<smem>>
    memref.store %11, %arg5[%c0_4] : memref<2xf32, #tpu.memory_space<smem>>
    %c1 = arith.constant 1 : index
    %13 = memref.load %arg5[%c1] : memref<2xf32, #tpu.memory_space<smem>>
    %14 = arith.mulf %5, %5 : vector<102x128xf32>
    %15 = vector.shape_cast %14 : vector<102x128xf32> to vector<1x102x128xf32>
    %cst_5 = arith.constant dense<0.000000e+00> : vector<1xf32>
    %16 = vector.multi_reduction <add>, %15, %cst_5 [1, 2] : vector<1x102x128xf32> to vector<1xf32>
    %17 = vector.shape_cast %16 : vector<1xf32> to vector<1x1x1xf32>
    %18 = vector.extract %17[0, 0, 0] : f32 from vector<1x1x1xf32>
    %19 = arith.addf %13, %18 : f32
    %c1_6 = arith.constant 1 : index
    %20 = memref.load %arg5[%c1_6] : memref<2xf32, #tpu.memory_space<smem>>
    memref.store %19, %arg5[%c1_6] : memref<2xf32, #tpu.memory_space<smem>>
    %c0_i32_7 = arith.constant 0 : i32
    %21 = arith.cmpi eq, %arg1, %c0_i32_7 : i32
    %22 = arith.extui %21 : i1 to i32
    %c0_i32_8 = arith.constant 0 : i32
    %23 = arith.cmpi ne, %22, %c0_i32_8 : i32
    scf.if %23 {
      %c0_9 = arith.constant 0 : index
      %24 = memref.load %arg5[%c0_9] : memref<2xf32, #tpu.memory_space<smem>>
      %cst_10 = arith.constant 7.65931399E-5 : f32
      %25 = arith.mulf %24, %cst_10 : f32
      %c1_11 = arith.constant 1 : index
      %26 = memref.load %arg5[%c1_11] : memref<2xf32, #tpu.memory_space<smem>>
      %cst_12 = arith.constant 7.65931399E-5 : f32
      %27 = arith.mulf %26, %cst_12 : f32
      %28 = arith.mulf %25, %25 : f32
      %29 = arith.subf %27, %28 : f32
      %cst_13 = arith.constant 0.000000e+00 : f32
      %30 = arith.maximumf %29, %cst_13 : f32
      %cst_14 = arith.constant 9.99999974E-6 : f32
      %31 = arith.addf %30, %cst_14 : f32
      %32 = math.rsqrt %31 : f32
      %33 = vector.broadcast %25 : f32 to vector<8x128xf32>
      %c0_15 = arith.constant 0 : index
      %c0_16 = arith.constant 0 : index
      %c0_17 = arith.constant 0 : index
      %34 = vector.load %arg3[%c0_15, %c0_16, %c0_17] : memref<1x8x128xf32, #tpu.memory_space<vmem>>, vector<1x8x128xf32>
      %35 = vector.shape_cast %34 : vector<1x8x128xf32> to vector<8x128xf32>
      %36 = vector.shape_cast %33 : vector<8x128xf32> to vector<1x8x128xf32>
      tpu.vector_store %arg3[%c0_15, %c0_16, %c0_17], %36 {strides = array<i32>} : memref<1x8x128xf32, #tpu.memory_space<vmem>>, vector<1x8x128xf32>,
      %37 = vector.broadcast %32 : f32 to vector<8x128xf32>
      %c0_18 = arith.constant 0 : index
      %c0_19 = arith.constant 0 : index
      %c0_20 = arith.constant 0 : index
      %38 = vector.load %arg4[%c0_18, %c0_19, %c0_20] : memref<1x8x128xf32, #tpu.memory_space<vmem>>, vector<1x8x128xf32>
      %39 = vector.shape_cast %38 : vector<1x8x128xf32> to vector<8x128xf32>
      %40 = vector.shape_cast %37 : vector<8x128xf32> to vector<1x8x128xf32>
      tpu.vector_store %arg4[%c0_18, %c0_19, %c0_20], %40 {strides = array<i32>} : memref<1x8x128xf32, #tpu.memory_space<vmem>>, vector<1x8x128xf32>,
    } else {
    }
    return
  }
  func.func @transform_0(%arg0: i32, %arg1: i32) -> (i32, i32, i32) {
    %c0_i32 = arith.constant 0 : i32
    %c0_i32_0 = arith.constant 0 : i32
    return %arg0, %c0_i32, %arg1 : i32, i32, i32
  }
  func.func @transform_1(%arg0: i32, %arg1: i32) -> (i32, i32, i32) {
    %c0_i32 = arith.constant 0 : i32
    %c0_i32_0 = arith.constant 0 : i32
    %c0_i32_1 = arith.constant 0 : i32
    return %arg0, %c0_i32, %c0_i32_0 : i32, i32, i32
  }
  func.func @transform_2(%arg0: i32, %arg1: i32) -> (i32, i32, i32) {
    %c0_i32 = arith.constant 0 : i32
    %c0_i32_0 = arith.constant 0 : i32
    %c0_i32_1 = arith.constant 0 : i32
    return %arg0, %c0_i32, %c0_i32_0 : i32, i32, i32
  }
}

module attributes {stable_mosaic.version = 11 : i64} {
  func.func @_ln_apply_kernel(%arg0: i32, %arg1: i32, %arg2: memref<1x102x128xbf16, #tpu.memory_space<vmem>>, %arg3: memref<1x8x128xf32, #tpu.memory_space<vmem>>, %arg4: memref<1x8x128xf32, #tpu.memory_space<vmem>>, %arg5: memref<102x128xbf16, #tpu.memory_space<vmem>>, %arg6: memref<102x128xbf16, #tpu.memory_space<vmem>>, %arg7: memref<1xf32, #tpu.memory_space<smem>>, %arg8: memref<2x102x512xbf16, #tpu.memory_space<any>>, %arg9: memref<1x102x128xbf16, #tpu.memory_space<vmem>>) attributes {dimension_semantics = [#tpu.dimension_semantics<parallel>, #tpu.dimension_semantics<parallel>], iteration_bounds = array<i64: 2, 1>, scalar_prefetch = 0 : i64, scratch_operands = 0 : i64, tpu.core_type = #tpu.core_type<tc>, window_params = [{transform_indices = @transform_0, window_bounds = array<i64: 1, 102, 128>}, {transform_indices = @transform_1, window_bounds = array<i64: 1, 8, 128>}, {transform_indices = @transform_2, window_bounds = array<i64: 1, 8, 128>}, {transform_indices = @transform_3, window_bounds = array<i64: 102, 128>}, {transform_indices = @transform_4, window_bounds = array<i64: 102, 128>}, {transform_indices = @transform_5, window_bounds = array<i64: 1>}, {}, {transform_indices = @transform_7, window_bounds = array<i64: 1, 102, 128>}]} {
    %c0 = arith.constant 0 : index
    %c0_0 = arith.constant 0 : index
    %c0_1 = arith.constant 0 : index
    %0 = vector.load %arg2[%c0, %c0_0, %c0_1] : memref<1x102x128xbf16, #tpu.memory_space<vmem>>, vector<1x102x128xbf16>
    %1 = vector.shape_cast %0 : vector<1x102x128xbf16> to vector<102x128xbf16>
    %2 = arith.extf %1 : vector<102x128xbf16> to vector<102x128xf32>
    %c0_2 = arith.constant 0 : index
    %c0_3 = arith.constant 0 : index
    %c0_4 = arith.constant 0 : index
    %3 = vector.load %arg3[%c0_2, %c0_3, %c0_4] : memref<1x8x128xf32, #tpu.memory_space<vmem>>, vector<1x1x1xf32>
    %4 = vector.extract %3[0, 0, 0] : f32 from vector<1x1x1xf32>
    %c0_5 = arith.constant 0 : index
    %c0_6 = arith.constant 0 : index
    %c0_7 = arith.constant 0 : index
    %5 = vector.load %arg4[%c0_5, %c0_6, %c0_7] : memref<1x8x128xf32, #tpu.memory_space<vmem>>, vector<1x1x1xf32>
    %6 = vector.extract %5[0, 0, 0] : f32 from vector<1x1x1xf32>
    %7 = vector.broadcast %4 : f32 to vector<102x128xf32>
    %8 = arith.subf %2, %7 : vector<102x128xf32>
    %9 = vector.broadcast %6 : f32 to vector<102x128xf32>
    %10 = arith.mulf %8, %9 : vector<102x128xf32>
    %c0_8 = arith.constant 0 : index
    %c0_9 = arith.constant 0 : index
    %11 = vector.load %arg5[%c0_8, %c0_9] : memref<102x128xbf16, #tpu.memory_space<vmem>>, vector<102x128xbf16>
    %12 = arith.extf %11 : vector<102x128xbf16> to vector<102x128xf32>
    %13 = arith.mulf %10, %12 : vector<102x128xf32>
    %c0_10 = arith.constant 0 : index
    %c0_11 = arith.constant 0 : index
    %14 = vector.load %arg6[%c0_10, %c0_11] : memref<102x128xbf16, #tpu.memory_space<vmem>>, vector<102x128xbf16>
    %15 = arith.extf %14 : vector<102x128xbf16> to vector<102x128xf32>
    %16 = arith.addf %13, %15 : vector<102x128xf32>
    %17 = arith.truncf %16 : vector<102x128xf32> to vector<102x128xbf16>
    %c0_12 = arith.constant 0 : index
    %c0_13 = arith.constant 0 : index
    %c0_14 = arith.constant 0 : index
    %18 = vector.load %arg9[%c0_12, %c0_13, %c0_14] : memref<1x102x128xbf16, #tpu.memory_space<vmem>>, vector<1x102x128xbf16>
    %19 = vector.shape_cast %18 : vector<1x102x128xbf16> to vector<102x128xbf16>
    %20 = vector.shape_cast %17 : vector<102x128xbf16> to vector<1x102x128xbf16>
    tpu.vector_store %arg9[%c0_12, %c0_13, %c0_14], %20 {strides = array<i32>} : memref<1x102x128xbf16, #tpu.memory_space<vmem>>, vector<1x102x128xbf16>,
    return
  }
  func.func @transform_0(%arg0: i32, %arg1: i32) -> (i32, i32, i32) {
    %c0_i32 = arith.constant 0 : i32
    %c0_i32_0 = arith.constant 0 : i32
    return %arg0, %c0_i32, %arg1 : i32, i32, i32
  }
  func.func @transform_1(%arg0: i32, %arg1: i32) -> (i32, i32, i32) {
    %c0_i32 = arith.constant 0 : i32
    %c0_i32_0 = arith.constant 0 : i32
    %c0_i32_1 = arith.constant 0 : i32
    return %arg0, %c0_i32, %c0_i32_0 : i32, i32, i32
  }
  func.func @transform_2(%arg0: i32, %arg1: i32) -> (i32, i32, i32) {
    %c0_i32 = arith.constant 0 : i32
    %c0_i32_0 = arith.constant 0 : i32
    %c0_i32_1 = arith.constant 0 : i32
    return %arg0, %c0_i32, %c0_i32_0 : i32, i32, i32
  }
  func.func @transform_3(%arg0: i32, %arg1: i32) -> (i32, i32) {
    %c0_i32 = arith.constant 0 : i32
    %c0_i32_0 = arith.constant 0 : i32
    return %c0_i32, %arg1 : i32, i32
  }
  func.func @transform_4(%arg0: i32, %arg1: i32) -> (i32, i32) {
    %c0_i32 = arith.constant 0 : i32
    %c0_i32_0 = arith.constant 0 : i32
    return %c0_i32, %arg1 : i32, i32
  }
  func.func @transform_5(%arg0: i32, %arg1: i32) -> i32 {
    %c0_i32 = arith.constant 0 : i32
    %c0_i32_0 = arith.constant 0 : i32
    return %c0_i32 : i32
  }
  func.func @transform_7(%arg0: i32, %arg1: i32) -> (i32, i32, i32) {
    %c0_i32 = arith.constant 0 : i32
    %0 = arith.addi %arg1, %c0_i32 : i32
    %c0_i32_0 = arith.constant 0 : i32
    %c0_i32_1 = arith.constant 0 : i32
    return %arg0, %c0_i32_0, %0 : i32, i32, i32
  }
}

module attributes {stable_mosaic.version = 11 : i64} {
  func.func @_matmul_kernel(%arg0: i32, %arg1: i32, %arg2: i32, %arg3: memref<208x128xbf16, #tpu.memory_space<vmem>>, %arg4: memref<128x128xbf16, #tpu.memory_space<vmem>>, %arg5: memref<1x128xf32, #tpu.memory_space<vmem>>, %arg6: memref<208x128xbf16, #tpu.memory_space<vmem>>, %arg7: memref<208x128xf32, #tpu.memory_space<vmem>>) attributes {dimension_semantics = [#tpu.dimension_semantics<parallel>, #tpu.dimension_semantics<parallel>, #tpu.dimension_semantics<arbitrary>], iteration_bounds = array<i64: 1, 1, 1>, scalar_prefetch = 0 : i64, scratch_operands = 1 : i64, tpu.core_type = #tpu.core_type<tc>, window_params = [{transform_indices = @transform_0, window_bounds = array<i64: 208, 128>}, {transform_indices = @transform_1, window_bounds = array<i64: 128, 128>}, {transform_indices = @transform_2, window_bounds = array<i64: 1, 128>}, {transform_indices = @transform_3, window_bounds = array<i64: 208, 128>}]} {
    %c0_i32 = arith.constant 0 : i32
    %0 = arith.cmpi eq, %arg2, %c0_i32 : i32
    %1 = arith.extui %0 : i1 to i32
    %c0_i32_0 = arith.constant 0 : i32
    %2 = arith.cmpi ne, %1, %c0_i32_0 : i32
    scf.if %2 {
      %cst_10 = arith.constant 0.000000e+00 : f32
      %12 = vector.broadcast %cst_10 : f32 to vector<208x128xf32>
      %c0_11 = arith.constant 0 : index
      %c0_12 = arith.constant 0 : index
      %13 = vector.load %arg7[%c0_11, %c0_12] : memref<208x128xf32, #tpu.memory_space<vmem>>, vector<208x128xf32>
      tpu.vector_store %arg7[%c0_11, %c0_12], %12 {strides = array<i32>} : memref<208x128xf32, #tpu.memory_space<vmem>>, vector<208x128xf32>,
    } else {
    }
    %c0 = arith.constant 0 : index
    %c0_1 = arith.constant 0 : index
    %3 = vector.load %arg7[%c0, %c0_1] : memref<208x128xf32, #tpu.memory_space<vmem>>, vector<208x128xf32>
    %c0_2 = arith.constant 0 : index
    %c0_3 = arith.constant 0 : index
    %4 = vector.load %arg3[%c0_2, %c0_3] : memref<208x128xbf16, #tpu.memory_space<vmem>>, vector<208x128xbf16>
    %c0_4 = arith.constant 0 : index
    %c0_5 = arith.constant 0 : index
    %5 = vector.load %arg4[%c0_4, %c0_5] : memref<128x128xbf16, #tpu.memory_space<vmem>>, vector<128x128xbf16>
    %cst = arith.constant dense<0.000000e+00> : vector<208x128xf32>
    %6 = tpu.matmul %4, %5, %cst {dimension_numbers = #tpu.dot_dimension_numbers<[1], [0], [0], [1], [0, 0, 1, 1], [], []>} : vector<208x128xbf16>, vector<128x128xbf16>, vector<208x128xf32> -> vector<208x128xf32>
    %7 = arith.addf %3, %6 : vector<208x128xf32>
    %c0_6 = arith.constant 0 : index
    %c0_7 = arith.constant 0 : index
    %8 = vector.load %arg7[%c0_6, %c0_7] : memref<208x128xf32, #tpu.memory_space<vmem>>, vector<208x128xf32>
    tpu.vector_store %arg7[%c0_6, %c0_7], %7 {strides = array<i32>} : memref<208x128xf32, #tpu.memory_space<vmem>>, vector<208x128xf32>,
    %c0_i32_8 = arith.constant 0 : i32
    %9 = arith.cmpi eq, %arg2, %c0_i32_8 : i32
    %10 = arith.extui %9 : i1 to i32
    %c0_i32_9 = arith.constant 0 : i32
    %11 = arith.cmpi ne, %10, %c0_i32_9 : i32
    scf.if %11 {
      %c0_10 = arith.constant 0 : index
      %c0_11 = arith.constant 0 : index
      %12 = vector.load %arg7[%c0_10, %c0_11] : memref<208x128xf32, #tpu.memory_space<vmem>>, vector<208x128xf32>
      %c0_12 = arith.constant 0 : index
      %c0_13 = arith.constant 0 : index
      %13 = vector.load %arg5[%c0_12, %c0_13] : memref<1x128xf32, #tpu.memory_space<vmem>>, vector<1x128xf32>
      %14 = vector.broadcast %13 : vector<1x128xf32> to vector<208x128xf32>
      %15 = arith.addf %12, %14 : vector<208x128xf32>
      %16 = arith.truncf %15 : vector<208x128xf32> to vector<208x128xbf16>
      %c0_14 = arith.constant 0 : index
      %c0_15 = arith.constant 0 : index
      %17 = vector.load %arg6[%c0_14, %c0_15] : memref<208x128xbf16, #tpu.memory_space<vmem>>, vector<208x128xbf16>
      tpu.vector_store %arg6[%c0_14, %c0_15], %16 {strides = array<i32>} : memref<208x128xbf16, #tpu.memory_space<vmem>>, vector<208x128xbf16>,
    } else {
    }
    return
  }
  func.func @transform_0(%arg0: i32, %arg1: i32, %arg2: i32) -> (i32, i32) {
    %c0_i32 = arith.constant 0 : i32
    return %arg0, %arg2 : i32, i32
  }
  func.func @transform_1(%arg0: i32, %arg1: i32, %arg2: i32) -> (i32, i32) {
    %c0_i32 = arith.constant 0 : i32
    return %arg2, %arg1 : i32, i32
  }
  func.func @transform_2(%arg0: i32, %arg1: i32, %arg2: i32) -> (i32, i32) {
    %c0_i32 = arith.constant 0 : i32
    %c0_i32_0 = arith.constant 0 : i32
    return %c0_i32, %arg1 : i32, i32
  }
  func.func @transform_3(%arg0: i32, %arg1: i32, %arg2: i32) -> (i32, i32) {
    %c0_i32 = arith.constant 0 : i32
    return %arg0, %arg1 : i32, i32
  }
}

module attributes {stable_mosaic.version = 11 : i64} {
  func.func @_ln_apply_kernel(%arg0: i32, %arg1: i32, %arg2: memref<1x102x128xbf16, #tpu.memory_space<vmem>>, %arg3: memref<1x8x128xf32, #tpu.memory_space<vmem>>, %arg4: memref<1x8x128xf32, #tpu.memory_space<vmem>>, %arg5: memref<102x128xbf16, #tpu.memory_space<vmem>>, %arg6: memref<102x128xbf16, #tpu.memory_space<vmem>>, %arg7: memref<1xf32, #tpu.memory_space<smem>>, %arg8: memref<2x102x512xbf16, #tpu.memory_space<any>>, %arg9: memref<1x102x128xbf16, #tpu.memory_space<vmem>>) attributes {dimension_semantics = [#tpu.dimension_semantics<parallel>, #tpu.dimension_semantics<parallel>], iteration_bounds = array<i64: 2, 1>, scalar_prefetch = 0 : i64, scratch_operands = 0 : i64, tpu.core_type = #tpu.core_type<tc>, window_params = [{transform_indices = @transform_0, window_bounds = array<i64: 1, 102, 128>}, {transform_indices = @transform_1, window_bounds = array<i64: 1, 8, 128>}, {transform_indices = @transform_2, window_bounds = array<i64: 1, 8, 128>}, {transform_indices = @transform_3, window_bounds = array<i64: 102, 128>}, {transform_indices = @transform_4, window_bounds = array<i64: 102, 128>}, {transform_indices = @transform_5, window_bounds = array<i64: 1>}, {}, {transform_indices = @transform_7, window_bounds = array<i64: 1, 102, 128>}]} {
    %c0 = arith.constant 0 : index
    %c0_0 = arith.constant 0 : index
    %c0_1 = arith.constant 0 : index
    %0 = vector.load %arg2[%c0, %c0_0, %c0_1] : memref<1x102x128xbf16, #tpu.memory_space<vmem>>, vector<1x102x128xbf16>
    %1 = vector.shape_cast %0 : vector<1x102x128xbf16> to vector<102x128xbf16>
    %2 = arith.extf %1 : vector<102x128xbf16> to vector<102x128xf32>
    %c0_2 = arith.constant 0 : index
    %c0_3 = arith.constant 0 : index
    %c0_4 = arith.constant 0 : index
    %3 = vector.load %arg3[%c0_2, %c0_3, %c0_4] : memref<1x8x128xf32, #tpu.memory_space<vmem>>, vector<1x1x1xf32>
    %4 = vector.extract %3[0, 0, 0] : f32 from vector<1x1x1xf32>
    %c0_5 = arith.constant 0 : index
    %c0_6 = arith.constant 0 : index
    %c0_7 = arith.constant 0 : index
    %5 = vector.load %arg4[%c0_5, %c0_6, %c0_7] : memref<1x8x128xf32, #tpu.memory_space<vmem>>, vector<1x1x1xf32>
    %6 = vector.extract %5[0, 0, 0] : f32 from vector<1x1x1xf32>
    %7 = vector.broadcast %4 : f32 to vector<102x128xf32>
    %8 = arith.subf %2, %7 : vector<102x128xf32>
    %9 = vector.broadcast %6 : f32 to vector<102x128xf32>
    %10 = arith.mulf %8, %9 : vector<102x128xf32>
    %c0_8 = arith.constant 0 : index
    %c0_9 = arith.constant 0 : index
    %11 = vector.load %arg5[%c0_8, %c0_9] : memref<102x128xbf16, #tpu.memory_space<vmem>>, vector<102x128xbf16>
    %12 = arith.extf %11 : vector<102x128xbf16> to vector<102x128xf32>
    %13 = arith.mulf %10, %12 : vector<102x128xf32>
    %c0_10 = arith.constant 0 : index
    %c0_11 = arith.constant 0 : index
    %14 = vector.load %arg6[%c0_10, %c0_11] : memref<102x128xbf16, #tpu.memory_space<vmem>>, vector<102x128xbf16>
    %15 = arith.extf %14 : vector<102x128xbf16> to vector<102x128xf32>
    %16 = arith.addf %13, %15 : vector<102x128xf32>
    %c0_12 = arith.constant 0 : index
    %17 = memref.load %arg7[%c0_12] : memref<1xf32, #tpu.memory_space<smem>>
    %cst = arith.constant 0.000000e+00 : f32
    %18 = vector.broadcast %cst : f32 to vector<102x128xf32>
    %19 = arith.cmpf oge, %16, %18 : vector<102x128xf32>
    %20 = vector.broadcast %17 : f32 to vector<102x128xf32>
    %21 = arith.mulf %20, %16 : vector<102x128xf32>
    %22 = arith.select %19, %16, %21 : vector<102x128xi1>, vector<102x128xf32>
    %23 = arith.truncf %22 : vector<102x128xf32> to vector<102x128xbf16>
    %c0_13 = arith.constant 0 : index
    %c0_14 = arith.constant 0 : index
    %c0_15 = arith.constant 0 : index
    %24 = vector.load %arg9[%c0_13, %c0_14, %c0_15] : memref<1x102x128xbf16, #tpu.memory_space<vmem>>, vector<1x102x128xbf16>
    %25 = vector.shape_cast %24 : vector<1x102x128xbf16> to vector<102x128xbf16>
    %26 = vector.shape_cast %23 : vector<102x128xbf16> to vector<1x102x128xbf16>
    tpu.vector_store %arg9[%c0_13, %c0_14, %c0_15], %26 {strides = array<i32>} : memref<1x102x128xbf16, #tpu.memory_space<vmem>>, vector<1x102x128xbf16>,
    return
  }
  func.func @transform_0(%arg0: i32, %arg1: i32) -> (i32, i32, i32) {
    %c0_i32 = arith.constant 0 : i32
    %c0_i32_0 = arith.constant 0 : i32
    return %arg0, %c0_i32, %arg1 : i32, i32, i32
  }
  func.func @transform_1(%arg0: i32, %arg1: i32) -> (i32, i32, i32) {
    %c0_i32 = arith.constant 0 : i32
    %c0_i32_0 = arith.constant 0 : i32
    %c0_i32_1 = arith.constant 0 : i32
    return %arg0, %c0_i32, %c0_i32_0 : i32, i32, i32
  }
  func.func @transform_2(%arg0: i32, %arg1: i32) -> (i32, i32, i32) {
    %c0_i32 = arith.constant 0 : i32
    %c0_i32_0 = arith.constant 0 : i32
    %c0_i32_1 = arith.constant 0 : i32
    return %arg0, %c0_i32, %c0_i32_0 : i32, i32, i32
  }
  func.func @transform_3(%arg0: i32, %arg1: i32) -> (i32, i32) {
    %c0_i32 = arith.constant 0 : i32
    %c0_i32_0 = arith.constant 0 : i32
    return %c0_i32, %arg1 : i32, i32
  }
  func.func @transform_4(%arg0: i32, %arg1: i32) -> (i32, i32) {
    %c0_i32 = arith.constant 0 : i32
    %c0_i32_0 = arith.constant 0 : i32
    return %c0_i32, %arg1 : i32, i32
  }
  func.func @transform_5(%arg0: i32, %arg1: i32) -> i32 {
    %c0_i32 = arith.constant 0 : i32
    %c0_i32_0 = arith.constant 0 : i32
    return %c0_i32 : i32
  }
  func.func @transform_7(%arg0: i32, %arg1: i32) -> (i32, i32, i32) {
    %c1_i32 = arith.constant 1 : i32
    %0 = arith.addi %arg1, %c1_i32 : i32
    %c0_i32 = arith.constant 0 : i32
    %c0_i32_0 = arith.constant 0 : i32
    return %arg0, %c0_i32, %0 : i32, i32, i32
  }
}

module attributes {stable_mosaic.version = 11 : i64} {
  func.func @_matmul_kernel(%arg0: i32, %arg1: i32, %arg2: i32, %arg3: memref<208x256xbf16, #tpu.memory_space<vmem>>, %arg4: memref<256x128xbf16, #tpu.memory_space<vmem>>, %arg5: memref<1x128xf32, #tpu.memory_space<vmem>>, %arg6: memref<208x128xbf16, #tpu.memory_space<vmem>>, %arg7: memref<208x128xf32, #tpu.memory_space<vmem>>) attributes {dimension_semantics = [#tpu.dimension_semantics<parallel>, #tpu.dimension_semantics<parallel>, #tpu.dimension_semantics<arbitrary>], iteration_bounds = array<i64: 1, 1, 1>, scalar_prefetch = 0 : i64, scratch_operands = 1 : i64, tpu.core_type = #tpu.core_type<tc>, window_params = [{transform_indices = @transform_0, window_bounds = array<i64: 208, 256>}, {transform_indices = @transform_1, window_bounds = array<i64: 256, 128>}, {transform_indices = @transform_2, window_bounds = array<i64: 1, 128>}, {transform_indices = @transform_3, window_bounds = array<i64: 208, 128>}]} {
    %c0_i32 = arith.constant 0 : i32
    %0 = arith.cmpi eq, %arg2, %c0_i32 : i32
    %1 = arith.extui %0 : i1 to i32
    %c0_i32_0 = arith.constant 0 : i32
    %2 = arith.cmpi ne, %1, %c0_i32_0 : i32
    scf.if %2 {
      %cst_10 = arith.constant 0.000000e+00 : f32
      %12 = vector.broadcast %cst_10 : f32 to vector<208x128xf32>
      %c0_11 = arith.constant 0 : index
      %c0_12 = arith.constant 0 : index
      %13 = vector.load %arg7[%c0_11, %c0_12] : memref<208x128xf32, #tpu.memory_space<vmem>>, vector<208x128xf32>
      tpu.vector_store %arg7[%c0_11, %c0_12], %12 {strides = array<i32>} : memref<208x128xf32, #tpu.memory_space<vmem>>, vector<208x128xf32>,
    } else {
    }
    %c0 = arith.constant 0 : index
    %c0_1 = arith.constant 0 : index
    %3 = vector.load %arg7[%c0, %c0_1] : memref<208x128xf32, #tpu.memory_space<vmem>>, vector<208x128xf32>
    %c0_2 = arith.constant 0 : index
    %c0_3 = arith.constant 0 : index
    %4 = vector.load %arg3[%c0_2, %c0_3] : memref<208x256xbf16, #tpu.memory_space<vmem>>, vector<208x256xbf16>
    %c0_4 = arith.constant 0 : index
    %c0_5 = arith.constant 0 : index
    %5 = vector.load %arg4[%c0_4, %c0_5] : memref<256x128xbf16, #tpu.memory_space<vmem>>, vector<256x128xbf16>
    %cst = arith.constant dense<0.000000e+00> : vector<208x128xf32>
    %6 = tpu.matmul %4, %5, %cst {dimension_numbers = #tpu.dot_dimension_numbers<[1], [0], [0], [1], [0, 0, 1, 1], [], []>} : vector<208x256xbf16>, vector<256x128xbf16>, vector<208x128xf32> -> vector<208x128xf32>
    %7 = arith.addf %3, %6 : vector<208x128xf32>
    %c0_6 = arith.constant 0 : index
    %c0_7 = arith.constant 0 : index
    %8 = vector.load %arg7[%c0_6, %c0_7] : memref<208x128xf32, #tpu.memory_space<vmem>>, vector<208x128xf32>
    tpu.vector_store %arg7[%c0_6, %c0_7], %7 {strides = array<i32>} : memref<208x128xf32, #tpu.memory_space<vmem>>, vector<208x128xf32>,
    %c0_i32_8 = arith.constant 0 : i32
    %9 = arith.cmpi eq, %arg2, %c0_i32_8 : i32
    %10 = arith.extui %9 : i1 to i32
    %c0_i32_9 = arith.constant 0 : i32
    %11 = arith.cmpi ne, %10, %c0_i32_9 : i32
    scf.if %11 {
      %c0_10 = arith.constant 0 : index
      %c0_11 = arith.constant 0 : index
      %12 = vector.load %arg7[%c0_10, %c0_11] : memref<208x128xf32, #tpu.memory_space<vmem>>, vector<208x128xf32>
      %c0_12 = arith.constant 0 : index
      %c0_13 = arith.constant 0 : index
      %13 = vector.load %arg5[%c0_12, %c0_13] : memref<1x128xf32, #tpu.memory_space<vmem>>, vector<1x128xf32>
      %14 = vector.broadcast %13 : vector<1x128xf32> to vector<208x128xf32>
      %15 = arith.addf %12, %14 : vector<208x128xf32>
      %16 = arith.truncf %15 : vector<208x128xf32> to vector<208x128xbf16>
      %c0_14 = arith.constant 0 : index
      %c0_15 = arith.constant 0 : index
      %17 = vector.load %arg6[%c0_14, %c0_15] : memref<208x128xbf16, #tpu.memory_space<vmem>>, vector<208x128xbf16>
      tpu.vector_store %arg6[%c0_14, %c0_15], %16 {strides = array<i32>} : memref<208x128xbf16, #tpu.memory_space<vmem>>, vector<208x128xbf16>,
    } else {
    }
    return
  }
  func.func @transform_0(%arg0: i32, %arg1: i32, %arg2: i32) -> (i32, i32) {
    %c0_i32 = arith.constant 0 : i32
    return %arg0, %arg2 : i32, i32
  }
  func.func @transform_1(%arg0: i32, %arg1: i32, %arg2: i32) -> (i32, i32) {
    %c0_i32 = arith.constant 0 : i32
    return %arg2, %arg1 : i32, i32
  }
  func.func @transform_2(%arg0: i32, %arg1: i32, %arg2: i32) -> (i32, i32) {
    %c0_i32 = arith.constant 0 : i32
    %c0_i32_0 = arith.constant 0 : i32
    return %c0_i32, %arg1 : i32, i32
  }
  func.func @transform_3(%arg0: i32, %arg1: i32, %arg2: i32) -> (i32, i32) {
    %c0_i32 = arith.constant 0 : i32
    return %arg0, %arg1 : i32, i32
  }
}

module attributes {stable_mosaic.version = 11 : i64} {
  func.func @_ln_apply_kernel(%arg0: i32, %arg1: i32, %arg2: memref<1x102x128xbf16, #tpu.memory_space<vmem>>, %arg3: memref<1x8x128xf32, #tpu.memory_space<vmem>>, %arg4: memref<1x8x128xf32, #tpu.memory_space<vmem>>, %arg5: memref<102x128xbf16, #tpu.memory_space<vmem>>, %arg6: memref<102x128xbf16, #tpu.memory_space<vmem>>, %arg7: memref<1xf32, #tpu.memory_space<smem>>, %arg8: memref<2x102x512xbf16, #tpu.memory_space<any>>, %arg9: memref<1x102x128xbf16, #tpu.memory_space<vmem>>) attributes {dimension_semantics = [#tpu.dimension_semantics<parallel>, #tpu.dimension_semantics<parallel>], iteration_bounds = array<i64: 2, 1>, scalar_prefetch = 0 : i64, scratch_operands = 0 : i64, tpu.core_type = #tpu.core_type<tc>, window_params = [{transform_indices = @transform_0, window_bounds = array<i64: 1, 102, 128>}, {transform_indices = @transform_1, window_bounds = array<i64: 1, 8, 128>}, {transform_indices = @transform_2, window_bounds = array<i64: 1, 8, 128>}, {transform_indices = @transform_3, window_bounds = array<i64: 102, 128>}, {transform_indices = @transform_4, window_bounds = array<i64: 102, 128>}, {transform_indices = @transform_5, window_bounds = array<i64: 1>}, {}, {transform_indices = @transform_7, window_bounds = array<i64: 1, 102, 128>}]} {
    %c0 = arith.constant 0 : index
    %c0_0 = arith.constant 0 : index
    %c0_1 = arith.constant 0 : index
    %0 = vector.load %arg2[%c0, %c0_0, %c0_1] : memref<1x102x128xbf16, #tpu.memory_space<vmem>>, vector<1x102x128xbf16>
    %1 = vector.shape_cast %0 : vector<1x102x128xbf16> to vector<102x128xbf16>
    %2 = arith.extf %1 : vector<102x128xbf16> to vector<102x128xf32>
    %c0_2 = arith.constant 0 : index
    %c0_3 = arith.constant 0 : index
    %c0_4 = arith.constant 0 : index
    %3 = vector.load %arg3[%c0_2, %c0_3, %c0_4] : memref<1x8x128xf32, #tpu.memory_space<vmem>>, vector<1x1x1xf32>
    %4 = vector.extract %3[0, 0, 0] : f32 from vector<1x1x1xf32>
    %c0_5 = arith.constant 0 : index
    %c0_6 = arith.constant 0 : index
    %c0_7 = arith.constant 0 : index
    %5 = vector.load %arg4[%c0_5, %c0_6, %c0_7] : memref<1x8x128xf32, #tpu.memory_space<vmem>>, vector<1x1x1xf32>
    %6 = vector.extract %5[0, 0, 0] : f32 from vector<1x1x1xf32>
    %7 = vector.broadcast %4 : f32 to vector<102x128xf32>
    %8 = arith.subf %2, %7 : vector<102x128xf32>
    %9 = vector.broadcast %6 : f32 to vector<102x128xf32>
    %10 = arith.mulf %8, %9 : vector<102x128xf32>
    %c0_8 = arith.constant 0 : index
    %c0_9 = arith.constant 0 : index
    %11 = vector.load %arg5[%c0_8, %c0_9] : memref<102x128xbf16, #tpu.memory_space<vmem>>, vector<102x128xbf16>
    %12 = arith.extf %11 : vector<102x128xbf16> to vector<102x128xf32>
    %13 = arith.mulf %10, %12 : vector<102x128xf32>
    %c0_10 = arith.constant 0 : index
    %c0_11 = arith.constant 0 : index
    %14 = vector.load %arg6[%c0_10, %c0_11] : memref<102x128xbf16, #tpu.memory_space<vmem>>, vector<102x128xbf16>
    %15 = arith.extf %14 : vector<102x128xbf16> to vector<102x128xf32>
    %16 = arith.addf %13, %15 : vector<102x128xf32>
    %c0_12 = arith.constant 0 : index
    %17 = memref.load %arg7[%c0_12] : memref<1xf32, #tpu.memory_space<smem>>
    %cst = arith.constant 0.000000e+00 : f32
    %18 = vector.broadcast %cst : f32 to vector<102x128xf32>
    %19 = arith.cmpf oge, %16, %18 : vector<102x128xf32>
    %20 = vector.broadcast %17 : f32 to vector<102x128xf32>
    %21 = arith.mulf %20, %16 : vector<102x128xf32>
    %22 = arith.select %19, %16, %21 : vector<102x128xi1>, vector<102x128xf32>
    %23 = arith.truncf %22 : vector<102x128xf32> to vector<102x128xbf16>
    %c0_13 = arith.constant 0 : index
    %c0_14 = arith.constant 0 : index
    %c0_15 = arith.constant 0 : index
    %24 = vector.load %arg9[%c0_13, %c0_14, %c0_15] : memref<1x102x128xbf16, #tpu.memory_space<vmem>>, vector<1x102x128xbf16>
    %25 = vector.shape_cast %24 : vector<1x102x128xbf16> to vector<102x128xbf16>
    %26 = vector.shape_cast %23 : vector<102x128xbf16> to vector<1x102x128xbf16>
    tpu.vector_store %arg9[%c0_13, %c0_14, %c0_15], %26 {strides = array<i32>} : memref<1x102x128xbf16, #tpu.memory_space<vmem>>, vector<1x102x128xbf16>,
    return
  }
  func.func @transform_0(%arg0: i32, %arg1: i32) -> (i32, i32, i32) {
    %c0_i32 = arith.constant 0 : i32
    %c0_i32_0 = arith.constant 0 : i32
    return %arg0, %c0_i32, %arg1 : i32, i32, i32
  }
  func.func @transform_1(%arg0: i32, %arg1: i32) -> (i32, i32, i32) {
    %c0_i32 = arith.constant 0 : i32
    %c0_i32_0 = arith.constant 0 : i32
    %c0_i32_1 = arith.constant 0 : i32
    return %arg0, %c0_i32, %c0_i32_0 : i32, i32, i32
  }
  func.func @transform_2(%arg0: i32, %arg1: i32) -> (i32, i32, i32) {
    %c0_i32 = arith.constant 0 : i32
    %c0_i32_0 = arith.constant 0 : i32
    %c0_i32_1 = arith.constant 0 : i32
    return %arg0, %c0_i32, %c0_i32_0 : i32, i32, i32
  }
  func.func @transform_3(%arg0: i32, %arg1: i32) -> (i32, i32) {
    %c0_i32 = arith.constant 0 : i32
    %c0_i32_0 = arith.constant 0 : i32
    return %c0_i32, %arg1 : i32, i32
  }
  func.func @transform_4(%arg0: i32, %arg1: i32) -> (i32, i32) {
    %c0_i32 = arith.constant 0 : i32
    %c0_i32_0 = arith.constant 0 : i32
    return %c0_i32, %arg1 : i32, i32
  }
  func.func @transform_5(%arg0: i32, %arg1: i32) -> i32 {
    %c0_i32 = arith.constant 0 : i32
    %c0_i32_0 = arith.constant 0 : i32
    return %c0_i32 : i32
  }
  func.func @transform_7(%arg0: i32, %arg1: i32) -> (i32, i32, i32) {
    %c2_i32 = arith.constant 2 : i32
    %0 = arith.addi %arg1, %c2_i32 : i32
    %c0_i32 = arith.constant 0 : i32
    %c0_i32_0 = arith.constant 0 : i32
    return %arg0, %c0_i32, %0 : i32, i32, i32
  }
}

module attributes {stable_mosaic.version = 11 : i64} {
  func.func @_matmul_kernel(%arg0: i32, %arg1: i32, %arg2: i32, %arg3: memref<208x384xbf16, #tpu.memory_space<vmem>>, %arg4: memref<384x128xbf16, #tpu.memory_space<vmem>>, %arg5: memref<1x128xf32, #tpu.memory_space<vmem>>, %arg6: memref<208x128xbf16, #tpu.memory_space<vmem>>, %arg7: memref<208x128xf32, #tpu.memory_space<vmem>>) attributes {dimension_semantics = [#tpu.dimension_semantics<parallel>, #tpu.dimension_semantics<parallel>, #tpu.dimension_semantics<arbitrary>], iteration_bounds = array<i64: 1, 1, 1>, scalar_prefetch = 0 : i64, scratch_operands = 1 : i64, tpu.core_type = #tpu.core_type<tc>, window_params = [{transform_indices = @transform_0, window_bounds = array<i64: 208, 384>}, {transform_indices = @transform_1, window_bounds = array<i64: 384, 128>}, {transform_indices = @transform_2, window_bounds = array<i64: 1, 128>}, {transform_indices = @transform_3, window_bounds = array<i64: 208, 128>}]} {
    %c0_i32 = arith.constant 0 : i32
    %0 = arith.cmpi eq, %arg2, %c0_i32 : i32
    %1 = arith.extui %0 : i1 to i32
    %c0_i32_0 = arith.constant 0 : i32
    %2 = arith.cmpi ne, %1, %c0_i32_0 : i32
    scf.if %2 {
      %cst_10 = arith.constant 0.000000e+00 : f32
      %12 = vector.broadcast %cst_10 : f32 to vector<208x128xf32>
      %c0_11 = arith.constant 0 : index
      %c0_12 = arith.constant 0 : index
      %13 = vector.load %arg7[%c0_11, %c0_12] : memref<208x128xf32, #tpu.memory_space<vmem>>, vector<208x128xf32>
      tpu.vector_store %arg7[%c0_11, %c0_12], %12 {strides = array<i32>} : memref<208x128xf32, #tpu.memory_space<vmem>>, vector<208x128xf32>,
    } else {
    }
    %c0 = arith.constant 0 : index
    %c0_1 = arith.constant 0 : index
    %3 = vector.load %arg7[%c0, %c0_1] : memref<208x128xf32, #tpu.memory_space<vmem>>, vector<208x128xf32>
    %c0_2 = arith.constant 0 : index
    %c0_3 = arith.constant 0 : index
    %4 = vector.load %arg3[%c0_2, %c0_3] : memref<208x384xbf16, #tpu.memory_space<vmem>>, vector<208x384xbf16>
    %c0_4 = arith.constant 0 : index
    %c0_5 = arith.constant 0 : index
    %5 = vector.load %arg4[%c0_4, %c0_5] : memref<384x128xbf16, #tpu.memory_space<vmem>>, vector<384x128xbf16>
    %cst = arith.constant dense<0.000000e+00> : vector<208x128xf32>
    %6 = tpu.matmul %4, %5, %cst {dimension_numbers = #tpu.dot_dimension_numbers<[1], [0], [0], [1], [0, 0, 1, 1], [], []>} : vector<208x384xbf16>, vector<384x128xbf16>, vector<208x128xf32> -> vector<208x128xf32>
    %7 = arith.addf %3, %6 : vector<208x128xf32>
    %c0_6 = arith.constant 0 : index
    %c0_7 = arith.constant 0 : index
    %8 = vector.load %arg7[%c0_6, %c0_7] : memref<208x128xf32, #tpu.memory_space<vmem>>, vector<208x128xf32>
    tpu.vector_store %arg7[%c0_6, %c0_7], %7 {strides = array<i32>} : memref<208x128xf32, #tpu.memory_space<vmem>>, vector<208x128xf32>,
    %c0_i32_8 = arith.constant 0 : i32
    %9 = arith.cmpi eq, %arg2, %c0_i32_8 : i32
    %10 = arith.extui %9 : i1 to i32
    %c0_i32_9 = arith.constant 0 : i32
    %11 = arith.cmpi ne, %10, %c0_i32_9 : i32
    scf.if %11 {
      %c0_10 = arith.constant 0 : index
      %c0_11 = arith.constant 0 : index
      %12 = vector.load %arg7[%c0_10, %c0_11] : memref<208x128xf32, #tpu.memory_space<vmem>>, vector<208x128xf32>
      %c0_12 = arith.constant 0 : index
      %c0_13 = arith.constant 0 : index
      %13 = vector.load %arg5[%c0_12, %c0_13] : memref<1x128xf32, #tpu.memory_space<vmem>>, vector<1x128xf32>
      %14 = vector.broadcast %13 : vector<1x128xf32> to vector<208x128xf32>
      %15 = arith.addf %12, %14 : vector<208x128xf32>
      %16 = arith.truncf %15 : vector<208x128xf32> to vector<208x128xbf16>
      %c0_14 = arith.constant 0 : index
      %c0_15 = arith.constant 0 : index
      %17 = vector.load %arg6[%c0_14, %c0_15] : memref<208x128xbf16, #tpu.memory_space<vmem>>, vector<208x128xbf16>
      tpu.vector_store %arg6[%c0_14, %c0_15], %16 {strides = array<i32>} : memref<208x128xbf16, #tpu.memory_space<vmem>>, vector<208x128xbf16>,
    } else {
    }
    return
  }
  func.func @transform_0(%arg0: i32, %arg1: i32, %arg2: i32) -> (i32, i32) {
    %c0_i32 = arith.constant 0 : i32
    return %arg0, %arg2 : i32, i32
  }
  func.func @transform_1(%arg0: i32, %arg1: i32, %arg2: i32) -> (i32, i32) {
    %c0_i32 = arith.constant 0 : i32
    return %arg2, %arg1 : i32, i32
  }
  func.func @transform_2(%arg0: i32, %arg1: i32, %arg2: i32) -> (i32, i32) {
    %c0_i32 = arith.constant 0 : i32
    %c0_i32_0 = arith.constant 0 : i32
    return %c0_i32, %arg1 : i32, i32
  }
  func.func @transform_3(%arg0: i32, %arg1: i32, %arg2: i32) -> (i32, i32) {
    %c0_i32 = arith.constant 0 : i32
    return %arg0, %arg1 : i32, i32
  }
}

module attributes {stable_mosaic.version = 11 : i64} {
  func.func @_ln_apply_kernel(%arg0: i32, %arg1: i32, %arg2: memref<1x102x128xbf16, #tpu.memory_space<vmem>>, %arg3: memref<1x8x128xf32, #tpu.memory_space<vmem>>, %arg4: memref<1x8x128xf32, #tpu.memory_space<vmem>>, %arg5: memref<102x128xbf16, #tpu.memory_space<vmem>>, %arg6: memref<102x128xbf16, #tpu.memory_space<vmem>>, %arg7: memref<1xf32, #tpu.memory_space<smem>>, %arg8: memref<2x102x512xbf16, #tpu.memory_space<any>>, %arg9: memref<1x102x128xbf16, #tpu.memory_space<vmem>>) attributes {dimension_semantics = [#tpu.dimension_semantics<parallel>, #tpu.dimension_semantics<parallel>], iteration_bounds = array<i64: 2, 1>, scalar_prefetch = 0 : i64, scratch_operands = 0 : i64, tpu.core_type = #tpu.core_type<tc>, window_params = [{transform_indices = @transform_0, window_bounds = array<i64: 1, 102, 128>}, {transform_indices = @transform_1, window_bounds = array<i64: 1, 8, 128>}, {transform_indices = @transform_2, window_bounds = array<i64: 1, 8, 128>}, {transform_indices = @transform_3, window_bounds = array<i64: 102, 128>}, {transform_indices = @transform_4, window_bounds = array<i64: 102, 128>}, {transform_indices = @transform_5, window_bounds = array<i64: 1>}, {}, {transform_indices = @transform_7, window_bounds = array<i64: 1, 102, 128>}]} {
    %c0 = arith.constant 0 : index
    %c0_0 = arith.constant 0 : index
    %c0_1 = arith.constant 0 : index
    %0 = vector.load %arg2[%c0, %c0_0, %c0_1] : memref<1x102x128xbf16, #tpu.memory_space<vmem>>, vector<1x102x128xbf16>
    %1 = vector.shape_cast %0 : vector<1x102x128xbf16> to vector<102x128xbf16>
    %2 = arith.extf %1 : vector<102x128xbf16> to vector<102x128xf32>
    %c0_2 = arith.constant 0 : index
    %c0_3 = arith.constant 0 : index
    %c0_4 = arith.constant 0 : index
    %3 = vector.load %arg3[%c0_2, %c0_3, %c0_4] : memref<1x8x128xf32, #tpu.memory_space<vmem>>, vector<1x1x1xf32>
    %4 = vector.extract %3[0, 0, 0] : f32 from vector<1x1x1xf32>
    %c0_5 = arith.constant 0 : index
    %c0_6 = arith.constant 0 : index
    %c0_7 = arith.constant 0 : index
    %5 = vector.load %arg4[%c0_5, %c0_6, %c0_7] : memref<1x8x128xf32, #tpu.memory_space<vmem>>, vector<1x1x1xf32>
    %6 = vector.extract %5[0, 0, 0] : f32 from vector<1x1x1xf32>
    %7 = vector.broadcast %4 : f32 to vector<102x128xf32>
    %8 = arith.subf %2, %7 : vector<102x128xf32>
    %9 = vector.broadcast %6 : f32 to vector<102x128xf32>
    %10 = arith.mulf %8, %9 : vector<102x128xf32>
    %c0_8 = arith.constant 0 : index
    %c0_9 = arith.constant 0 : index
    %11 = vector.load %arg5[%c0_8, %c0_9] : memref<102x128xbf16, #tpu.memory_space<vmem>>, vector<102x128xbf16>
    %12 = arith.extf %11 : vector<102x128xbf16> to vector<102x128xf32>
    %13 = arith.mulf %10, %12 : vector<102x128xf32>
    %c0_10 = arith.constant 0 : index
    %c0_11 = arith.constant 0 : index
    %14 = vector.load %arg6[%c0_10, %c0_11] : memref<102x128xbf16, #tpu.memory_space<vmem>>, vector<102x128xbf16>
    %15 = arith.extf %14 : vector<102x128xbf16> to vector<102x128xf32>
    %16 = arith.addf %13, %15 : vector<102x128xf32>
    %c0_12 = arith.constant 0 : index
    %17 = memref.load %arg7[%c0_12] : memref<1xf32, #tpu.memory_space<smem>>
    %cst = arith.constant 0.000000e+00 : f32
    %18 = vector.broadcast %cst : f32 to vector<102x128xf32>
    %19 = arith.cmpf oge, %16, %18 : vector<102x128xf32>
    %20 = vector.broadcast %17 : f32 to vector<102x128xf32>
    %21 = arith.mulf %20, %16 : vector<102x128xf32>
    %22 = arith.select %19, %16, %21 : vector<102x128xi1>, vector<102x128xf32>
    %23 = arith.truncf %22 : vector<102x128xf32> to vector<102x128xbf16>
    %c0_13 = arith.constant 0 : index
    %c0_14 = arith.constant 0 : index
    %c0_15 = arith.constant 0 : index
    %24 = vector.load %arg9[%c0_13, %c0_14, %c0_15] : memref<1x102x128xbf16, #tpu.memory_space<vmem>>, vector<1x102x128xbf16>
    %25 = vector.shape_cast %24 : vector<1x102x128xbf16> to vector<102x128xbf16>
    %26 = vector.shape_cast %23 : vector<102x128xbf16> to vector<1x102x128xbf16>
    tpu.vector_store %arg9[%c0_13, %c0_14, %c0_15], %26 {strides = array<i32>} : memref<1x102x128xbf16, #tpu.memory_space<vmem>>, vector<1x102x128xbf16>,
    return
  }
  func.func @transform_0(%arg0: i32, %arg1: i32) -> (i32, i32, i32) {
    %c0_i32 = arith.constant 0 : i32
    %c0_i32_0 = arith.constant 0 : i32
    return %arg0, %c0_i32, %arg1 : i32, i32, i32
  }
  func.func @transform_1(%arg0: i32, %arg1: i32) -> (i32, i32, i32) {
    %c0_i32 = arith.constant 0 : i32
    %c0_i32_0 = arith.constant 0 : i32
    %c0_i32_1 = arith.constant 0 : i32
    return %arg0, %c0_i32, %c0_i32_0 : i32, i32, i32
  }
  func.func @transform_2(%arg0: i32, %arg1: i32) -> (i32, i32, i32) {
    %c0_i32 = arith.constant 0 : i32
    %c0_i32_0 = arith.constant 0 : i32
    %c0_i32_1 = arith.constant 0 : i32
    return %arg0, %c0_i32, %c0_i32_0 : i32, i32, i32
  }
  func.func @transform_3(%arg0: i32, %arg1: i32) -> (i32, i32) {
    %c0_i32 = arith.constant 0 : i32
    %c0_i32_0 = arith.constant 0 : i32
    return %c0_i32, %arg1 : i32, i32
  }
  func.func @transform_4(%arg0: i32, %arg1: i32) -> (i32, i32) {
    %c0_i32 = arith.constant 0 : i32
    %c0_i32_0 = arith.constant 0 : i32
    return %c0_i32, %arg1 : i32, i32
  }
  func.func @transform_5(%arg0: i32, %arg1: i32) -> i32 {
    %c0_i32 = arith.constant 0 : i32
    %c0_i32_0 = arith.constant 0 : i32
    return %c0_i32 : i32
  }
  func.func @transform_7(%arg0: i32, %arg1: i32) -> (i32, i32, i32) {
    %c3_i32 = arith.constant 3 : i32
    %0 = arith.addi %arg1, %c3_i32 : i32
    %c0_i32 = arith.constant 0 : i32
    %c0_i32_0 = arith.constant 0 : i32
    return %arg0, %c0_i32, %0 : i32, i32, i32
  }
}

</mosaic_0001>

<llo_original>
// kernel: dense_fc_forward.11
$region0: #{dense_fc_forward.11}
  #allocation0 [shape = 'u32[]', space=smem, size = 0x4, offset = 0x4, fixed_abs, tag = 'smem constant byte address 0x4 - core index']
  #allocation1 [shape = 'u32[144,128]{1,0:T(1,128)}', space=vmem, size = 0x12000, scoped, tag = 'internal scratch']
  #allocation2 [shape = 'f32[2]{0:T(128)}', space=smem, size = 0x200, scoped, tag = 'scratch operand']
  %s0 = inlined_call_operand.vmem [shape: bf16[2,102,128], index: 0, kind: input, shape index: {}]
  %s1 = inlined_call_operand.vmem [shape: f32[2,8,128], index: 1, kind: output, shape index: {0}]
  %s2 = inlined_call_operand.vmem [shape: f32[2,8,128], index: 2, kind: output, shape index: {1}]
  %3 = xla_tuple %s1, %s2
  %s4 = sld [smem:[#allocation0]]
  $region53: #{dense_fc_forward.11} parent=0
    _
  %s6 = ssub.s32 1, %s4
  %s7 = scalar_select 0, %s6, %s4
  loop: start=0, step=1, limit=4
  $region2: #{dense_fc_forward.11} parent=0 // loop_pre_header
    _
  $region3: #{dense_fc_forward.11} parent=0 // loop_header
    %s9 = sphi 0, %s13
    %p10 = scmp.ge.s32.totalorder %s9, 4
    %s16 = sphi 0, %s28
    %s17 = sphi 0, %s24
    %s18 = sphi 0, %s16
    %s19 = sphi 0, %s17
    %s20 = sphi 0, %s18
    %s21 = sphi 0, %s19
    %s33 = sphi 0, %s35
    %s36 = sphi 0, %s33
    %s37 = sphi 0, %s36
    %s53 = sphi 0, %s37
    %s59 = sphi 0, %s61
    %s62 = sphi 0, %s59
    %s63 = sphi 0, %s62
    %s79 = sphi 0, %s63
    %s85 = sphi 0, %s87
    %s88 = sphi 0, %s85
    %s89 = sphi 0, %s88
    %s105 = sphi 0, %s89
  $region4: #{dense_fc_forward.11} parent=0 // loop_header_branch
    %12 = sbr.rel (%p10) target = $region8
  $region5: #{dense_fc_forward.11} parent=0 // loop_body
    %s14 = ssub.s32 %s9, 1
    %s15 = ssub.s32 %s9, 2
    %s22 = sadd.s32 1, %s17
    %p23 = scmp.ge.s32.totalorder %s22, 1
    %s24 = scalar_select %p23, 0, %s22
    %s25 = sadd.s32 1, %s16
    %s26 = scalar_select %p23, %s25, %s16
    %p27 = scmp.ge.s32.totalorder %s26, 2
    %s28 = scalar_select %p27, 0, %s26
    %s29 = ssub.s32 %s16, %s28
    %s30 = ssub.s32 %s17, %s24
    %s31 = sor.u32 %s29, %s30
    %p32 = scmp.eq.s32.totalorder %s31, 0
    %s34 = sadd.s32 %s33, 1
    %s35 = scalar_select %p32, %s33, %s34
    %p38 = pneg %p32
    %p39 = scmp.eq.s32.totalorder %s9, 1
    %p40 = por %p38, %p39
    %p41 = scmp.ne.s32.totalorder %s33, %s36
    %p42 = scmp.eq.s32.totalorder %s9, 0
    %p43 = por %p41, %p42
    %p44 = scmp.ne.s32.totalorder %s33, %s36
    %p45 = scmp.eq.s32.totalorder %s14, 1
    %p46 = por %p44, %p45
    %p47 = scmp.ne.s32.totalorder %s36, %s37
    %p48 = scmp.eq.s32.totalorder %s14, 0
    %p49 = por %p47, %p48
    %p50 = scmp.ne.s32.totalorder %s36, %s37
    %p51 = scmp.eq.s32.totalorder %s15, 1
    %p52 = por %p50, %p51
    %p54 = scmp.ne.s32.totalorder %s37, %s53
    %p55 = scmp.eq.s32.totalorder %s15, 0
    %p56 = por %p54, %p55
    %s57 = ssub.s32 %s16, %s28
    %p58 = scmp.eq.s32.totalorder %s57, 0
    %s60 = sadd.s32 %s59, 1
    %s61 = scalar_select %p58, %s59, %s60
    %p64 = pneg %p58
    %p65 = scmp.eq.s32.totalorder %s9, 1
    %p66 = por %p64, %p65
    %p67 = scmp.ne.s32.totalorder %s59, %s62
    %p68 = scmp.eq.s32.totalorder %s9, 0
    %p69 = por %p67, %p68
    %p70 = scmp.ne.s32.totalorder %s59, %s62
    %p71 = scmp.eq.s32.totalorder %s14, 1
    %p72 = por %p70, %p71
    %p73 = scmp.ne.s32.totalorder %s62, %s63
    %p74 = scmp.eq.s32.totalorder %s14, 0
    %p75 = por %p73, %p74
    %p76 = scmp.ne.s32.totalorder %s62, %s63
    %p77 = scmp.eq.s32.totalorder %s15, 1
    %p78 = por %p76, %p77
    %p80 = scmp.ne.s32.totalorder %s63, %s79
    %p81 = scmp.eq.s32.totalorder %s15, 0
    %p82 = por %p80, %p81
    %s83 = ssub.s32 %s16, %s28
    %p84 = scmp.eq.s32.totalorder %s83, 0
    %s86 = sadd.s32 %s85, 1
    %s87 = scalar_select %p84, %s85, %s86
    %p90 = pneg %p84
    %p91 = scmp.eq.s32.totalorder %s9, 1
    %p92 = por %p90, %p91
    %p93 = scmp.ne.s32.totalorder %s85, %s88
    %p94 = scmp.eq.s32.totalorder %s9, 0
    %p95 = por %p93, %p94
    %p96 = scmp.ne.s32.totalorder %s85, %s88
    %p97 = scmp.eq.s32.totalorder %s14, 1
    %p98 = por %p96, %p97
    %p99 = scmp.ne.s32.totalorder %s88, %s89
    %p100 = scmp.eq.s32.totalorder %s14, 0
    %p101 = por %p99, %p100
    %p102 = scmp.ne.s32.totalorder %s88, %s89
    %p103 = scmp.eq.s32.totalorder %s15, 1
    %p104 = por %p102, %p103
    %p106 = scmp.ne.s32.totalorder %s89, %s105
    %p107 = scmp.eq.s32.totalorder %s15, 0
    %p108 = por %p106, %p107
    %p109 = scmp.le.s32.totalorder 1, %s9
    %p110 = scmp.lt.s32.totalorder %s9, 3
    %p111 = pnand %p109, %p110
    %p112 = pneg %p111
    // Predicated region
    $region9: #{dense_fc_forward.11} parent=5 // pred_check
      _
    $region10: #{dense_fc_forward.11} parent=5 // pred_check_branch
      %114 = sbr.rel (%p111) target = $region12
    $region11: #{dense_fc_forward.11} parent=5 // pred_region
      %s115 = ssub.s32 %s9, 1
    $region12: #{dense_fc_forward.11} parent=5 // pred_fallthru
      _
    %p116 = scmp.lt.s32.totalorder %s9, 2
    // Predicated region
    $region13: #{dense_fc_forward.11} parent=5 // pred_check
      %p117 = pneg %p116
    $region14: #{dense_fc_forward.11} parent=5 // pred_check_branch
      %119 = sbr.rel (%p117) target = $region16
    $region15: #{dense_fc_forward.11} parent=5 // pred_region
      // Predicated region
      $region17: #{dense_fc_forward.11} parent=15 // pred_check
        %p120 = pneg %p43
      $region18: #{dense_fc_forward.11} parent=15 // pred_check_branch
        %122 = sbr.rel (%p120) target = $region20
      $region19: #{dense_fc_forward.11} parent=15 // pred_region
        %p123 = scmp.lt.s32.totalorder %s16, 1
        %s124 = scalar_select %p123, %s16, 1
        %p125 = scmp.lt.s32.totalorder %s17, 0
        %s126 = scalar_select %p125, %s17, 0
        %s127 = smul.addr %s124, 13
        %s128 = sadd.s32 %s126, %s127
        %s129 = smul.addr %s128, 4
        %s130 = scalar_lea.vmem %s0, %s129
      $region20: #{dense_fc_forward.11} parent=15 // pred_fallthru
        _
    $region16: #{dense_fc_forward.11} parent=5 // pred_fallthru
      _
    %p131 = scmp.le.s32.totalorder 1, %s9
    %p132 = scmp.lt.s32.totalorder %s9, 3
    %p133 = pnand %p131, %p132
    %p134 = pneg %p133
    // Predicated region
    $region21: #{dense_fc_forward.11} parent=5 // pred_check
      _
    $region22: #{dense_fc_forward.11} parent=5 // pred_check_branch
      %136 = sbr.rel (%p133) target = $region24
    $region23: #{dense_fc_forward.11} parent=5 // pred_region
      %s137 = ssub.s32 %s9, 1
      %p138 = scmp.lt.s32.totalorder %s18, 1
      %s139 = scalar_select %p138, %s18, 1
      %p140 = scmp.lt.s32.totalorder %s19, 0
      %s141 = scalar_select %p140, %s19, 0
      %s142 = smul.addr %s139, 13
      %s143 = sadd.s32 %s141, %s142
      %s144 = smul.addr %s143, 4
      %s145 = scalar_lea.vmem %s0, %s144
      %p146 = pneg %p49
      %p147 = pneg %p46
      %p148 = pneg %p75
      %p149 = pneg %p72
      %p150 = scmp.lt.s32.totalorder %s18, 1
      %s151 = scalar_select %p150, %s18, 1
      %s152 = smul.addr %s151, 8
      %s153 = scalar_lea.vmem %s1, %s152
      %p154 = pneg %p101
      %p155 = pneg %p98
      %p156 = scmp.lt.s32.totalorder %s18, 1
      %s157 = scalar_select %p156, %s18, 1
      %s158 = smul.addr %s157, 8
      %s159 = scalar_lea.vmem %s2, %s158
      %p160 = scmp.lt.s32.totalorder %s18, 1
      %s161 = scalar_select %p160, %s18, 1
      %p162 = scmp.lt.s32.totalorder %s19, 0
      %s163 = scalar_select %p162, %s19, 0
      %s164 = smul.addr %s161, 13
      %s165 = sadd.s32 %s163, %s164
      %s166 = smul.addr %s165, 4
      %s167 = scalar_lea.vmem %s0, %s166
      %p168 = scmp.lt.s32.totalorder %s18, 1
      %s169 = scalar_select %p168, %s18, 1
      %s170 = smul.addr %s169, 8
      %s171 = scalar_lea.vmem %s1, %s170
      %p172 = scmp.lt.s32.totalorder %s18, 1
      %s173 = scalar_select %p172, %s18, 1
      %s174 = smul.addr %s173, 8
      %s175 = scalar_lea.vmem %s2, %s174
      %p176 = scmp.eq.s32.totalorder %s19, 0
      // Predicated region
      $region25: #{dense_fc_forward.11} parent=23 // pred_check
        %p177 = pneg %p176
      $region26: #{dense_fc_forward.11} parent=23 // pred_check_branch
        %179 = sbr.rel (%p177) target = $region28
      $region27: #{dense_fc_forward.11} parent=23 // pred_region
        %s180 = scalar_lea.smem [#allocation2], 0
        %181 = sst [smem:[%s180]] 0.0
        %s182 = scalar_lea.smem [#allocation2], 1
        %183 = sst [smem:[%s182]] 0.0
      $region28: #{dense_fc_forward.11} parent=23 // pred_fallthru
        _
      %v184 = vld [vmem:[%s167] sm:$0xf]
      %v185 = vld [vmem:[%s167 + $0x4] sm:$0xf]
      %v186 = vld [vmem:[%s167 + $0x8] sm:$0xf]
      %v187 = vld [vmem:[%s167 + $0xc] sm:$0xf]
      %v188 = vld [vmem:[%s167 + $0x10] sm:$0xf]
      %v189 = vld [vmem:[%s167 + $0x14] sm:$0xf]
      %v190 = vld [vmem:[%s167 + $0x18] sm:$0xf]
      %v191 = vld [vmem:[%s167 + $0x1c] sm:$0xf]
      %v192 = vld [vmem:[%s167 + $0x20] sm:$0xf]
      %v193 = vld [vmem:[%s167 + $0x24] sm:$0xf]
      %v194 = vld [vmem:[%s167 + $0x28] sm:$0xf]
      %v195 = vld [vmem:[%s167 + $0x2c] sm:$0xf]
      %v196 = vld [vmem:[%s167 + $0x30] sm:$0x7]
      %v197 = vunpack.c.l.bf16 %v184
      %v198 = vunpack.c.l.bf16 %v185
      %v199 = vunpack.c.l.bf16 %v186
      %v200 = vunpack.c.l.bf16 %v187
      %v201 = vunpack.c.l.bf16 %v188
      %v202 = vunpack.c.l.bf16 %v189
      %v203 = vunpack.c.l.bf16 %v190
      %v204 = vunpack.c.l.bf16 %v191
      %v205 = vunpack.c.l.bf16 %v192
      %v206 = vunpack.c.l.bf16 %v193
      %v207 = vunpack.c.l.bf16 %v194
      %v208 = vunpack.c.l.bf16 %v195
      %v209 = vunpack.c.l.bf16 %v196
      %s210 = sld [smem:[#allocation2]]
      %v211 = vadd.f32 %v197, %v198
      %v212 = vadd.f32 %v211, %v199
      %v213 = vadd.f32 %v212, %v200
      %v214 = vadd.f32 %v213, %v201
      %v215 = vadd.f32 %v214, %v202
      %v216 = vadd.f32 %v215, %v203
      %v217 = vadd.f32 %v216, %v204
      %v218 = vadd.f32 %v217, %v205
      %v219 = vadd.f32 %v218, %v206
      %v220 = vadd.f32 %v219, %v207
      %v221 = vadd.f32 %v220, %v208
      %vm222 = vcmask 1045504
      %v223 = vsel %vm222, %v209, 0.0
      %v224 = vadd.f32 %v221, %v223
      %225 = vadd.xlane.f32.xlu0 %v224
      %v226 = vpop.xlane.xlu0 %225
      %v227 = vrot.slane %v226, 4
      %v228 = vadd.f32 %v226, %v227
      %v229 = vrot.slane %v228, 2
      %v230 = vadd.f32 %v228, %v229
      %v231 = vrot.slane %v230, 1
      %v232 = vadd.f32 %v230, %v231
      %s233 = vtos %v232
      %s234 = sadd.f32 %s210, %s233
      %s235 = scalar_lea.smem [#allocation2], 0
      %236 = sst [smem:[%s235]] %s234
      %s237 = sld [smem:[#allocation2 + $0x1]]
      %v238 = vmul.f32 %v197, %v197
      %v239 = vmul.f32 %v198, %v198
      %v240 = vmul.f32 %v199, %v199
      %v241 = vmul.f32 %v200, %v200
      %v242 = vmul.f32 %v201, %v201
      %v243 = vmul.f32 %v202, %v202
      %v244 = vmul.f32 %v203, %v203
      %v245 = vmul.f32 %v204, %v204
      %v246 = vmul.f32 %v205, %v205
      %v247 = vmul.f32 %v206, %v206
      %v248 = vmul.f32 %v207, %v207
      %v249 = vmul.f32 %v208, %v208
      %v250 = vmul.f32 %v209, %v209
      %v251 = vadd.f32 %v238, %v239
      %v252 = vadd.f32 %v251, %v240
      %v253 = vadd.f32 %v252, %v241
      %v254 = vadd.f32 %v253, %v242
      %v255 = vadd.f32 %v254, %v243
      %v256 = vadd.f32 %v255, %v244
      %v257 = vadd.f32 %v256, %v245
      %v258 = vadd.f32 %v257, %v246
      %v259 = vadd.f32 %v258, %v247
      %v260 = vadd.f32 %v259, %v248
      %v261 = vadd.f32 %v260, %v249
      %v262 = vsel %vm222, %v250, 0.0
      %v263 = vadd.f32 %v261, %v262
      %264 = vadd.xlane.f32.xlu0 %v263
      %v265 = vpop.xlane.xlu0 %264
      %v266 = vrot.slane %v265, 4
      %v267 = vadd.f32 %v265, %v266
      %v268 = vrot.slane %v267, 2
      %v269 = vadd.f32 %v267, %v268
      %v270 = vrot.slane %v269, 1
      %v271 = vadd.f32 %v269, %v270
      %s272 = vtos %v271
      %s273 = sadd.f32 %s237, %s272
      %s274 = scalar_lea.smem [#allocation2], 1
      %275 = sst [smem:[%s274]] %s273
      // Predicated region
      $region29: #{dense_fc_forward.11} parent=23 // pred_check
        %p276 = pneg %p176
      $region30: #{dense_fc_forward.11} parent=23 // pred_check_branch
        %278 = sbr.rel (%p276) target = $region32
      $region31: #{dense_fc_forward.11} parent=23 // pred_region
        %s279 = sld [smem:[#allocation2]]
        %s280 = smul.f32 %s279, 7.659314e-05
        %s281 = sld [smem:[#allocation2 + $0x1]]
        %s282 = smul.f32 %s281, 7.659314e-05
        %s283 = smul.f32 %s280, %s280
        %s284 = ssub.f32 %s282, %s283
        %s285 = smax.f32 %s284, 0.0
        %s286 = sadd.f32 %s285, 1e-05
        %v287 = vstv %s286
        %v288 = vrsqrt.pop %v287
        %s289 = vtos %v288
        %v290 = vstv %s280
        %291 = vst [vmem:[%s171] sm:$0xff] %v290
        %v292 = vstv %s289
        %293 = vst [vmem:[%s175] sm:$0xff] %v292
      $region32: #{dense_fc_forward.11} parent=23 // pred_fallthru
        _
      %p294 = scmp.lt.s32.totalorder %s18, 1
      %s295 = scalar_select %p294, %s18, 1
      %s296 = smul.addr %s295, 8
      %s297 = scalar_lea.vmem %s1, %s296
      %p298 = scmp.lt.s32.totalorder %s18, 1
      %s299 = scalar_select %p298, %s18, 1
      %s300 = smul.addr %s299, 8
      %s301 = scalar_lea.vmem %s2, %s300
      // Predicated region
      $region33: #{dense_fc_forward.11} parent=23 // pred_check
        %p302 = pneg %p72
      $region34: #{dense_fc_forward.11} parent=23 // pred_check_branch
        %304 = sbr.rel (%p302) target = $region36
      $region35: #{dense_fc_forward.11} parent=23 // pred_region
        _
      $region36: #{dense_fc_forward.11} parent=23 // pred_fallthru
        _
      // Predicated region
      $region37: #{dense_fc_forward.11} parent=23 // pred_check
        %p305 = pneg %p98
      $region38: #{dense_fc_forward.11} parent=23 // pred_check_branch
        %307 = sbr.rel (%p305) target = $region40
      $region39: #{dense_fc_forward.11} parent=23 // pred_region
        _
      $region40: #{dense_fc_forward.11} parent=23 // pred_fallthru
        _
    $region24: #{dense_fc_forward.11} parent=5 // pred_fallthru
      _
    %p308 = scmp.le.s32.totalorder 2, %s9
    // Predicated region
    $region41: #{dense_fc_forward.11} parent=5 // pred_check
      %p309 = pneg %p308
    $region42: #{dense_fc_forward.11} parent=5 // pred_check_branch
      %311 = sbr.rel (%p309) target = $region44
    $region43: #{dense_fc_forward.11} parent=5 // pred_region
      %s312 = ssub.s32 %s9, 2
      // Predicated region
      $region45: #{dense_fc_forward.11} parent=43 // pred_check
        %p313 = pneg %p78
      $region46: #{dense_fc_forward.11} parent=43 // pred_check_branch
        %315 = sbr.rel (%p313) target = $region48
      $region47: #{dense_fc_forward.11} parent=43 // pred_region
        %p316 = scmp.lt.s32.totalorder %s20, 1
        %s317 = scalar_select %p316, %s20, 1
        %s318 = smul.addr %s317, 8
        %s319 = scalar_lea.vmem %s1, %s318
      $region48: #{dense_fc_forward.11} parent=43 // pred_fallthru
        _
      // Predicated region
      $region49: #{dense_fc_forward.11} parent=43 // pred_check
        %p320 = pneg %p104
      $region50: #{dense_fc_forward.11} parent=43 // pred_check_branch
        %322 = sbr.rel (%p320) target = $region52
      $region51: #{dense_fc_forward.11} parent=43 // pred_region
        %p323 = scmp.lt.s32.totalorder %s20, 1
        %s324 = scalar_select %p323, %s20, 1
        %s325 = smul.addr %s324, 8
        %s326 = scalar_lea.vmem %s2, %s325
      $region52: #{dense_fc_forward.11} parent=43 // pred_fallthru
        _
    $region44: #{dense_fc_forward.11} parent=5 // pred_fallthru
      _
  $region6: #{dense_fc_forward.11} parent=0 // loop_footer
    %s13 = sadd.s32 1, %s9
  $region7: #{dense_fc_forward.11} parent=0 // loop_footer_branch
    %8 = sbr.rel target = $region3
  $region8: #{dense_fc_forward.11} parent=0 // loop_exit
    _

// kernel: dense_fc_forward.12
$region0: #{dense_fc_forward.12}
  #allocation0 [shape = 'u32[]', space=smem, size = 0x4, offset = 0x4, fixed_abs, tag = 'smem constant byte address 0x4 - core index']
  #allocation1 [shape = 'u32[144,128]{1,0:T(1,128)}', space=vmem, size = 0x12000, scoped, tag = 'internal scratch']
  #allocation2 [shape = 'f32[1]{0:T(128)S(6)}', space=smem, size = 0x200, scoped, tag = 'scoped memory for dense_fc_forward.12']
  %s0 = inlined_call_operand.vmem [shape: bf16[2,102,128], index: 0, kind: input, shape index: {}]
  %s1 = inlined_call_operand.vmem [shape: f32[2,8,128], index: 1, kind: input, shape index: {}]
  %s2 = inlined_call_operand.vmem [shape: f32[2,8,128], index: 2, kind: input, shape index: {}]
  %s3 = inlined_call_operand.vmem [shape: bf16[102,128], index: 3, kind: input, shape index: {}]
  %s4 = inlined_call_operand.vmem [shape: bf16[102,128], index: 4, kind: input, shape index: {}]
  %s5 = inlined_call_operand.<no memory space> [shape: f32[1], index: 5, kind: input, shape index: {}]
  %s6 = inlined_call_operand.vmem [shape: bf16[2,102,512], index: 6, kind: input, shape index: {}, may-alias: {6,7}]
  %s7 = inlined_call_operand.vmem [shape: bf16[2,102,512], index: 7, kind: output, shape index: {}, may-alias: {6,7}]
  %s8 = sld [smem:[#allocation0]]
  $region94: #{dense_fc_forward.12} parent=0
    _
  %s10 = ssub.s32 1, %s8
  %s11 = scalar_select 0, %s10, %s8
  %12 = sst [smem:[#allocation2]] %s5
  $region1: #{dense_fc_forward.12} parent=0
    #allocation3 [shape = 'u8[53248]{0}', space=vmem, size = 0xd000, scoped, tag = 'output window, operand 0']
    loop: start=0, step=1, limit=4
    $region2: #{dense_fc_forward.12} parent=1 // loop_pre_header
      _
    $region3: #{dense_fc_forward.12} parent=1 // loop_header
      %s14 = sphi 0, %s18
      %p15 = scmp.ge.s32.totalorder %s14, 4
      %s21 = sphi 0, %s33
      %s22 = sphi 0, %s29
      %s23 = sphi 0, %s21
      %s24 = sphi 0, %s22
      %s25 = sphi 0, %s23
      %s26 = sphi 0, %s24
      %s38 = sphi 0, %s40
      %s41 = sphi 0, %s38
      %s42 = sphi 0, %s41
      %s58 = sphi 0, %s42
      %s64 = sphi 0, %s66
      %s67 = sphi 0, %s64
      %s68 = sphi 0, %s67
      %s84 = sphi 0, %s68
      %s90 = sphi 0, %s92
      %s93 = sphi 0, %s90
      %s94 = sphi 0, %s93
      %s110 = sphi 0, %s94
      %s116 = sphi 0, %s118
      %s119 = sphi 0, %s116
      %s120 = sphi 0, %s119
      %s136 = sphi 0, %s120
      %s142 = sphi 0, %s144
      %s145 = sphi 0, %s142
      %s146 = sphi 0, %s145
      %s162 = sphi 0, %s146
      %s166 = sphi 0, %s166
      %s168 = sphi 0, %s166
      %s169 = sphi 0, %s168
      %s183 = sphi 0, %s169
      %s191 = sphi 0, %s193
      %s194 = sphi 0, %s191
      %s195 = sphi 0, %s194
      %s211 = sphi 0, %s195
    $region4: #{dense_fc_forward.12} parent=1 // loop_header_branch
      %17 = sbr.rel (%p15) target = $region8
    $region5: #{dense_fc_forward.12} parent=1 // loop_body
      %s19 = ssub.s32 %s14, 1
      %s20 = ssub.s32 %s14, 2
      %s27 = sadd.s32 1, %s22
      %p28 = scmp.ge.s32.totalorder %s27, 1
      %s29 = scalar_select %p28, 0, %s27
      %s30 = sadd.s32 1, %s21
      %s31 = scalar_select %p28, %s30, %s21
      %p32 = scmp.ge.s32.totalorder %s31, 2
      %s33 = scalar_select %p32, 0, %s31
      %s34 = ssub.s32 %s21, %s33
      %s35 = ssub.s32 %s22, %s29
      %s36 = sor.u32 %s34, %s35
      %p37 = scmp.eq.s32.totalorder %s36, 0
      %s39 = sadd.s32 %s38, 1
      %s40 = scalar_select %p37, %s38, %s39
      %p43 = pneg %p37
      %p44 = scmp.eq.s32.totalorder %s14, 1
      %p45 = por %p43, %p44
      %p46 = scmp.ne.s32.totalorder %s38, %s41
      %p47 = scmp.eq.s32.totalorder %s14, 0
      %p48 = por %p46, %p47
      %p49 = scmp.ne.s32.totalorder %s38, %s41
      %p50 = scmp.eq.s32.totalorder %s19, 1
      %p51 = por %p49, %p50
      %p52 = scmp.ne.s32.totalorder %s41, %s42
      %p53 = scmp.eq.s32.totalorder %s19, 0
      %p54 = por %p52, %p53
      %p55 = scmp.ne.s32.totalorder %s41, %s42
      %p56 = scmp.eq.s32.totalorder %s20, 1
      %p57 = por %p55, %p56
      %p59 = scmp.ne.s32.totalorder %s42, %s58
      %p60 = scmp.eq.s32.totalorder %s20, 0
      %p61 = por %p59, %p60
      %s62 = ssub.s32 %s21, %s33
      %p63 = scmp.eq.s32.totalorder %s62, 0
      %s65 = sadd.s32 %s64, 1
      %s66 = scalar_select %p63, %s64, %s65
      %p69 = pneg %p63
      %p70 = scmp.eq.s32.totalorder %s14, 1
      %p71 = por %p69, %p70
      %p72 = scmp.ne.s32.totalorder %s64, %s67
      %p73 = scmp.eq.s32.totalorder %s14, 0
      %p74 = por %p72, %p73
      %p75 = scmp.ne.s32.totalorder %s64, %s67
      %p76 = scmp.eq.s32.totalorder %s19, 1
      %p77 = por %p75, %p76
      %p78 = scmp.ne.s32.totalorder %s67, %s68
      %p79 = scmp.eq.s32.totalorder %s19, 0
      %p80 = por %p78, %p79
      %p81 = scmp.ne.s32.totalorder %s67, %s68
      %p82 = scmp.eq.s32.totalorder %s20, 1
      %p83 = por %p81, %p82
      %p85 = scmp.ne.s32.totalorder %s68, %s84
      %p86 = scmp.eq.s32.totalorder %s20, 0
      %p87 = por %p85, %p86
      %s88 = ssub.s32 %s21, %s33
      %p89 = scmp.eq.s32.totalorder %s88, 0
      %s91 = sadd.s32 %s90, 1
      %s92 = scalar_select %p89, %s90, %s91
      %p95 = pneg %p89
      %p96 = scmp.eq.s32.totalorder %s14, 1
      %p97 = por %p95, %p96
      %p98 = scmp.ne.s32.totalorder %s90, %s93
      %p99 = scmp.eq.s32.totalorder %s14, 0
      %p100 = por %p98, %p99
      %p101 = scmp.ne.s32.totalorder %s90, %s93
      %p102 = scmp.eq.s32.totalorder %s19, 1
      %p103 = por %p101, %p102
      %p104 = scmp.ne.s32.totalorder %s93, %s94
      %p105 = scmp.eq.s32.totalorder %s19, 0
      %p106 = por %p104, %p105
      %p107 = scmp.ne.s32.totalorder %s93, %s94
      %p108 = scmp.eq.s32.totalorder %s20, 1
      %p109 = por %p107, %p108
      %p111 = scmp.ne.s32.totalorder %s94, %s110
      %p112 = scmp.eq.s32.totalorder %s20, 0
      %p113 = por %p111, %p112
      %s114 = ssub.s32 %s22, %s29
      %p115 = scmp.eq.s32.totalorder %s114, 0
      %s117 = sadd.s32 %s116, 1
      %s118 = scalar_select %p115, %s116, %s117
      %p121 = pneg %p115
      %p122 = scmp.eq.s32.totalorder %s14, 1
      %p123 = por %p121, %p122
      %p124 = scmp.ne.s32.totalorder %s116, %s119
      %p125 = scmp.eq.s32.totalorder %s14, 0
      %p126 = por %p124, %p125
      %p127 = scmp.ne.s32.totalorder %s116, %s119
      %p128 = scmp.eq.s32.totalorder %s19, 1
      %p129 = por %p127, %p128
      %p130 = scmp.ne.s32.totalorder %s119, %s120
      %p131 = scmp.eq.s32.totalorder %s19, 0
      %p132 = por %p130, %p131
      %p133 = scmp.ne.s32.totalorder %s119, %s120
      %p134 = scmp.eq.s32.totalorder %s20, 1
      %p135 = por %p133, %p134
      %p137 = scmp.ne.s32.totalorder %s120, %s136
      %p138 = scmp.eq.s32.totalorder %s20, 0
      %p139 = por %p137, %p138
      %s140 = ssub.s32 %s22, %s29
      %p141 = scmp.eq.s32.totalorder %s140, 0
      %s143 = sadd.s32 %s142, 1
      %s144 = scalar_select %p141, %s142, %s143
      %p147 = pneg %p141
      %p148 = scmp.eq.s32.totalorder %s14, 1
      %p149 = por %p147, %p148
      %p150 = scmp.ne.s32.totalorder %s142, %s145
      %p151 = scmp.eq.s32.totalorder %s14, 0
      %p152 = por %p150, %p151
      %p153 = scmp.ne.s32.totalorder %s142, %s145
      %p154 = scmp.eq.s32.totalorder %s19, 1
      %p155 = por %p153, %p154
      %p156 = scmp.ne.s32.totalorder %s145, %s146
      %p157 = scmp.eq.s32.totalorder %s19, 0
      %p158 = por %p156, %p157
      %p159 = scmp.ne.s32.totalorder %s145, %s146
      %p160 = scmp.eq.s32.totalorder %s20, 1
      %p161 = por %p159, %p160
      %p163 = scmp.ne.s32.totalorder %s146, %s162
      %p164 = scmp.eq.s32.totalorder %s20, 0
      %p165 = por %p163, %p164
      %s167 = sadd.s32 %s166, 1
      %p170 = scmp.eq.s32.totalorder %s14, 1
      %p171 = scmp.ne.s32.totalorder %s166, %s168
      %p172 = scmp.eq.s32.totalorder %s14, 0
      %p173 = por %p171, %p172
      %p174 = scmp.ne.s32.totalorder %s166, %s168
      %p175 = scmp.eq.s32.totalorder %s19, 1
      %p176 = por %p174, %p175
      %p177 = scmp.ne.s32.totalorder %s168, %s169
      %p178 = scmp.eq.s32.totalorder %s19, 0
      %p179 = por %p177, %p178
      %p180 = scmp.ne.s32.totalorder %s168, %s169
      %p181 = scmp.eq.s32.totalorder %s20, 1
      %p182 = por %p180, %p181
      %p184 = scmp.ne.s32.totalorder %s169, %s183
      %p185 = scmp.eq.s32.totalorder %s20, 0
      %p186 = por %p184, %p185
      %s187 = ssub.s32 %s21, %s33
      %s188 = ssub.s32 %s22, %s29
      %s189 = sor.u32 %s187, %s188
      %p190 = scmp.eq.s32.totalorder %s189, 0
      %s192 = sadd.s32 %s191, 1
      %s193 = scalar_select %p190, %s191, %s192
      %p196 = pneg %p190
      %p197 = scmp.eq.s32.totalorder %s14, 1
      %p198 = por %p196, %p197
      %p199 = scmp.ne.s32.totalorder %s191, %s194
      %p200 = scmp.eq.s32.totalorder %s14, 0
      %p201 = por %p199, %p200
      %p202 = scmp.ne.s32.totalorder %s191, %s194
      %p203 = scmp.eq.s32.totalorder %s19, 1
      %p204 = por %p202, %p203
      %p205 = scmp.ne.s32.totalorder %s194, %s195
      %p206 = scmp.eq.s32.totalorder %s19, 0
      %p207 = por %p205, %p206
      %p208 = scmp.ne.s32.totalorder %s194, %s195
      %p209 = scmp.eq.s32.totalorder %s20, 1
      %p210 = por %p208, %p209
      %p212 = scmp.ne.s32.totalorder %s195, %s211
      %p213 = scmp.eq.s32.totalorder %s20, 0
      %p214 = por %p212, %p213
      %p215 = scmp.le.s32.totalorder 1, %s14
      %p216 = scmp.lt.s32.totalorder %s14, 3
      %p217 = pnand %p215, %p216
      %p218 = pneg %p217
      // Predicated region
      $region9: #{dense_fc_forward.12} parent=5 // pred_check
        _
      $region10: #{dense_fc_forward.12} parent=5 // pred_check_branch
        %220 = sbr.rel (%p217) target = $region12
      $region11: #{dense_fc_forward.12} parent=5 // pred_region
        %s221 = ssub.s32 %s14, 1
        // Predicated region
        $region13: #{dense_fc_forward.12} parent=11 // pred_check
          %p222 = pneg %p132
        $region14: #{dense_fc_forward.12} parent=11 // pred_check_branch
          %224 = sbr.rel (%p222) target = $region16
        $region15: #{dense_fc_forward.12} parent=11 // pred_region
          %p225 = scmp.lt.s32.totalorder %s24, 0
          %s226 = scalar_select %p225, %s24, 0
          %s227 = smul.addr %s226, 4
          %s228 = scalar_lea.vmem %s3, %s227
        $region16: #{dense_fc_forward.12} parent=11 // pred_fallthru
          _
        // Predicated region
        $region17: #{dense_fc_forward.12} parent=11 // pred_check
          %p229 = pneg %p158
        $region18: #{dense_fc_forward.12} parent=11 // pred_check_branch
          %231 = sbr.rel (%p229) target = $region20
        $region19: #{dense_fc_forward.12} parent=11 // pred_region
          %p232 = scmp.lt.s32.totalorder %s24, 0
          %s233 = scalar_select %p232, %s24, 0
          %s234 = smul.addr %s233, 4
          %s235 = scalar_lea.vmem %s4, %s234
        $region20: #{dense_fc_forward.12} parent=11 // pred_fallthru
          _
        // Predicated region
        $region21: #{dense_fc_forward.12} parent=11 // pred_check
          %p236 = pneg %p179
        $region22: #{dense_fc_forward.12} parent=11 // pred_check_branch
          %238 = sbr.rel (%p236) target = $region24
        $region23: #{dense_fc_forward.12} parent=11 // pred_region
          _
        $region24: #{dense_fc_forward.12} parent=11 // pred_fallthru
          _
      $region12: #{dense_fc_forward.12} parent=5 // pred_fallthru
        _
      %p239 = scmp.lt.s32.totalorder %s14, 2
      // Predicated region
      $region25: #{dense_fc_forward.12} parent=5 // pred_check
        %p240 = pneg %p239
      $region26: #{dense_fc_forward.12} parent=5 // pred_check_branch
        %242 = sbr.rel (%p240) target = $region28
      $region27: #{dense_fc_forward.12} parent=5 // pred_region
        // Predicated region
        $region29: #{dense_fc_forward.12} parent=27 // pred_check
          %p243 = pneg %p48
        $region30: #{dense_fc_forward.12} parent=27 // pred_check_branch
          %245 = sbr.rel (%p243) target = $region32
        $region31: #{dense_fc_forward.12} parent=27 // pred_region
          %p246 = scmp.lt.s32.totalorder %s21, 1
          %s247 = scalar_select %p246, %s21, 1
          %p248 = scmp.lt.s32.totalorder %s22, 0
          %s249 = scalar_select %p248, %s22, 0
          %s250 = smul.addr %s247, 13
          %s251 = sadd.s32 %s249, %s250
          %s252 = smul.addr %s251, 4
          %s253 = scalar_lea.vmem %s0, %s252
        $region32: #{dense_fc_forward.12} parent=27 // pred_fallthru
          _
        // Predicated region
        $region33: #{dense_fc_forward.12} parent=27 // pred_check
          %p254 = pneg %p74
        $region34: #{dense_fc_forward.12} parent=27 // pred_check_branch
          %256 = sbr.rel (%p254) target = $region36
        $region35: #{dense_fc_forward.12} parent=27 // pred_region
          %p257 = scmp.lt.s32.totalorder %s21, 1
          %s258 = scalar_select %p257, %s21, 1
          %s259 = smul.addr %s258, 8
          %s260 = scalar_lea.vmem %s1, %s259
        $region36: #{dense_fc_forward.12} parent=27 // pred_fallthru
          _
        // Predicated region
        $region37: #{dense_fc_forward.12} parent=27 // pred_check
          %p261 = pneg %p100
        $region38: #{dense_fc_forward.12} parent=27 // pred_check_branch
          %263 = sbr.rel (%p261) target = $region40
        $region39: #{dense_fc_forward.12} parent=27 // pred_region
          %p264 = scmp.lt.s32.totalorder %s21, 1
          %s265 = scalar_select %p264, %s21, 1
          %s266 = smul.addr %s265, 8
          %s267 = scalar_lea.vmem %s2, %s266
        $region40: #{dense_fc_forward.12} parent=27 // pred_fallthru
          _
      $region28: #{dense_fc_forward.12} parent=5 // pred_fallthru
        _
      %p268 = scmp.le.s32.totalorder 1, %s14
      %p269 = scmp.lt.s32.totalorder %s14, 3
      %p270 = pnand %p268, %p269
      %p271 = pneg %p270
      // Predicated region
      $region41: #{dense_fc_forward.12} parent=5 // pred_check
        _
      $region42: #{dense_fc_forward.12} parent=5 // pred_check_branch
        %273 = sbr.rel (%p270) target = $region44
      $region43: #{dense_fc_forward.12} parent=5 // pred_region
        %s274 = ssub.s32 %s14, 1
        %p275 = scmp.lt.s32.totalorder %s23, 1
        %s276 = scalar_select %p275, %s23, 1
        %p277 = scmp.lt.s32.totalorder %s24, 0
        %s278 = scalar_select %p277, %s24, 0
        %s279 = smul.addr %s276, 13
        %s280 = sadd.s32 %s278, %s279
        %s281 = smul.addr %s280, 4
        %s282 = scalar_lea.vmem %s0, %s281
        %p283 = pneg %p54
        %p284 = pneg %p51
        %p285 = scmp.lt.s32.totalorder %s23, 1
        %s286 = scalar_select %p285, %s23, 1
        %s287 = smul.addr %s286, 8
        %s288 = scalar_lea.vmem %s1, %s287
        %p289 = pneg %p80
        %p290 = pneg %p77
        %p291 = scmp.lt.s32.totalorder %s23, 1
        %s292 = scalar_select %p291, %s23, 1
        %s293 = smul.addr %s292, 8
        %s294 = scalar_lea.vmem %s2, %s293
        %p295 = pneg %p106
        %p296 = pneg %p103
        %p297 = scmp.lt.s32.totalorder %s24, 0
        %s298 = scalar_select %p297, %s24, 0
        %s299 = smul.addr %s298, 4
        %s300 = scalar_lea.vmem %s3, %s299
        %p301 = pneg %p132
        %p302 = pneg %p129
        %p303 = scmp.lt.s32.totalorder %s24, 0
        %s304 = scalar_select %p303, %s24, 0
        %s305 = smul.addr %s304, 4
        %s306 = scalar_lea.vmem %s4, %s305
        %p307 = pneg %p158
        %p308 = pneg %p155
        %p309 = pneg %p179
        %p310 = pneg %p176
        %p311 = pneg %p207
        %p312 = pneg %p204
        %s313 = sand.u32 %s194, 1
        %s314 = sand.u32 %s194, 1
        %s315 = smul.addr %s314, 52
        %s316 = scalar_lea.vmem [#allocation3], %s315
        %p317 = scmp.lt.s32.totalorder %s23, 1
        %s318 = scalar_select %p317, %s23, 1
        %p319 = scmp.lt.s32.totalorder %s24, 0
        %s320 = scalar_select %p319, %s24, 0
        %s321 = smul.addr %s318, 13
        %s322 = sadd.s32 %s320, %s321
        %s323 = smul.addr %s322, 4
        %s324 = scalar_lea.vmem %s0, %s323
        %p325 = scmp.lt.s32.totalorder %s23, 1
        %s326 = scalar_select %p325, %s23, 1
        %s327 = smul.addr %s326, 8
        %s328 = scalar_lea.vmem %s1, %s327
        %p329 = scmp.lt.s32.totalorder %s23, 1
        %s330 = scalar_select %p329, %s23, 1
        %s331 = smul.addr %s330, 8
        %s332 = scalar_lea.vmem %s2, %s331
        %p333 = scmp.lt.s32.totalorder %s24, 0
        %s334 = scalar_select %p333, %s24, 0
        %s335 = smul.addr %s334, 4
        %s336 = scalar_lea.vmem %s3, %s335
        %p337 = scmp.lt.s32.totalorder %s24, 0
        %s338 = scalar_select %p337, %s24, 0
        %s339 = smul.addr %s338, 4
        %s340 = scalar_lea.vmem %s4, %s339
        %v341 = vld [vmem:[%s324] sm:$0xf]
        %v342 = vld [vmem:[%s324 + $0x4] sm:$0xf]
        %v343 = vld [vmem:[%s324 + $0x8] sm:$0xf]
        %v344 = vld [vmem:[%s324 + $0xc] sm:$0xf]
        %v345 = vld [vmem:[%s324 + $0x10] sm:$0xf]
        %v346 = vld [vmem:[%s324 + $0x14] sm:$0xf]
        %v347 = vld [vmem:[%s324 + $0x18] sm:$0xf]
        %v348 = vld [vmem:[%s324 + $0x1c] sm:$0xf]
        %v349 = vld [vmem:[%s324 + $0x20] sm:$0xf]
        %v350 = vld [vmem:[%s324 + $0x24] sm:$0xf]
        %v351 = vld [vmem:[%s324 + $0x28] sm:$0xf]
        %v352 = vld [vmem:[%s324 + $0x2c] sm:$0xf]
        %v353 = vld [vmem:[%s324 + $0x30] sm:$0x7]
        %v354 = vunpack.c.l.bf16 %v341
        %v355 = vunpack.c.l.bf16 %v342
        %v356 = vunpack.c.l.bf16 %v343
        %v357 = vunpack.c.l.bf16 %v344
        %v358 = vunpack.c.l.bf16 %v345
        %v359 = vunpack.c.l.bf16 %v346
        %v360 = vunpack.c.l.bf16 %v347
        %v361 = vunpack.c.l.bf16 %v348
        %v362 = vunpack.c.l.bf16 %v349
        %v363 = vunpack.c.l.bf16 %v350
        %v364 = vunpack.c.l.bf16 %v351
        %v365 = vunpack.c.l.bf16 %v352
        %v366 = vunpack.c.l.bf16 %v353
        %v367 = vld [vmem:[%s328] sm:$0x1]
        %s368 = vtos %v367
        %v369 = vld [vmem:[%s332] sm:$0x1]
        %s370 = vtos %v369
        %v371 = vstv %s368
        %v372 = vsub.f32 %v354, %v371
        %v373 = vsub.f32 %v355, %v371
        %v374 = vsub.f32 %v356, %v371
        %v375 = vsub.f32 %v357, %v371
        %v376 = vsub.f32 %v358, %v371
        %v377 = vsub.f32 %v359, %v371
        %v378 = vsub.f32 %v360, %v371
        %v379 = vsub.f32 %v361, %v371
        %v380 = vsub.f32 %v362, %v371
        %v381 = vsub.f32 %v363, %v371
        %v382 = vsub.f32 %v364, %v371
        %v383 = vsub.f32 %v365, %v371
        %v384 = vsub.f32 %v366, %v371
        %v385 = vstv %s370
        %v386 = vmul.f32 %v372, %v385
        %v387 = vmul.f32 %v373, %v385
        %v388 = vmul.f32 %v374, %v385
        %v389 = vmul.f32 %v375, %v385
        %v390 = vmul.f32 %v376, %v385
        %v391 = vmul.f32 %v377, %v385
        %v392 = vmul.f32 %v378, %v385
        %v393 = vmul.f32 %v379, %v385
        %v394 = vmul.f32 %v380, %v385
        %v395 = vmul.f32 %v381, %v385
        %v396 = vmul.f32 %v382, %v385
        %v397 = vmul.f32 %v383, %v385
        %v398 = vmul.f32 %v384, %v385
        %v399 = vld [vmem:[%s336] sm:$0xf]
        %v400 = vld [vmem:[%s336 + $0x4] sm:$0xf]
        %v401 = vld [vmem:[%s336 + $0x8] sm:$0xf]
        %v402 = vld [vmem:[%s336 + $0xc] sm:$0xf]
        %v403 = vld [vmem:[%s336 + $0x10] sm:$0xf]
        %v404 = vld [vmem:[%s336 + $0x14] sm:$0xf]
        %v405 = vld [vmem:[%s336 + $0x18] sm:$0xf]
        %v406 = vld [vmem:[%s336 + $0x1c] sm:$0xf]
        %v407 = vld [vmem:[%s336 + $0x20] sm:$0xf]
        %v408 = vld [vmem:[%s336 + $0x24] sm:$0xf]
        %v409 = vld [vmem:[%s336 + $0x28] sm:$0xf]
        %v410 = vld [vmem:[%s336 + $0x2c] sm:$0xf]
        %v411 = vld [vmem:[%s336 + $0x30] sm:$0x7]
        %v412 = vunpack.c.l.bf16 %v399
        %v413 = vunpack.c.l.bf16 %v400
        %v414 = vunpack.c.l.bf16 %v401
        %v415 = vunpack.c.l.bf16 %v402
        %v416 = vunpack.c.l.bf16 %v403
        %v417 = vunpack.c.l.bf16 %v404
        %v418 = vunpack.c.l.bf16 %v405
        %v419 = vunpack.c.l.bf16 %v406
        %v420 = vunpack.c.l.bf16 %v407
        %v421 = vunpack.c.l.bf16 %v408
        %v422 = vunpack.c.l.bf16 %v409
        %v423 = vunpack.c.l.bf16 %v410
        %v424 = vunpack.c.l.bf16 %v411
        %v425 = vmul.f32 %v386, %v412
        %v426 = vmul.f32 %v387, %v413
        %v427 = vmul.f32 %v388, %v414
        %v428 = vmul.f32 %v389, %v415
        %v429 = vmul.f32 %v390, %v416
        %v430 = vmul.f32 %v391, %v417
        %v431 = vmul.f32 %v392, %v418
        %v432 = vmul.f32 %v393, %v419
        %v433 = vmul.f32 %v394, %v420
        %v434 = vmul.f32 %v395, %v421
        %v435 = vmul.f32 %v396, %v422
        %v436 = vmul.f32 %v397, %v423
        %v437 = vmul.f32 %v398, %v424
        %v438 = vld [vmem:[%s340] sm:$0xf]
        %v439 = vld [vmem:[%s340 + $0x4] sm:$0xf]
        %v440 = vld [vmem:[%s340 + $0x8] sm:$0xf]
        %v441 = vld [vmem:[%s340 + $0xc] sm:$0xf]
        %v442 = vld [vmem:[%s340 + $0x10] sm:$0xf]
        %v443 = vld [vmem:[%s340 + $0x14] sm:$0xf]
        %v444 = vld [vmem:[%s340 + $0x18] sm:$0xf]
        %v445 = vld [vmem:[%s340 + $0x1c] sm:$0xf]
        %v446 = vld [vmem:[%s340 + $0x20] sm:$0xf]
        %v447 = vld [vmem:[%s340 + $0x24] sm:$0xf]
        %v448 = vld [vmem:[%s340 + $0x28] sm:$0xf]
        %v449 = vld [vmem:[%s340 + $0x2c] sm:$0xf]
        %v450 = vld [vmem:[%s340 + $0x30] sm:$0x7]
        %v451 = vunpack.c.l.bf16 %v438
        %v452 = vunpack.c.l.bf16 %v439
        %v453 = vunpack.c.l.bf16 %v440
        %v454 = vunpack.c.l.bf16 %v441
        %v455 = vunpack.c.l.bf16 %v442
        %v456 = vunpack.c.l.bf16 %v443
        %v457 = vunpack.c.l.bf16 %v444
        %v458 = vunpack.c.l.bf16 %v445
        %v459 = vunpack.c.l.bf16 %v446
        %v460 = vunpack.c.l.bf16 %v447
        %v461 = vunpack.c.l.bf16 %v448
        %v462 = vunpack.c.l.bf16 %v449
        %v463 = vunpack.c.l.bf16 %v450
        %v464 = vadd.f32 %v425, %v451
        %v465 = vadd.f32 %v426, %v452
        %v466 = vadd.f32 %v427, %v453
        %v467 = vadd.f32 %v428, %v454
        %v468 = vadd.f32 %v429, %v455
        %v469 = vadd.f32 %v430, %v456
        %v470 = vadd.f32 %v431, %v457
        %v471 = vadd.f32 %v432, %v458
        %v472 = vadd.f32 %v433, %v459
        %v473 = vadd.f32 %v434, %v460
        %v474 = vadd.f32 %v435, %v461
        %v475 = vadd.f32 %v436, %v462
        %v476 = vadd.f32 %v437, %v463
        %v477 = vpack.c.bf16 %v465, %v464
        %v478 = vpack.c.bf16 %v467, %v466
        %v479 = vpack.c.bf16 %v469, %v468
        %v480 = vpack.c.bf16 %v471, %v470
        %v481 = vpack.c.bf16 %v473, %v472
        %v482 = vpack.c.bf16 %v475, %v474
        %v483 = vpack.c.bf16 %v476, %v476
        %v491 = vunpack.c.l.b16 %v477
        %v492 = vunpack.c.h.b16 %v477
        %v493 = vunpack.c.l.b16 %v478
        %v494 = vunpack.c.h.b16 %v478
        %v495 = vunpack.c.l.b16 %v479
        %v496 = vunpack.c.h.b16 %v479
        %v497 = vunpack.c.l.b16 %v480
        %v498 = vunpack.c.h.b16 %v480
        %v499 = vunpack.c.l.b16 %v481
        %v500 = vunpack.c.h.b16 %v481
        %v501 = vunpack.c.l.b16 %v482
        %v502 = vunpack.c.h.b16 %v482
        %v503 = vunpack.c.l.b16 %v483
        %v504 = vpack.c.b16 %v491, %v491
        %v505 = vpack.c.b16 %v492, %v492
        %v506 = vpack.c.b16 %v493, %v493
        %v507 = vpack.c.b16 %v494, %v494
        %v508 = vpack.c.b16 %v495, %v495
        %v509 = vpack.c.b16 %v496, %v496
        %v510 = vpack.c.b16 %v497, %v497
        %v511 = vpack.c.b16 %v498, %v498
        %v512 = vpack.c.b16 %v499, %v499
        %v513 = vpack.c.b16 %v500, %v500
        %v514 = vpack.c.b16 %v501, %v501
        %v515 = vpack.c.b16 %v502, %v502
        %v516 = vpack.c.b16 %v503, %v503
        %530 = vst [vmem:[%s316] sm:$0xf] %v504
        %531 = vst [vmem:[%s316 + $0x4] sm:$0xf] %v505
        %532 = vst [vmem:[%s316 + $0x8] sm:$0xf] %v506
        %533 = vst [vmem:[%s316 + $0xc] sm:$0xf] %v507
        %534 = vst [vmem:[%s316 + $0x10] sm:$0xf] %v508
        %535 = vst [vmem:[%s316 + $0x14] sm:$0xf] %v509
        %536 = vst [vmem:[%s316 + $0x18] sm:$0xf] %v510
        %537 = vst [vmem:[%s316 + $0x1c] sm:$0xf] %v511
        %538 = vst [vmem:[%s316 + $0x20] sm:$0xf] %v512
        %539 = vst [vmem:[%s316 + $0x24] sm:$0xf] %v513
        %540 = vst [vmem:[%s316 + $0x28] sm:$0xf] %v514
        %541 = vst [vmem:[%s316 + $0x2c] sm:$0xf] %v515
        %542 = vst [vmem:[%s316 + $0x30] sm:$0x7] %v516
        %s543 = sand.u32 %s194, 1
        %s544 = sand.u32 %s194, 1
        %s545 = smul.addr %s544, 52
        %s546 = scalar_lea.vmem [#allocation3], %s545
        // Predicated region
        $region45: #{dense_fc_forward.12} parent=43 // pred_check
          %p547 = pneg %p204
        $region46: #{dense_fc_forward.12} parent=43 // pred_check_branch
          %549 = sbr.rel (%p547) target = $region48
        $region47: #{dense_fc_forward.12} parent=43 // pred_region
          %s550 = smul.addr %s23, 52
          %s551 = sadd.s32 %s24, %s550
          %s552 = smul.addr %s551, 4
          %s553 = scalar_lea.vmem %s7, %s552
          // Predicated region
          $region49: #{dense_fc_forward.12} parent=47 // pred_check
            _
          $region50: #{dense_fc_forward.12} parent=47 // pred_check_branch
            %555 = sbr.rel (0) target = $region52
          $region51: #{dense_fc_forward.12} parent=47 // pred_region
            // Predicated region
            $region53: #{dense_fc_forward.12} parent=51 // pred_check
              _
            $region54: #{dense_fc_forward.12} parent=51 // pred_check_branch
              %557 = sbr.rel target = $region56
            $region55: #{dense_fc_forward.12} parent=51 // pred_region
              // Predicated region
              $region68: #{dense_fc_forward.12} parent=55 // pred_check
                _
              $region69: #{dense_fc_forward.12} parent=55 // pred_check_branch
                %596 = sbr.rel (0) target = $region71
              $region70: #{dense_fc_forward.12} parent=55 // pred_region
                loop: start=0, step=1, limit=1
                $region72: #{dense_fc_forward.12} parent=70 // loop_pre_header
                  _
                $region73: #{dense_fc_forward.12} parent=70 // loop_header
                  %s598 = sphi 0, %s602
                  %p599 = scmp.ge.s32.totalorder %s598, 1
                  %s603 = sphi %s546, %s546
                  %s604 = sphi %s553, %s553
                $region74: #{dense_fc_forward.12} parent=70 // loop_header_branch
                  %601 = sbr.rel (%p599) target = $region78
                $region75: #{dense_fc_forward.12} parent=70 // loop_body
                  _
                $region76: #{dense_fc_forward.12} parent=70 // loop_footer
                  %s602 = sadd.s32 1, %s598
                $region77: #{dense_fc_forward.12} parent=70 // loop_footer_branch
                  %597 = sbr.rel target = $region73
                $region78: #{dense_fc_forward.12} parent=70 // loop_exit
                  _
                loop: start=0, step=1, limit=1
                $region79: #{dense_fc_forward.12} parent=70 // loop_pre_header
                  _
                $region80: #{dense_fc_forward.12} parent=70 // loop_header
                  %s607 = sphi 0, %s611
                  %p608 = scmp.ge.s32.totalorder %s607, 1
                  %s612 = sphi %s546, %s546
                  %s613 = sphi %s553, %s553
                $region81: #{dense_fc_forward.12} parent=70 // loop_header_branch
                  %610 = sbr.rel (%p608) target = $region85
                $region82: #{dense_fc_forward.12} parent=70 // loop_body
                  %v614 = vld [vmem:[%s612] sm:$0xf]
                  %615 = vst [vmem:[%s613] sm:$0xf] %v614
                  %v616 = vld [vmem:[%s612 + $0x4] sm:$0xf]
                  %617 = vst [vmem:[%s613 + $0x10] sm:$0xf] %v616
                  %v618 = vld [vmem:[%s612 + $0x8] sm:$0xf]
                  %619 = vst [vmem:[%s613 + $0x20] sm:$0xf] %v618
                  %v620 = vld [vmem:[%s612 + $0xc] sm:$0xf]
                  %621 = vst [vmem:[%s613 + $0x30] sm:$0xf] %v620
                  %v622 = vld [vmem:[%s612 + $0x10] sm:$0xf]
                  %623 = vst [vmem:[%s613 + $0x40] sm:$0xf] %v622
                  %v624 = vld [vmem:[%s612 + $0x14] sm:$0xf]
                  %625 = vst [vmem:[%s613 + $0x50] sm:$0xf] %v624
                  %v626 = vld [vmem:[%s612 + $0x18] sm:$0xf]
                  %627 = vst [vmem:[%s613 + $0x60] sm:$0xf] %v626
                  %v628 = vld [vmem:[%s612 + $0x1c] sm:$0xf]
                  %629 = vst [vmem:[%s613 + $0x70] sm:$0xf] %v628
                  %v630 = vld [vmem:[%s612 + $0x20] sm:$0xf]
                  %631 = vst [vmem:[%s613 + $0x80] sm:$0xf] %v630
                  %v632 = vld [vmem:[%s612 + $0x24] sm:$0xf]
                  %633 = vst [vmem:[%s613 + $0x90] sm:$0xf] %v632
                  %v634 = vld [vmem:[%s612 + $0x28] sm:$0xf]
                  %635 = vst [vmem:[%s613 + $0xa0] sm:$0xf] %v634
                  %v636 = vld [vmem:[%s612 + $0x2c] sm:$0xf]
                  %637 = vst [vmem:[%s613 + $0xb0] sm:$0xf] %v636
                  %v638 = vld [vmem:[%s612 + $0x30] sm:$0xf]
                  %639 = vst [vmem:[%s613 + $0xc0] sm:$0xf] %v638
                $region83: #{dense_fc_forward.12} parent=70 // loop_footer
                  %s611 = sadd.s32 1, %s607
                $region84: #{dense_fc_forward.12} parent=70 // loop_footer_branch
                  %606 = sbr.rel target = $region80
                $region85: #{dense_fc_forward.12} parent=70 // loop_exit
                  _
              $region71: #{dense_fc_forward.12} parent=55 // pred_fallthru
                _
            $region56: #{dense_fc_forward.12} parent=51 // pred_fallthru
              _
            // Predicated region
            $region57: #{dense_fc_forward.12} parent=51 // pred_check
              _
            $region58: #{dense_fc_forward.12} parent=51 // pred_check_branch
              %559 = sbr.rel (0) target = $region60
            $region59: #{dense_fc_forward.12} parent=51 // pred_region
              loop: start=0, step=1, limit=1
              $region61: #{dense_fc_forward.12} parent=59 // loop_pre_header
                _
              $region62: #{dense_fc_forward.12} parent=59 // loop_header
                %s562 = sphi 0, %s566
                %p563 = scmp.ge.s32.totalorder %s562, 1
                %s567 = sphi %s546, %s546
                %s568 = sphi %s553, %s553
              $region63: #{dense_fc_forward.12} parent=59 // loop_header_branch
                %565 = sbr.rel (%p563) target = $region67
              $region64: #{dense_fc_forward.12} parent=59 // loop_body
                %v569 = vld [vmem:[%s567] sm:$0xf]
                %570 = vst [vmem:[%s568] sm:$0xf] %v569
                %v571 = vld [vmem:[%s567 + $0x4] sm:$0xf]
                %572 = vst [vmem:[%s568 + $0x10] sm:$0xf] %v571
                %v573 = vld [vmem:[%s567 + $0x8] sm:$0xf]
                %574 = vst [vmem:[%s568 + $0x20] sm:$0xf] %v573
                %v575 = vld [vmem:[%s567 + $0xc] sm:$0xf]
                %576 = vst [vmem:[%s568 + $0x30] sm:$0xf] %v575
                %v577 = vld [vmem:[%s567 + $0x10] sm:$0xf]
                %578 = vst [vmem:[%s568 + $0x40] sm:$0xf] %v577
                %v579 = vld [vmem:[%s567 + $0x14] sm:$0xf]
                %580 = vst [vmem:[%s568 + $0x50] sm:$0xf] %v579
                %v581 = vld [vmem:[%s567 + $0x18] sm:$0xf]
                %582 = vst [vmem:[%s568 + $0x60] sm:$0xf] %v581
                %v583 = vld [vmem:[%s567 + $0x1c] sm:$0xf]
                %584 = vst [vmem:[%s568 + $0x70] sm:$0xf] %v583
                %v585 = vld [vmem:[%s567 + $0x20] sm:$0xf]
                %586 = vst [vmem:[%s568 + $0x80] sm:$0xf] %v585
                %v587 = vld [vmem:[%s567 + $0x24] sm:$0xf]
                %588 = vst [vmem:[%s568 + $0x90] sm:$0xf] %v587
                %v589 = vld [vmem:[%s567 + $0x28] sm:$0xf]
                %590 = vst [vmem:[%s568 + $0xa0] sm:$0xf] %v589
                %v591 = vld [vmem:[%s567 + $0x2c] sm:$0xf]
                %592 = vst [vmem:[%s568 + $0xb0] sm:$0xf] %v591
                %v593 = vld [vmem:[%s567 + $0x30] sm:$0xf]
                %594 = vst [vmem:[%s568 + $0xc0] sm:$0xf] %v593
              $region65: #{dense_fc_forward.12} parent=59 // loop_footer
                %s566 = sadd.s32 1, %s562
              $region66: #{dense_fc_forward.12} parent=59 // loop_footer_branch
                %561 = sbr.rel target = $region62
              $region67: #{dense_fc_forward.12} parent=59 // loop_exit
                _
            $region60: #{dense_fc_forward.12} parent=51 // pred_fallthru
              _
          $region52: #{dense_fc_forward.12} parent=47 // pred_fallthru
            _
          %640 = vnop
        $region48: #{dense_fc_forward.12} parent=43 // pred_fallthru
          _
      $region44: #{dense_fc_forward.12} parent=5 // pred_fallthru
        _
      %p641 = scmp.le.s32.totalorder 2, %s14
      // Predicated region
      $region86: #{dense_fc_forward.12} parent=5 // pred_check
        %p642 = pneg %p641
      $region87: #{dense_fc_forward.12} parent=5 // pred_check_branch
        %644 = sbr.rel (%p642) target = $region89
      $region88: #{dense_fc_forward.12} parent=5 // pred_region
        %s645 = ssub.s32 %s14, 2
        // Predicated region
        $region90: #{dense_fc_forward.12} parent=88 // pred_check
          %p646 = pneg %p210
        $region91: #{dense_fc_forward.12} parent=88 // pred_check_branch
          %648 = sbr.rel (%p646) target = $region93
        $region92: #{dense_fc_forward.12} parent=88 // pred_region
          %s649 = sand.u32 %s195, 1
          %s650 = sand.u32 %s195, 1
          %s651 = smul.addr %s650, 52
          %s652 = scalar_lea.vmem [#allocation3], %s651
        $region93: #{dense_fc_forward.12} parent=88 // pred_fallthru
          _
      $region89: #{dense_fc_forward.12} parent=5 // pred_fallthru
        _
    $region6: #{dense_fc_forward.12} parent=1 // loop_footer
      %s18 = sadd.s32 1, %s14
    $region7: #{dense_fc_forward.12} parent=1 // loop_footer_branch
      %13 = sbr.rel target = $region3
    $region8: #{dense_fc_forward.12} parent=1 // loop_exit
      _

// kernel: dense_fc_forward.15
$region0: #{dense_fc_forward.15}
  #allocation0 [shape = 'u32[]', space=smem, size = 0x4, offset = 0x4, fixed_abs, tag = 'smem constant byte address 0x4 - core index']
  #allocation1 [shape = 'u32[144,128]{1,0:T(1,128)}', space=vmem, size = 0x12000, scoped, tag = 'internal scratch']
  #allocation2 [shape = 'f32[1]{0:T(128)S(6)}', space=smem, size = 0x200, scoped, tag = 'scoped memory for dense_fc_forward.15']
  %s0 = inlined_call_operand.vmem [shape: bf16[2,102,128], index: 0, kind: input, shape index: {}]
  %s1 = inlined_call_operand.vmem [shape: f32[2,8,128], index: 1, kind: input, shape index: {}]
  %s2 = inlined_call_operand.vmem [shape: f32[2,8,128], index: 2, kind: input, shape index: {}]
  %s3 = inlined_call_operand.vmem [shape: bf16[102,128], index: 3, kind: input, shape index: {}]
  %s4 = inlined_call_operand.vmem [shape: bf16[102,128], index: 4, kind: input, shape index: {}]
  %s5 = inlined_call_operand.<no memory space> [shape: f32[1], index: 5, kind: input, shape index: {}]
  %s6 = inlined_call_operand.vmem [shape: bf16[2,102,512], index: 6, kind: input, shape index: {}, may-alias: {6,7}]
  %s7 = inlined_call_operand.vmem [shape: bf16[2,102,512], index: 7, kind: output, shape index: {}, may-alias: {6,7}]
  %s8 = sld [smem:[#allocation0]]
  $region94: #{dense_fc_forward.15} parent=0
    _
  %s10 = ssub.s32 1, %s8
  %s11 = scalar_select 0, %s10, %s8
  %12 = sst [smem:[#allocation2]] %s5
  $region1: #{dense_fc_forward.15} parent=0
    #allocation3 [shape = 'u8[53248]{0}', space=vmem, size = 0xd000, scoped, tag = 'output window, operand 0']
    loop: start=0, step=1, limit=4
    $region2: #{dense_fc_forward.15} parent=1 // loop_pre_header
      _
    $region3: #{dense_fc_forward.15} parent=1 // loop_header
      %s14 = sphi 0, %s18
      %p15 = scmp.ge.s32.totalorder %s14, 4
      %s21 = sphi 0, %s33
      %s22 = sphi 0, %s29
      %s23 = sphi 0, %s21
      %s24 = sphi 0, %s22
      %s25 = sphi 0, %s23
      %s26 = sphi 0, %s24
      %s38 = sphi 0, %s40
      %s41 = sphi 0, %s38
      %s42 = sphi 0, %s41
      %s58 = sphi 0, %s42
      %s64 = sphi 0, %s66
      %s67 = sphi 0, %s64
      %s68 = sphi 0, %s67
      %s84 = sphi 0, %s68
      %s90 = sphi 0, %s92
      %s93 = sphi 0, %s90
      %s94 = sphi 0, %s93
      %s110 = sphi 0, %s94
      %s116 = sphi 0, %s118
      %s119 = sphi 0, %s116
      %s120 = sphi 0, %s119
      %s136 = sphi 0, %s120
      %s142 = sphi 0, %s144
      %s145 = sphi 0, %s142
      %s146 = sphi 0, %s145
      %s162 = sphi 0, %s146
      %s166 = sphi 0, %s166
      %s168 = sphi 0, %s166
      %s169 = sphi 0, %s168
      %s183 = sphi 0, %s169
      %s193 = sphi 0, %s195
      %s196 = sphi 0, %s193
      %s197 = sphi 0, %s196
      %s213 = sphi 0, %s197
    $region4: #{dense_fc_forward.15} parent=1 // loop_header_branch
      %17 = sbr.rel (%p15) target = $region8
    $region5: #{dense_fc_forward.15} parent=1 // loop_body
      %s19 = ssub.s32 %s14, 1
      %s20 = ssub.s32 %s14, 2
      %s27 = sadd.s32 1, %s22
      %p28 = scmp.ge.s32.totalorder %s27, 1
      %s29 = scalar_select %p28, 0, %s27
      %s30 = sadd.s32 1, %s21
      %s31 = scalar_select %p28, %s30, %s21
      %p32 = scmp.ge.s32.totalorder %s31, 2
      %s33 = scalar_select %p32, 0, %s31
      %s34 = ssub.s32 %s21, %s33
      %s35 = ssub.s32 %s22, %s29
      %s36 = sor.u32 %s34, %s35
      %p37 = scmp.eq.s32.totalorder %s36, 0
      %s39 = sadd.s32 %s38, 1
      %s40 = scalar_select %p37, %s38, %s39
      %p43 = pneg %p37
      %p44 = scmp.eq.s32.totalorder %s14, 1
      %p45 = por %p43, %p44
      %p46 = scmp.ne.s32.totalorder %s38, %s41
      %p47 = scmp.eq.s32.totalorder %s14, 0
      %p48 = por %p46, %p47
      %p49 = scmp.ne.s32.totalorder %s38, %s41
      %p50 = scmp.eq.s32.totalorder %s19, 1
      %p51 = por %p49, %p50
      %p52 = scmp.ne.s32.totalorder %s41, %s42
      %p53 = scmp.eq.s32.totalorder %s19, 0
      %p54 = por %p52, %p53
      %p55 = scmp.ne.s32.totalorder %s41, %s42
      %p56 = scmp.eq.s32.totalorder %s20, 1
      %p57 = por %p55, %p56
      %p59 = scmp.ne.s32.totalorder %s42, %s58
      %p60 = scmp.eq.s32.totalorder %s20, 0
      %p61 = por %p59, %p60
      %s62 = ssub.s32 %s21, %s33
      %p63 = scmp.eq.s32.totalorder %s62, 0
      %s65 = sadd.s32 %s64, 1
      %s66 = scalar_select %p63, %s64, %s65
      %p69 = pneg %p63
      %p70 = scmp.eq.s32.totalorder %s14, 1
      %p71 = por %p69, %p70
      %p72 = scmp.ne.s32.totalorder %s64, %s67
      %p73 = scmp.eq.s32.totalorder %s14, 0
      %p74 = por %p72, %p73
      %p75 = scmp.ne.s32.totalorder %s64, %s67
      %p76 = scmp.eq.s32.totalorder %s19, 1
      %p77 = por %p75, %p76
      %p78 = scmp.ne.s32.totalorder %s67, %s68
      %p79 = scmp.eq.s32.totalorder %s19, 0
      %p80 = por %p78, %p79
      %p81 = scmp.ne.s32.totalorder %s67, %s68
      %p82 = scmp.eq.s32.totalorder %s20, 1
      %p83 = por %p81, %p82
      %p85 = scmp.ne.s32.totalorder %s68, %s84
      %p86 = scmp.eq.s32.totalorder %s20, 0
      %p87 = por %p85, %p86
      %s88 = ssub.s32 %s21, %s33
      %p89 = scmp.eq.s32.totalorder %s88, 0
      %s91 = sadd.s32 %s90, 1
      %s92 = scalar_select %p89, %s90, %s91
      %p95 = pneg %p89
      %p96 = scmp.eq.s32.totalorder %s14, 1
      %p97 = por %p95, %p96
      %p98 = scmp.ne.s32.totalorder %s90, %s93
      %p99 = scmp.eq.s32.totalorder %s14, 0
      %p100 = por %p98, %p99
      %p101 = scmp.ne.s32.totalorder %s90, %s93
      %p102 = scmp.eq.s32.totalorder %s19, 1
      %p103 = por %p101, %p102
      %p104 = scmp.ne.s32.totalorder %s93, %s94
      %p105 = scmp.eq.s32.totalorder %s19, 0
      %p106 = por %p104, %p105
      %p107 = scmp.ne.s32.totalorder %s93, %s94
      %p108 = scmp.eq.s32.totalorder %s20, 1
      %p109 = por %p107, %p108
      %p111 = scmp.ne.s32.totalorder %s94, %s110
      %p112 = scmp.eq.s32.totalorder %s20, 0
      %p113 = por %p111, %p112
      %s114 = ssub.s32 %s22, %s29
      %p115 = scmp.eq.s32.totalorder %s114, 0
      %s117 = sadd.s32 %s116, 1
      %s118 = scalar_select %p115, %s116, %s117
      %p121 = pneg %p115
      %p122 = scmp.eq.s32.totalorder %s14, 1
      %p123 = por %p121, %p122
      %p124 = scmp.ne.s32.totalorder %s116, %s119
      %p125 = scmp.eq.s32.totalorder %s14, 0
      %p126 = por %p124, %p125
      %p127 = scmp.ne.s32.totalorder %s116, %s119
      %p128 = scmp.eq.s32.totalorder %s19, 1
      %p129 = por %p127, %p128
      %p130 = scmp.ne.s32.totalorder %s119, %s120
      %p131 = scmp.eq.s32.totalorder %s19, 0
      %p132 = por %p130, %p131
      %p133 = scmp.ne.s32.totalorder %s119, %s120
      %p134 = scmp.eq.s32.totalorder %s20, 1
      %p135 = por %p133, %p134
      %p137 = scmp.ne.s32.totalorder %s120, %s136
      %p138 = scmp.eq.s32.totalorder %s20, 0
      %p139 = por %p137, %p138
      %s140 = ssub.s32 %s22, %s29
      %p141 = scmp.eq.s32.totalorder %s140, 0
      %s143 = sadd.s32 %s142, 1
      %s144 = scalar_select %p141, %s142, %s143
      %p147 = pneg %p141
      %p148 = scmp.eq.s32.totalorder %s14, 1
      %p149 = por %p147, %p148
      %p150 = scmp.ne.s32.totalorder %s142, %s145
      %p151 = scmp.eq.s32.totalorder %s14, 0
      %p152 = por %p150, %p151
      %p153 = scmp.ne.s32.totalorder %s142, %s145
      %p154 = scmp.eq.s32.totalorder %s19, 1
      %p155 = por %p153, %p154
      %p156 = scmp.ne.s32.totalorder %s145, %s146
      %p157 = scmp.eq.s32.totalorder %s19, 0
      %p158 = por %p156, %p157
      %p159 = scmp.ne.s32.totalorder %s145, %s146
      %p160 = scmp.eq.s32.totalorder %s20, 1
      %p161 = por %p159, %p160
      %p163 = scmp.ne.s32.totalorder %s146, %s162
      %p164 = scmp.eq.s32.totalorder %s20, 0
      %p165 = por %p163, %p164
      %s167 = sadd.s32 %s166, 1
      %p170 = scmp.eq.s32.totalorder %s14, 1
      %p171 = scmp.ne.s32.totalorder %s166, %s168
      %p172 = scmp.eq.s32.totalorder %s14, 0
      %p173 = por %p171, %p172
      %p174 = scmp.ne.s32.totalorder %s166, %s168
      %p175 = scmp.eq.s32.totalorder %s19, 1
      %p176 = por %p174, %p175
      %p177 = scmp.ne.s32.totalorder %s168, %s169
      %p178 = scmp.eq.s32.totalorder %s19, 0
      %p179 = por %p177, %p178
      %p180 = scmp.ne.s32.totalorder %s168, %s169
      %p181 = scmp.eq.s32.totalorder %s20, 1
      %p182 = por %p180, %p181
      %p184 = scmp.ne.s32.totalorder %s169, %s183
      %p185 = scmp.eq.s32.totalorder %s20, 0
      %p186 = por %p184, %p185
      %s187 = sadd.s32 %s22, 1
      %s188 = sadd.s32 %s29, 1
      %s189 = ssub.s32 %s21, %s33
      %s190 = ssub.s32 %s187, %s188
      %s191 = sor.u32 %s189, %s190
      %p192 = scmp.eq.s32.totalorder %s191, 0
      %s194 = sadd.s32 %s193, 1
      %s195 = scalar_select %p192, %s193, %s194
      %p198 = pneg %p192
      %p199 = scmp.eq.s32.totalorder %s14, 1
      %p200 = por %p198, %p199
      %p201 = scmp.ne.s32.totalorder %s193, %s196
      %p202 = scmp.eq.s32.totalorder %s14, 0
      %p203 = por %p201, %p202
      %p204 = scmp.ne.s32.totalorder %s193, %s196
      %p205 = scmp.eq.s32.totalorder %s19, 1
      %p206 = por %p204, %p205
      %p207 = scmp.ne.s32.totalorder %s196, %s197
      %p208 = scmp.eq.s32.totalorder %s19, 0
      %p209 = por %p207, %p208
      %p210 = scmp.ne.s32.totalorder %s196, %s197
      %p211 = scmp.eq.s32.totalorder %s20, 1
      %p212 = por %p210, %p211
      %p214 = scmp.ne.s32.totalorder %s197, %s213
      %p215 = scmp.eq.s32.totalorder %s20, 0
      %p216 = por %p214, %p215
      %p217 = scmp.le.s32.totalorder 1, %s14
      %p218 = scmp.lt.s32.totalorder %s14, 3
      %p219 = pnand %p217, %p218
      %p220 = pneg %p219
      // Predicated region
      $region9: #{dense_fc_forward.15} parent=5 // pred_check
        _
      $region10: #{dense_fc_forward.15} parent=5 // pred_check_branch
        %222 = sbr.rel (%p219) target = $region12
      $region11: #{dense_fc_forward.15} parent=5 // pred_region
        %s223 = ssub.s32 %s14, 1
        // Predicated region
        $region13: #{dense_fc_forward.15} parent=11 // pred_check
          %p224 = pneg %p132
        $region14: #{dense_fc_forward.15} parent=11 // pred_check_branch
          %226 = sbr.rel (%p224) target = $region16
        $region15: #{dense_fc_forward.15} parent=11 // pred_region
          %p227 = scmp.lt.s32.totalorder %s24, 0
          %s228 = scalar_select %p227, %s24, 0
          %s229 = smul.addr %s228, 4
          %s230 = scalar_lea.vmem %s3, %s229
        $region16: #{dense_fc_forward.15} parent=11 // pred_fallthru
          _
        // Predicated region
        $region17: #{dense_fc_forward.15} parent=11 // pred_check
          %p231 = pneg %p158
        $region18: #{dense_fc_forward.15} parent=11 // pred_check_branch
          %233 = sbr.rel (%p231) target = $region20
        $region19: #{dense_fc_forward.15} parent=11 // pred_region
          %p234 = scmp.lt.s32.totalorder %s24, 0
          %s235 = scalar_select %p234, %s24, 0
          %s236 = smul.addr %s235, 4
          %s237 = scalar_lea.vmem %s4, %s236
        $region20: #{dense_fc_forward.15} parent=11 // pred_fallthru
          _
        // Predicated region
        $region21: #{dense_fc_forward.15} parent=11 // pred_check
          %p238 = pneg %p179
        $region22: #{dense_fc_forward.15} parent=11 // pred_check_branch
          %240 = sbr.rel (%p238) target = $region24
        $region23: #{dense_fc_forward.15} parent=11 // pred_region
          _
        $region24: #{dense_fc_forward.15} parent=11 // pred_fallthru
          _
      $region12: #{dense_fc_forward.15} parent=5 // pred_fallthru
        _
      %p241 = scmp.lt.s32.totalorder %s14, 2
      // Predicated region
      $region25: #{dense_fc_forward.15} parent=5 // pred_check
        %p242 = pneg %p241
      $region26: #{dense_fc_forward.15} parent=5 // pred_check_branch
        %244 = sbr.rel (%p242) target = $region28
      $region27: #{dense_fc_forward.15} parent=5 // pred_region
        // Predicated region
        $region29: #{dense_fc_forward.15} parent=27 // pred_check
          %p245 = pneg %p48
        $region30: #{dense_fc_forward.15} parent=27 // pred_check_branch
          %247 = sbr.rel (%p245) target = $region32
        $region31: #{dense_fc_forward.15} parent=27 // pred_region
          %p248 = scmp.lt.s32.totalorder %s21, 1
          %s249 = scalar_select %p248, %s21, 1
          %p250 = scmp.lt.s32.totalorder %s22, 0
          %s251 = scalar_select %p250, %s22, 0
          %s252 = smul.addr %s249, 13
          %s253 = sadd.s32 %s251, %s252
          %s254 = smul.addr %s253, 4
          %s255 = scalar_lea.vmem %s0, %s254
        $region32: #{dense_fc_forward.15} parent=27 // pred_fallthru
          _
        // Predicated region
        $region33: #{dense_fc_forward.15} parent=27 // pred_check
          %p256 = pneg %p74
        $region34: #{dense_fc_forward.15} parent=27 // pred_check_branch
          %258 = sbr.rel (%p256) target = $region36
        $region35: #{dense_fc_forward.15} parent=27 // pred_region
          %p259 = scmp.lt.s32.totalorder %s21, 1
          %s260 = scalar_select %p259, %s21, 1
          %s261 = smul.addr %s260, 8
          %s262 = scalar_lea.vmem %s1, %s261
        $region36: #{dense_fc_forward.15} parent=27 // pred_fallthru
          _
        // Predicated region
        $region37: #{dense_fc_forward.15} parent=27 // pred_check
          %p263 = pneg %p100
        $region38: #{dense_fc_forward.15} parent=27 // pred_check_branch
          %265 = sbr.rel (%p263) target = $region40
        $region39: #{dense_fc_forward.15} parent=27 // pred_region
          %p266 = scmp.lt.s32.totalorder %s21, 1
          %s267 = scalar_select %p266, %s21, 1
          %s268 = smul.addr %s267, 8
          %s269 = scalar_lea.vmem %s2, %s268
        $region40: #{dense_fc_forward.15} parent=27 // pred_fallthru
          _
      $region28: #{dense_fc_forward.15} parent=5 // pred_fallthru
        _
      %p270 = scmp.le.s32.totalorder 1, %s14
      %p271 = scmp.lt.s32.totalorder %s14, 3
      %p272 = pnand %p270, %p271
      %p273 = pneg %p272
      // Predicated region
      $region41: #{dense_fc_forward.15} parent=5 // pred_check
        _
      $region42: #{dense_fc_forward.15} parent=5 // pred_check_branch
        %275 = sbr.rel (%p272) target = $region44
      $region43: #{dense_fc_forward.15} parent=5 // pred_region
        %s276 = ssub.s32 %s14, 1
        %p277 = scmp.lt.s32.totalorder %s23, 1
        %s278 = scalar_select %p277, %s23, 1
        %p279 = scmp.lt.s32.totalorder %s24, 0
        %s280 = scalar_select %p279, %s24, 0
        %s281 = smul.addr %s278, 13
        %s282 = sadd.s32 %s280, %s281
        %s283 = smul.addr %s282, 4
        %s284 = scalar_lea.vmem %s0, %s283
        %p285 = pneg %p54
        %p286 = pneg %p51
        %p287 = scmp.lt.s32.totalorder %s23, 1
        %s288 = scalar_select %p287, %s23, 1
        %s289 = smul.addr %s288, 8
        %s290 = scalar_lea.vmem %s1, %s289
        %p291 = pneg %p80
        %p292 = pneg %p77
        %p293 = scmp.lt.s32.totalorder %s23, 1
        %s294 = scalar_select %p293, %s23, 1
        %s295 = smul.addr %s294, 8
        %s296 = scalar_lea.vmem %s2, %s295
        %p297 = pneg %p106
        %p298 = pneg %p103
        %p299 = scmp.lt.s32.totalorder %s24, 0
        %s300 = scalar_select %p299, %s24, 0
        %s301 = smul.addr %s300, 4
        %s302 = scalar_lea.vmem %s3, %s301
        %p303 = pneg %p132
        %p304 = pneg %p129
        %p305 = scmp.lt.s32.totalorder %s24, 0
        %s306 = scalar_select %p305, %s24, 0
        %s307 = smul.addr %s306, 4
        %s308 = scalar_lea.vmem %s4, %s307
        %p309 = pneg %p158
        %p310 = pneg %p155
        %p311 = pneg %p179
        %p312 = pneg %p176
        %p313 = pneg %p209
        %p314 = pneg %p206
        %s315 = sand.u32 %s196, 1
        %s316 = sand.u32 %s196, 1
        %s317 = smul.addr %s316, 52
        %s318 = scalar_lea.vmem [#allocation3], %s317
        %p319 = scmp.lt.s32.totalorder %s23, 1
        %s320 = scalar_select %p319, %s23, 1
        %p321 = scmp.lt.s32.totalorder %s24, 0
        %s322 = scalar_select %p321, %s24, 0
        %s323 = smul.addr %s320, 13
        %s324 = sadd.s32 %s322, %s323
        %s325 = smul.addr %s324, 4
        %s326 = scalar_lea.vmem %s0, %s325
        %p327 = scmp.lt.s32.totalorder %s23, 1
        %s328 = scalar_select %p327, %s23, 1
        %s329 = smul.addr %s328, 8
        %s330 = scalar_lea.vmem %s1, %s329
        %p331 = scmp.lt.s32.totalorder %s23, 1
        %s332 = scalar_select %p331, %s23, 1
        %s333 = smul.addr %s332, 8
        %s334 = scalar_lea.vmem %s2, %s333
        %p335 = scmp.lt.s32.totalorder %s24, 0
        %s336 = scalar_select %p335, %s24, 0
        %s337 = smul.addr %s336, 4
        %s338 = scalar_lea.vmem %s3, %s337
        %p339 = scmp.lt.s32.totalorder %s24, 0
        %s340 = scalar_select %p339, %s24, 0
        %s341 = smul.addr %s340, 4
        %s342 = scalar_lea.vmem %s4, %s341
        %s343 = sadd.s32 %s24, 1
        %v344 = vld [vmem:[%s326] sm:$0xf]
        %v345 = vld [vmem:[%s326 + $0x4] sm:$0xf]
        %v346 = vld [vmem:[%s326 + $0x8] sm:$0xf]
        %v347 = vld [vmem:[%s326 + $0xc] sm:$0xf]
        %v348 = vld [vmem:[%s326 + $0x10] sm:$0xf]
        %v349 = vld [vmem:[%s326 + $0x14] sm:$0xf]
        %v350 = vld [vmem:[%s326 + $0x18] sm:$0xf]
        %v351 = vld [vmem:[%s326 + $0x1c] sm:$0xf]
        %v352 = vld [vmem:[%s326 + $0x20] sm:$0xf]
        %v353 = vld [vmem:[%s326 + $0x24] sm:$0xf]
        %v354 = vld [vmem:[%s326 + $0x28] sm:$0xf]
        %v355 = vld [vmem:[%s326 + $0x2c] sm:$0xf]
        %v356 = vld [vmem:[%s326 + $0x30] sm:$0x7]
        %v357 = vunpack.c.l.bf16 %v344
        %v358 = vunpack.c.l.bf16 %v345
        %v359 = vunpack.c.l.bf16 %v346
        %v360 = vunpack.c.l.bf16 %v347
        %v361 = vunpack.c.l.bf16 %v348
        %v362 = vunpack.c.l.bf16 %v349
        %v363 = vunpack.c.l.bf16 %v350
        %v364 = vunpack.c.l.bf16 %v351
        %v365 = vunpack.c.l.bf16 %v352
        %v366 = vunpack.c.l.bf16 %v353
        %v367 = vunpack.c.l.bf16 %v354
        %v368 = vunpack.c.l.bf16 %v355
        %v369 = vunpack.c.l.bf16 %v356
        %v370 = vld [vmem:[%s330] sm:$0x1]
        %s371 = vtos %v370
        %v372 = vld [vmem:[%s334] sm:$0x1]
        %s373 = vtos %v372
        %v374 = vstv %s371
        %v375 = vsub.f32 %v357, %v374
        %v376 = vsub.f32 %v358, %v374
        %v377 = vsub.f32 %v359, %v374
        %v378 = vsub.f32 %v360, %v374
        %v379 = vsub.f32 %v361, %v374
        %v380 = vsub.f32 %v362, %v374
        %v381 = vsub.f32 %v363, %v374
        %v382 = vsub.f32 %v364, %v374
        %v383 = vsub.f32 %v365, %v374
        %v384 = vsub.f32 %v366, %v374
        %v385 = vsub.f32 %v367, %v374
        %v386 = vsub.f32 %v368, %v374
        %v387 = vsub.f32 %v369, %v374
        %v388 = vstv %s373
        %v389 = vmul.f32 %v375, %v388
        %v390 = vmul.f32 %v376, %v388
        %v391 = vmul.f32 %v377, %v388
        %v392 = vmul.f32 %v378, %v388
        %v393 = vmul.f32 %v379, %v388
        %v394 = vmul.f32 %v380, %v388
        %v395 = vmul.f32 %v381, %v388
        %v396 = vmul.f32 %v382, %v388
        %v397 = vmul.f32 %v383, %v388
        %v398 = vmul.f32 %v384, %v388
        %v399 = vmul.f32 %v385, %v388
        %v400 = vmul.f32 %v386, %v388
        %v401 = vmul.f32 %v387, %v388
        %v402 = vld [vmem:[%s338] sm:$0xf]
        %v403 = vld [vmem:[%s338 + $0x4] sm:$0xf]
        %v404 = vld [vmem:[%s338 + $0x8] sm:$0xf]
        %v405 = vld [vmem:[%s338 + $0xc] sm:$0xf]
        %v406 = vld [vmem:[%s338 + $0x10] sm:$0xf]
        %v407 = vld [vmem:[%s338 + $0x14] sm:$0xf]
        %v408 = vld [vmem:[%s338 + $0x18] sm:$0xf]
        %v409 = vld [vmem:[%s338 + $0x1c] sm:$0xf]
        %v410 = vld [vmem:[%s338 + $0x20] sm:$0xf]
        %v411 = vld [vmem:[%s338 + $0x24] sm:$0xf]
        %v412 = vld [vmem:[%s338 + $0x28] sm:$0xf]
        %v413 = vld [vmem:[%s338 + $0x2c] sm:$0xf]
        %v414 = vld [vmem:[%s338 + $0x30] sm:$0x7]
        %v415 = vunpack.c.l.bf16 %v402
        %v416 = vunpack.c.l.bf16 %v403
        %v417 = vunpack.c.l.bf16 %v404
        %v418 = vunpack.c.l.bf16 %v405
        %v419 = vunpack.c.l.bf16 %v406
        %v420 = vunpack.c.l.bf16 %v407
        %v421 = vunpack.c.l.bf16 %v408
        %v422 = vunpack.c.l.bf16 %v409
        %v423 = vunpack.c.l.bf16 %v410
        %v424 = vunpack.c.l.bf16 %v411
        %v425 = vunpack.c.l.bf16 %v412
        %v426 = vunpack.c.l.bf16 %v413
        %v427 = vunpack.c.l.bf16 %v414
        %v428 = vmul.f32 %v389, %v415
        %v429 = vmul.f32 %v390, %v416
        %v430 = vmul.f32 %v391, %v417
        %v431 = vmul.f32 %v392, %v418
        %v432 = vmul.f32 %v393, %v419
        %v433 = vmul.f32 %v394, %v420
        %v434 = vmul.f32 %v395, %v421
        %v435 = vmul.f32 %v396, %v422
        %v436 = vmul.f32 %v397, %v423
        %v437 = vmul.f32 %v398, %v424
        %v438 = vmul.f32 %v399, %v425
        %v439 = vmul.f32 %v400, %v426
        %v440 = vmul.f32 %v401, %v427
        %v441 = vld [vmem:[%s342] sm:$0xf]
        %v442 = vld [vmem:[%s342 + $0x4] sm:$0xf]
        %v443 = vld [vmem:[%s342 + $0x8] sm:$0xf]
        %v444 = vld [vmem:[%s342 + $0xc] sm:$0xf]
        %v445 = vld [vmem:[%s342 + $0x10] sm:$0xf]
        %v446 = vld [vmem:[%s342 + $0x14] sm:$0xf]
        %v447 = vld [vmem:[%s342 + $0x18] sm:$0xf]
        %v448 = vld [vmem:[%s342 + $0x1c] sm:$0xf]
        %v449 = vld [vmem:[%s342 + $0x20] sm:$0xf]
        %v450 = vld [vmem:[%s342 + $0x24] sm:$0xf]
        %v451 = vld [vmem:[%s342 + $0x28] sm:$0xf]
        %v452 = vld [vmem:[%s342 + $0x2c] sm:$0xf]
        %v453 = vld [vmem:[%s342 + $0x30] sm:$0x7]
        %v454 = vunpack.c.l.bf16 %v441
        %v455 = vunpack.c.l.bf16 %v442
        %v456 = vunpack.c.l.bf16 %v443
        %v457 = vunpack.c.l.bf16 %v444
        %v458 = vunpack.c.l.bf16 %v445
        %v459 = vunpack.c.l.bf16 %v446
        %v460 = vunpack.c.l.bf16 %v447
        %v461 = vunpack.c.l.bf16 %v448
        %v462 = vunpack.c.l.bf16 %v449
        %v463 = vunpack.c.l.bf16 %v450
        %v464 = vunpack.c.l.bf16 %v451
        %v465 = vunpack.c.l.bf16 %v452
        %v466 = vunpack.c.l.bf16 %v453
        %v467 = vadd.f32 %v428, %v454
        %v468 = vadd.f32 %v429, %v455
        %v469 = vadd.f32 %v430, %v456
        %v470 = vadd.f32 %v431, %v457
        %v471 = vadd.f32 %v432, %v458
        %v472 = vadd.f32 %v433, %v459
        %v473 = vadd.f32 %v434, %v460
        %v474 = vadd.f32 %v435, %v461
        %v475 = vadd.f32 %v436, %v462
        %v476 = vadd.f32 %v437, %v463
        %v477 = vadd.f32 %v438, %v464
        %v478 = vadd.f32 %v439, %v465
        %v479 = vadd.f32 %v440, %v466
        %s480 = sld [smem:[#allocation2]]
        %vm481 = vcmp.ge.f32.partialorder %v467, 0.0
        %vm482 = vcmp.ge.f32.partialorder %v468, 0.0
        %vm483 = vcmp.ge.f32.partialorder %v469, 0.0
        %vm484 = vcmp.ge.f32.partialorder %v470, 0.0
        %vm485 = vcmp.ge.f32.partialorder %v471, 0.0
        %vm486 = vcmp.ge.f32.partialorder %v472, 0.0
        %vm487 = vcmp.ge.f32.partialorder %v473, 0.0
        %vm488 = vcmp.ge.f32.partialorder %v474, 0.0
        %vm489 = vcmp.ge.f32.partialorder %v475, 0.0
        %vm490 = vcmp.ge.f32.partialorder %v476, 0.0
        %vm491 = vcmp.ge.f32.partialorder %v477, 0.0
        %vm492 = vcmp.ge.f32.partialorder %v478, 0.0
        %vm493 = vcmp.ge.f32.partialorder %v479, 0.0
        %v494 = vstv %s480
        %v495 = vmul.f32 %v494, %v467
        %v496 = vmul.f32 %v494, %v468
        %v497 = vmul.f32 %v494, %v469
        %v498 = vmul.f32 %v494, %v470
        %v499 = vmul.f32 %v494, %v471
        %v500 = vmul.f32 %v494, %v472
        %v501 = vmul.f32 %v494, %v473
        %v502 = vmul.f32 %v494, %v474
        %v503 = vmul.f32 %v494, %v475
        %v504 = vmul.f32 %v494, %v476
        %v505 = vmul.f32 %v494, %v477
        %v506 = vmul.f32 %v494, %v478
        %v507 = vmul.f32 %v494, %v479
        %v508 = vsel %vm481, %v467, %v495
        %v509 = vsel %vm482, %v468, %v496
        %v510 = vsel %vm483, %v469, %v497
        %v511 = vsel %vm484, %v470, %v498
        %v512 = vsel %vm485, %v471, %v499
        %v513 = vsel %vm486, %v472, %v500
        %v514 = vsel %vm487, %v473, %v501
        %v515 = vsel %vm488, %v474, %v502
        %v516 = vsel %vm489, %v475, %v503
        %v517 = vsel %vm490, %v476, %v504
        %v518 = vsel %vm491, %v477, %v505
        %v519 = vsel %vm492, %v478, %v506
        %v520 = vsel %vm493, %v479, %v507
        %v521 = vpack.c.bf16 %v509, %v508
        %v522 = vpack.c.bf16 %v511, %v510
        %v523 = vpack.c.bf16 %v513, %v512
        %v524 = vpack.c.bf16 %v515, %v514
        %v525 = vpack.c.bf16 %v517, %v516
        %v526 = vpack.c.bf16 %v519, %v518
        %v527 = vpack.c.bf16 %v520, %v520
        %v535 = vunpack.c.l.b16 %v521
        %v536 = vunpack.c.h.b16 %v521
        %v537 = vunpack.c.l.b16 %v522
        %v538 = vunpack.c.h.b16 %v522
        %v539 = vunpack.c.l.b16 %v523
        %v540 = vunpack.c.h.b16 %v523
        %v541 = vunpack.c.l.b16 %v524
        %v542 = vunpack.c.h.b16 %v524
        %v543 = vunpack.c.l.b16 %v525
        %v544 = vunpack.c.h.b16 %v525
        %v545 = vunpack.c.l.b16 %v526
        %v546 = vunpack.c.h.b16 %v526
        %v547 = vunpack.c.l.b16 %v527
        %v548 = vpack.c.b16 %v535, %v535
        %v549 = vpack.c.b16 %v536, %v536
        %v550 = vpack.c.b16 %v537, %v537
        %v551 = vpack.c.b16 %v538, %v538
        %v552 = vpack.c.b16 %v539, %v539
        %v553 = vpack.c.b16 %v540, %v540
        %v554 = vpack.c.b16 %v541, %v541
        %v555 = vpack.c.b16 %v542, %v542
        %v556 = vpack.c.b16 %v543, %v543
        %v557 = vpack.c.b16 %v544, %v544
        %v558 = vpack.c.b16 %v545, %v545
        %v559 = vpack.c.b16 %v546, %v546
        %v560 = vpack.c.b16 %v547, %v547
        %574 = vst [vmem:[%s318] sm:$0xf] %v548
        %575 = vst [vmem:[%s318 + $0x4] sm:$0xf] %v549
        %576 = vst [vmem:[%s318 + $0x8] sm:$0xf] %v550
        %577 = vst [vmem:[%s318 + $0xc] sm:$0xf] %v551
        %578 = vst [vmem:[%s318 + $0x10] sm:$0xf] %v552
        %579 = vst [vmem:[%s318 + $0x14] sm:$0xf] %v553
        %580 = vst [vmem:[%s318 + $0x18] sm:$0xf] %v554
        %581 = vst [vmem:[%s318 + $0x1c] sm:$0xf] %v555
        %582 = vst [vmem:[%s318 + $0x20] sm:$0xf] %v556
        %583 = vst [vmem:[%s318 + $0x24] sm:$0xf] %v557
        %584 = vst [vmem:[%s318 + $0x28] sm:$0xf] %v558
        %585 = vst [vmem:[%s318 + $0x2c] sm:$0xf] %v559
        %586 = vst [vmem:[%s318 + $0x30] sm:$0x7] %v560
        %s587 = sand.u32 %s196, 1
        %s588 = sand.u32 %s196, 1
        %s589 = smul.addr %s588, 52
        %s590 = scalar_lea.vmem [#allocation3], %s589
        // Predicated region
        $region45: #{dense_fc_forward.15} parent=43 // pred_check
          %p591 = pneg %p206
        $region46: #{dense_fc_forward.15} parent=43 // pred_check_branch
          %593 = sbr.rel (%p591) target = $region48
        $region47: #{dense_fc_forward.15} parent=43 // pred_region
          %s594 = sadd.s32 %s24, 1
          %s595 = smul.addr %s23, 52
          %s596 = sadd.s32 %s594, %s595
          %s597 = smul.addr %s596, 4
          %s598 = scalar_lea.vmem %s7, %s597
          // Predicated region
          $region49: #{dense_fc_forward.15} parent=47 // pred_check
            _
          $region50: #{dense_fc_forward.15} parent=47 // pred_check_branch
            %600 = sbr.rel (0) target = $region52
          $region51: #{dense_fc_forward.15} parent=47 // pred_region
            // Predicated region
            $region53: #{dense_fc_forward.15} parent=51 // pred_check
              _
            $region54: #{dense_fc_forward.15} parent=51 // pred_check_branch
              %602 = sbr.rel target = $region56
            $region55: #{dense_fc_forward.15} parent=51 // pred_region
              // Predicated region
              $region68: #{dense_fc_forward.15} parent=55 // pred_check
                _
              $region69: #{dense_fc_forward.15} parent=55 // pred_check_branch
                %641 = sbr.rel (0) target = $region71
              $region70: #{dense_fc_forward.15} parent=55 // pred_region
                loop: start=0, step=1, limit=1
                $region72: #{dense_fc_forward.15} parent=70 // loop_pre_header
                  _
                $region73: #{dense_fc_forward.15} parent=70 // loop_header
                  %s643 = sphi 0, %s647
                  %p644 = scmp.ge.s32.totalorder %s643, 1
                  %s648 = sphi %s590, %s590
                  %s649 = sphi %s598, %s598
                $region74: #{dense_fc_forward.15} parent=70 // loop_header_branch
                  %646 = sbr.rel (%p644) target = $region78
                $region75: #{dense_fc_forward.15} parent=70 // loop_body
                  _
                $region76: #{dense_fc_forward.15} parent=70 // loop_footer
                  %s647 = sadd.s32 1, %s643
                $region77: #{dense_fc_forward.15} parent=70 // loop_footer_branch
                  %642 = sbr.rel target = $region73
                $region78: #{dense_fc_forward.15} parent=70 // loop_exit
                  _
                loop: start=0, step=1, limit=1
                $region79: #{dense_fc_forward.15} parent=70 // loop_pre_header
                  _
                $region80: #{dense_fc_forward.15} parent=70 // loop_header
                  %s652 = sphi 0, %s656
                  %p653 = scmp.ge.s32.totalorder %s652, 1
                  %s657 = sphi %s590, %s590
                  %s658 = sphi %s598, %s598
                $region81: #{dense_fc_forward.15} parent=70 // loop_header_branch
                  %655 = sbr.rel (%p653) target = $region85
                $region82: #{dense_fc_forward.15} parent=70 // loop_body
                  %v659 = vld [vmem:[%s657] sm:$0xf]
                  %660 = vst [vmem:[%s658] sm:$0xf] %v659
                  %v661 = vld [vmem:[%s657 + $0x4] sm:$0xf]
                  %662 = vst [vmem:[%s658 + $0x10] sm:$0xf] %v661
                  %v663 = vld [vmem:[%s657 + $0x8] sm:$0xf]
                  %664 = vst [vmem:[%s658 + $0x20] sm:$0xf] %v663
                  %v665 = vld [vmem:[%s657 + $0xc] sm:$0xf]
                  %666 = vst [vmem:[%s658 + $0x30] sm:$0xf] %v665
                  %v667 = vld [vmem:[%s657 + $0x10] sm:$0xf]
                  %668 = vst [vmem:[%s658 + $0x40] sm:$0xf] %v667
                  %v669 = vld [vmem:[%s657 + $0x14] sm:$0xf]
                  %670 = vst [vmem:[%s658 + $0x50] sm:$0xf] %v669
                  %v671 = vld [vmem:[%s657 + $0x18] sm:$0xf]
                  %672 = vst [vmem:[%s658 + $0x60] sm:$0xf] %v671
                  %v673 = vld [vmem:[%s657 + $0x1c] sm:$0xf]
                  %674 = vst [vmem:[%s658 + $0x70] sm:$0xf] %v673
                  %v675 = vld [vmem:[%s657 + $0x20] sm:$0xf]
                  %676 = vst [vmem:[%s658 + $0x80] sm:$0xf] %v675
                  %v677 = vld [vmem:[%s657 + $0x24] sm:$0xf]
                  %678 = vst [vmem:[%s658 + $0x90] sm:$0xf] %v677
                  %v679 = vld [vmem:[%s657 + $0x28] sm:$0xf]
                  %680 = vst [vmem:[%s658 + $0xa0] sm:$0xf] %v679
                  %v681 = vld [vmem:[%s657 + $0x2c] sm:$0xf]
                  %682 = vst [vmem:[%s658 + $0xb0] sm:$0xf] %v681
                  %v683 = vld [vmem:[%s657 + $0x30] sm:$0xf]
                  %684 = vst [vmem:[%s658 + $0xc0] sm:$0xf] %v683
                $region83: #{dense_fc_forward.15} parent=70 // loop_footer
                  %s656 = sadd.s32 1, %s652
                $region84: #{dense_fc_forward.15} parent=70 // loop_footer_branch
                  %651 = sbr.rel target = $region80
                $region85: #{dense_fc_forward.15} parent=70 // loop_exit
                  _
              $region71: #{dense_fc_forward.15} parent=55 // pred_fallthru
                _
            $region56: #{dense_fc_forward.15} parent=51 // pred_fallthru
              _
            // Predicated region
            $region57: #{dense_fc_forward.15} parent=51 // pred_check
              _
            $region58: #{dense_fc_forward.15} parent=51 // pred_check_branch
              %604 = sbr.rel (0) target = $region60
            $region59: #{dense_fc_forward.15} parent=51 // pred_region
              loop: start=0, step=1, limit=1
              $region61: #{dense_fc_forward.15} parent=59 // loop_pre_header
                _
              $region62: #{dense_fc_forward.15} parent=59 // loop_header
                %s607 = sphi 0, %s611
                %p608 = scmp.ge.s32.totalorder %s607, 1
                %s612 = sphi %s590, %s590
                %s613 = sphi %s598, %s598
              $region63: #{dense_fc_forward.15} parent=59 // loop_header_branch
                %610 = sbr.rel (%p608) target = $region67
              $region64: #{dense_fc_forward.15} parent=59 // loop_body
                %v614 = vld [vmem:[%s612] sm:$0xf]
                %615 = vst [vmem:[%s613] sm:$0xf] %v614
                %v616 = vld [vmem:[%s612 + $0x4] sm:$0xf]
                %617 = vst [vmem:[%s613 + $0x10] sm:$0xf] %v616
                %v618 = vld [vmem:[%s612 + $0x8] sm:$0xf]
                %619 = vst [vmem:[%s613 + $0x20] sm:$0xf] %v618
                %v620 = vld [vmem:[%s612 + $0xc] sm:$0xf]
                %621 = vst [vmem:[%s613 + $0x30] sm:$0xf] %v620
                %v622 = vld [vmem:[%s612 + $0x10] sm:$0xf]
                %623 = vst [vmem:[%s613 + $0x40] sm:$0xf] %v622
                %v624 = vld [vmem:[%s612 + $0x14] sm:$0xf]
                %625 = vst [vmem:[%s613 + $0x50] sm:$0xf] %v624
                %v626 = vld [vmem:[%s612 + $0x18] sm:$0xf]
                %627 = vst [vmem:[%s613 + $0x60] sm:$0xf] %v626
                %v628 = vld [vmem:[%s612 + $0x1c] sm:$0xf]
                %629 = vst [vmem:[%s613 + $0x70] sm:$0xf] %v628
                %v630 = vld [vmem:[%s612 + $0x20] sm:$0xf]
                %631 = vst [vmem:[%s613 + $0x80] sm:$0xf] %v630
                %v632 = vld [vmem:[%s612 + $0x24] sm:$0xf]
                %633 = vst [vmem:[%s613 + $0x90] sm:$0xf] %v632
                %v634 = vld [vmem:[%s612 + $0x28] sm:$0xf]
                %635 = vst [vmem:[%s613 + $0xa0] sm:$0xf] %v634
                %v636 = vld [vmem:[%s612 + $0x2c] sm:$0xf]
                %637 = vst [vmem:[%s613 + $0xb0] sm:$0xf] %v636
                %v638 = vld [vmem:[%s612 + $0x30] sm:$0xf]
                %639 = vst [vmem:[%s613 + $0xc0] sm:$0xf] %v638
              $region65: #{dense_fc_forward.15} parent=59 // loop_footer
                %s611 = sadd.s32 1, %s607
              $region66: #{dense_fc_forward.15} parent=59 // loop_footer_branch
                %606 = sbr.rel target = $region62
              $region67: #{dense_fc_forward.15} parent=59 // loop_exit
                _
            $region60: #{dense_fc_forward.15} parent=51 // pred_fallthru
              _
          $region52: #{dense_fc_forward.15} parent=47 // pred_fallthru
            _
          %685 = vnop
        $region48: #{dense_fc_forward.15} parent=43 // pred_fallthru
          _
      $region44: #{dense_fc_forward.15} parent=5 // pred_fallthru
        _
      %p686 = scmp.le.s32.totalorder 2, %s14
      // Predicated region
      $region86: #{dense_fc_forward.15} parent=5 // pred_check
        %p687 = pneg %p686
      $region87: #{dense_fc_forward.15} parent=5 // pred_check_branch
        %689 = sbr.rel (%p687) target = $region89
      $region88: #{dense_fc_forward.15} parent=5 // pred_region
        %s690 = ssub.s32 %s14, 2
        // Predicated region
        $region90: #{dense_fc_forward.15} parent=88 // pred_check
          %p691 = pneg %p212
        $region91: #{dense_fc_forward.15} parent=88 // pred_check_branch
          %693 = sbr.rel (%p691) target = $region93
        $region92: #{dense_fc_forward.15} parent=88 // pred_region
          %s694 = sand.u32 %s197, 1
          %s695 = sand.u32 %s197, 1
          %s696 = smul.addr %s695, 52
          %s697 = scalar_lea.vmem [#allocation3], %s696
        $region93: #{dense_fc_forward.15} parent=88 // pred_fallthru
          _
      $region89: #{dense_fc_forward.15} parent=5 // pred_fallthru
        _
    $region6: #{dense_fc_forward.15} parent=1 // loop_footer
      %s18 = sadd.s32 1, %s14
    $region7: #{dense_fc_forward.15} parent=1 // loop_footer_branch
      %13 = sbr.rel target = $region3
    $region8: #{dense_fc_forward.15} parent=1 // loop_exit
      _

// kernel: dense_fc_forward.13
$region0: #{dense_fc_forward.13}
  #allocation0 [shape = 'u32[]', space=smem, size = 0x4, offset = 0x4, fixed_abs, tag = 'smem constant byte address 0x4 - core index']
  #allocation1 [shape = 'u32[144,128]{1,0:T(1,128)}', space=vmem, size = 0x12000, scoped, tag = 'internal scratch']
  #allocation2 [shape = 'f32[208,128]{1,0:T(8,128)}', space=vmem, size = 0x1a000, scoped, tag = 'scratch operand']
  %s0 = inlined_call_operand.vmem [shape: bf16[204,512], index: 0, kind: input, shape index: {}]
  %s1 = inlined_call_operand.vmem [shape: bf16[128,128], index: 1, kind: input, shape index: {}]
  %s2 = inlined_call_operand.vmem [shape: f32[1,128], index: 2, kind: input, shape index: {}]
  %s3 = inlined_call_operand.vmem [shape: bf16[204,128], index: 3, kind: output, shape index: {}]
  %s4 = sld [smem:[#allocation0]]
  $region71: #{dense_fc_forward.13} parent=0
    _
  %s6 = ssub.s32 1, %s4
  %s7 = scalar_select 0, %s6, %s4
  $region1: #{dense_fc_forward.13} parent=0
    #allocation3 [shape = 'u8[53248]{0}', space=vmem, size = 0xd000, scoped, tag = 'input window, operand 0, single buffered']
    // Predicated region
    $region2: #{dense_fc_forward.13} parent=1 // pred_check
      _
    $region3: #{dense_fc_forward.13} parent=1 // pred_check_branch
      %9 = sbr.rel (0) target = $region5
    $region4: #{dense_fc_forward.13} parent=1 // pred_region
      // Predicated region
      $region6: #{dense_fc_forward.13} parent=4 // pred_check
        _
      $region7: #{dense_fc_forward.13} parent=4 // pred_check_branch
        %11 = sbr.rel (0) target = $region9
      $region8: #{dense_fc_forward.13} parent=4 // pred_region
        // Predicated region
        $region10: #{dense_fc_forward.13} parent=8 // pred_check
          _
        $region11: #{dense_fc_forward.13} parent=8 // pred_check_branch
          %13 = sbr.rel target = $region13
        $region12: #{dense_fc_forward.13} parent=8 // pred_region
          // Predicated region
          $region25: #{dense_fc_forward.13} parent=12 // pred_check
            _
          $region26: #{dense_fc_forward.13} parent=12 // pred_check_branch
            %78 = sbr.rel (0) target = $region28
          $region27: #{dense_fc_forward.13} parent=12 // pred_region
            loop: start=0, step=1, limit=1
            $region29: #{dense_fc_forward.13} parent=27 // loop_pre_header
              _
            $region30: #{dense_fc_forward.13} parent=27 // loop_header
              %s80 = sphi 0, %s84
              %p81 = scmp.ge.s32.totalorder %s80, 1
              %s85 = sphi %s0, %s0
              %s86 = sphi [#allocation3], [#allocation3]
            $region31: #{dense_fc_forward.13} parent=27 // loop_header_branch
              %83 = sbr.rel (%p81) target = $region35
            $region32: #{dense_fc_forward.13} parent=27 // loop_body
              _
            $region33: #{dense_fc_forward.13} parent=27 // loop_footer
              %s84 = sadd.s32 1, %s80
            $region34: #{dense_fc_forward.13} parent=27 // loop_footer_branch
              %79 = sbr.rel target = $region30
            $region35: #{dense_fc_forward.13} parent=27 // loop_exit
              _
            loop: start=0, step=1, limit=1
            $region36: #{dense_fc_forward.13} parent=27 // loop_pre_header
              _
            $region37: #{dense_fc_forward.13} parent=27 // loop_header
              %s89 = sphi 0, %s93
              %p90 = scmp.ge.s32.totalorder %s89, 1
              %s94 = sphi %s0, %s0
              %s95 = sphi [#allocation3], [#allocation3]
            $region38: #{dense_fc_forward.13} parent=27 // loop_header_branch
              %92 = sbr.rel (%p90) target = $region42
            $region39: #{dense_fc_forward.13} parent=27 // loop_body
              %v96 = vld [vmem:[%s94] sm:$0xf]
              %97 = vst [vmem:[%s95] sm:$0xf] %v96
              %v98 = vld [vmem:[%s94 + $0x10] sm:$0xf]
              %99 = vst [vmem:[%s95 + $0x4] sm:$0xf] %v98
              %v100 = vld [vmem:[%s94 + $0x20] sm:$0xf]
              %101 = vst [vmem:[%s95 + $0x8] sm:$0xf] %v100
              %v102 = vld [vmem:[%s94 + $0x30] sm:$0xf]
              %103 = vst [vmem:[%s95 + $0xc] sm:$0xf] %v102
              %v104 = vld [vmem:[%s94 + $0x40] sm:$0xf]
              %105 = vst [vmem:[%s95 + $0x10] sm:$0xf] %v104
              %v106 = vld [vmem:[%s94 + $0x50] sm:$0xf]
              %107 = vst [vmem:[%s95 + $0x14] sm:$0xf] %v106
              %v108 = vld [vmem:[%s94 + $0x60] sm:$0xf]
              %109 = vst [vmem:[%s95 + $0x18] sm:$0xf] %v108
              %v110 = vld [vmem:[%s94 + $0x70] sm:$0xf]
              %111 = vst [vmem:[%s95 + $0x1c] sm:$0xf] %v110
              %v112 = vld [vmem:[%s94 + $0x80] sm:$0xf]
              %113 = vst [vmem:[%s95 + $0x20] sm:$0xf] %v112
              %v114 = vld [vmem:[%s94 + $0x90] sm:$0xf]
              %115 = vst [vmem:[%s95 + $0x24] sm:$0xf] %v114
              %v116 = vld [vmem:[%s94 + $0xa0] sm:$0xf]
              %117 = vst [vmem:[%s95 + $0x28] sm:$0xf] %v116
              %v118 = vld [vmem:[%s94 + $0xb0] sm:$0xf]
              %119 = vst [vmem:[%s95 + $0x2c] sm:$0xf] %v118
              %v120 = vld [vmem:[%s94 + $0xc0] sm:$0xf]
              %121 = vst [vmem:[%s95 + $0x30] sm:$0xf] %v120
              %v122 = vld [vmem:[%s94 + $0xd0] sm:$0xf]
              %123 = vst [vmem:[%s95 + $0x34] sm:$0xf] %v122
              %v124 = vld [vmem:[%s94 + $0xe0] sm:$0xf]
              %125 = vst [vmem:[%s95 + $0x38] sm:$0xf] %v124
              %v126 = vld [vmem:[%s94 + $0xf0] sm:$0xf]
              %127 = vst [vmem:[%s95 + $0x3c] sm:$0xf] %v126
              %v128 = vld [vmem:[%s94 + $0x100] sm:$0xf]
              %129 = vst [vmem:[%s95 + $0x40] sm:$0xf] %v128
              %v130 = vld [vmem:[%s94 + $0x110] sm:$0xf]
              %131 = vst [vmem:[%s95 + $0x44] sm:$0xf] %v130
              %v132 = vld [vmem:[%s94 + $0x120] sm:$0xf]
              %133 = vst [vmem:[%s95 + $0x48] sm:$0xf] %v132
              %v134 = vld [vmem:[%s94 + $0x130] sm:$0xf]
              %135 = vst [vmem:[%s95 + $0x4c] sm:$0xf] %v134
              %v136 = vld [vmem:[%s94 + $0x140] sm:$0xf]
              %137 = vst [vmem:[%s95 + $0x50] sm:$0xf] %v136
              %v138 = vld [vmem:[%s94 + $0x150] sm:$0xf]
              %139 = vst [vmem:[%s95 + $0x54] sm:$0xf] %v138
              %v140 = vld [vmem:[%s94 + $0x160] sm:$0xf]
              %141 = vst [vmem:[%s95 + $0x58] sm:$0xf] %v140
              %v142 = vld [vmem:[%s94 + $0x170] sm:$0xf]
              %143 = vst [vmem:[%s95 + $0x5c] sm:$0xf] %v142
              %v144 = vld [vmem:[%s94 + $0x180] sm:$0xf]
              %145 = vst [vmem:[%s95 + $0x60] sm:$0xf] %v144
              %v146 = vld [vmem:[%s94 + $0x190] sm:$0xf]
              %147 = vst [vmem:[%s95 + $0x64] sm:$0xf] %v146
            $region40: #{dense_fc_forward.13} parent=27 // loop_footer
              %s93 = sadd.s32 1, %s89
            $region41: #{dense_fc_forward.13} parent=27 // loop_footer_branch
              %88 = sbr.rel target = $region37
            $region42: #{dense_fc_forward.13} parent=27 // loop_exit
              _
          $region28: #{dense_fc_forward.13} parent=12 // pred_fallthru
            _
        $region13: #{dense_fc_forward.13} parent=8 // pred_fallthru
          _
        // Predicated region
        $region14: #{dense_fc_forward.13} parent=8 // pred_check
          _
        $region15: #{dense_fc_forward.13} parent=8 // pred_check_branch
          %15 = sbr.rel (0) target = $region17
        $region16: #{dense_fc_forward.13} parent=8 // pred_region
          loop: start=0, step=1, limit=1
          $region18: #{dense_fc_forward.13} parent=16 // loop_pre_header
            _
          $region19: #{dense_fc_forward.13} parent=16 // loop_header
            %s18 = sphi 0, %s22
            %p19 = scmp.ge.s32.totalorder %s18, 1
            %s23 = sphi %s0, %s0
            %s24 = sphi [#allocation3], [#allocation3]
          $region20: #{dense_fc_forward.13} parent=16 // loop_header_branch
            %21 = sbr.rel (%p19) target = $region24
          $region21: #{dense_fc_forward.13} parent=16 // loop_body
            %v25 = vld [vmem:[%s23] sm:$0xf]
            %26 = vst [vmem:[%s24] sm:$0xf] %v25
            %v27 = vld [vmem:[%s23 + $0x10] sm:$0xf]
            %28 = vst [vmem:[%s24 + $0x4] sm:$0xf] %v27
            %v29 = vld [vmem:[%s23 + $0x20] sm:$0xf]
            %30 = vst [vmem:[%s24 + $0x8] sm:$0xf] %v29
            %v31 = vld [vmem:[%s23 + $0x30] sm:$0xf]
            %32 = vst [vmem:[%s24 + $0xc] sm:$0xf] %v31
            %v33 = vld [vmem:[%s23 + $0x40] sm:$0xf]
            %34 = vst [vmem:[%s24 + $0x10] sm:$0xf] %v33
            %v35 = vld [vmem:[%s23 + $0x50] sm:$0xf]
            %36 = vst [vmem:[%s24 + $0x14] sm:$0xf] %v35
            %v37 = vld [vmem:[%s23 + $0x60] sm:$0xf]
            %38 = vst [vmem:[%s24 + $0x18] sm:$0xf] %v37
            %v39 = vld [vmem:[%s23 + $0x70] sm:$0xf]
            %40 = vst [vmem:[%s24 + $0x1c] sm:$0xf] %v39
            %v41 = vld [vmem:[%s23 + $0x80] sm:$0xf]
            %42 = vst [vmem:[%s24 + $0x20] sm:$0xf] %v41
            %v43 = vld [vmem:[%s23 + $0x90] sm:$0xf]
            %44 = vst [vmem:[%s24 + $0x24] sm:$0xf] %v43
            %v45 = vld [vmem:[%s23 + $0xa0] sm:$0xf]
            %46 = vst [vmem:[%s24 + $0x28] sm:$0xf] %v45
            %v47 = vld [vmem:[%s23 + $0xb0] sm:$0xf]
            %48 = vst [vmem:[%s24 + $0x2c] sm:$0xf] %v47
            %v49 = vld [vmem:[%s23 + $0xc0] sm:$0xf]
            %50 = vst [vmem:[%s24 + $0x30] sm:$0xf] %v49
            %v51 = vld [vmem:[%s23 + $0xd0] sm:$0xf]
            %52 = vst [vmem:[%s24 + $0x34] sm:$0xf] %v51
            %v53 = vld [vmem:[%s23 + $0xe0] sm:$0xf]
            %54 = vst [vmem:[%s24 + $0x38] sm:$0xf] %v53
            %v55 = vld [vmem:[%s23 + $0xf0] sm:$0xf]
            %56 = vst [vmem:[%s24 + $0x3c] sm:$0xf] %v55
            %v57 = vld [vmem:[%s23 + $0x100] sm:$0xf]
            %58 = vst [vmem:[%s24 + $0x40] sm:$0xf] %v57
            %v59 = vld [vmem:[%s23 + $0x110] sm:$0xf]
            %60 = vst [vmem:[%s24 + $0x44] sm:$0xf] %v59
            %v61 = vld [vmem:[%s23 + $0x120] sm:$0xf]
            %62 = vst [vmem:[%s24 + $0x48] sm:$0xf] %v61
            %v63 = vld [vmem:[%s23 + $0x130] sm:$0xf]
            %64 = vst [vmem:[%s24 + $0x4c] sm:$0xf] %v63
            %v65 = vld [vmem:[%s23 + $0x140] sm:$0xf]
            %66 = vst [vmem:[%s24 + $0x50] sm:$0xf] %v65
            %v67 = vld [vmem:[%s23 + $0x150] sm:$0xf]
            %68 = vst [vmem:[%s24 + $0x54] sm:$0xf] %v67
            %v69 = vld [vmem:[%s23 + $0x160] sm:$0xf]
            %70 = vst [vmem:[%s24 + $0x58] sm:$0xf] %v69
            %v71 = vld [vmem:[%s23 + $0x170] sm:$0xf]
            %72 = vst [vmem:[%s24 + $0x5c] sm:$0xf] %v71
            %v73 = vld [vmem:[%s23 + $0x180] sm:$0xf]
            %74 = vst [vmem:[%s24 + $0x60] sm:$0xf] %v73
            %v75 = vld [vmem:[%s23 + $0x190] sm:$0xf]
            %76 = vst [vmem:[%s24 + $0x64] sm:$0xf] %v75
          $region22: #{dense_fc_forward.13} parent=16 // loop_footer
            %s22 = sadd.s32 1, %s18
          $region23: #{dense_fc_forward.13} parent=16 // loop_footer_branch
            %17 = sbr.rel target = $region19
          $region24: #{dense_fc_forward.13} parent=16 // loop_exit
            _
        $region17: #{dense_fc_forward.13} parent=8 // pred_fallthru
          _
      $region9: #{dense_fc_forward.13} parent=4 // pred_fallthru
        _
      %148 = vnop
    $region5: #{dense_fc_forward.13} parent=1 // pred_fallthru
      _
    // Predicated region
    $region43: #{dense_fc_forward.13} parent=1 // pred_check
      _
    $region44: #{dense_fc_forward.13} parent=1 // pred_check_branch
      %150 = sbr.rel (0) target = $region46
    $region45: #{dense_fc_forward.13} parent=1 // pred_region
      _
    $region46: #{dense_fc_forward.13} parent=1 // pred_fallthru
      _
    // Predicated region
    $region47: #{dense_fc_forward.13} parent=1 // pred_check
      _
    $region48: #{dense_fc_forward.13} parent=1 // pred_check_branch
      %152 = sbr.rel (0) target = $region50
    $region49: #{dense_fc_forward.13} parent=1 // pred_region
      _
    $region50: #{dense_fc_forward.13} parent=1 // pred_fallthru
      _
    // Predicated region
    $region51: #{dense_fc_forward.13} parent=1 // pred_check
      _
    $region52: #{dense_fc_forward.13} parent=1 // pred_check_branch
      %154 = sbr.rel (0) target = $region54
    $region53: #{dense_fc_forward.13} parent=1 // pred_region
      _
    $region54: #{dense_fc_forward.13} parent=1 // pred_fallthru
      _
    %p156 = scmp.eq.s32.totalorder 0, 0
    // Predicated region
    $region55: #{dense_fc_forward.13} parent=1 // pred_check
      %p157 = pneg %p156
    $region56: #{dense_fc_forward.13} parent=1 // pred_check_branch
      %159 = sbr.rel (%p157) target = $region58
    $region57: #{dense_fc_forward.13} parent=1 // pred_region
      %160 = vst [vmem:[#allocation2] sm:$0xff] 0.0
      %161 = vst [vmem:[#allocation2 + $0x8] sm:$0xff] 0.0
      %162 = vst [vmem:[#allocation2 + $0x10] sm:$0xff] 0.0
      %163 = vst [vmem:[#allocation2 + $0x18] sm:$0xff] 0.0
      %164 = vst [vmem:[#allocation2 + $0x20] sm:$0xff] 0.0
      %165 = vst [vmem:[#allocation2 + $0x28] sm:$0xff] 0.0
      %166 = vst [vmem:[#allocation2 + $0x30] sm:$0xff] 0.0
      %167 = vst [vmem:[#allocation2 + $0x38] sm:$0xff] 0.0
      %168 = vst [vmem:[#allocation2 + $0x40] sm:$0xff] 0.0
      %169 = vst [vmem:[#allocation2 + $0x48] sm:$0xff] 0.0
      %170 = vst [vmem:[#allocation2 + $0x50] sm:$0xff] 0.0
      %171 = vst [vmem:[#allocation2 + $0x58] sm:$0xff] 0.0
      %172 = vst [vmem:[#allocation2 + $0x60] sm:$0xff] 0.0
      %173 = vst [vmem:[#allocation2 + $0x68] sm:$0xff] 0.0
      %174 = vst [vmem:[#allocation2 + $0x70] sm:$0xff] 0.0
      %175 = vst [vmem:[#allocation2 + $0x78] sm:$0xff] 0.0
      %176 = vst [vmem:[#allocation2 + $0x80] sm:$0xff] 0.0
      %177 = vst [vmem:[#allocation2 + $0x88] sm:$0xff] 0.0
      %178 = vst [vmem:[#allocation2 + $0x90] sm:$0xff] 0.0
      %179 = vst [vmem:[#allocation2 + $0x98] sm:$0xff] 0.0
      %180 = vst [vmem:[#allocation2 + $0xa0] sm:$0xff] 0.0
      %181 = vst [vmem:[#allocation2 + $0xa8] sm:$0xff] 0.0
      %182 = vst [vmem:[#allocation2 + $0xb0] sm:$0xff] 0.0
      %183 = vst [vmem:[#allocation2 + $0xb8] sm:$0xff] 0.0
      %184 = vst [vmem:[#allocation2 + $0xc0] sm:$0xff] 0.0
      %185 = vst [vmem:[#allocation2 + $0xc8] sm:$0xff] 0.0
    $region58: #{dense_fc_forward.13} parent=1 // pred_fallthru
      _
    %v186 = vld [vmem:[#allocation2] sm:$0xff]
    %v187 = vld [vmem:[#allocation2 + $0x8] sm:$0xff]
    %v188 = vld [vmem:[#allocation2 + $0x10] sm:$0xff]
    %v189 = vld [vmem:[#allocation2 + $0x18] sm:$0xff]
    %v190 = vld [vmem:[#allocation2 + $0x20] sm:$0xff]
    %v191 = vld [vmem:[#allocation2 + $0x28] sm:$0xff]
    %v192 = vld [vmem:[#allocation2 + $0x30] sm:$0xff]
    %v193 = vld [vmem:[#allocation2 + $0x38] sm:$0xff]
    %v194 = vld [vmem:[#allocation2 + $0x40] sm:$0xff]
    %v195 = vld [vmem:[#allocation2 + $0x48] sm:$0xff]
    %v196 = vld [vmem:[#allocation2 + $0x50] sm:$0xff]
    %v197 = vld [vmem:[#allocation2 + $0x58] sm:$0xff]
    %v198 = vld [vmem:[#allocation2 + $0x60] sm:$0xff]
    %v199 = vld [vmem:[#allocation2 + $0x68] sm:$0xff]
    %v200 = vld [vmem:[#allocation2 + $0x70] sm:$0xff]
    %v201 = vld [vmem:[#allocation2 + $0x78] sm:$0xff]
    %v202 = vld [vmem:[#allocation2 + $0x80] sm:$0xff]
    %v203 = vld [vmem:[#allocation2 + $0x88] sm:$0xff]
    %v204 = vld [vmem:[#allocation2 + $0x90] sm:$0xff]
    %v205 = vld [vmem:[#allocation2 + $0x98] sm:$0xff]
    %v206 = vld [vmem:[#allocation2 + $0xa0] sm:$0xff]
    %v207 = vld [vmem:[#allocation2 + $0xa8] sm:$0xff]
    %v208 = vld [vmem:[#allocation2 + $0xb0] sm:$0xff]
    %v209 = vld [vmem:[#allocation2 + $0xb8] sm:$0xff]
    %v210 = vld [vmem:[#allocation2 + $0xc0] sm:$0xff]
    %v211 = vld [vmem:[#allocation2 + $0xc8] sm:$0xff]
    %v212 = vld [vmem:[#allocation3] sm:$0xf]
    %v213 = vld [vmem:[#allocation3 + $0x4] sm:$0xf]
    %v214 = vld [vmem:[#allocation3 + $0x8] sm:$0xf]
    %v215 = vld [vmem:[#allocation3 + $0xc] sm:$0xf]
    %v216 = vld [vmem:[#allocation3 + $0x10] sm:$0xf]
    %v217 = vld [vmem:[#allocation3 + $0x14] sm:$0xf]
    %v218 = vld [vmem:[#allocation3 + $0x18] sm:$0xf]
    %v219 = vld [vmem:[#allocation3 + $0x1c] sm:$0xf]
    %v220 = vld [vmem:[#allocation3 + $0x20] sm:$0xf]
    %v221 = vld [vmem:[#allocation3 + $0x24] sm:$0xf]
    %v222 = vld [vmem:[#allocation3 + $0x28] sm:$0xf]
    %v223 = vld [vmem:[#allocation3 + $0x2c] sm:$0xf]
    %v224 = vld [vmem:[#allocation3 + $0x30] sm:$0xf]
    %v225 = vld [vmem:[#allocation3 + $0x34] sm:$0xf]
    %v226 = vld [vmem:[#allocation3 + $0x38] sm:$0xf]
    %v227 = vld [vmem:[#allocation3 + $0x3c] sm:$0xf]
    %v228 = vld [vmem:[#allocation3 + $0x40] sm:$0xf]
    %v229 = vld [vmem:[#allocation3 + $0x44] sm:$0xf]
    %v230 = vld [vmem:[#allocation3 + $0x48] sm:$0xf]
    %v231 = vld [vmem:[#allocation3 + $0x4c] sm:$0xf]
    %v232 = vld [vmem:[#allocation3 + $0x50] sm:$0xf]
    %v233 = vld [vmem:[#allocation3 + $0x54] sm:$0xf]
    %v234 = vld [vmem:[#allocation3 + $0x58] sm:$0xf]
    %v235 = vld [vmem:[#allocation3 + $0x5c] sm:$0xf]
    %v236 = vld [vmem:[#allocation3 + $0x60] sm:$0xf]
    %v237 = vld [vmem:[#allocation3 + $0x64] sm:$0xf]
    %v238 = vld [vmem:[%s1] sm:$0xf]
    %v239 = vld [vmem:[%s1 + $0x4] sm:$0xf]
    %v240 = vld [vmem:[%s1 + $0x8] sm:$0xf]
    %v241 = vld [vmem:[%s1 + $0xc] sm:$0xf]
    %v242 = vld [vmem:[%s1 + $0x10] sm:$0xf]
    %v243 = vld [vmem:[%s1 + $0x14] sm:$0xf]
    %v244 = vld [vmem:[%s1 + $0x18] sm:$0xf]
    %v245 = vld [vmem:[%s1 + $0x1c] sm:$0xf]
    %v246 = vld [vmem:[%s1 + $0x20] sm:$0xf]
    %v247 = vld [vmem:[%s1 + $0x24] sm:$0xf]
    %v248 = vld [vmem:[%s1 + $0x28] sm:$0xf]
    %v249 = vld [vmem:[%s1 + $0x2c] sm:$0xf]
    %v250 = vld [vmem:[%s1 + $0x30] sm:$0xf]
    %v251 = vld [vmem:[%s1 + $0x34] sm:$0xf]
    %v252 = vld [vmem:[%s1 + $0x38] sm:$0xf]
    %v253 = vld [vmem:[%s1 + $0x3c] sm:$0xf]
    %v280 = vunpack.c.l.b16 %v212
    %v281 = vunpack.c.l.b16 %v213
    %v282 = vunpack.c.l.b16 %v214
    %v283 = vunpack.c.l.b16 %v215
    %v284 = vunpack.c.l.b16 %v216
    %v285 = vunpack.c.l.b16 %v217
    %v286 = vunpack.c.l.b16 %v218
    %v287 = vunpack.c.l.b16 %v219
    %v288 = vunpack.c.l.b16 %v220
    %v289 = vunpack.c.l.b16 %v221
    %v290 = vunpack.c.l.b16 %v222
    %v291 = vunpack.c.l.b16 %v223
    %v292 = vunpack.c.l.b16 %v224
    %v293 = vunpack.c.l.b16 %v225
    %v294 = vunpack.c.l.b16 %v226
    %v295 = vunpack.c.l.b16 %v227
    %v296 = vunpack.c.l.b16 %v228
    %v297 = vunpack.c.l.b16 %v229
    %v298 = vunpack.c.l.b16 %v230
    %v299 = vunpack.c.l.b16 %v231
    %v300 = vunpack.c.l.b16 %v232
    %v301 = vunpack.c.l.b16 %v233
    %v302 = vunpack.c.l.b16 %v234
    %v303 = vunpack.c.l.b16 %v235
    %v304 = vunpack.c.l.b16 %v236
    %v305 = vunpack.c.l.b16 %v237
    %v306 = vpack.c.b16 %v281, %v280
    %v307 = vpack.c.b16 %v283, %v282
    %v308 = vpack.c.b16 %v285, %v284
    %v309 = vpack.c.b16 %v287, %v286
    %v310 = vpack.c.b16 %v289, %v288
    %v311 = vpack.c.b16 %v291, %v290
    %v312 = vpack.c.b16 %v293, %v292
    %v313 = vpack.c.b16 %v295, %v294
    %v314 = vpack.c.b16 %v297, %v296
    %v315 = vpack.c.b16 %v299, %v298
    %v316 = vpack.c.b16 %v301, %v300
    %v317 = vpack.c.b16 %v303, %v302
    %v318 = vpack.c.b16 %v305, %v304
    %v348 = vunpack.c.l.b16 %v238
    %v349 = vunpack.c.l.b16 %v239
    %v350 = vunpack.c.l.b16 %v240
    %v351 = vunpack.c.l.b16 %v241
    %v352 = vunpack.c.l.b16 %v242
    %v353 = vunpack.c.l.b16 %v243
    %v354 = vunpack.c.l.b16 %v244
    %v355 = vunpack.c.l.b16 %v245
    %v356 = vunpack.c.l.b16 %v246
    %v357 = vunpack.c.l.b16 %v247
    %v358 = vunpack.c.l.b16 %v248
    %v359 = vunpack.c.l.b16 %v249
    %v360 = vunpack.c.l.b16 %v250
    %v361 = vunpack.c.l.b16 %v251
    %v362 = vunpack.c.l.b16 %v252
    %v363 = vunpack.c.l.b16 %v253
    %v364 = vpack.c.b16 %v349, %v348
    %v365 = vpack.c.b16 %v351, %v350
    %v366 = vpack.c.b16 %v353, %v352
    %v367 = vpack.c.b16 %v355, %v354
    %v368 = vpack.c.b16 %v357, %v356
    %v369 = vpack.c.b16 %v359, %v358
    %v370 = vpack.c.b16 %v361, %v360
    %v371 = vpack.c.b16 %v363, %v362
    %380 = vmatprep.subr.bf16.mxu0 0
    %381 = vmatpush1.bf16.msra.mxu0 %v364
    %382 = vmatprep.subr.bf16.mxu0 0
    %383 = vmatpush1.bf16.msra.mxu0 %v365
    %384 = vmatprep.subr.bf16.mxu0 0
    %385 = vmatpush1.bf16.msra.mxu0 %v366
    %386 = vmatprep.subr.bf16.mxu0 0
    %387 = vmatpush1.bf16.msra.mxu0 %v367
    %388 = vmatprep.subr.bf16.mxu0 0
    %389 = vmatpush1.bf16.msra.mxu0 %v368
    %390 = vmatprep.subr.bf16.mxu0 0
    %391 = vmatpush1.bf16.msra.mxu0 %v369
    %392 = vmatprep.subr.bf16.mxu0 0
    %393 = vmatpush1.bf16.msra.mxu0 %v370
    %394 = vmatprep.subr.bf16.mxu0 0
    %395 = vmatpush1.bf16.msra.mxu0 %v371
    %396 = vmatprep.subr.bf16.mxu0 0
    %397 = vmatpush1.bf16.msra.mxu0 0
    %398 = vmatprep.subr.bf16.mxu0 0
    %399 = vmatpush1.bf16.msra.mxu0 0
    %400 = vmatprep.subr.bf16.mxu0 0
    %401 = vmatpush1.bf16.msra.mxu0 0
    %402 = vmatprep.subr.bf16.mxu0 0
    %403 = vmatpush1.bf16.msra.mxu0 0
    %404 = vmatprep.subr.bf16.mxu0 0
    %405 = vmatpush1.bf16.msra.mxu0 0
    %406 = vmatprep.subr.bf16.mxu0 0
    %407 = vmatpush1.bf16.msra.mxu0 0
    %408 = vmatprep.subr.bf16.mxu0 0
    %409 = vmatpush1.bf16.msra.mxu0 0
    %410 = vmatprep.subr.bf16.mxu0 0
    %411 = vmatpush1.bf16.msra.mxu0 0
    %412 = vmatprep.mubr.bf16.mxu0 0
    %413 = vmatmul.mubr.bf16.gmra.mrb[0].mxu0 %v306
    %v414 = vpop.f32.mrb[0].mxu0
    %v415 = vadd.f32 0.0, %v414
    %v416 = vpop.f32.mrb[0].mxu0
    %v417 = vpop.f32.mrb[0].mxu0
    %v418 = vadd.f32 0.0, %v417
    %v419 = vpop.f32.mrb[0].mxu0
    %420 = vmatprep.mubr.bf16.mxu0 0
    %421 = vmatmul.mubr.bf16.gmra.mrb[0].mxu0 %v307
    %v422 = vpop.f32.mrb[0].mxu0
    %v423 = vadd.f32 0.0, %v422
    %v424 = vpop.f32.mrb[0].mxu0
    %v425 = vpop.f32.mrb[0].mxu0
    %v426 = vadd.f32 0.0, %v425
    %v427 = vpop.f32.mrb[0].mxu0
    %428 = vmatprep.mubr.bf16.mxu0 0
    %429 = vmatmul.mubr.bf16.gmra.mrb[0].mxu0 %v308
    %v430 = vpop.f32.mrb[0].mxu0
    %v431 = vadd.f32 0.0, %v430
    %v432 = vpop.f32.mrb[0].mxu0
    %v433 = vpop.f32.mrb[0].mxu0
    %v434 = vadd.f32 0.0, %v433
    %v435 = vpop.f32.mrb[0].mxu0
    %436 = vmatprep.mubr.bf16.mxu0 0
    %437 = vmatmul.mubr.bf16.gmra.mrb[0].mxu0 %v309
    %v438 = vpop.f32.mrb[0].mxu0
    %v439 = vadd.f32 0.0, %v438
    %v440 = vpop.f32.mrb[0].mxu0
    %v441 = vpop.f32.mrb[0].mxu0
    %v442 = vadd.f32 0.0, %v441
    %v443 = vpop.f32.mrb[0].mxu0
    %444 = vmatprep.mubr.bf16.mxu0 0
    %445 = vmatmul.mubr.bf16.gmra.mrb[0].mxu0 %v310
    %v446 = vpop.f32.mrb[0].mxu0
    %v447 = vadd.f32 0.0, %v446
    %v448 = vpop.f32.mrb[0].mxu0
    %v449 = vpop.f32.mrb[0].mxu0
    %v450 = vadd.f32 0.0, %v449
    %v451 = vpop.f32.mrb[0].mxu0
    %452 = vmatprep.mubr.bf16.mxu0 0
    %453 = vmatmul.mubr.bf16.gmra.mrb[0].mxu0 %v311
    %v454 = vpop.f32.mrb[0].mxu0
    %v455 = vadd.f32 0.0, %v454
    %v456 = vpop.f32.mrb[0].mxu0
    %v457 = vpop.f32.mrb[0].mxu0
    %v458 = vadd.f32 0.0, %v457
    %v459 = vpop.f32.mrb[0].mxu0
    %460 = vmatprep.mubr.bf16.mxu0 0
    %461 = vmatmul.mubr.bf16.gmra.mrb[0].mxu0 %v312
    %v462 = vpop.f32.mrb[0].mxu0
    %v463 = vadd.f32 0.0, %v462
    %v464 = vpop.f32.mrb[0].mxu0
    %v465 = vpop.f32.mrb[0].mxu0
    %v466 = vadd.f32 0.0, %v465
    %v467 = vpop.f32.mrb[0].mxu0
    %468 = vmatprep.mubr.bf16.mxu0 0
    %469 = vmatmul.mubr.bf16.gmra.mrb[0].mxu0 %v313
    %v470 = vpop.f32.mrb[0].mxu0
    %v471 = vadd.f32 0.0, %v470
    %v472 = vpop.f32.mrb[0].mxu0
    %v473 = vpop.f32.mrb[0].mxu0
    %v474 = vadd.f32 0.0, %v473
    %v475 = vpop.f32.mrb[0].mxu0
    %476 = vmatprep.mubr.bf16.mxu0 0
    %477 = vmatmul.mubr.bf16.gmra.mrb[0].mxu0 %v314
    %v478 = vpop.f32.mrb[0].mxu0
    %v479 = vadd.f32 0.0, %v478
    %v480 = vpop.f32.mrb[0].mxu0
    %v481 = vpop.f32.mrb[0].mxu0
    %v482 = vadd.f32 0.0, %v481
    %v483 = vpop.f32.mrb[0].mxu0
    %484 = vmatprep.mubr.bf16.mxu0 0
    %485 = vmatmul.mubr.bf16.gmra.mrb[0].mxu0 %v315
    %v486 = vpop.f32.mrb[0].mxu0
    %v487 = vadd.f32 0.0, %v486
    %v488 = vpop.f32.mrb[0].mxu0
    %v489 = vpop.f32.mrb[0].mxu0
    %v490 = vadd.f32 0.0, %v489
    %v491 = vpop.f32.mrb[0].mxu0
    %492 = vmatprep.mubr.bf16.mxu0 0
    %493 = vmatmul.mubr.bf16.gmra.mrb[0].mxu0 %v316
    %v494 = vpop.f32.mrb[0].mxu0
    %v495 = vadd.f32 0.0, %v494
    %v496 = vpop.f32.mrb[0].mxu0
    %v497 = vpop.f32.mrb[0].mxu0
    %v498 = vadd.f32 0.0, %v497
    %v499 = vpop.f32.mrb[0].mxu0
    %500 = vmatprep.mubr.bf16.mxu0 0
    %501 = vmatmul.mubr.bf16.gmra.mrb[0].mxu0 %v317
    %v502 = vpop.f32.mrb[0].mxu0
    %v503 = vadd.f32 0.0, %v502
    %v504 = vpop.f32.mrb[0].mxu0
    %v505 = vpop.f32.mrb[0].mxu0
    %v506 = vadd.f32 0.0, %v505
    %v507 = vpop.f32.mrb[0].mxu0
    %508 = vmatprep.mubr.bf16.mxu0 0
    %509 = vmatmul.mubr.bf16.gmra.mrb[0].mxu0 %v318
    %v510 = vpop.f32.mrb[0].mxu0
    %v511 = vadd.f32 0.0, %v510
    %v512 = vpop.f32.mrb[0].mxu0
    %v513 = vpop.f32.mrb[0].mxu0
    %v514 = vadd.f32 0.0, %v513
    %v515 = vpop.f32.mrb[0].mxu0
    %516 = vdwg.mxu0
    %v517 = vadd.f32 %v186, %v415
    %v518 = vadd.f32 %v187, %v418
    %v519 = vadd.f32 %v188, %v423
    %v520 = vadd.f32 %v189, %v426
    %v521 = vadd.f32 %v190, %v431
    %v522 = vadd.f32 %v191, %v434
    %v523 = vadd.f32 %v192, %v439
    %v524 = vadd.f32 %v193, %v442
    %v525 = vadd.f32 %v194, %v447
    %v526 = vadd.f32 %v195, %v450
    %v527 = vadd.f32 %v196, %v455
    %v528 = vadd.f32 %v197, %v458
    %v529 = vadd.f32 %v198, %v463
    %v530 = vadd.f32 %v199, %v466
    %v531 = vadd.f32 %v200, %v471
    %v532 = vadd.f32 %v201, %v474
    %v533 = vadd.f32 %v202, %v479
    %v534 = vadd.f32 %v203, %v482
    %v535 = vadd.f32 %v204, %v487
    %v536 = vadd.f32 %v205, %v490
    %v537 = vadd.f32 %v206, %v495
    %v538 = vadd.f32 %v207, %v498
    %v539 = vadd.f32 %v208, %v503
    %v540 = vadd.f32 %v209, %v506
    %v541 = vadd.f32 %v210, %v511
    %v542 = vadd.f32 %v211, %v514
    %543 = vst [vmem:[#allocation2] sm:$0xff] %v517
    %544 = vst [vmem:[#allocation2 + $0x8] sm:$0xff] %v518
    %545 = vst [vmem:[#allocation2 + $0x10] sm:$0xff] %v519
    %546 = vst [vmem:[#allocation2 + $0x18] sm:$0xff] %v520
    %547 = vst [vmem:[#allocation2 + $0x20] sm:$0xff] %v521
    %548 = vst [vmem:[#allocation2 + $0x28] sm:$0xff] %v522
    %549 = vst [vmem:[#allocation2 + $0x30] sm:$0xff] %v523
    %550 = vst [vmem:[#allocation2 + $0x38] sm:$0xff] %v524
    %551 = vst [vmem:[#allocation2 + $0x40] sm:$0xff] %v525
    %552 = vst [vmem:[#allocation2 + $0x48] sm:$0xff] %v526
    %553 = vst [vmem:[#allocation2 + $0x50] sm:$0xff] %v527
    %554 = vst [vmem:[#allocation2 + $0x58] sm:$0xff] %v528
    %555 = vst [vmem:[#allocation2 + $0x60] sm:$0xff] %v529
    %556 = vst [vmem:[#allocation2 + $0x68] sm:$0xff] %v530
    %557 = vst [vmem:[#allocation2 + $0x70] sm:$0xff] %v531
    %558 = vst [vmem:[#allocation2 + $0x78] sm:$0xff] %v532
    %559 = vst [vmem:[#allocation2 + $0x80] sm:$0xff] %v533
    %560 = vst [vmem:[#allocation2 + $0x88] sm:$0xff] %v534
    %561 = vst [vmem:[#allocation2 + $0x90] sm:$0xff] %v535
    %562 = vst [vmem:[#allocation2 + $0x98] sm:$0xff] %v536
    %563 = vst [vmem:[#allocation2 + $0xa0] sm:$0xff] %v537
    %564 = vst [vmem:[#allocation2 + $0xa8] sm:$0xff] %v538
    %565 = vst [vmem:[#allocation2 + $0xb0] sm:$0xff] %v539
    %566 = vst [vmem:[#allocation2 + $0xb8] sm:$0xff] %v540
    %567 = vst [vmem:[#allocation2 + $0xc0] sm:$0xff] %v541
    %568 = vst [vmem:[#allocation2 + $0xc8] sm:$0xff] %v542
    // Predicated region
    $region59: #{dense_fc_forward.13} parent=1 // pred_check
      %p569 = pneg %p156
    $region60: #{dense_fc_forward.13} parent=1 // pred_check_branch
      %571 = sbr.rel (%p569) target = $region62
    $region61: #{dense_fc_forward.13} parent=1 // pred_region
      %v572 = vld [vmem:[#allocation2] sm:$0xff]
      %v573 = vld [vmem:[#allocation2 + $0x8] sm:$0xff]
      %v574 = vld [vmem:[#allocation2 + $0x10] sm:$0xff]
      %v575 = vld [vmem:[#allocation2 + $0x18] sm:$0xff]
      %v576 = vld [vmem:[#allocation2 + $0x20] sm:$0xff]
      %v577 = vld [vmem:[#allocation2 + $0x28] sm:$0xff]
      %v578 = vld [vmem:[#allocation2 + $0x30] sm:$0xff]
      %v579 = vld [vmem:[#allocation2 + $0x38] sm:$0xff]
      %v580 = vld [vmem:[#allocation2 + $0x40] sm:$0xff]
      %v581 = vld [vmem:[#allocation2 + $0x48] sm:$0xff]
      %v582 = vld [vmem:[#allocation2 + $0x50] sm:$0xff]
      %v583 = vld [vmem:[#allocation2 + $0x58] sm:$0xff]
      %v584 = vld [vmem:[#allocation2 + $0x60] sm:$0xff]
      %v585 = vld [vmem:[#allocation2 + $0x68] sm:$0xff]
      %v586 = vld [vmem:[#allocation2 + $0x70] sm:$0xff]
      %v587 = vld [vmem:[#allocation2 + $0x78] sm:$0xff]
      %v588 = vld [vmem:[#allocation2 + $0x80] sm:$0xff]
      %v589 = vld [vmem:[#allocation2 + $0x88] sm:$0xff]
      %v590 = vld [vmem:[#allocation2 + $0x90] sm:$0xff]
      %v591 = vld [vmem:[#allocation2 + $0x98] sm:$0xff]
      %v592 = vld [vmem:[#allocation2 + $0xa0] sm:$0xff]
      %v593 = vld [vmem:[#allocation2 + $0xa8] sm:$0xff]
      %v594 = vld [vmem:[#allocation2 + $0xb0] sm:$0xff]
      %v595 = vld [vmem:[#allocation2 + $0xb8] sm:$0xff]
      %v596 = vld [vmem:[#allocation2 + $0xc0] sm:$0xff]
      %v597 = vld [vmem:[#allocation2 + $0xc8] sm:$0xff]
      %v598 = vld [vmem:[%s2] sm:$0x1]
      %v600 = vlaneseq
      %v601 = vshrl.u32 %v600, 7
      %v602 = vsub.s32 0, %v601
      %v603 = vrot.slane %v598, %v602
      %v605 = vadd.f32 %v572, %v603
      %v606 = vadd.f32 %v573, %v603
      %v607 = vadd.f32 %v574, %v603
      %v608 = vadd.f32 %v575, %v603
      %v609 = vadd.f32 %v576, %v603
      %v610 = vadd.f32 %v577, %v603
      %v611 = vadd.f32 %v578, %v603
      %v612 = vadd.f32 %v579, %v603
      %v613 = vadd.f32 %v580, %v603
      %v614 = vadd.f32 %v581, %v603
      %v615 = vadd.f32 %v582, %v603
      %v616 = vadd.f32 %v583, %v603
      %v617 = vadd.f32 %v584, %v603
      %v618 = vadd.f32 %v585, %v603
      %v619 = vadd.f32 %v586, %v603
      %v620 = vadd.f32 %v587, %v603
      %v621 = vadd.f32 %v588, %v603
      %v622 = vadd.f32 %v589, %v603
      %v623 = vadd.f32 %v590, %v603
      %v624 = vadd.f32 %v591, %v603
      %v625 = vadd.f32 %v592, %v603
      %v626 = vadd.f32 %v593, %v603
      %v627 = vadd.f32 %v594, %v603
      %v628 = vadd.f32 %v595, %v603
      %v629 = vadd.f32 %v596, %v603
      %v630 = vadd.f32 %v597, %v603
      %v631 = vpack.c.bf16 %v606, %v605
      %v632 = vpack.c.bf16 %v608, %v607
      %v633 = vpack.c.bf16 %v610, %v609
      %v634 = vpack.c.bf16 %v612, %v611
      %v635 = vpack.c.bf16 %v614, %v613
      %v636 = vpack.c.bf16 %v616, %v615
      %v637 = vpack.c.bf16 %v618, %v617
      %v638 = vpack.c.bf16 %v620, %v619
      %v639 = vpack.c.bf16 %v622, %v621
      %v640 = vpack.c.bf16 %v624, %v623
      %v641 = vpack.c.bf16 %v626, %v625
      %v642 = vpack.c.bf16 %v628, %v627
      %v643 = vpack.c.bf16 %v630, %v629
      %v657 = vunpack.c.l.b16 %v631
      %v658 = vunpack.c.h.b16 %v631
      %v659 = vunpack.c.l.b16 %v632
      %v660 = vunpack.c.h.b16 %v632
      %v661 = vunpack.c.l.b16 %v633
      %v662 = vunpack.c.h.b16 %v633
      %v663 = vunpack.c.l.b16 %v634
      %v664 = vunpack.c.h.b16 %v634
      %v665 = vunpack.c.l.b16 %v635
      %v666 = vunpack.c.h.b16 %v635
      %v667 = vunpack.c.l.b16 %v636
      %v668 = vunpack.c.h.b16 %v636
      %v669 = vunpack.c.l.b16 %v637
      %v670 = vunpack.c.h.b16 %v637
      %v671 = vunpack.c.l.b16 %v638
      %v672 = vunpack.c.h.b16 %v638
      %v673 = vunpack.c.l.b16 %v639
      %v674 = vunpack.c.h.b16 %v639
      %v675 = vunpack.c.l.b16 %v640
      %v676 = vunpack.c.h.b16 %v640
      %v677 = vunpack.c.l.b16 %v641
      %v678 = vunpack.c.h.b16 %v641
      %v679 = vunpack.c.l.b16 %v642
      %v680 = vunpack.c.h.b16 %v642
      %v681 = vunpack.c.l.b16 %v643
      %v682 = vunpack.c.h.b16 %v643
      %v683 = vpack.c.b16 %v657, %v657
      %v684 = vpack.c.b16 %v658, %v658
      %v685 = vpack.c.b16 %v659, %v659
      %v686 = vpack.c.b16 %v660, %v660
      %v687 = vpack.c.b16 %v661, %v661
      %v688 = vpack.c.b16 %v662, %v662
      %v689 = vpack.c.b16 %v663, %v663
      %v690 = vpack.c.b16 %v664, %v664
      %v691 = vpack.c.b16 %v665, %v665
      %v692 = vpack.c.b16 %v666, %v666
      %v693 = vpack.c.b16 %v667, %v667
      %v694 = vpack.c.b16 %v668, %v668
      %v695 = vpack.c.b16 %v669, %v669
      %v696 = vpack.c.b16 %v670, %v670
      %v697 = vpack.c.b16 %v671, %v671
      %v698 = vpack.c.b16 %v672, %v672
      %v699 = vpack.c.b16 %v673, %v673
      %v700 = vpack.c.b16 %v674, %v674
      %v701 = vpack.c.b16 %v675, %v675
      %v702 = vpack.c.b16 %v676, %v676
      %v703 = vpack.c.b16 %v677, %v677
      %v704 = vpack.c.b16 %v678, %v678
      %v705 = vpack.c.b16 %v679, %v679
      %v706 = vpack.c.b16 %v680, %v680
      %v707 = vpack.c.b16 %v681, %v681
      %v708 = vpack.c.b16 %v682, %v682
      %735 = vst [vmem:[%s3] sm:$0xf] %v683
      %736 = vst [vmem:[%s3 + $0x4] sm:$0xf] %v684
      %737 = vst [vmem:[%s3 + $0x8] sm:$0xf] %v685
      %738 = vst [vmem:[%s3 + $0xc] sm:$0xf] %v686
      %739 = vst [vmem:[%s3 + $0x10] sm:$0xf] %v687
      %740 = vst [vmem:[%s3 + $0x14] sm:$0xf] %v688
      %741 = vst [vmem:[%s3 + $0x18] sm:$0xf] %v689
      %742 = vst [vmem:[%s3 + $0x1c] sm:$0xf] %v690
      %743 = vst [vmem:[%s3 + $0x20] sm:$0xf] %v691
      %744 = vst [vmem:[%s3 + $0x24] sm:$0xf] %v692
      %745 = vst [vmem:[%s3 + $0x28] sm:$0xf] %v693
      %746 = vst [vmem:[%s3 + $0x2c] sm:$0xf] %v694
      %747 = vst [vmem:[%s3 + $0x30] sm:$0xf] %v695
      %748 = vst [vmem:[%s3 + $0x34] sm:$0xf] %v696
      %749 = vst [vmem:[%s3 + $0x38] sm:$0xf] %v697
      %750 = vst [vmem:[%s3 + $0x3c] sm:$0xf] %v698
      %751 = vst [vmem:[%s3 + $0x40] sm:$0xf] %v699
      %752 = vst [vmem:[%s3 + $0x44] sm:$0xf] %v700
      %753 = vst [vmem:[%s3 + $0x48] sm:$0xf] %v701
      %754 = vst [vmem:[%s3 + $0x4c] sm:$0xf] %v702
      %755 = vst [vmem:[%s3 + $0x50] sm:$0xf] %v703
      %756 = vst [vmem:[%s3 + $0x54] sm:$0xf] %v704
      %757 = vst [vmem:[%s3 + $0x58] sm:$0xf] %v705
      %758 = vst [vmem:[%s3 + $0x5c] sm:$0xf] %v706
      %759 = vst [vmem:[%s3 + $0x60] sm:$0xf] %v707
      %760 = vst [vmem:[%s3 + $0x64] sm:$0xf] %v708
    $region62: #{dense_fc_forward.13} parent=1 // pred_fallthru
      _
    // Predicated region
    $region63: #{dense_fc_forward.13} parent=1 // pred_check
      _
    $region64: #{dense_fc_forward.13} parent=1 // pred_check_branch
      %762 = sbr.rel (0) target = $region66
    $region65: #{dense_fc_forward.13} parent=1 // pred_region
      _
    $region66: #{dense_fc_forward.13} parent=1 // pred_fallthru
      _
    // Predicated region
    $region67: #{dense_fc_forward.13} parent=1 // pred_check
      _
    $region68: #{dense_fc_forward.13} parent=1 // pred_check_branch
      %764 = sbr.rel (0) target = $region70
    $region69: #{dense_fc_forward.13} parent=1 // pred_region
      _
    $region70: #{dense_fc_forward.13} parent=1 // pred_fallthru
      _

// kernel: dense_fc_forward.18
$region0: #{dense_fc_forward.18}
  #allocation0 [shape = 'u32[]', space=smem, size = 0x4, offset = 0x4, fixed_abs, tag = 'smem constant byte address 0x4 - core index']
  #allocation1 [shape = 'u32[144,128]{1,0:T(1,128)}', space=vmem, size = 0x12000, scoped, tag = 'internal scratch']
  #allocation2 [shape = 'f32[1]{0:T(128)S(6)}', space=smem, size = 0x200, scoped, tag = 'scoped memory for dense_fc_forward.18']
  %s0 = inlined_call_operand.vmem [shape: bf16[2,102,128], index: 0, kind: input, shape index: {}]
  %s1 = inlined_call_operand.vmem [shape: f32[2,8,128], index: 1, kind: input, shape index: {}]
  %s2 = inlined_call_operand.vmem [shape: f32[2,8,128], index: 2, kind: input, shape index: {}]
  %s3 = inlined_call_operand.vmem [shape: bf16[102,128], index: 3, kind: input, shape index: {}]
  %s4 = inlined_call_operand.vmem [shape: bf16[102,128], index: 4, kind: input, shape index: {}]
  %s5 = inlined_call_operand.<no memory space> [shape: f32[1], index: 5, kind: input, shape index: {}]
  %s6 = inlined_call_operand.vmem [shape: bf16[2,102,512], index: 6, kind: input, shape index: {}, may-alias: {6,7}]
  %s7 = inlined_call_operand.vmem [shape: bf16[2,102,512], index: 7, kind: output, shape index: {}, may-alias: {6,7}]
  %s8 = sld [smem:[#allocation0]]
  $region94: #{dense_fc_forward.18} parent=0
    _
  %s10 = ssub.s32 1, %s8
  %s11 = scalar_select 0, %s10, %s8
  %12 = sst [smem:[#allocation2]] %s5
  $region1: #{dense_fc_forward.18} parent=0
    #allocation3 [shape = 'u8[53248]{0}', space=vmem, size = 0xd000, scoped, tag = 'output window, operand 0']
    loop: start=0, step=1, limit=4
    $region2: #{dense_fc_forward.18} parent=1 // loop_pre_header
      _
    $region3: #{dense_fc_forward.18} parent=1 // loop_header
      %s14 = sphi 0, %s18
      %p15 = scmp.ge.s32.totalorder %s14, 4
      %s21 = sphi 0, %s33
      %s22 = sphi 0, %s29
      %s23 = sphi 0, %s21
      %s24 = sphi 0, %s22
      %s25 = sphi 0, %s23
      %s26 = sphi 0, %s24
      %s38 = sphi 0, %s40
      %s41 = sphi 0, %s38
      %s42 = sphi 0, %s41
      %s58 = sphi 0, %s42
      %s64 = sphi 0, %s66
      %s67 = sphi 0, %s64
      %s68 = sphi 0, %s67
      %s84 = sphi 0, %s68
      %s90 = sphi 0, %s92
      %s93 = sphi 0, %s90
      %s94 = sphi 0, %s93
      %s110 = sphi 0, %s94
      %s116 = sphi 0, %s118
      %s119 = sphi 0, %s116
      %s120 = sphi 0, %s119
      %s136 = sphi 0, %s120
      %s142 = sphi 0, %s144
      %s145 = sphi 0, %s142
      %s146 = sphi 0, %s145
      %s162 = sphi 0, %s146
      %s166 = sphi 0, %s166
      %s168 = sphi 0, %s166
      %s169 = sphi 0, %s168
      %s183 = sphi 0, %s169
      %s193 = sphi 0, %s195
      %s196 = sphi 0, %s193
      %s197 = sphi 0, %s196
      %s213 = sphi 0, %s197
    $region4: #{dense_fc_forward.18} parent=1 // loop_header_branch
      %17 = sbr.rel (%p15) target = $region8
    $region5: #{dense_fc_forward.18} parent=1 // loop_body
      %s19 = ssub.s32 %s14, 1
      %s20 = ssub.s32 %s14, 2
      %s27 = sadd.s32 1, %s22
      %p28 = scmp.ge.s32.totalorder %s27, 1
      %s29 = scalar_select %p28, 0, %s27
      %s30 = sadd.s32 1, %s21
      %s31 = scalar_select %p28, %s30, %s21
      %p32 = scmp.ge.s32.totalorder %s31, 2
      %s33 = scalar_select %p32, 0, %s31
      %s34 = ssub.s32 %s21, %s33
      %s35 = ssub.s32 %s22, %s29
      %s36 = sor.u32 %s34, %s35
      %p37 = scmp.eq.s32.totalorder %s36, 0
      %s39 = sadd.s32 %s38, 1
      %s40 = scalar_select %p37, %s38, %s39
      %p43 = pneg %p37
      %p44 = scmp.eq.s32.totalorder %s14, 1
      %p45 = por %p43, %p44
      %p46 = scmp.ne.s32.totalorder %s38, %s41
      %p47 = scmp.eq.s32.totalorder %s14, 0
      %p48 = por %p46, %p47
      %p49 = scmp.ne.s32.totalorder %s38, %s41
      %p50 = scmp.eq.s32.totalorder %s19, 1
      %p51 = por %p49, %p50
      %p52 = scmp.ne.s32.totalorder %s41, %s42
      %p53 = scmp.eq.s32.totalorder %s19, 0
      %p54 = por %p52, %p53
      %p55 = scmp.ne.s32.totalorder %s41, %s42
      %p56 = scmp.eq.s32.totalorder %s20, 1
      %p57 = por %p55, %p56
      %p59 = scmp.ne.s32.totalorder %s42, %s58
      %p60 = scmp.eq.s32.totalorder %s20, 0
      %p61 = por %p59, %p60
      %s62 = ssub.s32 %s21, %s33
      %p63 = scmp.eq.s32.totalorder %s62, 0
      %s65 = sadd.s32 %s64, 1
      %s66 = scalar_select %p63, %s64, %s65
      %p69 = pneg %p63
      %p70 = scmp.eq.s32.totalorder %s14, 1
      %p71 = por %p69, %p70
      %p72 = scmp.ne.s32.totalorder %s64, %s67
      %p73 = scmp.eq.s32.totalorder %s14, 0
      %p74 = por %p72, %p73
      %p75 = scmp.ne.s32.totalorder %s64, %s67
      %p76 = scmp.eq.s32.totalorder %s19, 1
      %p77 = por %p75, %p76
      %p78 = scmp.ne.s32.totalorder %s67, %s68
      %p79 = scmp.eq.s32.totalorder %s19, 0
      %p80 = por %p78, %p79
      %p81 = scmp.ne.s32.totalorder %s67, %s68
      %p82 = scmp.eq.s32.totalorder %s20, 1
      %p83 = por %p81, %p82
      %p85 = scmp.ne.s32.totalorder %s68, %s84
      %p86 = scmp.eq.s32.totalorder %s20, 0
      %p87 = por %p85, %p86
      %s88 = ssub.s32 %s21, %s33
      %p89 = scmp.eq.s32.totalorder %s88, 0
      %s91 = sadd.s32 %s90, 1
      %s92 = scalar_select %p89, %s90, %s91
      %p95 = pneg %p89
      %p96 = scmp.eq.s32.totalorder %s14, 1
      %p97 = por %p95, %p96
      %p98 = scmp.ne.s32.totalorder %s90, %s93
      %p99 = scmp.eq.s32.totalorder %s14, 0
      %p100 = por %p98, %p99
      %p101 = scmp.ne.s32.totalorder %s90, %s93
      %p102 = scmp.eq.s32.totalorder %s19, 1
      %p103 = por %p101, %p102
      %p104 = scmp.ne.s32.totalorder %s93, %s94
      %p105 = scmp.eq.s32.totalorder %s19, 0
      %p106 = por %p104, %p105
      %p107 = scmp.ne.s32.totalorder %s93, %s94
      %p108 = scmp.eq.s32.totalorder %s20, 1
      %p109 = por %p107, %p108
      %p111 = scmp.ne.s32.totalorder %s94, %s110
      %p112 = scmp.eq.s32.totalorder %s20, 0
      %p113 = por %p111, %p112
      %s114 = ssub.s32 %s22, %s29
      %p115 = scmp.eq.s32.totalorder %s114, 0
      %s117 = sadd.s32 %s116, 1
      %s118 = scalar_select %p115, %s116, %s117
      %p121 = pneg %p115
      %p122 = scmp.eq.s32.totalorder %s14, 1
      %p123 = por %p121, %p122
      %p124 = scmp.ne.s32.totalorder %s116, %s119
      %p125 = scmp.eq.s32.totalorder %s14, 0
      %p126 = por %p124, %p125
      %p127 = scmp.ne.s32.totalorder %s116, %s119
      %p128 = scmp.eq.s32.totalorder %s19, 1
      %p129 = por %p127, %p128
      %p130 = scmp.ne.s32.totalorder %s119, %s120
      %p131 = scmp.eq.s32.totalorder %s19, 0
      %p132 = por %p130, %p131
      %p133 = scmp.ne.s32.totalorder %s119, %s120
      %p134 = scmp.eq.s32.totalorder %s20, 1
      %p135 = por %p133, %p134
      %p137 = scmp.ne.s32.totalorder %s120, %s136
      %p138 = scmp.eq.s32.totalorder %s20, 0
      %p139 = por %p137, %p138
      %s140 = ssub.s32 %s22, %s29
      %p141 = scmp.eq.s32.totalorder %s140, 0
      %s143 = sadd.s32 %s142, 1
      %s144 = scalar_select %p141, %s142, %s143
      %p147 = pneg %p141
      %p148 = scmp.eq.s32.totalorder %s14, 1
      %p149 = por %p147, %p148
      %p150 = scmp.ne.s32.totalorder %s142, %s145
      %p151 = scmp.eq.s32.totalorder %s14, 0
      %p152 = por %p150, %p151
      %p153 = scmp.ne.s32.totalorder %s142, %s145
      %p154 = scmp.eq.s32.totalorder %s19, 1
      %p155 = por %p153, %p154
      %p156 = scmp.ne.s32.totalorder %s145, %s146
      %p157 = scmp.eq.s32.totalorder %s19, 0
      %p158 = por %p156, %p157
      %p159 = scmp.ne.s32.totalorder %s145, %s146
      %p160 = scmp.eq.s32.totalorder %s20, 1
      %p161 = por %p159, %p160
      %p163 = scmp.ne.s32.totalorder %s146, %s162
      %p164 = scmp.eq.s32.totalorder %s20, 0
      %p165 = por %p163, %p164
      %s167 = sadd.s32 %s166, 1
      %p170 = scmp.eq.s32.totalorder %s14, 1
      %p171 = scmp.ne.s32.totalorder %s166, %s168
      %p172 = scmp.eq.s32.totalorder %s14, 0
      %p173 = por %p171, %p172
      %p174 = scmp.ne.s32.totalorder %s166, %s168
      %p175 = scmp.eq.s32.totalorder %s19, 1
      %p176 = por %p174, %p175
      %p177 = scmp.ne.s32.totalorder %s168, %s169
      %p178 = scmp.eq.s32.totalorder %s19, 0
      %p179 = por %p177, %p178
      %p180 = scmp.ne.s32.totalorder %s168, %s169
      %p181 = scmp.eq.s32.totalorder %s20, 1
      %p182 = por %p180, %p181
      %p184 = scmp.ne.s32.totalorder %s169, %s183
      %p185 = scmp.eq.s32.totalorder %s20, 0
      %p186 = por %p184, %p185
      %s187 = sadd.s32 %s22, 2
      %s188 = sadd.s32 %s29, 2
      %s189 = ssub.s32 %s21, %s33
      %s190 = ssub.s32 %s187, %s188
      %s191 = sor.u32 %s189, %s190
      %p192 = scmp.eq.s32.totalorder %s191, 0
      %s194 = sadd.s32 %s193, 1
      %s195 = scalar_select %p192, %s193, %s194
      %p198 = pneg %p192
      %p199 = scmp.eq.s32.totalorder %s14, 1
      %p200 = por %p198, %p199
      %p201 = scmp.ne.s32.totalorder %s193, %s196
      %p202 = scmp.eq.s32.totalorder %s14, 0
      %p203 = por %p201, %p202
      %p204 = scmp.ne.s32.totalorder %s193, %s196
      %p205 = scmp.eq.s32.totalorder %s19, 1
      %p206 = por %p204, %p205
      %p207 = scmp.ne.s32.totalorder %s196, %s197
      %p208 = scmp.eq.s32.totalorder %s19, 0
      %p209 = por %p207, %p208
      %p210 = scmp.ne.s32.totalorder %s196, %s197
      %p211 = scmp.eq.s32.totalorder %s20, 1
      %p212 = por %p210, %p211
      %p214 = scmp.ne.s32.totalorder %s197, %s213
      %p215 = scmp.eq.s32.totalorder %s20, 0
      %p216 = por %p214, %p215
      %p217 = scmp.le.s32.totalorder 1, %s14
      %p218 = scmp.lt.s32.totalorder %s14, 3
      %p219 = pnand %p217, %p218
      %p220 = pneg %p219
      // Predicated region
      $region9: #{dense_fc_forward.18} parent=5 // pred_check
        _
      $region10: #{dense_fc_forward.18} parent=5 // pred_check_branch
        %222 = sbr.rel (%p219) target = $region12
      $region11: #{dense_fc_forward.18} parent=5 // pred_region
        %s223 = ssub.s32 %s14, 1
        // Predicated region
        $region13: #{dense_fc_forward.18} parent=11 // pred_check
          %p224 = pneg %p132
        $region14: #{dense_fc_forward.18} parent=11 // pred_check_branch
          %226 = sbr.rel (%p224) target = $region16
        $region15: #{dense_fc_forward.18} parent=11 // pred_region
          %p227 = scmp.lt.s32.totalorder %s24, 0
          %s228 = scalar_select %p227, %s24, 0
          %s229 = smul.addr %s228, 4
          %s230 = scalar_lea.vmem %s3, %s229
        $region16: #{dense_fc_forward.18} parent=11 // pred_fallthru
          _
        // Predicated region
        $region17: #{dense_fc_forward.18} parent=11 // pred_check
          %p231 = pneg %p158
        $region18: #{dense_fc_forward.18} parent=11 // pred_check_branch
          %233 = sbr.rel (%p231) target = $region20
        $region19: #{dense_fc_forward.18} parent=11 // pred_region
          %p234 = scmp.lt.s32.totalorder %s24, 0
          %s235 = scalar_select %p234, %s24, 0
          %s236 = smul.addr %s235, 4
          %s237 = scalar_lea.vmem %s4, %s236
        $region20: #{dense_fc_forward.18} parent=11 // pred_fallthru
          _
        // Predicated region
        $region21: #{dense_fc_forward.18} parent=11 // pred_check
          %p238 = pneg %p179
        $region22: #{dense_fc_forward.18} parent=11 // pred_check_branch
          %240 = sbr.rel (%p238) target = $region24
        $region23: #{dense_fc_forward.18} parent=11 // pred_region
          _
        $region24: #{dense_fc_forward.18} parent=11 // pred_fallthru
          _
      $region12: #{dense_fc_forward.18} parent=5 // pred_fallthru
        _
      %p241 = scmp.lt.s32.totalorder %s14, 2
      // Predicated region
      $region25: #{dense_fc_forward.18} parent=5 // pred_check
        %p242 = pneg %p241
      $region26: #{dense_fc_forward.18} parent=5 // pred_check_branch
        %244 = sbr.rel (%p242) target = $region28
      $region27: #{dense_fc_forward.18} parent=5 // pred_region
        // Predicated region
        $region29: #{dense_fc_forward.18} parent=27 // pred_check
          %p245 = pneg %p48
        $region30: #{dense_fc_forward.18} parent=27 // pred_check_branch
          %247 = sbr.rel (%p245) target = $region32
        $region31: #{dense_fc_forward.18} parent=27 // pred_region
          %p248 = scmp.lt.s32.totalorder %s21, 1
          %s249 = scalar_select %p248, %s21, 1
          %p250 = scmp.lt.s32.totalorder %s22, 0
          %s251 = scalar_select %p250, %s22, 0
          %s252 = smul.addr %s249, 13
          %s253 = sadd.s32 %s251, %s252
          %s254 = smul.addr %s253, 4
          %s255 = scalar_lea.vmem %s0, %s254
        $region32: #{dense_fc_forward.18} parent=27 // pred_fallthru
          _
        // Predicated region
        $region33: #{dense_fc_forward.18} parent=27 // pred_check
          %p256 = pneg %p74
        $region34: #{dense_fc_forward.18} parent=27 // pred_check_branch
          %258 = sbr.rel (%p256) target = $region36
        $region35: #{dense_fc_forward.18} parent=27 // pred_region
          %p259 = scmp.lt.s32.totalorder %s21, 1
          %s260 = scalar_select %p259, %s21, 1
          %s261 = smul.addr %s260, 8
          %s262 = scalar_lea.vmem %s1, %s261
        $region36: #{dense_fc_forward.18} parent=27 // pred_fallthru
          _
        // Predicated region
        $region37: #{dense_fc_forward.18} parent=27 // pred_check
          %p263 = pneg %p100
        $region38: #{dense_fc_forward.18} parent=27 // pred_check_branch
          %265 = sbr.rel (%p263) target = $region40
        $region39: #{dense_fc_forward.18} parent=27 // pred_region
          %p266 = scmp.lt.s32.totalorder %s21, 1
          %s267 = scalar_select %p266, %s21, 1
          %s268 = smul.addr %s267, 8
          %s269 = scalar_lea.vmem %s2, %s268
        $region40: #{dense_fc_forward.18} parent=27 // pred_fallthru
          _
      $region28: #{dense_fc_forward.18} parent=5 // pred_fallthru
        _
      %p270 = scmp.le.s32.totalorder 1, %s14
      %p271 = scmp.lt.s32.totalorder %s14, 3
      %p272 = pnand %p270, %p271
      %p273 = pneg %p272
      // Predicated region
      $region41: #{dense_fc_forward.18} parent=5 // pred_check
        _
      $region42: #{dense_fc_forward.18} parent=5 // pred_check_branch
        %275 = sbr.rel (%p272) target = $region44
      $region43: #{dense_fc_forward.18} parent=5 // pred_region
        %s276 = ssub.s32 %s14, 1
        %p277 = scmp.lt.s32.totalorder %s23, 1
        %s278 = scalar_select %p277, %s23, 1
        %p279 = scmp.lt.s32.totalorder %s24, 0
        %s280 = scalar_select %p279, %s24, 0
        %s281 = smul.addr %s278, 13
        %s282 = sadd.s32 %s280, %s281
        %s283 = smul.addr %s282, 4
        %s284 = scalar_lea.vmem %s0, %s283
        %p285 = pneg %p54
        %p286 = pneg %p51
        %p287 = scmp.lt.s32.totalorder %s23, 1
        %s288 = scalar_select %p287, %s23, 1
        %s289 = smul.addr %s288, 8
        %s290 = scalar_lea.vmem %s1, %s289
        %p291 = pneg %p80
        %p292 = pneg %p77
        %p293 = scmp.lt.s32.totalorder %s23, 1
        %s294 = scalar_select %p293, %s23, 1
        %s295 = smul.addr %s294, 8
        %s296 = scalar_lea.vmem %s2, %s295
        %p297 = pneg %p106
        %p298 = pneg %p103
        %p299 = scmp.lt.s32.totalorder %s24, 0
        %s300 = scalar_select %p299, %s24, 0
        %s301 = smul.addr %s300, 4
        %s302 = scalar_lea.vmem %s3, %s301
        %p303 = pneg %p132
        %p304 = pneg %p129
        %p305 = scmp.lt.s32.totalorder %s24, 0
        %s306 = scalar_select %p305, %s24, 0
        %s307 = smul.addr %s306, 4
        %s308 = scalar_lea.vmem %s4, %s307
        %p309 = pneg %p158
        %p310 = pneg %p155
        %p311 = pneg %p179
        %p312 = pneg %p176
        %p313 = pneg %p209
        %p314 = pneg %p206
        %s315 = sand.u32 %s196, 1
        %s316 = sand.u32 %s196, 1
        %s317 = smul.addr %s316, 52
        %s318 = scalar_lea.vmem [#allocation3], %s317
        %p319 = scmp.lt.s32.totalorder %s23, 1
        %s320 = scalar_select %p319, %s23, 1
        %p321 = scmp.lt.s32.totalorder %s24, 0
        %s322 = scalar_select %p321, %s24, 0
        %s323 = smul.addr %s320, 13
        %s324 = sadd.s32 %s322, %s323
        %s325 = smul.addr %s324, 4
        %s326 = scalar_lea.vmem %s0, %s325
        %p327 = scmp.lt.s32.totalorder %s23, 1
        %s328 = scalar_select %p327, %s23, 1
        %s329 = smul.addr %s328, 8
        %s330 = scalar_lea.vmem %s1, %s329
        %p331 = scmp.lt.s32.totalorder %s23, 1
        %s332 = scalar_select %p331, %s23, 1
        %s333 = smul.addr %s332, 8
        %s334 = scalar_lea.vmem %s2, %s333
        %p335 = scmp.lt.s32.totalorder %s24, 0
        %s336 = scalar_select %p335, %s24, 0
        %s337 = smul.addr %s336, 4
        %s338 = scalar_lea.vmem %s3, %s337
        %p339 = scmp.lt.s32.totalorder %s24, 0
        %s340 = scalar_select %p339, %s24, 0
        %s341 = smul.addr %s340, 4
        %s342 = scalar_lea.vmem %s4, %s341
        %s343 = sadd.s32 %s24, 2
        %v344 = vld [vmem:[%s326] sm:$0xf]
        %v345 = vld [vmem:[%s326 + $0x4] sm:$0xf]
        %v346 = vld [vmem:[%s326 + $0x8] sm:$0xf]
        %v347 = vld [vmem:[%s326 + $0xc] sm:$0xf]
        %v348 = vld [vmem:[%s326 + $0x10] sm:$0xf]
        %v349 = vld [vmem:[%s326 + $0x14] sm:$0xf]
        %v350 = vld [vmem:[%s326 + $0x18] sm:$0xf]
        %v351 = vld [vmem:[%s326 + $0x1c] sm:$0xf]
        %v352 = vld [vmem:[%s326 + $0x20] sm:$0xf]
        %v353 = vld [vmem:[%s326 + $0x24] sm:$0xf]
        %v354 = vld [vmem:[%s326 + $0x28] sm:$0xf]
        %v355 = vld [vmem:[%s326 + $0x2c] sm:$0xf]
        %v356 = vld [vmem:[%s326 + $0x30] sm:$0x7]
        %v357 = vunpack.c.l.bf16 %v344
        %v358 = vunpack.c.l.bf16 %v345
        %v359 = vunpack.c.l.bf16 %v346
        %v360 = vunpack.c.l.bf16 %v347
        %v361 = vunpack.c.l.bf16 %v348
        %v362 = vunpack.c.l.bf16 %v349
        %v363 = vunpack.c.l.bf16 %v350
        %v364 = vunpack.c.l.bf16 %v351
        %v365 = vunpack.c.l.bf16 %v352
        %v366 = vunpack.c.l.bf16 %v353
        %v367 = vunpack.c.l.bf16 %v354
        %v368 = vunpack.c.l.bf16 %v355
        %v369 = vunpack.c.l.bf16 %v356
        %v370 = vld [vmem:[%s330] sm:$0x1]
        %s371 = vtos %v370
        %v372 = vld [vmem:[%s334] sm:$0x1]
        %s373 = vtos %v372
        %v374 = vstv %s371
        %v375 = vsub.f32 %v357, %v374
        %v376 = vsub.f32 %v358, %v374
        %v377 = vsub.f32 %v359, %v374
        %v378 = vsub.f32 %v360, %v374
        %v379 = vsub.f32 %v361, %v374
        %v380 = vsub.f32 %v362, %v374
        %v381 = vsub.f32 %v363, %v374
        %v382 = vsub.f32 %v364, %v374
        %v383 = vsub.f32 %v365, %v374
        %v384 = vsub.f32 %v366, %v374
        %v385 = vsub.f32 %v367, %v374
        %v386 = vsub.f32 %v368, %v374
        %v387 = vsub.f32 %v369, %v374
        %v388 = vstv %s373
        %v389 = vmul.f32 %v375, %v388
        %v390 = vmul.f32 %v376, %v388
        %v391 = vmul.f32 %v377, %v388
        %v392 = vmul.f32 %v378, %v388
        %v393 = vmul.f32 %v379, %v388
        %v394 = vmul.f32 %v380, %v388
        %v395 = vmul.f32 %v381, %v388
        %v396 = vmul.f32 %v382, %v388
        %v397 = vmul.f32 %v383, %v388
        %v398 = vmul.f32 %v384, %v388
        %v399 = vmul.f32 %v385, %v388
        %v400 = vmul.f32 %v386, %v388
        %v401 = vmul.f32 %v387, %v388
        %v402 = vld [vmem:[%s338] sm:$0xf]
        %v403 = vld [vmem:[%s338 + $0x4] sm:$0xf]
        %v404 = vld [vmem:[%s338 + $0x8] sm:$0xf]
        %v405 = vld [vmem:[%s338 + $0xc] sm:$0xf]
        %v406 = vld [vmem:[%s338 + $0x10] sm:$0xf]
        %v407 = vld [vmem:[%s338 + $0x14] sm:$0xf]
        %v408 = vld [vmem:[%s338 + $0x18] sm:$0xf]
        %v409 = vld [vmem:[%s338 + $0x1c] sm:$0xf]
        %v410 = vld [vmem:[%s338 + $0x20] sm:$0xf]
        %v411 = vld [vmem:[%s338 + $0x24] sm:$0xf]
        %v412 = vld [vmem:[%s338 + $0x28] sm:$0xf]
        %v413 = vld [vmem:[%s338 + $0x2c] sm:$0xf]
        %v414 = vld [vmem:[%s338 + $0x30] sm:$0x7]
        %v415 = vunpack.c.l.bf16 %v402
        %v416 = vunpack.c.l.bf16 %v403
        %v417 = vunpack.c.l.bf16 %v404
        %v418 = vunpack.c.l.bf16 %v405
        %v419 = vunpack.c.l.bf16 %v406
        %v420 = vunpack.c.l.bf16 %v407
        %v421 = vunpack.c.l.bf16 %v408
        %v422 = vunpack.c.l.bf16 %v409
        %v423 = vunpack.c.l.bf16 %v410
        %v424 = vunpack.c.l.bf16 %v411
        %v425 = vunpack.c.l.bf16 %v412
        %v426 = vunpack.c.l.bf16 %v413
        %v427 = vunpack.c.l.bf16 %v414
        %v428 = vmul.f32 %v389, %v415
        %v429 = vmul.f32 %v390, %v416
        %v430 = vmul.f32 %v391, %v417
        %v431 = vmul.f32 %v392, %v418
        %v432 = vmul.f32 %v393, %v419
        %v433 = vmul.f32 %v394, %v420
        %v434 = vmul.f32 %v395, %v421
        %v435 = vmul.f32 %v396, %v422
        %v436 = vmul.f32 %v397, %v423
        %v437 = vmul.f32 %v398, %v424
        %v438 = vmul.f32 %v399, %v425
        %v439 = vmul.f32 %v400, %v426
        %v440 = vmul.f32 %v401, %v427
        %v441 = vld [vmem:[%s342] sm:$0xf]
        %v442 = vld [vmem:[%s342 + $0x4] sm:$0xf]
        %v443 = vld [vmem:[%s342 + $0x8] sm:$0xf]
        %v444 = vld [vmem:[%s342 + $0xc] sm:$0xf]
        %v445 = vld [vmem:[%s342 + $0x10] sm:$0xf]
        %v446 = vld [vmem:[%s342 + $0x14] sm:$0xf]
        %v447 = vld [vmem:[%s342 + $0x18] sm:$0xf]
        %v448 = vld [vmem:[%s342 + $0x1c] sm:$0xf]
        %v449 = vld [vmem:[%s342 + $0x20] sm:$0xf]
        %v450 = vld [vmem:[%s342 + $0x24] sm:$0xf]
        %v451 = vld [vmem:[%s342 + $0x28] sm:$0xf]
        %v452 = vld [vmem:[%s342 + $0x2c] sm:$0xf]
        %v453 = vld [vmem:[%s342 + $0x30] sm:$0x7]
        %v454 = vunpack.c.l.bf16 %v441
        %v455 = vunpack.c.l.bf16 %v442
        %v456 = vunpack.c.l.bf16 %v443
        %v457 = vunpack.c.l.bf16 %v444
        %v458 = vunpack.c.l.bf16 %v445
        %v459 = vunpack.c.l.bf16 %v446
        %v460 = vunpack.c.l.bf16 %v447
        %v461 = vunpack.c.l.bf16 %v448
        %v462 = vunpack.c.l.bf16 %v449
        %v463 = vunpack.c.l.bf16 %v450
        %v464 = vunpack.c.l.bf16 %v451
        %v465 = vunpack.c.l.bf16 %v452
        %v466 = vunpack.c.l.bf16 %v453
        %v467 = vadd.f32 %v428, %v454
        %v468 = vadd.f32 %v429, %v455
        %v469 = vadd.f32 %v430, %v456
        %v470 = vadd.f32 %v431, %v457
        %v471 = vadd.f32 %v432, %v458
        %v472 = vadd.f32 %v433, %v459
        %v473 = vadd.f32 %v434, %v460
        %v474 = vadd.f32 %v435, %v461
        %v475 = vadd.f32 %v436, %v462
        %v476 = vadd.f32 %v437, %v463
        %v477 = vadd.f32 %v438, %v464
        %v478 = vadd.f32 %v439, %v465
        %v479 = vadd.f32 %v440, %v466
        %s480 = sld [smem:[#allocation2]]
        %vm481 = vcmp.ge.f32.partialorder %v467, 0.0
        %vm482 = vcmp.ge.f32.partialorder %v468, 0.0
        %vm483 = vcmp.ge.f32.partialorder %v469, 0.0
        %vm484 = vcmp.ge.f32.partialorder %v470, 0.0
        %vm485 = vcmp.ge.f32.partialorder %v471, 0.0
        %vm486 = vcmp.ge.f32.partialorder %v472, 0.0
        %vm487 = vcmp.ge.f32.partialorder %v473, 0.0
        %vm488 = vcmp.ge.f32.partialorder %v474, 0.0
        %vm489 = vcmp.ge.f32.partialorder %v475, 0.0
        %vm490 = vcmp.ge.f32.partialorder %v476, 0.0
        %vm491 = vcmp.ge.f32.partialorder %v477, 0.0
        %vm492 = vcmp.ge.f32.partialorder %v478, 0.0
        %vm493 = vcmp.ge.f32.partialorder %v479, 0.0
        %v494 = vstv %s480
        %v495 = vmul.f32 %v494, %v467
        %v496 = vmul.f32 %v494, %v468
        %v497 = vmul.f32 %v494, %v469
        %v498 = vmul.f32 %v494, %v470
        %v499 = vmul.f32 %v494, %v471
        %v500 = vmul.f32 %v494, %v472
        %v501 = vmul.f32 %v494, %v473
        %v502 = vmul.f32 %v494, %v474
        %v503 = vmul.f32 %v494, %v475
        %v504 = vmul.f32 %v494, %v476
        %v505 = vmul.f32 %v494, %v477
        %v506 = vmul.f32 %v494, %v478
        %v507 = vmul.f32 %v494, %v479
        %v508 = vsel %vm481, %v467, %v495
        %v509 = vsel %vm482, %v468, %v496
        %v510 = vsel %vm483, %v469, %v497
        %v511 = vsel %vm484, %v470, %v498
        %v512 = vsel %vm485, %v471, %v499
        %v513 = vsel %vm486, %v472, %v500
        %v514 = vsel %vm487, %v473, %v501
        %v515 = vsel %vm488, %v474, %v502
        %v516 = vsel %vm489, %v475, %v503
        %v517 = vsel %vm490, %v476, %v504
        %v518 = vsel %vm491, %v477, %v505
        %v519 = vsel %vm492, %v478, %v506
        %v520 = vsel %vm493, %v479, %v507
        %v521 = vpack.c.bf16 %v509, %v508
        %v522 = vpack.c.bf16 %v511, %v510
        %v523 = vpack.c.bf16 %v513, %v512
        %v524 = vpack.c.bf16 %v515, %v514
        %v525 = vpack.c.bf16 %v517, %v516
        %v526 = vpack.c.bf16 %v519, %v518
        %v527 = vpack.c.bf16 %v520, %v520
        %v535 = vunpack.c.l.b16 %v521
        %v536 = vunpack.c.h.b16 %v521
        %v537 = vunpack.c.l.b16 %v522
        %v538 = vunpack.c.h.b16 %v522
        %v539 = vunpack.c.l.b16 %v523
        %v540 = vunpack.c.h.b16 %v523
        %v541 = vunpack.c.l.b16 %v524
        %v542 = vunpack.c.h.b16 %v524
        %v543 = vunpack.c.l.b16 %v525
        %v544 = vunpack.c.h.b16 %v525
        %v545 = vunpack.c.l.b16 %v526
        %v546 = vunpack.c.h.b16 %v526
        %v547 = vunpack.c.l.b16 %v527
        %v548 = vpack.c.b16 %v535, %v535
        %v549 = vpack.c.b16 %v536, %v536
        %v550 = vpack.c.b16 %v537, %v537
        %v551 = vpack.c.b16 %v538, %v538
        %v552 = vpack.c.b16 %v539, %v539
        %v553 = vpack.c.b16 %v540, %v540
        %v554 = vpack.c.b16 %v541, %v541
        %v555 = vpack.c.b16 %v542, %v542
        %v556 = vpack.c.b16 %v543, %v543
        %v557 = vpack.c.b16 %v544, %v544
        %v558 = vpack.c.b16 %v545, %v545
        %v559 = vpack.c.b16 %v546, %v546
        %v560 = vpack.c.b16 %v547, %v547
        %574 = vst [vmem:[%s318] sm:$0xf] %v548
        %575 = vst [vmem:[%s318 + $0x4] sm:$0xf] %v549
        %576 = vst [vmem:[%s318 + $0x8] sm:$0xf] %v550
        %577 = vst [vmem:[%s318 + $0xc] sm:$0xf] %v551
        %578 = vst [vmem:[%s318 + $0x10] sm:$0xf] %v552
        %579 = vst [vmem:[%s318 + $0x14] sm:$0xf] %v553
        %580 = vst [vmem:[%s318 + $0x18] sm:$0xf] %v554
        %581 = vst [vmem:[%s318 + $0x1c] sm:$0xf] %v555
        %582 = vst [vmem:[%s318 + $0x20] sm:$0xf] %v556
        %583 = vst [vmem:[%s318 + $0x24] sm:$0xf] %v557
        %584 = vst [vmem:[%s318 + $0x28] sm:$0xf] %v558
        %585 = vst [vmem:[%s318 + $0x2c] sm:$0xf] %v559
        %586 = vst [vmem:[%s318 + $0x30] sm:$0x7] %v560
        %s587 = sand.u32 %s196, 1
        %s588 = sand.u32 %s196, 1
        %s589 = smul.addr %s588, 52
        %s590 = scalar_lea.vmem [#allocation3], %s589
        // Predicated region
        $region45: #{dense_fc_forward.18} parent=43 // pred_check
          %p591 = pneg %p206
        $region46: #{dense_fc_forward.18} parent=43 // pred_check_branch
          %593 = sbr.rel (%p591) target = $region48
        $region47: #{dense_fc_forward.18} parent=43 // pred_region
          %s594 = sadd.s32 %s24, 2
          %s595 = smul.addr %s23, 52
          %s596 = sadd.s32 %s594, %s595
          %s597 = smul.addr %s596, 4
          %s598 = scalar_lea.vmem %s7, %s597
          // Predicated region
          $region49: #{dense_fc_forward.18} parent=47 // pred_check
            _
          $region50: #{dense_fc_forward.18} parent=47 // pred_check_branch
            %600 = sbr.rel (0) target = $region52
          $region51: #{dense_fc_forward.18} parent=47 // pred_region
            // Predicated region
            $region53: #{dense_fc_forward.18} parent=51 // pred_check
              _
            $region54: #{dense_fc_forward.18} parent=51 // pred_check_branch
              %602 = sbr.rel target = $region56
            $region55: #{dense_fc_forward.18} parent=51 // pred_region
              // Predicated region
              $region68: #{dense_fc_forward.18} parent=55 // pred_check
                _
              $region69: #{dense_fc_forward.18} parent=55 // pred_check_branch
                %641 = sbr.rel (0) target = $region71
              $region70: #{dense_fc_forward.18} parent=55 // pred_region
                loop: start=0, step=1, limit=1
                $region72: #{dense_fc_forward.18} parent=70 // loop_pre_header
                  _
                $region73: #{dense_fc_forward.18} parent=70 // loop_header
                  %s643 = sphi 0, %s647
                  %p644 = scmp.ge.s32.totalorder %s643, 1
                  %s648 = sphi %s590, %s590
                  %s649 = sphi %s598, %s598
                $region74: #{dense_fc_forward.18} parent=70 // loop_header_branch
                  %646 = sbr.rel (%p644) target = $region78
                $region75: #{dense_fc_forward.18} parent=70 // loop_body
                  _
                $region76: #{dense_fc_forward.18} parent=70 // loop_footer
                  %s647 = sadd.s32 1, %s643
                $region77: #{dense_fc_forward.18} parent=70 // loop_footer_branch
                  %642 = sbr.rel target = $region73
                $region78: #{dense_fc_forward.18} parent=70 // loop_exit
                  _
                loop: start=0, step=1, limit=1
                $region79: #{dense_fc_forward.18} parent=70 // loop_pre_header
                  _
                $region80: #{dense_fc_forward.18} parent=70 // loop_header
                  %s652 = sphi 0, %s656
                  %p653 = scmp.ge.s32.totalorder %s652, 1
                  %s657 = sphi %s590, %s590
                  %s658 = sphi %s598, %s598
                $region81: #{dense_fc_forward.18} parent=70 // loop_header_branch
                  %655 = sbr.rel (%p653) target = $region85
                $region82: #{dense_fc_forward.18} parent=70 // loop_body
                  %v659 = vld [vmem:[%s657] sm:$0xf]
                  %660 = vst [vmem:[%s658] sm:$0xf] %v659
                  %v661 = vld [vmem:[%s657 + $0x4] sm:$0xf]
                  %662 = vst [vmem:[%s658 + $0x10] sm:$0xf] %v661
                  %v663 = vld [vmem:[%s657 + $0x8] sm:$0xf]
                  %664 = vst [vmem:[%s658 + $0x20] sm:$0xf] %v663
                  %v665 = vld [vmem:[%s657 + $0xc] sm:$0xf]
                  %666 = vst [vmem:[%s658 + $0x30] sm:$0xf] %v665
                  %v667 = vld [vmem:[%s657 + $0x10] sm:$0xf]
                  %668 = vst [vmem:[%s658 + $0x40] sm:$0xf] %v667
                  %v669 = vld [vmem:[%s657 + $0x14] sm:$0xf]
                  %670 = vst [vmem:[%s658 + $0x50] sm:$0xf] %v669
                  %v671 = vld [vmem:[%s657 + $0x18] sm:$0xf]
                  %672 = vst [vmem:[%s658 + $0x60] sm:$0xf] %v671
                  %v673 = vld [vmem:[%s657 + $0x1c] sm:$0xf]
                  %674 = vst [vmem:[%s658 + $0x70] sm:$0xf] %v673
                  %v675 = vld [vmem:[%s657 + $0x20] sm:$0xf]
                  %676 = vst [vmem:[%s658 + $0x80] sm:$0xf] %v675
                  %v677 = vld [vmem:[%s657 + $0x24] sm:$0xf]
                  %678 = vst [vmem:[%s658 + $0x90] sm:$0xf] %v677
                  %v679 = vld [vmem:[%s657 + $0x28] sm:$0xf]
                  %680 = vst [vmem:[%s658 + $0xa0] sm:$0xf] %v679
                  %v681 = vld [vmem:[%s657 + $0x2c] sm:$0xf]
                  %682 = vst [vmem:[%s658 + $0xb0] sm:$0xf] %v681
                  %v683 = vld [vmem:[%s657 + $0x30] sm:$0xf]
                  %684 = vst [vmem:[%s658 + $0xc0] sm:$0xf] %v683
                $region83: #{dense_fc_forward.18} parent=70 // loop_footer
                  %s656 = sadd.s32 1, %s652
                $region84: #{dense_fc_forward.18} parent=70 // loop_footer_branch
                  %651 = sbr.rel target = $region80
                $region85: #{dense_fc_forward.18} parent=70 // loop_exit
                  _
              $region71: #{dense_fc_forward.18} parent=55 // pred_fallthru
                _
            $region56: #{dense_fc_forward.18} parent=51 // pred_fallthru
              _
            // Predicated region
            $region57: #{dense_fc_forward.18} parent=51 // pred_check
              _
            $region58: #{dense_fc_forward.18} parent=51 // pred_check_branch
              %604 = sbr.rel (0) target = $region60
            $region59: #{dense_fc_forward.18} parent=51 // pred_region
              loop: start=0, step=1, limit=1
              $region61: #{dense_fc_forward.18} parent=59 // loop_pre_header
                _
              $region62: #{dense_fc_forward.18} parent=59 // loop_header
                %s607 = sphi 0, %s611
                %p608 = scmp.ge.s32.totalorder %s607, 1
                %s612 = sphi %s590, %s590
                %s613 = sphi %s598, %s598
              $region63: #{dense_fc_forward.18} parent=59 // loop_header_branch
                %610 = sbr.rel (%p608) target = $region67
              $region64: #{dense_fc_forward.18} parent=59 // loop_body
                %v614 = vld [vmem:[%s612] sm:$0xf]
                %615 = vst [vmem:[%s613] sm:$0xf] %v614
                %v616 = vld [vmem:[%s612 + $0x4] sm:$0xf]
                %617 = vst [vmem:[%s613 + $0x10] sm:$0xf] %v616
                %v618 = vld [vmem:[%s612 + $0x8] sm:$0xf]
                %619 = vst [vmem:[%s613 + $0x20] sm:$0xf] %v618
                %v620 = vld [vmem:[%s612 + $0xc] sm:$0xf]
                %621 = vst [vmem:[%s613 + $0x30] sm:$0xf] %v620
                %v622 = vld [vmem:[%s612 + $0x10] sm:$0xf]
                %623 = vst [vmem:[%s613 + $0x40] sm:$0xf] %v622
                %v624 = vld [vmem:[%s612 + $0x14] sm:$0xf]
                %625 = vst [vmem:[%s613 + $0x50] sm:$0xf] %v624
                %v626 = vld [vmem:[%s612 + $0x18] sm:$0xf]
                %627 = vst [vmem:[%s613 + $0x60] sm:$0xf] %v626
                %v628 = vld [vmem:[%s612 + $0x1c] sm:$0xf]
                %629 = vst [vmem:[%s613 + $0x70] sm:$0xf] %v628
                %v630 = vld [vmem:[%s612 + $0x20] sm:$0xf]
                %631 = vst [vmem:[%s613 + $0x80] sm:$0xf] %v630
                %v632 = vld [vmem:[%s612 + $0x24] sm:$0xf]
                %633 = vst [vmem:[%s613 + $0x90] sm:$0xf] %v632
                %v634 = vld [vmem:[%s612 + $0x28] sm:$0xf]
                %635 = vst [vmem:[%s613 + $0xa0] sm:$0xf] %v634
                %v636 = vld [vmem:[%s612 + $0x2c] sm:$0xf]
                %637 = vst [vmem:[%s613 + $0xb0] sm:$0xf] %v636
                %v638 = vld [vmem:[%s612 + $0x30] sm:$0xf]
                %639 = vst [vmem:[%s613 + $0xc0] sm:$0xf] %v638
              $region65: #{dense_fc_forward.18} parent=59 // loop_footer
                %s611 = sadd.s32 1, %s607
              $region66: #{dense_fc_forward.18} parent=59 // loop_footer_branch
                %606 = sbr.rel target = $region62
              $region67: #{dense_fc_forward.18} parent=59 // loop_exit
                _
            $region60: #{dense_fc_forward.18} parent=51 // pred_fallthru
              _
          $region52: #{dense_fc_forward.18} parent=47 // pred_fallthru
            _
          %685 = vnop
        $region48: #{dense_fc_forward.18} parent=43 // pred_fallthru
          _
      $region44: #{dense_fc_forward.18} parent=5 // pred_fallthru
        _
      %p686 = scmp.le.s32.totalorder 2, %s14
      // Predicated region
      $region86: #{dense_fc_forward.18} parent=5 // pred_check
        %p687 = pneg %p686
      $region87: #{dense_fc_forward.18} parent=5 // pred_check_branch
        %689 = sbr.rel (%p687) target = $region89
      $region88: #{dense_fc_forward.18} parent=5 // pred_region
        %s690 = ssub.s32 %s14, 2
        // Predicated region
        $region90: #{dense_fc_forward.18} parent=88 // pred_check
          %p691 = pneg %p212
        $region91: #{dense_fc_forward.18} parent=88 // pred_check_branch
          %693 = sbr.rel (%p691) target = $region93
        $region92: #{dense_fc_forward.18} parent=88 // pred_region
          %s694 = sand.u32 %s197, 1
          %s695 = sand.u32 %s197, 1
          %s696 = smul.addr %s695, 52
          %s697 = scalar_lea.vmem [#allocation3], %s696
        $region93: #{dense_fc_forward.18} parent=88 // pred_fallthru
          _
      $region89: #{dense_fc_forward.18} parent=5 // pred_fallthru
        _
    $region6: #{dense_fc_forward.18} parent=1 // loop_footer
      %s18 = sadd.s32 1, %s14
    $region7: #{dense_fc_forward.18} parent=1 // loop_footer_branch
      %13 = sbr.rel target = $region3
    $region8: #{dense_fc_forward.18} parent=1 // loop_exit
      _

// kernel: dense_fc_forward.16
$region0: #{dense_fc_forward.16}
  #allocation0 [shape = 'u32[]', space=smem, size = 0x4, offset = 0x4, fixed_abs, tag = 'smem constant byte address 0x4 - core index']
  #allocation1 [shape = 'u32[144,128]{1,0:T(1,128)}', space=vmem, size = 0x12000, scoped, tag = 'internal scratch']
  #allocation2 [shape = 'f32[208,128]{1,0:T(8,128)}', space=vmem, size = 0x1a000, scoped, tag = 'scratch operand']
  %s0 = inlined_call_operand.vmem [shape: bf16[204,512], index: 0, kind: input, shape index: {}]
  %s1 = inlined_call_operand.vmem [shape: bf16[256,128], index: 1, kind: input, shape index: {}]
  %s2 = inlined_call_operand.vmem [shape: f32[1,128], index: 2, kind: input, shape index: {}]
  %s3 = inlined_call_operand.vmem [shape: bf16[204,128], index: 3, kind: output, shape index: {}]
  %s4 = sld [smem:[#allocation0]]
  $region68: #{dense_fc_forward.16} parent=0
    _
  %s6 = ssub.s32 1, %s4
  %s7 = scalar_select 0, %s6, %s4
  $region1: #{dense_fc_forward.16} parent=0
    #allocation3 [shape = 'u8[106496]{0}', space=vmem, size = 0x1a000, scoped, tag = 'input window, operand 0, single buffered']
    // Predicated region
    $region2: #{dense_fc_forward.16} parent=1 // pred_check
      _
    $region3: #{dense_fc_forward.16} parent=1 // pred_check_branch
      %9 = sbr.rel (0) target = $region5
    $region4: #{dense_fc_forward.16} parent=1 // pred_region
      // Predicated region
      $region6: #{dense_fc_forward.16} parent=4 // pred_check
        _
      $region7: #{dense_fc_forward.16} parent=4 // pred_check_branch
        %11 = sbr.rel (0) target = $region9
      $region8: #{dense_fc_forward.16} parent=4 // pred_region
        // Predicated region
        $region10: #{dense_fc_forward.16} parent=8 // pred_check
          _
        $region11: #{dense_fc_forward.16} parent=8 // pred_check_branch
          %13 = sbr.rel (0) target = $region13
        $region12: #{dense_fc_forward.16} parent=8 // pred_region
          // Predicated region
          $region25: #{dense_fc_forward.16} parent=12 // pred_check
            _
          $region26: #{dense_fc_forward.16} parent=12 // pred_check_branch
            %78 = sbr.rel (0) target = $region28
          $region27: #{dense_fc_forward.16} parent=12 // pred_region
            loop: start=0, step=1, limit=1
            $region29: #{dense_fc_forward.16} parent=27 // loop_pre_header
              _
            $region30: #{dense_fc_forward.16} parent=27 // loop_header
              %s80 = sphi 0, %s84
              %p81 = scmp.ge.s32.totalorder %s80, 1
              %s85 = sphi %s0, %s0
              %s86 = sphi [#allocation3], [#allocation3]
            $region31: #{dense_fc_forward.16} parent=27 // loop_header_branch
              %83 = sbr.rel (%p81) target = $region35
            $region32: #{dense_fc_forward.16} parent=27 // loop_body
              %v87 = vld [vmem:[%s85] sm:$0xff]
              %88 = vst [vmem:[%s86] sm:$0xff] %v87
              %v89 = vld [vmem:[%s85 + $0x10] sm:$0xff]
              %90 = vst [vmem:[%s86 + $0x8] sm:$0xff] %v89
              %v91 = vld [vmem:[%s85 + $0x20] sm:$0xff]
              %92 = vst [vmem:[%s86 + $0x10] sm:$0xff] %v91
              %v93 = vld [vmem:[%s85 + $0x30] sm:$0xff]
              %94 = vst [vmem:[%s86 + $0x18] sm:$0xff] %v93
              %v95 = vld [vmem:[%s85 + $0x40] sm:$0xff]
              %96 = vst [vmem:[%s86 + $0x20] sm:$0xff] %v95
              %v97 = vld [vmem:[%s85 + $0x50] sm:$0xff]
              %98 = vst [vmem:[%s86 + $0x28] sm:$0xff] %v97
              %v99 = vld [vmem:[%s85 + $0x60] sm:$0xff]
              %100 = vst [vmem:[%s86 + $0x30] sm:$0xff] %v99
              %v101 = vld [vmem:[%s85 + $0x70] sm:$0xff]
              %102 = vst [vmem:[%s86 + $0x38] sm:$0xff] %v101
              %v103 = vld [vmem:[%s85 + $0x80] sm:$0xff]
              %104 = vst [vmem:[%s86 + $0x40] sm:$0xff] %v103
              %v105 = vld [vmem:[%s85 + $0x90] sm:$0xff]
              %106 = vst [vmem:[%s86 + $0x48] sm:$0xff] %v105
              %v107 = vld [vmem:[%s85 + $0xa0] sm:$0xff]
              %108 = vst [vmem:[%s86 + $0x50] sm:$0xff] %v107
              %v109 = vld [vmem:[%s85 + $0xb0] sm:$0xff]
              %110 = vst [vmem:[%s86 + $0x58] sm:$0xff] %v109
              %v111 = vld [vmem:[%s85 + $0xc0] sm:$0xff]
              %112 = vst [vmem:[%s86 + $0x60] sm:$0xff] %v111
              %v113 = vld [vmem:[%s85 + $0xd0] sm:$0xff]
              %114 = vst [vmem:[%s86 + $0x68] sm:$0xff] %v113
              %v115 = vld [vmem:[%s85 + $0xe0] sm:$0xff]
              %116 = vst [vmem:[%s86 + $0x70] sm:$0xff] %v115
              %v117 = vld [vmem:[%s85 + $0xf0] sm:$0xff]
              %118 = vst [vmem:[%s86 + $0x78] sm:$0xff] %v117
              %v119 = vld [vmem:[%s85 + $0x100] sm:$0xff]
              %120 = vst [vmem:[%s86 + $0x80] sm:$0xff] %v119
              %v121 = vld [vmem:[%s85 + $0x110] sm:$0xff]
              %122 = vst [vmem:[%s86 + $0x88] sm:$0xff] %v121
              %v123 = vld [vmem:[%s85 + $0x120] sm:$0xff]
              %124 = vst [vmem:[%s86 + $0x90] sm:$0xff] %v123
              %v125 = vld [vmem:[%s85 + $0x130] sm:$0xff]
              %126 = vst [vmem:[%s86 + $0x98] sm:$0xff] %v125
              %v127 = vld [vmem:[%s85 + $0x140] sm:$0xff]
              %128 = vst [vmem:[%s86 + $0xa0] sm:$0xff] %v127
              %v129 = vld [vmem:[%s85 + $0x150] sm:$0xff]
              %130 = vst [vmem:[%s86 + $0xa8] sm:$0xff] %v129
              %v131 = vld [vmem:[%s85 + $0x160] sm:$0xff]
              %132 = vst [vmem:[%s86 + $0xb0] sm:$0xff] %v131
              %v133 = vld [vmem:[%s85 + $0x170] sm:$0xff]
              %134 = vst [vmem:[%s86 + $0xb8] sm:$0xff] %v133
              %v135 = vld [vmem:[%s85 + $0x180] sm:$0xff]
              %136 = vst [vmem:[%s86 + $0xc0] sm:$0xff] %v135
              %v137 = vld [vmem:[%s85 + $0x190] sm:$0xff]
              %138 = vst [vmem:[%s86 + $0xc8] sm:$0xff] %v137
            $region33: #{dense_fc_forward.16} parent=27 // loop_footer
              %s84 = sadd.s32 1, %s80
            $region34: #{dense_fc_forward.16} parent=27 // loop_footer_branch
              %79 = sbr.rel target = $region30
            $region35: #{dense_fc_forward.16} parent=27 // loop_exit
              _
          $region28: #{dense_fc_forward.16} parent=12 // pred_fallthru
            _
          // Predicated region
          $region36: #{dense_fc_forward.16} parent=12 // pred_check
            _
          $region37: #{dense_fc_forward.16} parent=12 // pred_check_branch
            %140 = sbr.rel target = $region39
          $region38: #{dense_fc_forward.16} parent=12 // pred_region
            _
          $region39: #{dense_fc_forward.16} parent=12 // pred_fallthru
            _
        $region13: #{dense_fc_forward.16} parent=8 // pred_fallthru
          _
        // Predicated region
        $region14: #{dense_fc_forward.16} parent=8 // pred_check
          _
        $region15: #{dense_fc_forward.16} parent=8 // pred_check_branch
          %15 = sbr.rel target = $region17
        $region16: #{dense_fc_forward.16} parent=8 // pred_region
          loop: start=0, step=1, limit=1
          $region18: #{dense_fc_forward.16} parent=16 // loop_pre_header
            _
          $region19: #{dense_fc_forward.16} parent=16 // loop_header
            %s18 = sphi 0, %s22
            %p19 = scmp.ge.s32.totalorder %s18, 1
            %s23 = sphi %s0, %s0
            %s24 = sphi [#allocation3], [#allocation3]
          $region20: #{dense_fc_forward.16} parent=16 // loop_header_branch
            %21 = sbr.rel (%p19) target = $region24
          $region21: #{dense_fc_forward.16} parent=16 // loop_body
            %v25 = vld [vmem:[%s23] sm:$0xff]
            %26 = vst [vmem:[%s24] sm:$0xff] %v25
            %v27 = vld [vmem:[%s23 + $0x10] sm:$0xff]
            %28 = vst [vmem:[%s24 + $0x8] sm:$0xff] %v27
            %v29 = vld [vmem:[%s23 + $0x20] sm:$0xff]
            %30 = vst [vmem:[%s24 + $0x10] sm:$0xff] %v29
            %v31 = vld [vmem:[%s23 + $0x30] sm:$0xff]
            %32 = vst [vmem:[%s24 + $0x18] sm:$0xff] %v31
            %v33 = vld [vmem:[%s23 + $0x40] sm:$0xff]
            %34 = vst [vmem:[%s24 + $0x20] sm:$0xff] %v33
            %v35 = vld [vmem:[%s23 + $0x50] sm:$0xff]
            %36 = vst [vmem:[%s24 + $0x28] sm:$0xff] %v35
            %v37 = vld [vmem:[%s23 + $0x60] sm:$0xff]
            %38 = vst [vmem:[%s24 + $0x30] sm:$0xff] %v37
            %v39 = vld [vmem:[%s23 + $0x70] sm:$0xff]
            %40 = vst [vmem:[%s24 + $0x38] sm:$0xff] %v39
            %v41 = vld [vmem:[%s23 + $0x80] sm:$0xff]
            %42 = vst [vmem:[%s24 + $0x40] sm:$0xff] %v41
            %v43 = vld [vmem:[%s23 + $0x90] sm:$0xff]
            %44 = vst [vmem:[%s24 + $0x48] sm:$0xff] %v43
            %v45 = vld [vmem:[%s23 + $0xa0] sm:$0xff]
            %46 = vst [vmem:[%s24 + $0x50] sm:$0xff] %v45
            %v47 = vld [vmem:[%s23 + $0xb0] sm:$0xff]
            %48 = vst [vmem:[%s24 + $0x58] sm:$0xff] %v47
            %v49 = vld [vmem:[%s23 + $0xc0] sm:$0xff]
            %50 = vst [vmem:[%s24 + $0x60] sm:$0xff] %v49
            %v51 = vld [vmem:[%s23 + $0xd0] sm:$0xff]
            %52 = vst [vmem:[%s24 + $0x68] sm:$0xff] %v51
            %v53 = vld [vmem:[%s23 + $0xe0] sm:$0xff]
            %54 = vst [vmem:[%s24 + $0x70] sm:$0xff] %v53
            %v55 = vld [vmem:[%s23 + $0xf0] sm:$0xff]
            %56 = vst [vmem:[%s24 + $0x78] sm:$0xff] %v55
            %v57 = vld [vmem:[%s23 + $0x100] sm:$0xff]
            %58 = vst [vmem:[%s24 + $0x80] sm:$0xff] %v57
            %v59 = vld [vmem:[%s23 + $0x110] sm:$0xff]
            %60 = vst [vmem:[%s24 + $0x88] sm:$0xff] %v59
            %v61 = vld [vmem:[%s23 + $0x120] sm:$0xff]
            %62 = vst [vmem:[%s24 + $0x90] sm:$0xff] %v61
            %v63 = vld [vmem:[%s23 + $0x130] sm:$0xff]
            %64 = vst [vmem:[%s24 + $0x98] sm:$0xff] %v63
            %v65 = vld [vmem:[%s23 + $0x140] sm:$0xff]
            %66 = vst [vmem:[%s24 + $0xa0] sm:$0xff] %v65
            %v67 = vld [vmem:[%s23 + $0x150] sm:$0xff]
            %68 = vst [vmem:[%s24 + $0xa8] sm:$0xff] %v67
            %v69 = vld [vmem:[%s23 + $0x160] sm:$0xff]
            %70 = vst [vmem:[%s24 + $0xb0] sm:$0xff] %v69
            %v71 = vld [vmem:[%s23 + $0x170] sm:$0xff]
            %72 = vst [vmem:[%s24 + $0xb8] sm:$0xff] %v71
            %v73 = vld [vmem:[%s23 + $0x180] sm:$0xff]
            %74 = vst [vmem:[%s24 + $0xc0] sm:$0xff] %v73
            %v75 = vld [vmem:[%s23 + $0x190] sm:$0xff]
            %76 = vst [vmem:[%s24 + $0xc8] sm:$0xff] %v75
          $region22: #{dense_fc_forward.16} parent=16 // loop_footer
            %s22 = sadd.s32 1, %s18
          $region23: #{dense_fc_forward.16} parent=16 // loop_footer_branch
            %17 = sbr.rel target = $region19
          $region24: #{dense_fc_forward.16} parent=16 // loop_exit
            _
        $region17: #{dense_fc_forward.16} parent=8 // pred_fallthru
          _
      $region9: #{dense_fc_forward.16} parent=4 // pred_fallthru
        _
      %141 = vnop
    $region5: #{dense_fc_forward.16} parent=1 // pred_fallthru
      _
    // Predicated region
    $region40: #{dense_fc_forward.16} parent=1 // pred_check
      _
    $region41: #{dense_fc_forward.16} parent=1 // pred_check_branch
      %143 = sbr.rel (0) target = $region43
    $region42: #{dense_fc_forward.16} parent=1 // pred_region
      _
    $region43: #{dense_fc_forward.16} parent=1 // pred_fallthru
      _
    // Predicated region
    $region44: #{dense_fc_forward.16} parent=1 // pred_check
      _
    $region45: #{dense_fc_forward.16} parent=1 // pred_check_branch
      %145 = sbr.rel (0) target = $region47
    $region46: #{dense_fc_forward.16} parent=1 // pred_region
      _
    $region47: #{dense_fc_forward.16} parent=1 // pred_fallthru
      _
    // Predicated region
    $region48: #{dense_fc_forward.16} parent=1 // pred_check
      _
    $region49: #{dense_fc_forward.16} parent=1 // pred_check_branch
      %147 = sbr.rel (0) target = $region51
    $region50: #{dense_fc_forward.16} parent=1 // pred_region
      _
    $region51: #{dense_fc_forward.16} parent=1 // pred_fallthru
      _
    %p149 = scmp.eq.s32.totalorder 0, 0
    // Predicated region
    $region52: #{dense_fc_forward.16} parent=1 // pred_check
      %p150 = pneg %p149
    $region53: #{dense_fc_forward.16} parent=1 // pred_check_branch
      %152 = sbr.rel (%p150) target = $region55
    $region54: #{dense_fc_forward.16} parent=1 // pred_region
      %153 = vst [vmem:[#allocation2] sm:$0xff] 0.0
      %154 = vst [vmem:[#allocation2 + $0x8] sm:$0xff] 0.0
      %155 = vst [vmem:[#allocation2 + $0x10] sm:$0xff] 0.0
      %156 = vst [vmem:[#allocation2 + $0x18] sm:$0xff] 0.0
      %157 = vst [vmem:[#allocation2 + $0x20] sm:$0xff] 0.0
      %158 = vst [vmem:[#allocation2 + $0x28] sm:$0xff] 0.0
      %159 = vst [vmem:[#allocation2 + $0x30] sm:$0xff] 0.0
      %160 = vst [vmem:[#allocation2 + $0x38] sm:$0xff] 0.0
      %161 = vst [vmem:[#allocation2 + $0x40] sm:$0xff] 0.0
      %162 = vst [vmem:[#allocation2 + $0x48] sm:$0xff] 0.0
      %163 = vst [vmem:[#allocation2 + $0x50] sm:$0xff] 0.0
      %164 = vst [vmem:[#allocation2 + $0x58] sm:$0xff] 0.0
      %165 = vst [vmem:[#allocation2 + $0x60] sm:$0xff] 0.0
      %166 = vst [vmem:[#allocation2 + $0x68] sm:$0xff] 0.0
      %167 = vst [vmem:[#allocation2 + $0x70] sm:$0xff] 0.0
      %168 = vst [vmem:[#allocation2 + $0x78] sm:$0xff] 0.0
      %169 = vst [vmem:[#allocation2 + $0x80] sm:$0xff] 0.0
      %170 = vst [vmem:[#allocation2 + $0x88] sm:$0xff] 0.0
      %171 = vst [vmem:[#allocation2 + $0x90] sm:$0xff] 0.0
      %172 = vst [vmem:[#allocation2 + $0x98] sm:$0xff] 0.0
      %173 = vst [vmem:[#allocation2 + $0xa0] sm:$0xff] 0.0
      %174 = vst [vmem:[#allocation2 + $0xa8] sm:$0xff] 0.0
      %175 = vst [vmem:[#allocation2 + $0xb0] sm:$0xff] 0.0
      %176 = vst [vmem:[#allocation2 + $0xb8] sm:$0xff] 0.0
      %177 = vst [vmem:[#allocation2 + $0xc0] sm:$0xff] 0.0
      %178 = vst [vmem:[#allocation2 + $0xc8] sm:$0xff] 0.0
    $region55: #{dense_fc_forward.16} parent=1 // pred_fallthru
      _
    %v179 = vld [vmem:[#allocation2] sm:$0xff]
    %v180 = vld [vmem:[#allocation2 + $0x8] sm:$0xff]
    %v181 = vld [vmem:[#allocation2 + $0x10] sm:$0xff]
    %v182 = vld [vmem:[#allocation2 + $0x18] sm:$0xff]
    %v183 = vld [vmem:[#allocation2 + $0x20] sm:$0xff]
    %v184 = vld [vmem:[#allocation2 + $0x28] sm:$0xff]
    %v185 = vld [vmem:[#allocation2 + $0x30] sm:$0xff]
    %v186 = vld [vmem:[#allocation2 + $0x38] sm:$0xff]
    %v187 = vld [vmem:[#allocation2 + $0x40] sm:$0xff]
    %v188 = vld [vmem:[#allocation2 + $0x48] sm:$0xff]
    %v189 = vld [vmem:[#allocation2 + $0x50] sm:$0xff]
    %v190 = vld [vmem:[#allocation2 + $0x58] sm:$0xff]
    %v191 = vld [vmem:[#allocation2 + $0x60] sm:$0xff]
    %v192 = vld [vmem:[#allocation2 + $0x68] sm:$0xff]
    %v193 = vld [vmem:[#allocation2 + $0x70] sm:$0xff]
    %v194 = vld [vmem:[#allocation2 + $0x78] sm:$0xff]
    %v195 = vld [vmem:[#allocation2 + $0x80] sm:$0xff]
    %v196 = vld [vmem:[#allocation2 + $0x88] sm:$0xff]
    %v197 = vld [vmem:[#allocation2 + $0x90] sm:$0xff]
    %v198 = vld [vmem:[#allocation2 + $0x98] sm:$0xff]
    %v199 = vld [vmem:[#allocation2 + $0xa0] sm:$0xff]
    %v200 = vld [vmem:[#allocation2 + $0xa8] sm:$0xff]
    %v201 = vld [vmem:[#allocation2 + $0xb0] sm:$0xff]
    %v202 = vld [vmem:[#allocation2 + $0xb8] sm:$0xff]
    %v203 = vld [vmem:[#allocation2 + $0xc0] sm:$0xff]
    %v204 = vld [vmem:[#allocation2 + $0xc8] sm:$0xff]
    %v205 = vld [vmem:[#allocation3] sm:$0xff]
    %v206 = vld [vmem:[#allocation3 + $0x8] sm:$0xff]
    %v207 = vld [vmem:[#allocation3 + $0x10] sm:$0xff]
    %v208 = vld [vmem:[#allocation3 + $0x18] sm:$0xff]
    %v209 = vld [vmem:[#allocation3 + $0x20] sm:$0xff]
    %v210 = vld [vmem:[#allocation3 + $0x28] sm:$0xff]
    %v211 = vld [vmem:[#allocation3 + $0x30] sm:$0xff]
    %v212 = vld [vmem:[#allocation3 + $0x38] sm:$0xff]
    %v213 = vld [vmem:[#allocation3 + $0x40] sm:$0xff]
    %v214 = vld [vmem:[#allocation3 + $0x48] sm:$0xff]
    %v215 = vld [vmem:[#allocation3 + $0x50] sm:$0xff]
    %v216 = vld [vmem:[#allocation3 + $0x58] sm:$0xff]
    %v217 = vld [vmem:[#allocation3 + $0x60] sm:$0xff]
    %v218 = vld [vmem:[#allocation3 + $0x68] sm:$0xff]
    %v219 = vld [vmem:[#allocation3 + $0x70] sm:$0xff]
    %v220 = vld [vmem:[#allocation3 + $0x78] sm:$0xff]
    %v221 = vld [vmem:[#allocation3 + $0x80] sm:$0xff]
    %v222 = vld [vmem:[#allocation3 + $0x88] sm:$0xff]
    %v223 = vld [vmem:[#allocation3 + $0x90] sm:$0xff]
    %v224 = vld [vmem:[#allocation3 + $0x98] sm:$0xff]
    %v225 = vld [vmem:[#allocation3 + $0xa0] sm:$0xff]
    %v226 = vld [vmem:[#allocation3 + $0xa8] sm:$0xff]
    %v227 = vld [vmem:[#allocation3 + $0xb0] sm:$0xff]
    %v228 = vld [vmem:[#allocation3 + $0xb8] sm:$0xff]
    %v229 = vld [vmem:[#allocation3 + $0xc0] sm:$0xff]
    %v230 = vld [vmem:[#allocation3 + $0xc8] sm:$0xff]
    %v231 = vld [vmem:[%s1] sm:$0xf]
    %v232 = vld [vmem:[%s1 + $0x4] sm:$0xf]
    %v233 = vld [vmem:[%s1 + $0x8] sm:$0xf]
    %v234 = vld [vmem:[%s1 + $0xc] sm:$0xf]
    %v235 = vld [vmem:[%s1 + $0x10] sm:$0xf]
    %v236 = vld [vmem:[%s1 + $0x14] sm:$0xf]
    %v237 = vld [vmem:[%s1 + $0x18] sm:$0xf]
    %v238 = vld [vmem:[%s1 + $0x1c] sm:$0xf]
    %v239 = vld [vmem:[%s1 + $0x20] sm:$0xf]
    %v240 = vld [vmem:[%s1 + $0x24] sm:$0xf]
    %v241 = vld [vmem:[%s1 + $0x28] sm:$0xf]
    %v242 = vld [vmem:[%s1 + $0x2c] sm:$0xf]
    %v243 = vld [vmem:[%s1 + $0x30] sm:$0xf]
    %v244 = vld [vmem:[%s1 + $0x34] sm:$0xf]
    %v245 = vld [vmem:[%s1 + $0x38] sm:$0xf]
    %v246 = vld [vmem:[%s1 + $0x3c] sm:$0xf]
    %v247 = vld [vmem:[%s1 + $0x40] sm:$0xf]
    %v248 = vld [vmem:[%s1 + $0x44] sm:$0xf]
    %v249 = vld [vmem:[%s1 + $0x48] sm:$0xf]
    %v250 = vld [vmem:[%s1 + $0x4c] sm:$0xf]
    %v251 = vld [vmem:[%s1 + $0x50] sm:$0xf]
    %v252 = vld [vmem:[%s1 + $0x54] sm:$0xf]
    %v253 = vld [vmem:[%s1 + $0x58] sm:$0xf]
    %v254 = vld [vmem:[%s1 + $0x5c] sm:$0xf]
    %v255 = vld [vmem:[%s1 + $0x60] sm:$0xf]
    %v256 = vld [vmem:[%s1 + $0x64] sm:$0xf]
    %v257 = vld [vmem:[%s1 + $0x68] sm:$0xf]
    %v258 = vld [vmem:[%s1 + $0x6c] sm:$0xf]
    %v259 = vld [vmem:[%s1 + $0x70] sm:$0xf]
    %v260 = vld [vmem:[%s1 + $0x74] sm:$0xf]
    %v261 = vld [vmem:[%s1 + $0x78] sm:$0xf]
    %v262 = vld [vmem:[%s1 + $0x7c] sm:$0xf]
    %v289 = vunpack.c.l.b16 %v205
    %v290 = vunpack.c.h.b16 %v205
    %v291 = vunpack.c.l.b16 %v206
    %v292 = vunpack.c.h.b16 %v206
    %v293 = vunpack.c.l.b16 %v207
    %v294 = vunpack.c.h.b16 %v207
    %v295 = vunpack.c.l.b16 %v208
    %v296 = vunpack.c.h.b16 %v208
    %v297 = vunpack.c.l.b16 %v209
    %v298 = vunpack.c.h.b16 %v209
    %v299 = vunpack.c.l.b16 %v210
    %v300 = vunpack.c.h.b16 %v210
    %v301 = vunpack.c.l.b16 %v211
    %v302 = vunpack.c.h.b16 %v211
    %v303 = vunpack.c.l.b16 %v212
    %v304 = vunpack.c.h.b16 %v212
    %v305 = vunpack.c.l.b16 %v213
    %v306 = vunpack.c.h.b16 %v213
    %v307 = vunpack.c.l.b16 %v214
    %v308 = vunpack.c.h.b16 %v214
    %v309 = vunpack.c.l.b16 %v215
    %v310 = vunpack.c.h.b16 %v215
    %v311 = vunpack.c.l.b16 %v216
    %v312 = vunpack.c.h.b16 %v216
    %v313 = vunpack.c.l.b16 %v217
    %v314 = vunpack.c.h.b16 %v217
    %v315 = vunpack.c.l.b16 %v218
    %v316 = vunpack.c.h.b16 %v218
    %v317 = vunpack.c.l.b16 %v219
    %v318 = vunpack.c.h.b16 %v219
    %v319 = vunpack.c.l.b16 %v220
    %v320 = vunpack.c.h.b16 %v220
    %v321 = vunpack.c.l.b16 %v221
    %v322 = vunpack.c.h.b16 %v221
    %v323 = vunpack.c.l.b16 %v222
    %v324 = vunpack.c.h.b16 %v222
    %v325 = vunpack.c.l.b16 %v223
    %v326 = vunpack.c.h.b16 %v223
    %v327 = vunpack.c.l.b16 %v224
    %v328 = vunpack.c.h.b16 %v224
    %v329 = vunpack.c.l.b16 %v225
    %v330 = vunpack.c.h.b16 %v225
    %v331 = vunpack.c.l.b16 %v226
    %v332 = vunpack.c.h.b16 %v226
    %v333 = vunpack.c.l.b16 %v227
    %v334 = vunpack.c.h.b16 %v227
    %v335 = vunpack.c.l.b16 %v228
    %v336 = vunpack.c.h.b16 %v228
    %v337 = vunpack.c.l.b16 %v229
    %v338 = vunpack.c.h.b16 %v229
    %v339 = vunpack.c.l.b16 %v230
    %v340 = vunpack.c.h.b16 %v230
    %v341 = vpack.c.b16 %v291, %v289
    %v342 = vpack.c.b16 %v292, %v290
    %v343 = vpack.c.b16 %v295, %v293
    %v344 = vpack.c.b16 %v296, %v294
    %v345 = vpack.c.b16 %v299, %v297
    %v346 = vpack.c.b16 %v300, %v298
    %v347 = vpack.c.b16 %v303, %v301
    %v348 = vpack.c.b16 %v304, %v302
    %v349 = vpack.c.b16 %v307, %v305
    %v350 = vpack.c.b16 %v308, %v306
    %v351 = vpack.c.b16 %v311, %v309
    %v352 = vpack.c.b16 %v312, %v310
    %v353 = vpack.c.b16 %v315, %v313
    %v354 = vpack.c.b16 %v316, %v314
    %v355 = vpack.c.b16 %v319, %v317
    %v356 = vpack.c.b16 %v320, %v318
    %v357 = vpack.c.b16 %v323, %v321
    %v358 = vpack.c.b16 %v324, %v322
    %v359 = vpack.c.b16 %v327, %v325
    %v360 = vpack.c.b16 %v328, %v326
    %v361 = vpack.c.b16 %v331, %v329
    %v362 = vpack.c.b16 %v332, %v330
    %v363 = vpack.c.b16 %v335, %v333
    %v364 = vpack.c.b16 %v336, %v334
    %v365 = vpack.c.b16 %v339, %v337
    %v366 = vpack.c.b16 %v340, %v338
    %v425 = vunpack.c.l.b16 %v231
    %v426 = vunpack.c.l.b16 %v232
    %v427 = vunpack.c.l.b16 %v233
    %v428 = vunpack.c.l.b16 %v234
    %v429 = vunpack.c.l.b16 %v235
    %v430 = vunpack.c.l.b16 %v236
    %v431 = vunpack.c.l.b16 %v237
    %v432 = vunpack.c.l.b16 %v238
    %v433 = vunpack.c.l.b16 %v239
    %v434 = vunpack.c.l.b16 %v240
    %v435 = vunpack.c.l.b16 %v241
    %v436 = vunpack.c.l.b16 %v242
    %v437 = vunpack.c.l.b16 %v243
    %v438 = vunpack.c.l.b16 %v244
    %v439 = vunpack.c.l.b16 %v245
    %v440 = vunpack.c.l.b16 %v246
    %v441 = vunpack.c.l.b16 %v247
    %v442 = vunpack.c.l.b16 %v248
    %v443 = vunpack.c.l.b16 %v249
    %v444 = vunpack.c.l.b16 %v250
    %v445 = vunpack.c.l.b16 %v251
    %v446 = vunpack.c.l.b16 %v252
    %v447 = vunpack.c.l.b16 %v253
    %v448 = vunpack.c.l.b16 %v254
    %v449 = vunpack.c.l.b16 %v255
    %v450 = vunpack.c.l.b16 %v256
    %v451 = vunpack.c.l.b16 %v257
    %v452 = vunpack.c.l.b16 %v258
    %v453 = vunpack.c.l.b16 %v259
    %v454 = vunpack.c.l.b16 %v260
    %v455 = vunpack.c.l.b16 %v261
    %v456 = vunpack.c.l.b16 %v262
    %v457 = vpack.c.b16 %v426, %v425
    %v458 = vpack.c.b16 %v428, %v427
    %v459 = vpack.c.b16 %v430, %v429
    %v460 = vpack.c.b16 %v432, %v431
    %v461 = vpack.c.b16 %v434, %v433
    %v462 = vpack.c.b16 %v436, %v435
    %v463 = vpack.c.b16 %v438, %v437
    %v464 = vpack.c.b16 %v440, %v439
    %v465 = vpack.c.b16 %v442, %v441
    %v466 = vpack.c.b16 %v444, %v443
    %v467 = vpack.c.b16 %v446, %v445
    %v468 = vpack.c.b16 %v448, %v447
    %v469 = vpack.c.b16 %v450, %v449
    %v470 = vpack.c.b16 %v452, %v451
    %v471 = vpack.c.b16 %v454, %v453
    %v472 = vpack.c.b16 %v456, %v455
    %489 = vmatprep.subr.bf16.mxu0 0
    %490 = vmatpush1.bf16.msra.mxu0 %v457
    %491 = vmatprep.subr.bf16.mxu0 0
    %492 = vmatpush1.bf16.msra.mxu0 %v458
    %493 = vmatprep.subr.bf16.mxu0 0
    %494 = vmatpush1.bf16.msra.mxu0 %v459
    %495 = vmatprep.subr.bf16.mxu0 0
    %496 = vmatpush1.bf16.msra.mxu0 %v460
    %497 = vmatprep.subr.bf16.mxu0 0
    %498 = vmatpush1.bf16.msra.mxu0 %v461
    %499 = vmatprep.subr.bf16.mxu0 0
    %500 = vmatpush1.bf16.msra.mxu0 %v462
    %501 = vmatprep.subr.bf16.mxu0 0
    %502 = vmatpush1.bf16.msra.mxu0 %v463
    %503 = vmatprep.subr.bf16.mxu0 0
    %504 = vmatpush1.bf16.msra.mxu0 %v464
    %505 = vmatprep.subr.bf16.mxu0 0
    %506 = vmatpush1.bf16.msra.mxu0 %v465
    %507 = vmatprep.subr.bf16.mxu0 0
    %508 = vmatpush1.bf16.msra.mxu0 %v466
    %509 = vmatprep.subr.bf16.mxu0 0
    %510 = vmatpush1.bf16.msra.mxu0 %v467
    %511 = vmatprep.subr.bf16.mxu0 0
    %512 = vmatpush1.bf16.msra.mxu0 %v468
    %513 = vmatprep.subr.bf16.mxu0 0
    %514 = vmatpush1.bf16.msra.mxu0 %v469
    %515 = vmatprep.subr.bf16.mxu0 0
    %516 = vmatpush1.bf16.msra.mxu0 %v470
    %517 = vmatprep.subr.bf16.mxu0 0
    %518 = vmatpush1.bf16.msra.mxu0 %v471
    %519 = vmatprep.subr.bf16.mxu0 0
    %520 = vmatpush1.bf16.msra.mxu0 %v472
    %521 = vmatprep.mubr.bf16.mxu0 %v342
    %522 = vmatmul.mubr.bf16.gmra.mrb[0].mxu0 %v341
    %v523 = vpop.f32.mrb[0].mxu0
    %v524 = vadd.f32 0.0, %v523
    %v525 = vpop.f32.mrb[0].mxu0
    %v526 = vpop.f32.mrb[0].mxu0
    %v527 = vadd.f32 0.0, %v526
    %v528 = vpop.f32.mrb[0].mxu0
    %529 = vmatprep.mubr.bf16.mxu0 %v344
    %530 = vmatmul.mubr.bf16.gmra.mrb[0].mxu0 %v343
    %v531 = vpop.f32.mrb[0].mxu0
    %v532 = vadd.f32 0.0, %v531
    %v533 = vpop.f32.mrb[0].mxu0
    %v534 = vpop.f32.mrb[0].mxu0
    %v535 = vadd.f32 0.0, %v534
    %v536 = vpop.f32.mrb[0].mxu0
    %537 = vmatprep.mubr.bf16.mxu0 %v346
    %538 = vmatmul.mubr.bf16.gmra.mrb[0].mxu0 %v345
    %v539 = vpop.f32.mrb[0].mxu0
    %v540 = vadd.f32 0.0, %v539
    %v541 = vpop.f32.mrb[0].mxu0
    %v542 = vpop.f32.mrb[0].mxu0
    %v543 = vadd.f32 0.0, %v542
    %v544 = vpop.f32.mrb[0].mxu0
    %545 = vmatprep.mubr.bf16.mxu0 %v348
    %546 = vmatmul.mubr.bf16.gmra.mrb[0].mxu0 %v347
    %v547 = vpop.f32.mrb[0].mxu0
    %v548 = vadd.f32 0.0, %v547
    %v549 = vpop.f32.mrb[0].mxu0
    %v550 = vpop.f32.mrb[0].mxu0
    %v551 = vadd.f32 0.0, %v550
    %v552 = vpop.f32.mrb[0].mxu0
    %553 = vmatprep.mubr.bf16.mxu0 %v350
    %554 = vmatmul.mubr.bf16.gmra.mrb[0].mxu0 %v349
    %v555 = vpop.f32.mrb[0].mxu0
    %v556 = vadd.f32 0.0, %v555
    %v557 = vpop.f32.mrb[0].mxu0
    %v558 = vpop.f32.mrb[0].mxu0
    %v559 = vadd.f32 0.0, %v558
    %v560 = vpop.f32.mrb[0].mxu0
    %561 = vmatprep.mubr.bf16.mxu0 %v352
    %562 = vmatmul.mubr.bf16.gmra.mrb[0].mxu0 %v351
    %v563 = vpop.f32.mrb[0].mxu0
    %v564 = vadd.f32 0.0, %v563
    %v565 = vpop.f32.mrb[0].mxu0
    %v566 = vpop.f32.mrb[0].mxu0
    %v567 = vadd.f32 0.0, %v566
    %v568 = vpop.f32.mrb[0].mxu0
    %569 = vmatprep.mubr.bf16.mxu0 %v354
    %570 = vmatmul.mubr.bf16.gmra.mrb[0].mxu0 %v353
    %v571 = vpop.f32.mrb[0].mxu0
    %v572 = vadd.f32 0.0, %v571
    %v573 = vpop.f32.mrb[0].mxu0
    %v574 = vpop.f32.mrb[0].mxu0
    %v575 = vadd.f32 0.0, %v574
    %v576 = vpop.f32.mrb[0].mxu0
    %577 = vmatprep.mubr.bf16.mxu0 %v356
    %578 = vmatmul.mubr.bf16.gmra.mrb[0].mxu0 %v355
    %v579 = vpop.f32.mrb[0].mxu0
    %v580 = vadd.f32 0.0, %v579
    %v581 = vpop.f32.mrb[0].mxu0
    %v582 = vpop.f32.mrb[0].mxu0
    %v583 = vadd.f32 0.0, %v582
    %v584 = vpop.f32.mrb[0].mxu0
    %585 = vmatprep.mubr.bf16.mxu0 %v358
    %586 = vmatmul.mubr.bf16.gmra.mrb[0].mxu0 %v357
    %v587 = vpop.f32.mrb[0].mxu0
    %v588 = vadd.f32 0.0, %v587
    %v589 = vpop.f32.mrb[0].mxu0
    %v590 = vpop.f32.mrb[0].mxu0
    %v591 = vadd.f32 0.0, %v590
    %v592 = vpop.f32.mrb[0].mxu0
    %593 = vmatprep.mubr.bf16.mxu0 %v360
    %594 = vmatmul.mubr.bf16.gmra.mrb[0].mxu0 %v359
    %v595 = vpop.f32.mrb[0].mxu0
    %v596 = vadd.f32 0.0, %v595
    %v597 = vpop.f32.mrb[0].mxu0
    %v598 = vpop.f32.mrb[0].mxu0
    %v599 = vadd.f32 0.0, %v598
    %v600 = vpop.f32.mrb[0].mxu0
    %601 = vmatprep.mubr.bf16.mxu0 %v362
    %602 = vmatmul.mubr.bf16.gmra.mrb[0].mxu0 %v361
    %v603 = vpop.f32.mrb[0].mxu0
    %v604 = vadd.f32 0.0, %v603
    %v605 = vpop.f32.mrb[0].mxu0
    %v606 = vpop.f32.mrb[0].mxu0
    %v607 = vadd.f32 0.0, %v606
    %v608 = vpop.f32.mrb[0].mxu0
    %609 = vmatprep.mubr.bf16.mxu0 %v364
    %610 = vmatmul.mubr.bf16.gmra.mrb[0].mxu0 %v363
    %v611 = vpop.f32.mrb[0].mxu0
    %v612 = vadd.f32 0.0, %v611
    %v613 = vpop.f32.mrb[0].mxu0
    %v614 = vpop.f32.mrb[0].mxu0
    %v615 = vadd.f32 0.0, %v614
    %v616 = vpop.f32.mrb[0].mxu0
    %617 = vmatprep.mubr.bf16.mxu0 %v366
    %618 = vmatmul.mubr.bf16.gmra.mrb[0].mxu0 %v365
    %v619 = vpop.f32.mrb[0].mxu0
    %v620 = vadd.f32 0.0, %v619
    %v621 = vpop.f32.mrb[0].mxu0
    %v622 = vpop.f32.mrb[0].mxu0
    %v623 = vadd.f32 0.0, %v622
    %v624 = vpop.f32.mrb[0].mxu0
    %625 = vdwg.mxu0
    %v626 = vadd.f32 %v179, %v524
    %v627 = vadd.f32 %v180, %v527
    %v628 = vadd.f32 %v181, %v532
    %v629 = vadd.f32 %v182, %v535
    %v630 = vadd.f32 %v183, %v540
    %v631 = vadd.f32 %v184, %v543
    %v632 = vadd.f32 %v185, %v548
    %v633 = vadd.f32 %v186, %v551
    %v634 = vadd.f32 %v187, %v556
    %v635 = vadd.f32 %v188, %v559
    %v636 = vadd.f32 %v189, %v564
    %v637 = vadd.f32 %v190, %v567
    %v638 = vadd.f32 %v191, %v572
    %v639 = vadd.f32 %v192, %v575
    %v640 = vadd.f32 %v193, %v580
    %v641 = vadd.f32 %v194, %v583
    %v642 = vadd.f32 %v195, %v588
    %v643 = vadd.f32 %v196, %v591
    %v644 = vadd.f32 %v197, %v596
    %v645 = vadd.f32 %v198, %v599
    %v646 = vadd.f32 %v199, %v604
    %v647 = vadd.f32 %v200, %v607
    %v648 = vadd.f32 %v201, %v612
    %v649 = vadd.f32 %v202, %v615
    %v650 = vadd.f32 %v203, %v620
    %v651 = vadd.f32 %v204, %v623
    %652 = vst [vmem:[#allocation2] sm:$0xff] %v626
    %653 = vst [vmem:[#allocation2 + $0x8] sm:$0xff] %v627
    %654 = vst [vmem:[#allocation2 + $0x10] sm:$0xff] %v628
    %655 = vst [vmem:[#allocation2 + $0x18] sm:$0xff] %v629
    %656 = vst [vmem:[#allocation2 + $0x20] sm:$0xff] %v630
    %657 = vst [vmem:[#allocation2 + $0x28] sm:$0xff] %v631
    %658 = vst [vmem:[#allocation2 + $0x30] sm:$0xff] %v632
    %659 = vst [vmem:[#allocation2 + $0x38] sm:$0xff] %v633
    %660 = vst [vmem:[#allocation2 + $0x40] sm:$0xff] %v634
    %661 = vst [vmem:[#allocation2 + $0x48] sm:$0xff] %v635
    %662 = vst [vmem:[#allocation2 + $0x50] sm:$0xff] %v636
    %663 = vst [vmem:[#allocation2 + $0x58] sm:$0xff] %v637
    %664 = vst [vmem:[#allocation2 + $0x60] sm:$0xff] %v638
    %665 = vst [vmem:[#allocation2 + $0x68] sm:$0xff] %v639
    %666 = vst [vmem:[#allocation2 + $0x70] sm:$0xff] %v640
    %667 = vst [vmem:[#allocation2 + $0x78] sm:$0xff] %v641
    %668 = vst [vmem:[#allocation2 + $0x80] sm:$0xff] %v642
    %669 = vst [vmem:[#allocation2 + $0x88] sm:$0xff] %v643
    %670 = vst [vmem:[#allocation2 + $0x90] sm:$0xff] %v644
    %671 = vst [vmem:[#allocation2 + $0x98] sm:$0xff] %v645
    %672 = vst [vmem:[#allocation2 + $0xa0] sm:$0xff] %v646
    %673 = vst [vmem:[#allocation2 + $0xa8] sm:$0xff] %v647
    %674 = vst [vmem:[#allocation2 + $0xb0] sm:$0xff] %v648
    %675 = vst [vmem:[#allocation2 + $0xb8] sm:$0xff] %v649
    %676 = vst [vmem:[#allocation2 + $0xc0] sm:$0xff] %v650
    %677 = vst [vmem:[#allocation2 + $0xc8] sm:$0xff] %v651
    // Predicated region
    $region56: #{dense_fc_forward.16} parent=1 // pred_check
      %p678 = pneg %p149
    $region57: #{dense_fc_forward.16} parent=1 // pred_check_branch
      %680 = sbr.rel (%p678) target = $region59
    $region58: #{dense_fc_forward.16} parent=1 // pred_region
      %v681 = vld [vmem:[#allocation2] sm:$0xff]
      %v682 = vld [vmem:[#allocation2 + $0x8] sm:$0xff]
      %v683 = vld [vmem:[#allocation2 + $0x10] sm:$0xff]
      %v684 = vld [vmem:[#allocation2 + $0x18] sm:$0xff]
      %v685 = vld [vmem:[#allocation2 + $0x20] sm:$0xff]
      %v686 = vld [vmem:[#allocation2 + $0x28] sm:$0xff]
      %v687 = vld [vmem:[#allocation2 + $0x30] sm:$0xff]
      %v688 = vld [vmem:[#allocation2 + $0x38] sm:$0xff]
      %v689 = vld [vmem:[#allocation2 + $0x40] sm:$0xff]
      %v690 = vld [vmem:[#allocation2 + $0x48] sm:$0xff]
      %v691 = vld [vmem:[#allocation2 + $0x50] sm:$0xff]
      %v692 = vld [vmem:[#allocation2 + $0x58] sm:$0xff]
      %v693 = vld [vmem:[#allocation2 + $0x60] sm:$0xff]
      %v694 = vld [vmem:[#allocation2 + $0x68] sm:$0xff]
      %v695 = vld [vmem:[#allocation2 + $0x70] sm:$0xff]
      %v696 = vld [vmem:[#allocation2 + $0x78] sm:$0xff]
      %v697 = vld [vmem:[#allocation2 + $0x80] sm:$0xff]
      %v698 = vld [vmem:[#allocation2 + $0x88] sm:$0xff]
      %v699 = vld [vmem:[#allocation2 + $0x90] sm:$0xff]
      %v700 = vld [vmem:[#allocation2 + $0x98] sm:$0xff]
      %v701 = vld [vmem:[#allocation2 + $0xa0] sm:$0xff]
      %v702 = vld [vmem:[#allocation2 + $0xa8] sm:$0xff]
      %v703 = vld [vmem:[#allocation2 + $0xb0] sm:$0xff]
      %v704 = vld [vmem:[#allocation2 + $0xb8] sm:$0xff]
      %v705 = vld [vmem:[#allocation2 + $0xc0] sm:$0xff]
      %v706 = vld [vmem:[#allocation2 + $0xc8] sm:$0xff]
      %v707 = vld [vmem:[%s2] sm:$0x1]
      %v709 = vlaneseq
      %v710 = vshrl.u32 %v709, 7
      %v711 = vsub.s32 0, %v710
      %v712 = vrot.slane %v707, %v711
      %v714 = vadd.f32 %v681, %v712
      %v715 = vadd.f32 %v682, %v712
      %v716 = vadd.f32 %v683, %v712
      %v717 = vadd.f32 %v684, %v712
      %v718 = vadd.f32 %v685, %v712
      %v719 = vadd.f32 %v686, %v712
      %v720 = vadd.f32 %v687, %v712
      %v721 = vadd.f32 %v688, %v712
      %v722 = vadd.f32 %v689, %v712
      %v723 = vadd.f32 %v690, %v712
      %v724 = vadd.f32 %v691, %v712
      %v725 = vadd.f32 %v692, %v712
      %v726 = vadd.f32 %v693, %v712
      %v727 = vadd.f32 %v694, %v712
      %v728 = vadd.f32 %v695, %v712
      %v729 = vadd.f32 %v696, %v712
      %v730 = vadd.f32 %v697, %v712
      %v731 = vadd.f32 %v698, %v712
      %v732 = vadd.f32 %v699, %v712
      %v733 = vadd.f32 %v700, %v712
      %v734 = vadd.f32 %v701, %v712
      %v735 = vadd.f32 %v702, %v712
      %v736 = vadd.f32 %v703, %v712
      %v737 = vadd.f32 %v704, %v712
      %v738 = vadd.f32 %v705, %v712
      %v739 = vadd.f32 %v706, %v712
      %v740 = vpack.c.bf16 %v715, %v714
      %v741 = vpack.c.bf16 %v717, %v716
      %v742 = vpack.c.bf16 %v719, %v718
      %v743 = vpack.c.bf16 %v721, %v720
      %v744 = vpack.c.bf16 %v723, %v722
      %v745 = vpack.c.bf16 %v725, %v724
      %v746 = vpack.c.bf16 %v727, %v726
      %v747 = vpack.c.bf16 %v729, %v728
      %v748 = vpack.c.bf16 %v731, %v730
      %v749 = vpack.c.bf16 %v733, %v732
      %v750 = vpack.c.bf16 %v735, %v734
      %v751 = vpack.c.bf16 %v737, %v736
      %v752 = vpack.c.bf16 %v739, %v738
      %v766 = vunpack.c.l.b16 %v740
      %v767 = vunpack.c.h.b16 %v740
      %v768 = vunpack.c.l.b16 %v741
      %v769 = vunpack.c.h.b16 %v741
      %v770 = vunpack.c.l.b16 %v742
      %v771 = vunpack.c.h.b16 %v742
      %v772 = vunpack.c.l.b16 %v743
      %v773 = vunpack.c.h.b16 %v743
      %v774 = vunpack.c.l.b16 %v744
      %v775 = vunpack.c.h.b16 %v744
      %v776 = vunpack.c.l.b16 %v745
      %v777 = vunpack.c.h.b16 %v745
      %v778 = vunpack.c.l.b16 %v746
      %v779 = vunpack.c.h.b16 %v746
      %v780 = vunpack.c.l.b16 %v747
      %v781 = vunpack.c.h.b16 %v747
      %v782 = vunpack.c.l.b16 %v748
      %v783 = vunpack.c.h.b16 %v748
      %v784 = vunpack.c.l.b16 %v749
      %v785 = vunpack.c.h.b16 %v749
      %v786 = vunpack.c.l.b16 %v750
      %v787 = vunpack.c.h.b16 %v750
      %v788 = vunpack.c.l.b16 %v751
      %v789 = vunpack.c.h.b16 %v751
      %v790 = vunpack.c.l.b16 %v752
      %v791 = vunpack.c.h.b16 %v752
      %v792 = vpack.c.b16 %v766, %v766
      %v793 = vpack.c.b16 %v767, %v767
      %v794 = vpack.c.b16 %v768, %v768
      %v795 = vpack.c.b16 %v769, %v769
      %v796 = vpack.c.b16 %v770, %v770
      %v797 = vpack.c.b16 %v771, %v771
      %v798 = vpack.c.b16 %v772, %v772
      %v799 = vpack.c.b16 %v773, %v773
      %v800 = vpack.c.b16 %v774, %v774
      %v801 = vpack.c.b16 %v775, %v775
      %v802 = vpack.c.b16 %v776, %v776
      %v803 = vpack.c.b16 %v777, %v777
      %v804 = vpack.c.b16 %v778, %v778
      %v805 = vpack.c.b16 %v779, %v779
      %v806 = vpack.c.b16 %v780, %v780
      %v807 = vpack.c.b16 %v781, %v781
      %v808 = vpack.c.b16 %v782, %v782
      %v809 = vpack.c.b16 %v783, %v783
      %v810 = vpack.c.b16 %v784, %v784
      %v811 = vpack.c.b16 %v785, %v785
      %v812 = vpack.c.b16 %v786, %v786
      %v813 = vpack.c.b16 %v787, %v787
      %v814 = vpack.c.b16 %v788, %v788
      %v815 = vpack.c.b16 %v789, %v789
      %v816 = vpack.c.b16 %v790, %v790
      %v817 = vpack.c.b16 %v791, %v791
      %844 = vst [vmem:[%s3] sm:$0xf] %v792
      %845 = vst [vmem:[%s3 + $0x4] sm:$0xf] %v793
      %846 = vst [vmem:[%s3 + $0x8] sm:$0xf] %v794
      %847 = vst [vmem:[%s3 + $0xc] sm:$0xf] %v795
      %848 = vst [vmem:[%s3 + $0x10] sm:$0xf] %v796
      %849 = vst [vmem:[%s3 + $0x14] sm:$0xf] %v797
      %850 = vst [vmem:[%s3 + $0x18] sm:$0xf] %v798
      %851 = vst [vmem:[%s3 + $0x1c] sm:$0xf] %v799
      %852 = vst [vmem:[%s3 + $0x20] sm:$0xf] %v800
      %853 = vst [vmem:[%s3 + $0x24] sm:$0xf] %v801
      %854 = vst [vmem:[%s3 + $0x28] sm:$0xf] %v802
      %855 = vst [vmem:[%s3 + $0x2c] sm:$0xf] %v803
      %856 = vst [vmem:[%s3 + $0x30] sm:$0xf] %v804
      %857 = vst [vmem:[%s3 + $0x34] sm:$0xf] %v805
      %858 = vst [vmem:[%s3 + $0x38] sm:$0xf] %v806
      %859 = vst [vmem:[%s3 + $0x3c] sm:$0xf] %v807
      %860 = vst [vmem:[%s3 + $0x40] sm:$0xf] %v808
      %861 = vst [vmem:[%s3 + $0x44] sm:$0xf] %v809
      %862 = vst [vmem:[%s3 + $0x48] sm:$0xf] %v810
      %863 = vst [vmem:[%s3 + $0x4c] sm:$0xf] %v811
      %864 = vst [vmem:[%s3 + $0x50] sm:$0xf] %v812
      %865 = vst [vmem:[%s3 + $0x54] sm:$0xf] %v813
      %866 = vst [vmem:[%s3 + $0x58] sm:$0xf] %v814
      %867 = vst [vmem:[%s3 + $0x5c] sm:$0xf] %v815
      %868 = vst [vmem:[%s3 + $0x60] sm:$0xf] %v816
      %869 = vst [vmem:[%s3 + $0x64] sm:$0xf] %v817
    $region59: #{dense_fc_forward.16} parent=1 // pred_fallthru
      _
    // Predicated region
    $region60: #{dense_fc_forward.16} parent=1 // pred_check
      _
    $region61: #{dense_fc_forward.16} parent=1 // pred_check_branch
      %871 = sbr.rel (0) target = $region63
    $region62: #{dense_fc_forward.16} parent=1 // pred_region
      _
    $region63: #{dense_fc_forward.16} parent=1 // pred_fallthru
      _
    // Predicated region
    $region64: #{dense_fc_forward.16} parent=1 // pred_check
      _
    $region65: #{dense_fc_forward.16} parent=1 // pred_check_branch
      %873 = sbr.rel (0) target = $region67
    $region66: #{dense_fc_forward.16} parent=1 // pred_region
      _
    $region67: #{dense_fc_forward.16} parent=1 // pred_fallthru
      _

// kernel: dense_fc_forward.21
$region0: #{dense_fc_forward.21}
  #allocation0 [shape = 'u32[]', space=smem, size = 0x4, offset = 0x4, fixed_abs, tag = 'smem constant byte address 0x4 - core index']
  #allocation1 [shape = 'u32[144,128]{1,0:T(1,128)}', space=vmem, size = 0x12000, scoped, tag = 'internal scratch']
  #allocation2 [shape = 'f32[1]{0:T(128)S(6)}', space=smem, size = 0x200, scoped, tag = 'scoped memory for dense_fc_forward.21']
  %s0 = inlined_call_operand.vmem [shape: bf16[2,102,128], index: 0, kind: input, shape index: {}]
  %s1 = inlined_call_operand.vmem [shape: f32[2,8,128], index: 1, kind: input, shape index: {}]
  %s2 = inlined_call_operand.vmem [shape: f32[2,8,128], index: 2, kind: input, shape index: {}]
  %s3 = inlined_call_operand.vmem [shape: bf16[102,128], index: 3, kind: input, shape index: {}]
  %s4 = inlined_call_operand.vmem [shape: bf16[102,128], index: 4, kind: input, shape index: {}]
  %s5 = inlined_call_operand.<no memory space> [shape: f32[1], index: 5, kind: input, shape index: {}]
  %s6 = inlined_call_operand.vmem [shape: bf16[2,102,512], index: 6, kind: input, shape index: {}, may-alias: {6,7}]
  %s7 = inlined_call_operand.vmem [shape: bf16[2,102,512], index: 7, kind: output, shape index: {}, may-alias: {6,7}]
  %s8 = sld [smem:[#allocation0]]
  $region94: #{dense_fc_forward.21} parent=0
    _
  %s10 = ssub.s32 1, %s8
  %s11 = scalar_select 0, %s10, %s8
  %12 = sst [smem:[#allocation2]] %s5
  $region1: #{dense_fc_forward.21} parent=0
    #allocation3 [shape = 'u8[53248]{0}', space=vmem, size = 0xd000, scoped, tag = 'output window, operand 0']
    loop: start=0, step=1, limit=4
    $region2: #{dense_fc_forward.21} parent=1 // loop_pre_header
      _
    $region3: #{dense_fc_forward.21} parent=1 // loop_header
      %s14 = sphi 0, %s18
      %p15 = scmp.ge.s32.totalorder %s14, 4
      %s21 = sphi 0, %s33
      %s22 = sphi 0, %s29
      %s23 = sphi 0, %s21
      %s24 = sphi 0, %s22
      %s25 = sphi 0, %s23
      %s26 = sphi 0, %s24
      %s38 = sphi 0, %s40
      %s41 = sphi 0, %s38
      %s42 = sphi 0, %s41
      %s58 = sphi 0, %s42
      %s64 = sphi 0, %s66
      %s67 = sphi 0, %s64
      %s68 = sphi 0, %s67
      %s84 = sphi 0, %s68
      %s90 = sphi 0, %s92
      %s93 = sphi 0, %s90
      %s94 = sphi 0, %s93
      %s110 = sphi 0, %s94
      %s116 = sphi 0, %s118
      %s119 = sphi 0, %s116
      %s120 = sphi 0, %s119
      %s136 = sphi 0, %s120
      %s142 = sphi 0, %s144
      %s145 = sphi 0, %s142
      %s146 = sphi 0, %s145
      %s162 = sphi 0, %s146
      %s166 = sphi 0, %s166
      %s168 = sphi 0, %s166
      %s169 = sphi 0, %s168
      %s183 = sphi 0, %s169
      %s193 = sphi 0, %s195
      %s196 = sphi 0, %s193
      %s197 = sphi 0, %s196
      %s213 = sphi 0, %s197
    $region4: #{dense_fc_forward.21} parent=1 // loop_header_branch
      %17 = sbr.rel (%p15) target = $region8
    $region5: #{dense_fc_forward.21} parent=1 // loop_body
      %s19 = ssub.s32 %s14, 1
      %s20 = ssub.s32 %s14, 2
      %s27 = sadd.s32 1, %s22
      %p28 = scmp.ge.s32.totalorder %s27, 1
      %s29 = scalar_select %p28, 0, %s27
      %s30 = sadd.s32 1, %s21
      %s31 = scalar_select %p28, %s30, %s21
      %p32 = scmp.ge.s32.totalorder %s31, 2
      %s33 = scalar_select %p32, 0, %s31
      %s34 = ssub.s32 %s21, %s33
      %s35 = ssub.s32 %s22, %s29
      %s36 = sor.u32 %s34, %s35
      %p37 = scmp.eq.s32.totalorder %s36, 0
      %s39 = sadd.s32 %s38, 1
      %s40 = scalar_select %p37, %s38, %s39
      %p43 = pneg %p37
      %p44 = scmp.eq.s32.totalorder %s14, 1
      %p45 = por %p43, %p44
      %p46 = scmp.ne.s32.totalorder %s38, %s41
      %p47 = scmp.eq.s32.totalorder %s14, 0
      %p48 = por %p46, %p47
      %p49 = scmp.ne.s32.totalorder %s38, %s41
      %p50 = scmp.eq.s32.totalorder %s19, 1
      %p51 = por %p49, %p50
      %p52 = scmp.ne.s32.totalorder %s41, %s42
      %p53 = scmp.eq.s32.totalorder %s19, 0
      %p54 = por %p52, %p53
      %p55 = scmp.ne.s32.totalorder %s41, %s42
      %p56 = scmp.eq.s32.totalorder %s20, 1
      %p57 = por %p55, %p56
      %p59 = scmp.ne.s32.totalorder %s42, %s58
      %p60 = scmp.eq.s32.totalorder %s20, 0
      %p61 = por %p59, %p60
      %s62 = ssub.s32 %s21, %s33
      %p63 = scmp.eq.s32.totalorder %s62, 0
      %s65 = sadd.s32 %s64, 1
      %s66 = scalar_select %p63, %s64, %s65
      %p69 = pneg %p63
      %p70 = scmp.eq.s32.totalorder %s14, 1
      %p71 = por %p69, %p70
      %p72 = scmp.ne.s32.totalorder %s64, %s67
      %p73 = scmp.eq.s32.totalorder %s14, 0
      %p74 = por %p72, %p73
      %p75 = scmp.ne.s32.totalorder %s64, %s67
      %p76 = scmp.eq.s32.totalorder %s19, 1
      %p77 = por %p75, %p76
      %p78 = scmp.ne.s32.totalorder %s67, %s68
      %p79 = scmp.eq.s32.totalorder %s19, 0
      %p80 = por %p78, %p79
      %p81 = scmp.ne.s32.totalorder %s67, %s68
      %p82 = scmp.eq.s32.totalorder %s20, 1
      %p83 = por %p81, %p82
      %p85 = scmp.ne.s32.totalorder %s68, %s84
      %p86 = scmp.eq.s32.totalorder %s20, 0
      %p87 = por %p85, %p86
      %s88 = ssub.s32 %s21, %s33
      %p89 = scmp.eq.s32.totalorder %s88, 0
      %s91 = sadd.s32 %s90, 1
      %s92 = scalar_select %p89, %s90, %s91
      %p95 = pneg %p89
      %p96 = scmp.eq.s32.totalorder %s14, 1
      %p97 = por %p95, %p96
      %p98 = scmp.ne.s32.totalorder %s90, %s93
      %p99 = scmp.eq.s32.totalorder %s14, 0
      %p100 = por %p98, %p99
      %p101 = scmp.ne.s32.totalorder %s90, %s93
      %p102 = scmp.eq.s32.totalorder %s19, 1
      %p103 = por %p101, %p102
      %p104 = scmp.ne.s32.totalorder %s93, %s94
      %p105 = scmp.eq.s32.totalorder %s19, 0
      %p106 = por %p104, %p105
      %p107 = scmp.ne.s32.totalorder %s93, %s94
      %p108 = scmp.eq.s32.totalorder %s20, 1
      %p109 = por %p107, %p108
      %p111 = scmp.ne.s32.totalorder %s94, %s110
      %p112 = scmp.eq.s32.totalorder %s20, 0
      %p113 = por %p111, %p112
      %s114 = ssub.s32 %s22, %s29
      %p115 = scmp.eq.s32.totalorder %s114, 0
      %s117 = sadd.s32 %s116, 1
      %s118 = scalar_select %p115, %s116, %s117
      %p121 = pneg %p115
      %p122 = scmp.eq.s32.totalorder %s14, 1
      %p123 = por %p121, %p122
      %p124 = scmp.ne.s32.totalorder %s116, %s119
      %p125 = scmp.eq.s32.totalorder %s14, 0
      %p126 = por %p124, %p125
      %p127 = scmp.ne.s32.totalorder %s116, %s119
      %p128 = scmp.eq.s32.totalorder %s19, 1
      %p129 = por %p127, %p128
      %p130 = scmp.ne.s32.totalorder %s119, %s120
      %p131 = scmp.eq.s32.totalorder %s19, 0
      %p132 = por %p130, %p131
      %p133 = scmp.ne.s32.totalorder %s119, %s120
      %p134 = scmp.eq.s32.totalorder %s20, 1
      %p135 = por %p133, %p134
      %p137 = scmp.ne.s32.totalorder %s120, %s136
      %p138 = scmp.eq.s32.totalorder %s20, 0
      %p139 = por %p137, %p138
      %s140 = ssub.s32 %s22, %s29
      %p141 = scmp.eq.s32.totalorder %s140, 0
      %s143 = sadd.s32 %s142, 1
      %s144 = scalar_select %p141, %s142, %s143
      %p147 = pneg %p141
      %p148 = scmp.eq.s32.totalorder %s14, 1
      %p149 = por %p147, %p148
      %p150 = scmp.ne.s32.totalorder %s142, %s145
      %p151 = scmp.eq.s32.totalorder %s14, 0
      %p152 = por %p150, %p151
      %p153 = scmp.ne.s32.totalorder %s142, %s145
      %p154 = scmp.eq.s32.totalorder %s19, 1
      %p155 = por %p153, %p154
      %p156 = scmp.ne.s32.totalorder %s145, %s146
      %p157 = scmp.eq.s32.totalorder %s19, 0
      %p158 = por %p156, %p157
      %p159 = scmp.ne.s32.totalorder %s145, %s146
      %p160 = scmp.eq.s32.totalorder %s20, 1
      %p161 = por %p159, %p160
      %p163 = scmp.ne.s32.totalorder %s146, %s162
      %p164 = scmp.eq.s32.totalorder %s20, 0
      %p165 = por %p163, %p164
      %s167 = sadd.s32 %s166, 1
      %p170 = scmp.eq.s32.totalorder %s14, 1
      %p171 = scmp.ne.s32.totalorder %s166, %s168
      %p172 = scmp.eq.s32.totalorder %s14, 0
      %p173 = por %p171, %p172
      %p174 = scmp.ne.s32.totalorder %s166, %s168
      %p175 = scmp.eq.s32.totalorder %s19, 1
      %p176 = por %p174, %p175
      %p177 = scmp.ne.s32.totalorder %s168, %s169
      %p178 = scmp.eq.s32.totalorder %s19, 0
      %p179 = por %p177, %p178
      %p180 = scmp.ne.s32.totalorder %s168, %s169
      %p181 = scmp.eq.s32.totalorder %s20, 1
      %p182 = por %p180, %p181
      %p184 = scmp.ne.s32.totalorder %s169, %s183
      %p185 = scmp.eq.s32.totalorder %s20, 0
      %p186 = por %p184, %p185
      %s187 = sadd.s32 %s22, 3
      %s188 = sadd.s32 %s29, 3
      %s189 = ssub.s32 %s21, %s33
      %s190 = ssub.s32 %s187, %s188
      %s191 = sor.u32 %s189, %s190
      %p192 = scmp.eq.s32.totalorder %s191, 0
      %s194 = sadd.s32 %s193, 1
      %s195 = scalar_select %p192, %s193, %s194
      %p198 = pneg %p192
      %p199 = scmp.eq.s32.totalorder %s14, 1
      %p200 = por %p198, %p199
      %p201 = scmp.ne.s32.totalorder %s193, %s196
      %p202 = scmp.eq.s32.totalorder %s14, 0
      %p203 = por %p201, %p202
      %p204 = scmp.ne.s32.totalorder %s193, %s196
      %p205 = scmp.eq.s32.totalorder %s19, 1
      %p206 = por %p204, %p205
      %p207 = scmp.ne.s32.totalorder %s196, %s197
      %p208 = scmp.eq.s32.totalorder %s19, 0
      %p209 = por %p207, %p208
      %p210 = scmp.ne.s32.totalorder %s196, %s197
      %p211 = scmp.eq.s32.totalorder %s20, 1
      %p212 = por %p210, %p211
      %p214 = scmp.ne.s32.totalorder %s197, %s213
      %p215 = scmp.eq.s32.totalorder %s20, 0
      %p216 = por %p214, %p215
      %p217 = scmp.le.s32.totalorder 1, %s14
      %p218 = scmp.lt.s32.totalorder %s14, 3
      %p219 = pnand %p217, %p218
      %p220 = pneg %p219
      // Predicated region
      $region9: #{dense_fc_forward.21} parent=5 // pred_check
        _
      $region10: #{dense_fc_forward.21} parent=5 // pred_check_branch
        %222 = sbr.rel (%p219) target = $region12
      $region11: #{dense_fc_forward.21} parent=5 // pred_region
        %s223 = ssub.s32 %s14, 1
        // Predicated region
        $region13: #{dense_fc_forward.21} parent=11 // pred_check
          %p224 = pneg %p132
        $region14: #{dense_fc_forward.21} parent=11 // pred_check_branch
          %226 = sbr.rel (%p224) target = $region16
        $region15: #{dense_fc_forward.21} parent=11 // pred_region
          %p227 = scmp.lt.s32.totalorder %s24, 0
          %s228 = scalar_select %p227, %s24, 0
          %s229 = smul.addr %s228, 4
          %s230 = scalar_lea.vmem %s3, %s229
        $region16: #{dense_fc_forward.21} parent=11 // pred_fallthru
          _
        // Predicated region
        $region17: #{dense_fc_forward.21} parent=11 // pred_check
          %p231 = pneg %p158
        $region18: #{dense_fc_forward.21} parent=11 // pred_check_branch
          %233 = sbr.rel (%p231) target = $region20
        $region19: #{dense_fc_forward.21} parent=11 // pred_region
          %p234 = scmp.lt.s32.totalorder %s24, 0
          %s235 = scalar_select %p234, %s24, 0
          %s236 = smul.addr %s235, 4
          %s237 = scalar_lea.vmem %s4, %s236
        $region20: #{dense_fc_forward.21} parent=11 // pred_fallthru
          _
        // Predicated region
        $region21: #{dense_fc_forward.21} parent=11 // pred_check
          %p238 = pneg %p179
        $region22: #{dense_fc_forward.21} parent=11 // pred_check_branch
          %240 = sbr.rel (%p238) target = $region24
        $region23: #{dense_fc_forward.21} parent=11 // pred_region
          _
        $region24: #{dense_fc_forward.21} parent=11 // pred_fallthru
          _
      $region12: #{dense_fc_forward.21} parent=5 // pred_fallthru
        _
      %p241 = scmp.lt.s32.totalorder %s14, 2
      // Predicated region
      $region25: #{dense_fc_forward.21} parent=5 // pred_check
        %p242 = pneg %p241
      $region26: #{dense_fc_forward.21} parent=5 // pred_check_branch
        %244 = sbr.rel (%p242) target = $region28
      $region27: #{dense_fc_forward.21} parent=5 // pred_region
        // Predicated region
        $region29: #{dense_fc_forward.21} parent=27 // pred_check
          %p245 = pneg %p48
        $region30: #{dense_fc_forward.21} parent=27 // pred_check_branch
          %247 = sbr.rel (%p245) target = $region32
        $region31: #{dense_fc_forward.21} parent=27 // pred_region
          %p248 = scmp.lt.s32.totalorder %s21, 1
          %s249 = scalar_select %p248, %s21, 1
          %p250 = scmp.lt.s32.totalorder %s22, 0
          %s251 = scalar_select %p250, %s22, 0
          %s252 = smul.addr %s249, 13
          %s253 = sadd.s32 %s251, %s252
          %s254 = smul.addr %s253, 4
          %s255 = scalar_lea.vmem %s0, %s254
        $region32: #{dense_fc_forward.21} parent=27 // pred_fallthru
          _
        // Predicated region
        $region33: #{dense_fc_forward.21} parent=27 // pred_check
          %p256 = pneg %p74
        $region34: #{dense_fc_forward.21} parent=27 // pred_check_branch
          %258 = sbr.rel (%p256) target = $region36
        $region35: #{dense_fc_forward.21} parent=27 // pred_region
          %p259 = scmp.lt.s32.totalorder %s21, 1
          %s260 = scalar_select %p259, %s21, 1
          %s261 = smul.addr %s260, 8
          %s262 = scalar_lea.vmem %s1, %s261
        $region36: #{dense_fc_forward.21} parent=27 // pred_fallthru
          _
        // Predicated region
        $region37: #{dense_fc_forward.21} parent=27 // pred_check
          %p263 = pneg %p100
        $region38: #{dense_fc_forward.21} parent=27 // pred_check_branch
          %265 = sbr.rel (%p263) target = $region40
        $region39: #{dense_fc_forward.21} parent=27 // pred_region
          %p266 = scmp.lt.s32.totalorder %s21, 1
          %s267 = scalar_select %p266, %s21, 1
          %s268 = smul.addr %s267, 8
          %s269 = scalar_lea.vmem %s2, %s268
        $region40: #{dense_fc_forward.21} parent=27 // pred_fallthru
          _
      $region28: #{dense_fc_forward.21} parent=5 // pred_fallthru
        _
      %p270 = scmp.le.s32.totalorder 1, %s14
      %p271 = scmp.lt.s32.totalorder %s14, 3
      %p272 = pnand %p270, %p271
      %p273 = pneg %p272
      // Predicated region
      $region41: #{dense_fc_forward.21} parent=5 // pred_check
        _
      $region42: #{dense_fc_forward.21} parent=5 // pred_check_branch
        %275 = sbr.rel (%p272) target = $region44
      $region43: #{dense_fc_forward.21} parent=5 // pred_region
        %s276 = ssub.s32 %s14, 1
        %p277 = scmp.lt.s32.totalorder %s23, 1
        %s278 = scalar_select %p277, %s23, 1
        %p279 = scmp.lt.s32.totalorder %s24, 0
        %s280 = scalar_select %p279, %s24, 0
        %s281 = smul.addr %s278, 13
        %s282 = sadd.s32 %s280, %s281
        %s283 = smul.addr %s282, 4
        %s284 = scalar_lea.vmem %s0, %s283
        %p285 = pneg %p54
        %p286 = pneg %p51
        %p287 = scmp.lt.s32.totalorder %s23, 1
        %s288 = scalar_select %p287, %s23, 1
        %s289 = smul.addr %s288, 8
        %s290 = scalar_lea.vmem %s1, %s289
        %p291 = pneg %p80
        %p292 = pneg %p77
        %p293 = scmp.lt.s32.totalorder %s23, 1
        %s294 = scalar_select %p293, %s23, 1
        %s295 = smul.addr %s294, 8
        %s296 = scalar_lea.vmem %s2, %s295
        %p297 = pneg %p106
        %p298 = pneg %p103
        %p299 = scmp.lt.s32.totalorder %s24, 0
        %s300 = scalar_select %p299, %s24, 0
        %s301 = smul.addr %s300, 4
        %s302 = scalar_lea.vmem %s3, %s301
        %p303 = pneg %p132
        %p304 = pneg %p129
        %p305 = scmp.lt.s32.totalorder %s24, 0
        %s306 = scalar_select %p305, %s24, 0
        %s307 = smul.addr %s306, 4
        %s308 = scalar_lea.vmem %s4, %s307
        %p309 = pneg %p158
        %p310 = pneg %p155
        %p311 = pneg %p179
        %p312 = pneg %p176
        %p313 = pneg %p209
        %p314 = pneg %p206
        %s315 = sand.u32 %s196, 1
        %s316 = sand.u32 %s196, 1
        %s317 = smul.addr %s316, 52
        %s318 = scalar_lea.vmem [#allocation3], %s317
        %p319 = scmp.lt.s32.totalorder %s23, 1
        %s320 = scalar_select %p319, %s23, 1
        %p321 = scmp.lt.s32.totalorder %s24, 0
        %s322 = scalar_select %p321, %s24, 0
        %s323 = smul.addr %s320, 13
        %s324 = sadd.s32 %s322, %s323
        %s325 = smul.addr %s324, 4
        %s326 = scalar_lea.vmem %s0, %s325
        %p327 = scmp.lt.s32.totalorder %s23, 1
        %s328 = scalar_select %p327, %s23, 1
        %s329 = smul.addr %s328, 8
        %s330 = scalar_lea.vmem %s1, %s329
        %p331 = scmp.lt.s32.totalorder %s23, 1
        %s332 = scalar_select %p331, %s23, 1
        %s333 = smul.addr %s332, 8
        %s334 = scalar_lea.vmem %s2, %s333
        %p335 = scmp.lt.s32.totalorder %s24, 0
        %s336 = scalar_select %p335, %s24, 0
        %s337 = smul.addr %s336, 4
        %s338 = scalar_lea.vmem %s3, %s337
        %p339 = scmp.lt.s32.totalorder %s24, 0
        %s340 = scalar_select %p339, %s24, 0
        %s341 = smul.addr %s340, 4
        %s342 = scalar_lea.vmem %s4, %s341
        %s343 = sadd.s32 %s24, 3
        %v344 = vld [vmem:[%s326] sm:$0xf]
        %v345 = vld [vmem:[%s326 + $0x4] sm:$0xf]
        %v346 = vld [vmem:[%s326 + $0x8] sm:$0xf]
        %v347 = vld [vmem:[%s326 + $0xc] sm:$0xf]
        %v348 = vld [vmem:[%s326 + $0x10] sm:$0xf]
        %v349 = vld [vmem:[%s326 + $0x14] sm:$0xf]
        %v350 = vld [vmem:[%s326 + $0x18] sm:$0xf]
        %v351 = vld [vmem:[%s326 + $0x1c] sm:$0xf]
        %v352 = vld [vmem:[%s326 + $0x20] sm:$0xf]
        %v353 = vld [vmem:[%s326 + $0x24] sm:$0xf]
        %v354 = vld [vmem:[%s326 + $0x28] sm:$0xf]
        %v355 = vld [vmem:[%s326 + $0x2c] sm:$0xf]
        %v356 = vld [vmem:[%s326 + $0x30] sm:$0x7]
        %v357 = vunpack.c.l.bf16 %v344
        %v358 = vunpack.c.l.bf16 %v345
        %v359 = vunpack.c.l.bf16 %v346
        %v360 = vunpack.c.l.bf16 %v347
        %v361 = vunpack.c.l.bf16 %v348
        %v362 = vunpack.c.l.bf16 %v349
        %v363 = vunpack.c.l.bf16 %v350
        %v364 = vunpack.c.l.bf16 %v351
        %v365 = vunpack.c.l.bf16 %v352
        %v366 = vunpack.c.l.bf16 %v353
        %v367 = vunpack.c.l.bf16 %v354
        %v368 = vunpack.c.l.bf16 %v355
        %v369 = vunpack.c.l.bf16 %v356
        %v370 = vld [vmem:[%s330] sm:$0x1]
        %s371 = vtos %v370
        %v372 = vld [vmem:[%s334] sm:$0x1]
        %s373 = vtos %v372
        %v374 = vstv %s371
        %v375 = vsub.f32 %v357, %v374
        %v376 = vsub.f32 %v358, %v374
        %v377 = vsub.f32 %v359, %v374
        %v378 = vsub.f32 %v360, %v374
        %v379 = vsub.f32 %v361, %v374
        %v380 = vsub.f32 %v362, %v374
        %v381 = vsub.f32 %v363, %v374
        %v382 = vsub.f32 %v364, %v374
        %v383 = vsub.f32 %v365, %v374
        %v384 = vsub.f32 %v366, %v374
        %v385 = vsub.f32 %v367, %v374
        %v386 = vsub.f32 %v368, %v374
        %v387 = vsub.f32 %v369, %v374
        %v388 = vstv %s373
        %v389 = vmul.f32 %v375, %v388
        %v390 = vmul.f32 %v376, %v388
        %v391 = vmul.f32 %v377, %v388
        %v392 = vmul.f32 %v378, %v388
        %v393 = vmul.f32 %v379, %v388
        %v394 = vmul.f32 %v380, %v388
        %v395 = vmul.f32 %v381, %v388
        %v396 = vmul.f32 %v382, %v388
        %v397 = vmul.f32 %v383, %v388
        %v398 = vmul.f32 %v384, %v388
        %v399 = vmul.f32 %v385, %v388
        %v400 = vmul.f32 %v386, %v388
        %v401 = vmul.f32 %v387, %v388
        %v402 = vld [vmem:[%s338] sm:$0xf]
        %v403 = vld [vmem:[%s338 + $0x4] sm:$0xf]
        %v404 = vld [vmem:[%s338 + $0x8] sm:$0xf]
        %v405 = vld [vmem:[%s338 + $0xc] sm:$0xf]
        %v406 = vld [vmem:[%s338 + $0x10] sm:$0xf]
        %v407 = vld [vmem:[%s338 + $0x14] sm:$0xf]
        %v408 = vld [vmem:[%s338 + $0x18] sm:$0xf]
        %v409 = vld [vmem:[%s338 + $0x1c] sm:$0xf]
        %v410 = vld [vmem:[%s338 + $0x20] sm:$0xf]
        %v411 = vld [vmem:[%s338 + $0x24] sm:$0xf]
        %v412 = vld [vmem:[%s338 + $0x28] sm:$0xf]
        %v413 = vld [vmem:[%s338 + $0x2c] sm:$0xf]
        %v414 = vld [vmem:[%s338 + $0x30] sm:$0x7]
        %v415 = vunpack.c.l.bf16 %v402
        %v416 = vunpack.c.l.bf16 %v403
        %v417 = vunpack.c.l.bf16 %v404
        %v418 = vunpack.c.l.bf16 %v405
        %v419 = vunpack.c.l.bf16 %v406
        %v420 = vunpack.c.l.bf16 %v407
        %v421 = vunpack.c.l.bf16 %v408
        %v422 = vunpack.c.l.bf16 %v409
        %v423 = vunpack.c.l.bf16 %v410
        %v424 = vunpack.c.l.bf16 %v411
        %v425 = vunpack.c.l.bf16 %v412
        %v426 = vunpack.c.l.bf16 %v413
        %v427 = vunpack.c.l.bf16 %v414
        %v428 = vmul.f32 %v389, %v415
        %v429 = vmul.f32 %v390, %v416
        %v430 = vmul.f32 %v391, %v417
        %v431 = vmul.f32 %v392, %v418
        %v432 = vmul.f32 %v393, %v419
        %v433 = vmul.f32 %v394, %v420
        %v434 = vmul.f32 %v395, %v421
        %v435 = vmul.f32 %v396, %v422
        %v436 = vmul.f32 %v397, %v423
        %v437 = vmul.f32 %v398, %v424
        %v438 = vmul.f32 %v399, %v425
        %v439 = vmul.f32 %v400, %v426
        %v440 = vmul.f32 %v401, %v427
        %v441 = vld [vmem:[%s342] sm:$0xf]
        %v442 = vld [vmem:[%s342 + $0x4] sm:$0xf]
        %v443 = vld [vmem:[%s342 + $0x8] sm:$0xf]
        %v444 = vld [vmem:[%s342 + $0xc] sm:$0xf]
        %v445 = vld [vmem:[%s342 + $0x10] sm:$0xf]
        %v446 = vld [vmem:[%s342 + $0x14] sm:$0xf]
        %v447 = vld [vmem:[%s342 + $0x18] sm:$0xf]
        %v448 = vld [vmem:[%s342 + $0x1c] sm:$0xf]
        %v449 = vld [vmem:[%s342 + $0x20] sm:$0xf]
        %v450 = vld [vmem:[%s342 + $0x24] sm:$0xf]
        %v451 = vld [vmem:[%s342 + $0x28] sm:$0xf]
        %v452 = vld [vmem:[%s342 + $0x2c] sm:$0xf]
        %v453 = vld [vmem:[%s342 + $0x30] sm:$0x7]
        %v454 = vunpack.c.l.bf16 %v441
        %v455 = vunpack.c.l.bf16 %v442
        %v456 = vunpack.c.l.bf16 %v443
        %v457 = vunpack.c.l.bf16 %v444
        %v458 = vunpack.c.l.bf16 %v445
        %v459 = vunpack.c.l.bf16 %v446
        %v460 = vunpack.c.l.bf16 %v447
        %v461 = vunpack.c.l.bf16 %v448
        %v462 = vunpack.c.l.bf16 %v449
        %v463 = vunpack.c.l.bf16 %v450
        %v464 = vunpack.c.l.bf16 %v451
        %v465 = vunpack.c.l.bf16 %v452
        %v466 = vunpack.c.l.bf16 %v453
        %v467 = vadd.f32 %v428, %v454
        %v468 = vadd.f32 %v429, %v455
        %v469 = vadd.f32 %v430, %v456
        %v470 = vadd.f32 %v431, %v457
        %v471 = vadd.f32 %v432, %v458
        %v472 = vadd.f32 %v433, %v459
        %v473 = vadd.f32 %v434, %v460
        %v474 = vadd.f32 %v435, %v461
        %v475 = vadd.f32 %v436, %v462
        %v476 = vadd.f32 %v437, %v463
        %v477 = vadd.f32 %v438, %v464
        %v478 = vadd.f32 %v439, %v465
        %v479 = vadd.f32 %v440, %v466
        %s480 = sld [smem:[#allocation2]]
        %vm481 = vcmp.ge.f32.partialorder %v467, 0.0
        %vm482 = vcmp.ge.f32.partialorder %v468, 0.0
        %vm483 = vcmp.ge.f32.partialorder %v469, 0.0
        %vm484 = vcmp.ge.f32.partialorder %v470, 0.0
        %vm485 = vcmp.ge.f32.partialorder %v471, 0.0
        %vm486 = vcmp.ge.f32.partialorder %v472, 0.0
        %vm487 = vcmp.ge.f32.partialorder %v473, 0.0
        %vm488 = vcmp.ge.f32.partialorder %v474, 0.0
        %vm489 = vcmp.ge.f32.partialorder %v475, 0.0
        %vm490 = vcmp.ge.f32.partialorder %v476, 0.0
        %vm491 = vcmp.ge.f32.partialorder %v477, 0.0
        %vm492 = vcmp.ge.f32.partialorder %v478, 0.0
        %vm493 = vcmp.ge.f32.partialorder %v479, 0.0
        %v494 = vstv %s480
        %v495 = vmul.f32 %v494, %v467
        %v496 = vmul.f32 %v494, %v468
        %v497 = vmul.f32 %v494, %v469
        %v498 = vmul.f32 %v494, %v470
        %v499 = vmul.f32 %v494, %v471
        %v500 = vmul.f32 %v494, %v472
        %v501 = vmul.f32 %v494, %v473
        %v502 = vmul.f32 %v494, %v474
        %v503 = vmul.f32 %v494, %v475
        %v504 = vmul.f32 %v494, %v476
        %v505 = vmul.f32 %v494, %v477
        %v506 = vmul.f32 %v494, %v478
        %v507 = vmul.f32 %v494, %v479
        %v508 = vsel %vm481, %v467, %v495
        %v509 = vsel %vm482, %v468, %v496
        %v510 = vsel %vm483, %v469, %v497
        %v511 = vsel %vm484, %v470, %v498
        %v512 = vsel %vm485, %v471, %v499
        %v513 = vsel %vm486, %v472, %v500
        %v514 = vsel %vm487, %v473, %v501
        %v515 = vsel %vm488, %v474, %v502
        %v516 = vsel %vm489, %v475, %v503
        %v517 = vsel %vm490, %v476, %v504
        %v518 = vsel %vm491, %v477, %v505
        %v519 = vsel %vm492, %v478, %v506
        %v520 = vsel %vm493, %v479, %v507
        %v521 = vpack.c.bf16 %v509, %v508
        %v522 = vpack.c.bf16 %v511, %v510
        %v523 = vpack.c.bf16 %v513, %v512
        %v524 = vpack.c.bf16 %v515, %v514
        %v525 = vpack.c.bf16 %v517, %v516
        %v526 = vpack.c.bf16 %v519, %v518
        %v527 = vpack.c.bf16 %v520, %v520
        %v535 = vunpack.c.l.b16 %v521
        %v536 = vunpack.c.h.b16 %v521
        %v537 = vunpack.c.l.b16 %v522
        %v538 = vunpack.c.h.b16 %v522
        %v539 = vunpack.c.l.b16 %v523
        %v540 = vunpack.c.h.b16 %v523
        %v541 = vunpack.c.l.b16 %v524
        %v542 = vunpack.c.h.b16 %v524
        %v543 = vunpack.c.l.b16 %v525
        %v544 = vunpack.c.h.b16 %v525
        %v545 = vunpack.c.l.b16 %v526
        %v546 = vunpack.c.h.b16 %v526
        %v547 = vunpack.c.l.b16 %v527
        %v548 = vpack.c.b16 %v535, %v535
        %v549 = vpack.c.b16 %v536, %v536
        %v550 = vpack.c.b16 %v537, %v537
        %v551 = vpack.c.b16 %v538, %v538
        %v552 = vpack.c.b16 %v539, %v539
        %v553 = vpack.c.b16 %v540, %v540
        %v554 = vpack.c.b16 %v541, %v541
        %v555 = vpack.c.b16 %v542, %v542
        %v556 = vpack.c.b16 %v543, %v543
        %v557 = vpack.c.b16 %v544, %v544
        %v558 = vpack.c.b16 %v545, %v545
        %v559 = vpack.c.b16 %v546, %v546
        %v560 = vpack.c.b16 %v547, %v547
        %574 = vst [vmem:[%s318] sm:$0xf] %v548
        %575 = vst [vmem:[%s318 + $0x4] sm:$0xf] %v549
        %576 = vst [vmem:[%s318 + $0x8] sm:$0xf] %v550
        %577 = vst [vmem:[%s318 + $0xc] sm:$0xf] %v551
        %578 = vst [vmem:[%s318 + $0x10] sm:$0xf] %v552
        %579 = vst [vmem:[%s318 + $0x14] sm:$0xf] %v553
        %580 = vst [vmem:[%s318 + $0x18] sm:$0xf] %v554
        %581 = vst [vmem:[%s318 + $0x1c] sm:$0xf] %v555
        %582 = vst [vmem:[%s318 + $0x20] sm:$0xf] %v556
        %583 = vst [vmem:[%s318 + $0x24] sm:$0xf] %v557
        %584 = vst [vmem:[%s318 + $0x28] sm:$0xf] %v558
        %585 = vst [vmem:[%s318 + $0x2c] sm:$0xf] %v559
        %586 = vst [vmem:[%s318 + $0x30] sm:$0x7] %v560
        %s587 = sand.u32 %s196, 1
        %s588 = sand.u32 %s196, 1
        %s589 = smul.addr %s588, 52
        %s590 = scalar_lea.vmem [#allocation3], %s589
        // Predicated region
        $region45: #{dense_fc_forward.21} parent=43 // pred_check
          %p591 = pneg %p206
        $region46: #{dense_fc_forward.21} parent=43 // pred_check_branch
          %593 = sbr.rel (%p591) target = $region48
        $region47: #{dense_fc_forward.21} parent=43 // pred_region
          %s594 = sadd.s32 %s24, 3
          %s595 = smul.addr %s23, 52
          %s596 = sadd.s32 %s594, %s595
          %s597 = smul.addr %s596, 4
          %s598 = scalar_lea.vmem %s7, %s597
          // Predicated region
          $region49: #{dense_fc_forward.21} parent=47 // pred_check
            _
          $region50: #{dense_fc_forward.21} parent=47 // pred_check_branch
            %600 = sbr.rel (0) target = $region52
          $region51: #{dense_fc_forward.21} parent=47 // pred_region
            // Predicated region
            $region53: #{dense_fc_forward.21} parent=51 // pred_check
              _
            $region54: #{dense_fc_forward.21} parent=51 // pred_check_branch
              %602 = sbr.rel target = $region56
            $region55: #{dense_fc_forward.21} parent=51 // pred_region
              // Predicated region
              $region68: #{dense_fc_forward.21} parent=55 // pred_check
                _
              $region69: #{dense_fc_forward.21} parent=55 // pred_check_branch
                %641 = sbr.rel (0) target = $region71
              $region70: #{dense_fc_forward.21} parent=55 // pred_region
                loop: start=0, step=1, limit=1
                $region72: #{dense_fc_forward.21} parent=70 // loop_pre_header
                  _
                $region73: #{dense_fc_forward.21} parent=70 // loop_header
                  %s643 = sphi 0, %s647
                  %p644 = scmp.ge.s32.totalorder %s643, 1
                  %s648 = sphi %s590, %s590
                  %s649 = sphi %s598, %s598
                $region74: #{dense_fc_forward.21} parent=70 // loop_header_branch
                  %646 = sbr.rel (%p644) target = $region78
                $region75: #{dense_fc_forward.21} parent=70 // loop_body
                  _
                $region76: #{dense_fc_forward.21} parent=70 // loop_footer
                  %s647 = sadd.s32 1, %s643
                $region77: #{dense_fc_forward.21} parent=70 // loop_footer_branch
                  %642 = sbr.rel target = $region73
                $region78: #{dense_fc_forward.21} parent=70 // loop_exit
                  _
                loop: start=0, step=1, limit=1
                $region79: #{dense_fc_forward.21} parent=70 // loop_pre_header
                  _
                $region80: #{dense_fc_forward.21} parent=70 // loop_header
                  %s652 = sphi 0, %s656
                  %p653 = scmp.ge.s32.totalorder %s652, 1
                  %s657 = sphi %s590, %s590
                  %s658 = sphi %s598, %s598
                $region81: #{dense_fc_forward.21} parent=70 // loop_header_branch
                  %655 = sbr.rel (%p653) target = $region85
                $region82: #{dense_fc_forward.21} parent=70 // loop_body
                  %v659 = vld [vmem:[%s657] sm:$0xf]
                  %660 = vst [vmem:[%s658] sm:$0xf] %v659
                  %v661 = vld [vmem:[%s657 + $0x4] sm:$0xf]
                  %662 = vst [vmem:[%s658 + $0x10] sm:$0xf] %v661
                  %v663 = vld [vmem:[%s657 + $0x8] sm:$0xf]
                  %664 = vst [vmem:[%s658 + $0x20] sm:$0xf] %v663
                  %v665 = vld [vmem:[%s657 + $0xc] sm:$0xf]
                  %666 = vst [vmem:[%s658 + $0x30] sm:$0xf] %v665
                  %v667 = vld [vmem:[%s657 + $0x10] sm:$0xf]
                  %668 = vst [vmem:[%s658 + $0x40] sm:$0xf] %v667
                  %v669 = vld [vmem:[%s657 + $0x14] sm:$0xf]
                  %670 = vst [vmem:[%s658 + $0x50] sm:$0xf] %v669
                  %v671 = vld [vmem:[%s657 + $0x18] sm:$0xf]
                  %672 = vst [vmem:[%s658 + $0x60] sm:$0xf] %v671
                  %v673 = vld [vmem:[%s657 + $0x1c] sm:$0xf]
                  %674 = vst [vmem:[%s658 + $0x70] sm:$0xf] %v673
                  %v675 = vld [vmem:[%s657 + $0x20] sm:$0xf]
                  %676 = vst [vmem:[%s658 + $0x80] sm:$0xf] %v675
                  %v677 = vld [vmem:[%s657 + $0x24] sm:$0xf]
                  %678 = vst [vmem:[%s658 + $0x90] sm:$0xf] %v677
                  %v679 = vld [vmem:[%s657 + $0x28] sm:$0xf]
                  %680 = vst [vmem:[%s658 + $0xa0] sm:$0xf] %v679
                  %v681 = vld [vmem:[%s657 + $0x2c] sm:$0xf]
                  %682 = vst [vmem:[%s658 + $0xb0] sm:$0xf] %v681
                  %v683 = vld [vmem:[%s657 + $0x30] sm:$0xf]
                  %684 = vst [vmem:[%s658 + $0xc0] sm:$0xf] %v683
                $region83: #{dense_fc_forward.21} parent=70 // loop_footer
                  %s656 = sadd.s32 1, %s652
                $region84: #{dense_fc_forward.21} parent=70 // loop_footer_branch
                  %651 = sbr.rel target = $region80
                $region85: #{dense_fc_forward.21} parent=70 // loop_exit
                  _
              $region71: #{dense_fc_forward.21} parent=55 // pred_fallthru
                _
            $region56: #{dense_fc_forward.21} parent=51 // pred_fallthru
              _
            // Predicated region
            $region57: #{dense_fc_forward.21} parent=51 // pred_check
              _
            $region58: #{dense_fc_forward.21} parent=51 // pred_check_branch
              %604 = sbr.rel (0) target = $region60
            $region59: #{dense_fc_forward.21} parent=51 // pred_region
              loop: start=0, step=1, limit=1
              $region61: #{dense_fc_forward.21} parent=59 // loop_pre_header
                _
              $region62: #{dense_fc_forward.21} parent=59 // loop_header
                %s607 = sphi 0, %s611
                %p608 = scmp.ge.s32.totalorder %s607, 1
                %s612 = sphi %s590, %s590
                %s613 = sphi %s598, %s598
              $region63: #{dense_fc_forward.21} parent=59 // loop_header_branch
                %610 = sbr.rel (%p608) target = $region67
              $region64: #{dense_fc_forward.21} parent=59 // loop_body
                %v614 = vld [vmem:[%s612] sm:$0xf]
                %615 = vst [vmem:[%s613] sm:$0xf] %v614
                %v616 = vld [vmem:[%s612 + $0x4] sm:$0xf]
                %617 = vst [vmem:[%s613 + $0x10] sm:$0xf] %v616
                %v618 = vld [vmem:[%s612 + $0x8] sm:$0xf]
                %619 = vst [vmem:[%s613 + $0x20] sm:$0xf] %v618
                %v620 = vld [vmem:[%s612 + $0xc] sm:$0xf]
                %621 = vst [vmem:[%s613 + $0x30] sm:$0xf] %v620
                %v622 = vld [vmem:[%s612 + $0x10] sm:$0xf]
                %623 = vst [vmem:[%s613 + $0x40] sm:$0xf] %v622
                %v624 = vld [vmem:[%s612 + $0x14] sm:$0xf]
                %625 = vst [vmem:[%s613 + $0x50] sm:$0xf] %v624
                %v626 = vld [vmem:[%s612 + $0x18] sm:$0xf]
                %627 = vst [vmem:[%s613 + $0x60] sm:$0xf] %v626
                %v628 = vld [vmem:[%s612 + $0x1c] sm:$0xf]
                %629 = vst [vmem:[%s613 + $0x70] sm:$0xf] %v628
                %v630 = vld [vmem:[%s612 + $0x20] sm:$0xf]
                %631 = vst [vmem:[%s613 + $0x80] sm:$0xf] %v630
                %v632 = vld [vmem:[%s612 + $0x24] sm:$0xf]
                %633 = vst [vmem:[%s613 + $0x90] sm:$0xf] %v632
                %v634 = vld [vmem:[%s612 + $0x28] sm:$0xf]
                %635 = vst [vmem:[%s613 + $0xa0] sm:$0xf] %v634
                %v636 = vld [vmem:[%s612 + $0x2c] sm:$0xf]
                %637 = vst [vmem:[%s613 + $0xb0] sm:$0xf] %v636
                %v638 = vld [vmem:[%s612 + $0x30] sm:$0xf]
                %639 = vst [vmem:[%s613 + $0xc0] sm:$0xf] %v638
              $region65: #{dense_fc_forward.21} parent=59 // loop_footer
                %s611 = sadd.s32 1, %s607
              $region66: #{dense_fc_forward.21} parent=59 // loop_footer_branch
                %606 = sbr.rel target = $region62
              $region67: #{dense_fc_forward.21} parent=59 // loop_exit
                _
            $region60: #{dense_fc_forward.21} parent=51 // pred_fallthru
              _
          $region52: #{dense_fc_forward.21} parent=47 // pred_fallthru
            _
          %685 = vnop
        $region48: #{dense_fc_forward.21} parent=43 // pred_fallthru
          _
      $region44: #{dense_fc_forward.21} parent=5 // pred_fallthru
        _
      %p686 = scmp.le.s32.totalorder 2, %s14
      // Predicated region
      $region86: #{dense_fc_forward.21} parent=5 // pred_check
        %p687 = pneg %p686
      $region87: #{dense_fc_forward.21} parent=5 // pred_check_branch
        %689 = sbr.rel (%p687) target = $region89
      $region88: #{dense_fc_forward.21} parent=5 // pred_region
        %s690 = ssub.s32 %s14, 2
        // Predicated region
        $region90: #{dense_fc_forward.21} parent=88 // pred_check
          %p691 = pneg %p212
        $region91: #{dense_fc_forward.21} parent=88 // pred_check_branch
          %693 = sbr.rel (%p691) target = $region93
        $region92: #{dense_fc_forward.21} parent=88 // pred_region
          %s694 = sand.u32 %s197, 1
          %s695 = sand.u32 %s197, 1
          %s696 = smul.addr %s695, 52
          %s697 = scalar_lea.vmem [#allocation3], %s696
        $region93: #{dense_fc_forward.21} parent=88 // pred_fallthru
          _
      $region89: #{dense_fc_forward.21} parent=5 // pred_fallthru
        _
    $region6: #{dense_fc_forward.21} parent=1 // loop_footer
      %s18 = sadd.s32 1, %s14
    $region7: #{dense_fc_forward.21} parent=1 // loop_footer_branch
      %13 = sbr.rel target = $region3
    $region8: #{dense_fc_forward.21} parent=1 // loop_exit
      _

// kernel: dense_fc_forward.19
$region0: #{dense_fc_forward.19}
  #allocation0 [shape = 'u32[]', space=smem, size = 0x4, offset = 0x4, fixed_abs, tag = 'smem constant byte address 0x4 - core index']
  #allocation1 [shape = 'u32[144,128]{1,0:T(1,128)}', space=vmem, size = 0x12000, scoped, tag = 'internal scratch']
  #allocation2 [shape = 'f32[208,128]{1,0:T(8,128)}', space=vmem, size = 0x1a000, scoped, tag = 'scratch operand']
  %s0 = inlined_call_operand.vmem [shape: bf16[204,512], index: 0, kind: input, shape index: {}]
  %s1 = inlined_call_operand.vmem [shape: bf16[384,128], index: 1, kind: input, shape index: {}]
  %s2 = inlined_call_operand.vmem [shape: f32[1,128], index: 2, kind: input, shape index: {}]
  %s3 = inlined_call_operand.vmem [shape: bf16[204,128], index: 3, kind: output, shape index: {}]
  %s4 = sld [smem:[#allocation0]]
  $region56: #{dense_fc_forward.19} parent=0
    _
  %s6 = ssub.s32 1, %s4
  %s7 = scalar_select 0, %s6, %s4
  $region1: #{dense_fc_forward.19} parent=0
    #allocation3 [shape = 'u8[159744]{0}', space=vmem, size = 0x27000, scoped, tag = 'input window, operand 0, single buffered']
    // Predicated region
    $region2: #{dense_fc_forward.19} parent=1 // pred_check
      _
    $region3: #{dense_fc_forward.19} parent=1 // pred_check_branch
      %9 = sbr.rel (0) target = $region5
    $region4: #{dense_fc_forward.19} parent=1 // pred_region
      // Predicated region
      $region6: #{dense_fc_forward.19} parent=4 // pred_check
        _
      $region7: #{dense_fc_forward.19} parent=4 // pred_check_branch
        %11 = sbr.rel (0) target = $region9
      $region8: #{dense_fc_forward.19} parent=4 // pred_region
        // Predicated region
        $region10: #{dense_fc_forward.19} parent=8 // pred_check
          _
        $region11: #{dense_fc_forward.19} parent=8 // pred_check_branch
          %13 = sbr.rel (0) target = $region13
        $region12: #{dense_fc_forward.19} parent=8 // pred_region
          %s14 = scalar_lea.vmem %s0, 8
          %s15 = scalar_lea.vmem [#allocation3], 8
          loop: start=0, step=1, limit=1
          $region14: #{dense_fc_forward.19} parent=12 // loop_pre_header
            _
          $region15: #{dense_fc_forward.19} parent=12 // loop_header
            %s17 = sphi 0, %s21
            %p18 = scmp.ge.s32.totalorder %s17, 1
            %s22 = sphi %s0, %s0
            %s23 = sphi [#allocation3], [#allocation3]
          $region16: #{dense_fc_forward.19} parent=12 // loop_header_branch
            %20 = sbr.rel (%p18) target = $region20
          $region17: #{dense_fc_forward.19} parent=12 // loop_body
            %v24 = vld [vmem:[%s22] sm:$0xff]
            %25 = vst [vmem:[%s23] sm:$0xff] %v24
            %v26 = vld [vmem:[%s22 + $0x10] sm:$0xff]
            %27 = vst [vmem:[%s23 + $0xc] sm:$0xff] %v26
            %v28 = vld [vmem:[%s22 + $0x20] sm:$0xff]
            %29 = vst [vmem:[%s23 + $0x18] sm:$0xff] %v28
            %v30 = vld [vmem:[%s22 + $0x30] sm:$0xff]
            %31 = vst [vmem:[%s23 + $0x24] sm:$0xff] %v30
            %v32 = vld [vmem:[%s22 + $0x40] sm:$0xff]
            %33 = vst [vmem:[%s23 + $0x30] sm:$0xff] %v32
            %v34 = vld [vmem:[%s22 + $0x50] sm:$0xff]
            %35 = vst [vmem:[%s23 + $0x3c] sm:$0xff] %v34
            %v36 = vld [vmem:[%s22 + $0x60] sm:$0xff]
            %37 = vst [vmem:[%s23 + $0x48] sm:$0xff] %v36
            %v38 = vld [vmem:[%s22 + $0x70] sm:$0xff]
            %39 = vst [vmem:[%s23 + $0x54] sm:$0xff] %v38
            %v40 = vld [vmem:[%s22 + $0x80] sm:$0xff]
            %41 = vst [vmem:[%s23 + $0x60] sm:$0xff] %v40
            %v42 = vld [vmem:[%s22 + $0x90] sm:$0xff]
            %43 = vst [vmem:[%s23 + $0x6c] sm:$0xff] %v42
            %v44 = vld [vmem:[%s22 + $0xa0] sm:$0xff]
            %45 = vst [vmem:[%s23 + $0x78] sm:$0xff] %v44
            %v46 = vld [vmem:[%s22 + $0xb0] sm:$0xff]
            %47 = vst [vmem:[%s23 + $0x84] sm:$0xff] %v46
            %v48 = vld [vmem:[%s22 + $0xc0] sm:$0xff]
            %49 = vst [vmem:[%s23 + $0x90] sm:$0xff] %v48
            %v50 = vld [vmem:[%s22 + $0xd0] sm:$0xff]
            %51 = vst [vmem:[%s23 + $0x9c] sm:$0xff] %v50
            %v52 = vld [vmem:[%s22 + $0xe0] sm:$0xff]
            %53 = vst [vmem:[%s23 + $0xa8] sm:$0xff] %v52
            %v54 = vld [vmem:[%s22 + $0xf0] sm:$0xff]
            %55 = vst [vmem:[%s23 + $0xb4] sm:$0xff] %v54
            %v56 = vld [vmem:[%s22 + $0x100] sm:$0xff]
            %57 = vst [vmem:[%s23 + $0xc0] sm:$0xff] %v56
            %v58 = vld [vmem:[%s22 + $0x110] sm:$0xff]
            %59 = vst [vmem:[%s23 + $0xcc] sm:$0xff] %v58
            %v60 = vld [vmem:[%s22 + $0x120] sm:$0xff]
            %61 = vst [vmem:[%s23 + $0xd8] sm:$0xff] %v60
            %v62 = vld [vmem:[%s22 + $0x130] sm:$0xff]
            %63 = vst [vmem:[%s23 + $0xe4] sm:$0xff] %v62
            %v64 = vld [vmem:[%s22 + $0x140] sm:$0xff]
            %65 = vst [vmem:[%s23 + $0xf0] sm:$0xff] %v64
            %v66 = vld [vmem:[%s22 + $0x150] sm:$0xff]
            %67 = vst [vmem:[%s23 + $0xfc] sm:$0xff] %v66
            %v68 = vld [vmem:[%s22 + $0x160] sm:$0xff]
            %69 = vst [vmem:[%s23 + $0x108] sm:$0xff] %v68
            %v70 = vld [vmem:[%s22 + $0x170] sm:$0xff]
            %71 = vst [vmem:[%s23 + $0x114] sm:$0xff] %v70
            %v72 = vld [vmem:[%s22 + $0x180] sm:$0xff]
            %73 = vst [vmem:[%s23 + $0x120] sm:$0xff] %v72
            %v74 = vld [vmem:[%s22 + $0x190] sm:$0xff]
            %75 = vst [vmem:[%s23 + $0x12c] sm:$0xff] %v74
          $region18: #{dense_fc_forward.19} parent=12 // loop_footer
            %s21 = sadd.s32 1, %s17
          $region19: #{dense_fc_forward.19} parent=12 // loop_footer_branch
            %16 = sbr.rel target = $region15
          $region20: #{dense_fc_forward.19} parent=12 // loop_exit
            _
          loop: start=0, step=1, limit=1
          $region21: #{dense_fc_forward.19} parent=12 // loop_pre_header
            _
          $region22: #{dense_fc_forward.19} parent=12 // loop_header
            %s78 = sphi 0, %s82
            %p79 = scmp.ge.s32.totalorder %s78, 1
            %s83 = sphi %s14, %s14
            %s84 = sphi %s15, %s15
          $region23: #{dense_fc_forward.19} parent=12 // loop_header_branch
            %81 = sbr.rel (%p79) target = $region27
          $region24: #{dense_fc_forward.19} parent=12 // loop_body
            %v85 = vld [vmem:[%s83] sm:$0xf]
            %86 = vst [vmem:[%s84] sm:$0xf] %v85
            %v87 = vld [vmem:[%s83 + $0x10] sm:$0xf]
            %88 = vst [vmem:[%s84 + $0xc] sm:$0xf] %v87
            %v89 = vld [vmem:[%s83 + $0x20] sm:$0xf]
            %90 = vst [vmem:[%s84 + $0x18] sm:$0xf] %v89
            %v91 = vld [vmem:[%s83 + $0x30] sm:$0xf]
            %92 = vst [vmem:[%s84 + $0x24] sm:$0xf] %v91
            %v93 = vld [vmem:[%s83 + $0x40] sm:$0xf]
            %94 = vst [vmem:[%s84 + $0x30] sm:$0xf] %v93
            %v95 = vld [vmem:[%s83 + $0x50] sm:$0xf]
            %96 = vst [vmem:[%s84 + $0x3c] sm:$0xf] %v95
            %v97 = vld [vmem:[%s83 + $0x60] sm:$0xf]
            %98 = vst [vmem:[%s84 + $0x48] sm:$0xf] %v97
            %v99 = vld [vmem:[%s83 + $0x70] sm:$0xf]
            %100 = vst [vmem:[%s84 + $0x54] sm:$0xf] %v99
            %v101 = vld [vmem:[%s83 + $0x80] sm:$0xf]
            %102 = vst [vmem:[%s84 + $0x60] sm:$0xf] %v101
            %v103 = vld [vmem:[%s83 + $0x90] sm:$0xf]
            %104 = vst [vmem:[%s84 + $0x6c] sm:$0xf] %v103
            %v105 = vld [vmem:[%s83 + $0xa0] sm:$0xf]
            %106 = vst [vmem:[%s84 + $0x78] sm:$0xf] %v105
            %v107 = vld [vmem:[%s83 + $0xb0] sm:$0xf]
            %108 = vst [vmem:[%s84 + $0x84] sm:$0xf] %v107
            %v109 = vld [vmem:[%s83 + $0xc0] sm:$0xf]
            %110 = vst [vmem:[%s84 + $0x90] sm:$0xf] %v109
            %v111 = vld [vmem:[%s83 + $0xd0] sm:$0xf]
            %112 = vst [vmem:[%s84 + $0x9c] sm:$0xf] %v111
            %v113 = vld [vmem:[%s83 + $0xe0] sm:$0xf]
            %114 = vst [vmem:[%s84 + $0xa8] sm:$0xf] %v113
            %v115 = vld [vmem:[%s83 + $0xf0] sm:$0xf]
            %116 = vst [vmem:[%s84 + $0xb4] sm:$0xf] %v115
            %v117 = vld [vmem:[%s83 + $0x100] sm:$0xf]
            %118 = vst [vmem:[%s84 + $0xc0] sm:$0xf] %v117
            %v119 = vld [vmem:[%s83 + $0x110] sm:$0xf]
            %120 = vst [vmem:[%s84 + $0xcc] sm:$0xf] %v119
            %v121 = vld [vmem:[%s83 + $0x120] sm:$0xf]
            %122 = vst [vmem:[%s84 + $0xd8] sm:$0xf] %v121
            %v123 = vld [vmem:[%s83 + $0x130] sm:$0xf]
            %124 = vst [vmem:[%s84 + $0xe4] sm:$0xf] %v123
            %v125 = vld [vmem:[%s83 + $0x140] sm:$0xf]
            %126 = vst [vmem:[%s84 + $0xf0] sm:$0xf] %v125
            %v127 = vld [vmem:[%s83 + $0x150] sm:$0xf]
            %128 = vst [vmem:[%s84 + $0xfc] sm:$0xf] %v127
            %v129 = vld [vmem:[%s83 + $0x160] sm:$0xf]
            %130 = vst [vmem:[%s84 + $0x108] sm:$0xf] %v129
            %v131 = vld [vmem:[%s83 + $0x170] sm:$0xf]
            %132 = vst [vmem:[%s84 + $0x114] sm:$0xf] %v131
            %v133 = vld [vmem:[%s83 + $0x180] sm:$0xf]
            %134 = vst [vmem:[%s84 + $0x120] sm:$0xf] %v133
            %v135 = vld [vmem:[%s83 + $0x190] sm:$0xf]
            %136 = vst [vmem:[%s84 + $0x12c] sm:$0xf] %v135
          $region25: #{dense_fc_forward.19} parent=12 // loop_footer
            %s82 = sadd.s32 1, %s78
          $region26: #{dense_fc_forward.19} parent=12 // loop_footer_branch
            %77 = sbr.rel target = $region22
          $region27: #{dense_fc_forward.19} parent=12 // loop_exit
            _
        $region13: #{dense_fc_forward.19} parent=8 // pred_fallthru
          _
      $region9: #{dense_fc_forward.19} parent=4 // pred_fallthru
        _
      %137 = vnop
    $region5: #{dense_fc_forward.19} parent=1 // pred_fallthru
      _
    // Predicated region
    $region28: #{dense_fc_forward.19} parent=1 // pred_check
      _
    $region29: #{dense_fc_forward.19} parent=1 // pred_check_branch
      %139 = sbr.rel (0) target = $region31
    $region30: #{dense_fc_forward.19} parent=1 // pred_region
      _
    $region31: #{dense_fc_forward.19} parent=1 // pred_fallthru
      _
    // Predicated region
    $region32: #{dense_fc_forward.19} parent=1 // pred_check
      _
    $region33: #{dense_fc_forward.19} parent=1 // pred_check_branch
      %141 = sbr.rel (0) target = $region35
    $region34: #{dense_fc_forward.19} parent=1 // pred_region
      _
    $region35: #{dense_fc_forward.19} parent=1 // pred_fallthru
      _
    // Predicated region
    $region36: #{dense_fc_forward.19} parent=1 // pred_check
      _
    $region37: #{dense_fc_forward.19} parent=1 // pred_check_branch
      %143 = sbr.rel (0) target = $region39
    $region38: #{dense_fc_forward.19} parent=1 // pred_region
      _
    $region39: #{dense_fc_forward.19} parent=1 // pred_fallthru
      _
    %p145 = scmp.eq.s32.totalorder 0, 0
    // Predicated region
    $region40: #{dense_fc_forward.19} parent=1 // pred_check
      %p146 = pneg %p145
    $region41: #{dense_fc_forward.19} parent=1 // pred_check_branch
      %148 = sbr.rel (%p146) target = $region43
    $region42: #{dense_fc_forward.19} parent=1 // pred_region
      %149 = vst [vmem:[#allocation2] sm:$0xff] 0.0
      %150 = vst [vmem:[#allocation2 + $0x8] sm:$0xff] 0.0
      %151 = vst [vmem:[#allocation2 + $0x10] sm:$0xff] 0.0
      %152 = vst [vmem:[#allocation2 + $0x18] sm:$0xff] 0.0
      %153 = vst [vmem:[#allocation2 + $0x20] sm:$0xff] 0.0
      %154 = vst [vmem:[#allocation2 + $0x28] sm:$0xff] 0.0
      %155 = vst [vmem:[#allocation2 + $0x30] sm:$0xff] 0.0
      %156 = vst [vmem:[#allocation2 + $0x38] sm:$0xff] 0.0
      %157 = vst [vmem:[#allocation2 + $0x40] sm:$0xff] 0.0
      %158 = vst [vmem:[#allocation2 + $0x48] sm:$0xff] 0.0
      %159 = vst [vmem:[#allocation2 + $0x50] sm:$0xff] 0.0
      %160 = vst [vmem:[#allocation2 + $0x58] sm:$0xff] 0.0
      %161 = vst [vmem:[#allocation2 + $0x60] sm:$0xff] 0.0
      %162 = vst [vmem:[#allocation2 + $0x68] sm:$0xff] 0.0
      %163 = vst [vmem:[#allocation2 + $0x70] sm:$0xff] 0.0
      %164 = vst [vmem:[#allocation2 + $0x78] sm:$0xff] 0.0
      %165 = vst [vmem:[#allocation2 + $0x80] sm:$0xff] 0.0
      %166 = vst [vmem:[#allocation2 + $0x88] sm:$0xff] 0.0
      %167 = vst [vmem:[#allocation2 + $0x90] sm:$0xff] 0.0
      %168 = vst [vmem:[#allocation2 + $0x98] sm:$0xff] 0.0
      %169 = vst [vmem:[#allocation2 + $0xa0] sm:$0xff] 0.0
      %170 = vst [vmem:[#allocation2 + $0xa8] sm:$0xff] 0.0
      %171 = vst [vmem:[#allocation2 + $0xb0] sm:$0xff] 0.0
      %172 = vst [vmem:[#allocation2 + $0xb8] sm:$0xff] 0.0
      %173 = vst [vmem:[#allocation2 + $0xc0] sm:$0xff] 0.0
      %174 = vst [vmem:[#allocation2 + $0xc8] sm:$0xff] 0.0
    $region43: #{dense_fc_forward.19} parent=1 // pred_fallthru
      _
    %v175 = vld [vmem:[#allocation2] sm:$0xff]
    %v176 = vld [vmem:[#allocation2 + $0x8] sm:$0xff]
    %v177 = vld [vmem:[#allocation2 + $0x10] sm:$0xff]
    %v178 = vld [vmem:[#allocation2 + $0x18] sm:$0xff]
    %v179 = vld [vmem:[#allocation2 + $0x20] sm:$0xff]
    %v180 = vld [vmem:[#allocation2 + $0x28] sm:$0xff]
    %v181 = vld [vmem:[#allocation2 + $0x30] sm:$0xff]
    %v182 = vld [vmem:[#allocation2 + $0x38] sm:$0xff]
    %v183 = vld [vmem:[#allocation2 + $0x40] sm:$0xff]
    %v184 = vld [vmem:[#allocation2 + $0x48] sm:$0xff]
    %v185 = vld [vmem:[#allocation2 + $0x50] sm:$0xff]
    %v186 = vld [vmem:[#allocation2 + $0x58] sm:$0xff]
    %v187 = vld [vmem:[#allocation2 + $0x60] sm:$0xff]
    %v188 = vld [vmem:[#allocation2 + $0x68] sm:$0xff]
    %v189 = vld [vmem:[#allocation2 + $0x70] sm:$0xff]
    %v190 = vld [vmem:[#allocation2 + $0x78] sm:$0xff]
    %v191 = vld [vmem:[#allocation2 + $0x80] sm:$0xff]
    %v192 = vld [vmem:[#allocation2 + $0x88] sm:$0xff]
    %v193 = vld [vmem:[#allocation2 + $0x90] sm:$0xff]
    %v194 = vld [vmem:[#allocation2 + $0x98] sm:$0xff]
    %v195 = vld [vmem:[#allocation2 + $0xa0] sm:$0xff]
    %v196 = vld [vmem:[#allocation2 + $0xa8] sm:$0xff]
    %v197 = vld [vmem:[#allocation2 + $0xb0] sm:$0xff]
    %v198 = vld [vmem:[#allocation2 + $0xb8] sm:$0xff]
    %v199 = vld [vmem:[#allocation2 + $0xc0] sm:$0xff]
    %v200 = vld [vmem:[#allocation2 + $0xc8] sm:$0xff]
    %v201 = vld [vmem:[#allocation3] sm:$0xff]
    %v202 = vld [vmem:[#allocation3 + $0x8] sm:$0xf]
    %v203 = vld [vmem:[#allocation3 + $0xc] sm:$0xff]
    %v204 = vld [vmem:[#allocation3 + $0x14] sm:$0xf]
    %v205 = vld [vmem:[#allocation3 + $0x18] sm:$0xff]
    %v206 = vld [vmem:[#allocation3 + $0x20] sm:$0xf]
    %v207 = vld [vmem:[#allocation3 + $0x24] sm:$0xff]
    %v208 = vld [vmem:[#allocation3 + $0x2c] sm:$0xf]
    %v209 = vld [vmem:[#allocation3 + $0x30] sm:$0xff]
    %v210 = vld [vmem:[#allocation3 + $0x38] sm:$0xf]
    %v211 = vld [vmem:[#allocation3 + $0x3c] sm:$0xff]
    %v212 = vld [vmem:[#allocation3 + $0x44] sm:$0xf]
    %v213 = vld [vmem:[#allocation3 + $0x48] sm:$0xff]
    %v214 = vld [vmem:[#allocation3 + $0x50] sm:$0xf]
    %v215 = vld [vmem:[#allocation3 + $0x54] sm:$0xff]
    %v216 = vld [vmem:[#allocation3 + $0x5c] sm:$0xf]
    %v217 = vld [vmem:[#allocation3 + $0x60] sm:$0xff]
    %v218 = vld [vmem:[#allocation3 + $0x68] sm:$0xf]
    %v219 = vld [vmem:[#allocation3 + $0x6c] sm:$0xff]
    %v220 = vld [vmem:[#allocation3 + $0x74] sm:$0xf]
    %v221 = vld [vmem:[#allocation3 + $0x78] sm:$0xff]
    %v222 = vld [vmem:[#allocation3 + $0x80] sm:$0xf]
    %v223 = vld [vmem:[#allocation3 + $0x84] sm:$0xff]
    %v224 = vld [vmem:[#allocation3 + $0x8c] sm:$0xf]
    %v225 = vld [vmem:[#allocation3 + $0x90] sm:$0xff]
    %v226 = vld [vmem:[#allocation3 + $0x98] sm:$0xf]
    %v227 = vld [vmem:[#allocation3 + $0x9c] sm:$0xff]
    %v228 = vld [vmem:[#allocation3 + $0xa4] sm:$0xf]
    %v229 = vld [vmem:[#allocation3 + $0xa8] sm:$0xff]
    %v230 = vld [vmem:[#allocation3 + $0xb0] sm:$0xf]
    %v231 = vld [vmem:[#allocation3 + $0xb4] sm:$0xff]
    %v232 = vld [vmem:[#allocation3 + $0xbc] sm:$0xf]
    %v233 = vld [vmem:[#allocation3 + $0xc0] sm:$0xff]
    %v234 = vld [vmem:[#allocation3 + $0xc8] sm:$0xf]
    %v235 = vld [vmem:[#allocation3 + $0xcc] sm:$0xff]
    %v236 = vld [vmem:[#allocation3 + $0xd4] sm:$0xf]
    %v237 = vld [vmem:[#allocation3 + $0xd8] sm:$0xff]
    %v238 = vld [vmem:[#allocation3 + $0xe0] sm:$0xf]
    %v239 = vld [vmem:[#allocation3 + $0xe4] sm:$0xff]
    %v240 = vld [vmem:[#allocation3 + $0xec] sm:$0xf]
    %v241 = vld [vmem:[#allocation3 + $0xf0] sm:$0xff]
    %v242 = vld [vmem:[#allocation3 + $0xf8] sm:$0xf]
    %v243 = vld [vmem:[#allocation3 + $0xfc] sm:$0xff]
    %v244 = vld [vmem:[#allocation3 + $0x104] sm:$0xf]
    %v245 = vld [vmem:[#allocation3 + $0x108] sm:$0xff]
    %v246 = vld [vmem:[#allocation3 + $0x110] sm:$0xf]
    %v247 = vld [vmem:[#allocation3 + $0x114] sm:$0xff]
    %v248 = vld [vmem:[#allocation3 + $0x11c] sm:$0xf]
    %v249 = vld [vmem:[#allocation3 + $0x120] sm:$0xff]
    %v250 = vld [vmem:[#allocation3 + $0x128] sm:$0xf]
    %v251 = vld [vmem:[#allocation3 + $0x12c] sm:$0xff]
    %v252 = vld [vmem:[#allocation3 + $0x134] sm:$0xf]
    %v253 = vld [vmem:[%s1] sm:$0xf]
    %v254 = vld [vmem:[%s1 + $0x4] sm:$0xf]
    %v255 = vld [vmem:[%s1 + $0x8] sm:$0xf]
    %v256 = vld [vmem:[%s1 + $0xc] sm:$0xf]
    %v257 = vld [vmem:[%s1 + $0x10] sm:$0xf]
    %v258 = vld [vmem:[%s1 + $0x14] sm:$0xf]
    %v259 = vld [vmem:[%s1 + $0x18] sm:$0xf]
    %v260 = vld [vmem:[%s1 + $0x1c] sm:$0xf]
    %v261 = vld [vmem:[%s1 + $0x20] sm:$0xf]
    %v262 = vld [vmem:[%s1 + $0x24] sm:$0xf]
    %v263 = vld [vmem:[%s1 + $0x28] sm:$0xf]
    %v264 = vld [vmem:[%s1 + $0x2c] sm:$0xf]
    %v265 = vld [vmem:[%s1 + $0x30] sm:$0xf]
    %v266 = vld [vmem:[%s1 + $0x34] sm:$0xf]
    %v267 = vld [vmem:[%s1 + $0x38] sm:$0xf]
    %v268 = vld [vmem:[%s1 + $0x3c] sm:$0xf]
    %v269 = vld [vmem:[%s1 + $0x40] sm:$0xf]
    %v270 = vld [vmem:[%s1 + $0x44] sm:$0xf]
    %v271 = vld [vmem:[%s1 + $0x48] sm:$0xf]
    %v272 = vld [vmem:[%s1 + $0x4c] sm:$0xf]
    %v273 = vld [vmem:[%s1 + $0x50] sm:$0xf]
    %v274 = vld [vmem:[%s1 + $0x54] sm:$0xf]
    %v275 = vld [vmem:[%s1 + $0x58] sm:$0xf]
    %v276 = vld [vmem:[%s1 + $0x5c] sm:$0xf]
    %v277 = vld [vmem:[%s1 + $0x60] sm:$0xf]
    %v278 = vld [vmem:[%s1 + $0x64] sm:$0xf]
    %v279 = vld [vmem:[%s1 + $0x68] sm:$0xf]
    %v280 = vld [vmem:[%s1 + $0x6c] sm:$0xf]
    %v281 = vld [vmem:[%s1 + $0x70] sm:$0xf]
    %v282 = vld [vmem:[%s1 + $0x74] sm:$0xf]
    %v283 = vld [vmem:[%s1 + $0x78] sm:$0xf]
    %v284 = vld [vmem:[%s1 + $0x7c] sm:$0xf]
    %v285 = vld [vmem:[%s1 + $0x80] sm:$0xf]
    %v286 = vld [vmem:[%s1 + $0x84] sm:$0xf]
    %v287 = vld [vmem:[%s1 + $0x88] sm:$0xf]
    %v288 = vld [vmem:[%s1 + $0x8c] sm:$0xf]
    %v289 = vld [vmem:[%s1 + $0x90] sm:$0xf]
    %v290 = vld [vmem:[%s1 + $0x94] sm:$0xf]
    %v291 = vld [vmem:[%s1 + $0x98] sm:$0xf]
    %v292 = vld [vmem:[%s1 + $0x9c] sm:$0xf]
    %v293 = vld [vmem:[%s1 + $0xa0] sm:$0xf]
    %v294 = vld [vmem:[%s1 + $0xa4] sm:$0xf]
    %v295 = vld [vmem:[%s1 + $0xa8] sm:$0xf]
    %v296 = vld [vmem:[%s1 + $0xac] sm:$0xf]
    %v297 = vld [vmem:[%s1 + $0xb0] sm:$0xf]
    %v298 = vld [vmem:[%s1 + $0xb4] sm:$0xf]
    %v299 = vld [vmem:[%s1 + $0xb8] sm:$0xf]
    %v300 = vld [vmem:[%s1 + $0xbc] sm:$0xf]
    %v353 = vunpack.c.l.b16 %v201
    %v354 = vunpack.c.h.b16 %v201
    %v355 = vunpack.c.l.b16 %v202
    %v356 = vunpack.c.l.b16 %v203
    %v357 = vunpack.c.h.b16 %v203
    %v358 = vunpack.c.l.b16 %v204
    %v359 = vunpack.c.l.b16 %v205
    %v360 = vunpack.c.h.b16 %v205
    %v361 = vunpack.c.l.b16 %v206
    %v362 = vunpack.c.l.b16 %v207
    %v363 = vunpack.c.h.b16 %v207
    %v364 = vunpack.c.l.b16 %v208
    %v365 = vunpack.c.l.b16 %v209
    %v366 = vunpack.c.h.b16 %v209
    %v367 = vunpack.c.l.b16 %v210
    %v368 = vunpack.c.l.b16 %v211
    %v369 = vunpack.c.h.b16 %v211
    %v370 = vunpack.c.l.b16 %v212
    %v371 = vunpack.c.l.b16 %v213
    %v372 = vunpack.c.h.b16 %v213
    %v373 = vunpack.c.l.b16 %v214
    %v374 = vunpack.c.l.b16 %v215
    %v375 = vunpack.c.h.b16 %v215
    %v376 = vunpack.c.l.b16 %v216
    %v377 = vunpack.c.l.b16 %v217
    %v378 = vunpack.c.h.b16 %v217
    %v379 = vunpack.c.l.b16 %v218
    %v380 = vunpack.c.l.b16 %v219
    %v381 = vunpack.c.h.b16 %v219
    %v382 = vunpack.c.l.b16 %v220
    %v383 = vunpack.c.l.b16 %v221
    %v384 = vunpack.c.h.b16 %v221
    %v385 = vunpack.c.l.b16 %v222
    %v386 = vunpack.c.l.b16 %v223
    %v387 = vunpack.c.h.b16 %v223
    %v388 = vunpack.c.l.b16 %v224
    %v389 = vunpack.c.l.b16 %v225
    %v390 = vunpack.c.h.b16 %v225
    %v391 = vunpack.c.l.b16 %v226
    %v392 = vunpack.c.l.b16 %v227
    %v393 = vunpack.c.h.b16 %v227
    %v394 = vunpack.c.l.b16 %v228
    %v395 = vunpack.c.l.b16 %v229
    %v396 = vunpack.c.h.b16 %v229
    %v397 = vunpack.c.l.b16 %v230
    %v398 = vunpack.c.l.b16 %v231
    %v399 = vunpack.c.h.b16 %v231
    %v400 = vunpack.c.l.b16 %v232
    %v401 = vunpack.c.l.b16 %v233
    %v402 = vunpack.c.h.b16 %v233
    %v403 = vunpack.c.l.b16 %v234
    %v404 = vunpack.c.l.b16 %v235
    %v405 = vunpack.c.h.b16 %v235
    %v406 = vunpack.c.l.b16 %v236
    %v407 = vunpack.c.l.b16 %v237
    %v408 = vunpack.c.h.b16 %v237
    %v409 = vunpack.c.l.b16 %v238
    %v410 = vunpack.c.l.b16 %v239
    %v411 = vunpack.c.h.b16 %v239
    %v412 = vunpack.c.l.b16 %v240
    %v413 = vunpack.c.l.b16 %v241
    %v414 = vunpack.c.h.b16 %v241
    %v415 = vunpack.c.l.b16 %v242
    %v416 = vunpack.c.l.b16 %v243
    %v417 = vunpack.c.h.b16 %v243
    %v418 = vunpack.c.l.b16 %v244
    %v419 = vunpack.c.l.b16 %v245
    %v420 = vunpack.c.h.b16 %v245
    %v421 = vunpack.c.l.b16 %v246
    %v422 = vunpack.c.l.b16 %v247
    %v423 = vunpack.c.h.b16 %v247
    %v424 = vunpack.c.l.b16 %v248
    %v425 = vunpack.c.l.b16 %v249
    %v426 = vunpack.c.h.b16 %v249
    %v427 = vunpack.c.l.b16 %v250
    %v428 = vunpack.c.l.b16 %v251
    %v429 = vunpack.c.h.b16 %v251
    %v430 = vunpack.c.l.b16 %v252
    %v431 = vpack.c.b16 %v356, %v353
    %v432 = vpack.c.b16 %v357, %v354
    %v433 = vpack.c.b16 %v358, %v355
    %v434 = vpack.c.b16 %v362, %v359
    %v435 = vpack.c.b16 %v363, %v360
    %v436 = vpack.c.b16 %v364, %v361
    %v437 = vpack.c.b16 %v368, %v365
    %v438 = vpack.c.b16 %v369, %v366
    %v439 = vpack.c.b16 %v370, %v367
    %v440 = vpack.c.b16 %v374, %v371
    %v441 = vpack.c.b16 %v375, %v372
    %v442 = vpack.c.b16 %v376, %v373
    %v443 = vpack.c.b16 %v380, %v377
    %v444 = vpack.c.b16 %v381, %v378
    %v445 = vpack.c.b16 %v382, %v379
    %v446 = vpack.c.b16 %v386, %v383
    %v447 = vpack.c.b16 %v387, %v384
    %v448 = vpack.c.b16 %v388, %v385
    %v449 = vpack.c.b16 %v392, %v389
    %v450 = vpack.c.b16 %v393, %v390
    %v451 = vpack.c.b16 %v394, %v391
    %v452 = vpack.c.b16 %v398, %v395
    %v453 = vpack.c.b16 %v399, %v396
    %v454 = vpack.c.b16 %v400, %v397
    %v455 = vpack.c.b16 %v404, %v401
    %v456 = vpack.c.b16 %v405, %v402
    %v457 = vpack.c.b16 %v406, %v403
    %v458 = vpack.c.b16 %v410, %v407
    %v459 = vpack.c.b16 %v411, %v408
    %v460 = vpack.c.b16 %v412, %v409
    %v461 = vpack.c.b16 %v416, %v413
    %v462 = vpack.c.b16 %v417, %v414
    %v463 = vpack.c.b16 %v418, %v415
    %v464 = vpack.c.b16 %v422, %v419
    %v465 = vpack.c.b16 %v423, %v420
    %v466 = vpack.c.b16 %v424, %v421
    %v467 = vpack.c.b16 %v428, %v425
    %v468 = vpack.c.b16 %v429, %v426
    %v469 = vpack.c.b16 %v430, %v427
    %v557 = vunpack.c.l.b16 %v253
    %v558 = vunpack.c.l.b16 %v254
    %v559 = vunpack.c.l.b16 %v255
    %v560 = vunpack.c.l.b16 %v256
    %v561 = vunpack.c.l.b16 %v257
    %v562 = vunpack.c.l.b16 %v258
    %v563 = vunpack.c.l.b16 %v259
    %v564 = vunpack.c.l.b16 %v260
    %v565 = vunpack.c.l.b16 %v261
    %v566 = vunpack.c.l.b16 %v262
    %v567 = vunpack.c.l.b16 %v263
    %v568 = vunpack.c.l.b16 %v264
    %v569 = vunpack.c.l.b16 %v265
    %v570 = vunpack.c.l.b16 %v266
    %v571 = vunpack.c.l.b16 %v267
    %v572 = vunpack.c.l.b16 %v268
    %v573 = vunpack.c.l.b16 %v269
    %v574 = vunpack.c.l.b16 %v270
    %v575 = vunpack.c.l.b16 %v271
    %v576 = vunpack.c.l.b16 %v272
    %v577 = vunpack.c.l.b16 %v273
    %v578 = vunpack.c.l.b16 %v274
    %v579 = vunpack.c.l.b16 %v275
    %v580 = vunpack.c.l.b16 %v276
    %v581 = vunpack.c.l.b16 %v277
    %v582 = vunpack.c.l.b16 %v278
    %v583 = vunpack.c.l.b16 %v279
    %v584 = vunpack.c.l.b16 %v280
    %v585 = vunpack.c.l.b16 %v281
    %v586 = vunpack.c.l.b16 %v282
    %v587 = vunpack.c.l.b16 %v283
    %v588 = vunpack.c.l.b16 %v284
    %v589 = vunpack.c.l.b16 %v285
    %v590 = vunpack.c.l.b16 %v286
    %v591 = vunpack.c.l.b16 %v287
    %v592 = vunpack.c.l.b16 %v288
    %v593 = vunpack.c.l.b16 %v289
    %v594 = vunpack.c.l.b16 %v290
    %v595 = vunpack.c.l.b16 %v291
    %v596 = vunpack.c.l.b16 %v292
    %v597 = vunpack.c.l.b16 %v293
    %v598 = vunpack.c.l.b16 %v294
    %v599 = vunpack.c.l.b16 %v295
    %v600 = vunpack.c.l.b16 %v296
    %v601 = vunpack.c.l.b16 %v297
    %v602 = vunpack.c.l.b16 %v298
    %v603 = vunpack.c.l.b16 %v299
    %v604 = vunpack.c.l.b16 %v300
    %v605 = vpack.c.b16 %v558, %v557
    %v606 = vpack.c.b16 %v560, %v559
    %v607 = vpack.c.b16 %v562, %v561
    %v608 = vpack.c.b16 %v564, %v563
    %v609 = vpack.c.b16 %v566, %v565
    %v610 = vpack.c.b16 %v568, %v567
    %v611 = vpack.c.b16 %v570, %v569
    %v612 = vpack.c.b16 %v572, %v571
    %v613 = vpack.c.b16 %v574, %v573
    %v614 = vpack.c.b16 %v576, %v575
    %v615 = vpack.c.b16 %v578, %v577
    %v616 = vpack.c.b16 %v580, %v579
    %v617 = vpack.c.b16 %v582, %v581
    %v618 = vpack.c.b16 %v584, %v583
    %v619 = vpack.c.b16 %v586, %v585
    %v620 = vpack.c.b16 %v588, %v587
    %v621 = vpack.c.b16 %v590, %v589
    %v622 = vpack.c.b16 %v592, %v591
    %v623 = vpack.c.b16 %v594, %v593
    %v624 = vpack.c.b16 %v596, %v595
    %v625 = vpack.c.b16 %v598, %v597
    %v626 = vpack.c.b16 %v600, %v599
    %v627 = vpack.c.b16 %v602, %v601
    %v628 = vpack.c.b16 %v604, %v603
    %653 = vmatprep.subr.bf16.mxu0 0
    %654 = vmatpush1.bf16.msra.mxu0 %v605
    %655 = vmatprep.subr.bf16.mxu0 0
    %656 = vmatpush1.bf16.msra.mxu0 %v606
    %657 = vmatprep.subr.bf16.mxu0 0
    %658 = vmatpush1.bf16.msra.mxu0 %v607
    %659 = vmatprep.subr.bf16.mxu0 0
    %660 = vmatpush1.bf16.msra.mxu0 %v608
    %661 = vmatprep.subr.bf16.mxu0 0
    %662 = vmatpush1.bf16.msra.mxu0 %v609
    %663 = vmatprep.subr.bf16.mxu0 0
    %664 = vmatpush1.bf16.msra.mxu0 %v610
    %665 = vmatprep.subr.bf16.mxu0 0
    %666 = vmatpush1.bf16.msra.mxu0 %v611
    %667 = vmatprep.subr.bf16.mxu0 0
    %668 = vmatpush1.bf16.msra.mxu0 %v612
    %669 = vmatprep.subr.bf16.mxu0 0
    %670 = vmatpush1.bf16.msra.mxu0 %v613
    %671 = vmatprep.subr.bf16.mxu0 0
    %672 = vmatpush1.bf16.msra.mxu0 %v614
    %673 = vmatprep.subr.bf16.mxu0 0
    %674 = vmatpush1.bf16.msra.mxu0 %v615
    %675 = vmatprep.subr.bf16.mxu0 0
    %676 = vmatpush1.bf16.msra.mxu0 %v616
    %677 = vmatprep.subr.bf16.mxu0 0
    %678 = vmatpush1.bf16.msra.mxu0 %v617
    %679 = vmatprep.subr.bf16.mxu0 0
    %680 = vmatpush1.bf16.msra.mxu0 %v618
    %681 = vmatprep.subr.bf16.mxu0 0
    %682 = vmatpush1.bf16.msra.mxu0 %v619
    %683 = vmatprep.subr.bf16.mxu0 0
    %684 = vmatpush1.bf16.msra.mxu0 %v620
    %685 = vmatprep.mubr.bf16.mxu0 %v432
    %686 = vmatmul.mubr.bf16.gmra.mrb[0].mxu0 %v431
    %v687 = vpop.f32.mrb[0].mxu0
    %v688 = vadd.f32 0.0, %v687
    %v689 = vpop.f32.mrb[0].mxu0
    %v690 = vpop.f32.mrb[0].mxu0
    %v691 = vadd.f32 0.0, %v690
    %v692 = vpop.f32.mrb[0].mxu0
    %693 = vmatprep.mubr.bf16.mxu0 %v435
    %694 = vmatmul.mubr.bf16.gmra.mrb[0].mxu0 %v434
    %v695 = vpop.f32.mrb[0].mxu0
    %v696 = vadd.f32 0.0, %v695
    %v697 = vpop.f32.mrb[0].mxu0
    %v698 = vpop.f32.mrb[0].mxu0
    %v699 = vadd.f32 0.0, %v698
    %v700 = vpop.f32.mrb[0].mxu0
    %701 = vmatprep.mubr.bf16.mxu0 %v438
    %702 = vmatmul.mubr.bf16.gmra.mrb[0].mxu0 %v437
    %v703 = vpop.f32.mrb[0].mxu0
    %v704 = vadd.f32 0.0, %v703
    %v705 = vpop.f32.mrb[0].mxu0
    %v706 = vpop.f32.mrb[0].mxu0
    %v707 = vadd.f32 0.0, %v706
    %v708 = vpop.f32.mrb[0].mxu0
    %709 = vmatprep.mubr.bf16.mxu0 %v441
    %710 = vmatmul.mubr.bf16.gmra.mrb[0].mxu0 %v440
    %v711 = vpop.f32.mrb[0].mxu0
    %v712 = vadd.f32 0.0, %v711
    %v713 = vpop.f32.mrb[0].mxu0
    %v714 = vpop.f32.mrb[0].mxu0
    %v715 = vadd.f32 0.0, %v714
    %v716 = vpop.f32.mrb[0].mxu0
    %717 = vmatprep.mubr.bf16.mxu0 %v444
    %718 = vmatmul.mubr.bf16.gmra.mrb[0].mxu0 %v443
    %v719 = vpop.f32.mrb[0].mxu0
    %v720 = vadd.f32 0.0, %v719
    %v721 = vpop.f32.mrb[0].mxu0
    %v722 = vpop.f32.mrb[0].mxu0
    %v723 = vadd.f32 0.0, %v722
    %v724 = vpop.f32.mrb[0].mxu0
    %725 = vmatprep.mubr.bf16.mxu0 %v447
    %726 = vmatmul.mubr.bf16.gmra.mrb[0].mxu0 %v446
    %v727 = vpop.f32.mrb[0].mxu0
    %v728 = vadd.f32 0.0, %v727
    %v729 = vpop.f32.mrb[0].mxu0
    %v730 = vpop.f32.mrb[0].mxu0
    %v731 = vadd.f32 0.0, %v730
    %v732 = vpop.f32.mrb[0].mxu0
    %733 = vmatprep.mubr.bf16.mxu0 %v450
    %734 = vmatmul.mubr.bf16.gmra.mrb[0].mxu0 %v449
    %v735 = vpop.f32.mrb[0].mxu0
    %v736 = vadd.f32 0.0, %v735
    %v737 = vpop.f32.mrb[0].mxu0
    %v738 = vpop.f32.mrb[0].mxu0
    %v739 = vadd.f32 0.0, %v738
    %v740 = vpop.f32.mrb[0].mxu0
    %741 = vmatprep.mubr.bf16.mxu0 %v453
    %742 = vmatmul.mubr.bf16.gmra.mrb[0].mxu0 %v452
    %v743 = vpop.f32.mrb[0].mxu0
    %v744 = vadd.f32 0.0, %v743
    %v745 = vpop.f32.mrb[0].mxu0
    %v746 = vpop.f32.mrb[0].mxu0
    %v747 = vadd.f32 0.0, %v746
    %v748 = vpop.f32.mrb[0].mxu0
    %749 = vmatprep.mubr.bf16.mxu0 %v456
    %750 = vmatmul.mubr.bf16.gmra.mrb[0].mxu0 %v455
    %v751 = vpop.f32.mrb[0].mxu0
    %v752 = vadd.f32 0.0, %v751
    %v753 = vpop.f32.mrb[0].mxu0
    %v754 = vpop.f32.mrb[0].mxu0
    %v755 = vadd.f32 0.0, %v754
    %v756 = vpop.f32.mrb[0].mxu0
    %757 = vmatprep.mubr.bf16.mxu0 %v459
    %758 = vmatmul.mubr.bf16.gmra.mrb[0].mxu0 %v458
    %v759 = vpop.f32.mrb[0].mxu0
    %v760 = vadd.f32 0.0, %v759
    %v761 = vpop.f32.mrb[0].mxu0
    %v762 = vpop.f32.mrb[0].mxu0
    %v763 = vadd.f32 0.0, %v762
    %v764 = vpop.f32.mrb[0].mxu0
    %765 = vmatprep.mubr.bf16.mxu0 %v462
    %766 = vmatmul.mubr.bf16.gmra.mrb[0].mxu0 %v461
    %v767 = vpop.f32.mrb[0].mxu0
    %v768 = vadd.f32 0.0, %v767
    %v769 = vpop.f32.mrb[0].mxu0
    %v770 = vpop.f32.mrb[0].mxu0
    %v771 = vadd.f32 0.0, %v770
    %v772 = vpop.f32.mrb[0].mxu0
    %773 = vmatprep.mubr.bf16.mxu0 %v465
    %774 = vmatmul.mubr.bf16.gmra.mrb[0].mxu0 %v464
    %v775 = vpop.f32.mrb[0].mxu0
    %v776 = vadd.f32 0.0, %v775
    %v777 = vpop.f32.mrb[0].mxu0
    %v778 = vpop.f32.mrb[0].mxu0
    %v779 = vadd.f32 0.0, %v778
    %v780 = vpop.f32.mrb[0].mxu0
    %781 = vmatprep.mubr.bf16.mxu0 %v468
    %782 = vmatmul.mubr.bf16.gmra.mrb[0].mxu0 %v467
    %v783 = vpop.f32.mrb[0].mxu0
    %v784 = vadd.f32 0.0, %v783
    %v785 = vpop.f32.mrb[0].mxu0
    %v786 = vpop.f32.mrb[0].mxu0
    %v787 = vadd.f32 0.0, %v786
    %v788 = vpop.f32.mrb[0].mxu0
    %789 = vdwg.mxu0
    %790 = vmatprep.subr.bf16.mxu0 0
    %791 = vmatpush1.bf16.msra.mxu0 %v621
    %792 = vmatprep.subr.bf16.mxu0 0
    %793 = vmatpush1.bf16.msra.mxu0 %v622
    %794 = vmatprep.subr.bf16.mxu0 0
    %795 = vmatpush1.bf16.msra.mxu0 %v623
    %796 = vmatprep.subr.bf16.mxu0 0
    %797 = vmatpush1.bf16.msra.mxu0 %v624
    %798 = vmatprep.subr.bf16.mxu0 0
    %799 = vmatpush1.bf16.msra.mxu0 %v625
    %800 = vmatprep.subr.bf16.mxu0 0
    %801 = vmatpush1.bf16.msra.mxu0 %v626
    %802 = vmatprep.subr.bf16.mxu0 0
    %803 = vmatpush1.bf16.msra.mxu0 %v627
    %804 = vmatprep.subr.bf16.mxu0 0
    %805 = vmatpush1.bf16.msra.mxu0 %v628
    %806 = vmatprep.subr.bf16.mxu0 0
    %807 = vmatpush1.bf16.msra.mxu0 0
    %808 = vmatprep.subr.bf16.mxu0 0
    %809 = vmatpush1.bf16.msra.mxu0 0
    %810 = vmatprep.subr.bf16.mxu0 0
    %811 = vmatpush1.bf16.msra.mxu0 0
    %812 = vmatprep.subr.bf16.mxu0 0
    %813 = vmatpush1.bf16.msra.mxu0 0
    %814 = vmatprep.subr.bf16.mxu0 0
    %815 = vmatpush1.bf16.msra.mxu0 0
    %816 = vmatprep.subr.bf16.mxu0 0
    %817 = vmatpush1.bf16.msra.mxu0 0
    %818 = vmatprep.subr.bf16.mxu0 0
    %819 = vmatpush1.bf16.msra.mxu0 0
    %820 = vmatprep.subr.bf16.mxu0 0
    %821 = vmatpush1.bf16.msra.mxu0 0
    %822 = vmatprep.mubr.bf16.mxu0 0
    %823 = vmatmul.mubr.bf16.gmra.mrb[0].mxu0 %v433
    %v824 = vpop.f32.mrb[0].mxu0
    %v825 = vadd.f32 %v688, %v824
    %v826 = vpop.f32.mrb[0].mxu0
    %v827 = vpop.f32.mrb[0].mxu0
    %v828 = vadd.f32 %v691, %v827
    %v829 = vpop.f32.mrb[0].mxu0
    %830 = vmatprep.mubr.bf16.mxu0 0
    %831 = vmatmul.mubr.bf16.gmra.mrb[0].mxu0 %v436
    %v832 = vpop.f32.mrb[0].mxu0
    %v833 = vadd.f32 %v696, %v832
    %v834 = vpop.f32.mrb[0].mxu0
    %v835 = vpop.f32.mrb[0].mxu0
    %v836 = vadd.f32 %v699, %v835
    %v837 = vpop.f32.mrb[0].mxu0
    %838 = vmatprep.mubr.bf16.mxu0 0
    %839 = vmatmul.mubr.bf16.gmra.mrb[0].mxu0 %v439
    %v840 = vpop.f32.mrb[0].mxu0
    %v841 = vadd.f32 %v704, %v840
    %v842 = vpop.f32.mrb[0].mxu0
    %v843 = vpop.f32.mrb[0].mxu0
    %v844 = vadd.f32 %v707, %v843
    %v845 = vpop.f32.mrb[0].mxu0
    %846 = vmatprep.mubr.bf16.mxu0 0
    %847 = vmatmul.mubr.bf16.gmra.mrb[0].mxu0 %v442
    %v848 = vpop.f32.mrb[0].mxu0
    %v849 = vadd.f32 %v712, %v848
    %v850 = vpop.f32.mrb[0].mxu0
    %v851 = vpop.f32.mrb[0].mxu0
    %v852 = vadd.f32 %v715, %v851
    %v853 = vpop.f32.mrb[0].mxu0
    %854 = vmatprep.mubr.bf16.mxu0 0
    %855 = vmatmul.mubr.bf16.gmra.mrb[0].mxu0 %v445
    %v856 = vpop.f32.mrb[0].mxu0
    %v857 = vadd.f32 %v720, %v856
    %v858 = vpop.f32.mrb[0].mxu0
    %v859 = vpop.f32.mrb[0].mxu0
    %v860 = vadd.f32 %v723, %v859
    %v861 = vpop.f32.mrb[0].mxu0
    %862 = vmatprep.mubr.bf16.mxu0 0
    %863 = vmatmul.mubr.bf16.gmra.mrb[0].mxu0 %v448
    %v864 = vpop.f32.mrb[0].mxu0
    %v865 = vadd.f32 %v728, %v864
    %v866 = vpop.f32.mrb[0].mxu0
    %v867 = vpop.f32.mrb[0].mxu0
    %v868 = vadd.f32 %v731, %v867
    %v869 = vpop.f32.mrb[0].mxu0
    %870 = vmatprep.mubr.bf16.mxu0 0
    %871 = vmatmul.mubr.bf16.gmra.mrb[0].mxu0 %v451
    %v872 = vpop.f32.mrb[0].mxu0
    %v873 = vadd.f32 %v736, %v872
    %v874 = vpop.f32.mrb[0].mxu0
    %v875 = vpop.f32.mrb[0].mxu0
    %v876 = vadd.f32 %v739, %v875
    %v877 = vpop.f32.mrb[0].mxu0
    %878 = vmatprep.mubr.bf16.mxu0 0
    %879 = vmatmul.mubr.bf16.gmra.mrb[0].mxu0 %v454
    %v880 = vpop.f32.mrb[0].mxu0
    %v881 = vadd.f32 %v744, %v880
    %v882 = vpop.f32.mrb[0].mxu0
    %v883 = vpop.f32.mrb[0].mxu0
    %v884 = vadd.f32 %v747, %v883
    %v885 = vpop.f32.mrb[0].mxu0
    %886 = vmatprep.mubr.bf16.mxu0 0
    %887 = vmatmul.mubr.bf16.gmra.mrb[0].mxu0 %v457
    %v888 = vpop.f32.mrb[0].mxu0
    %v889 = vadd.f32 %v752, %v888
    %v890 = vpop.f32.mrb[0].mxu0
    %v891 = vpop.f32.mrb[0].mxu0
    %v892 = vadd.f32 %v755, %v891
    %v893 = vpop.f32.mrb[0].mxu0
    %894 = vmatprep.mubr.bf16.mxu0 0
    %895 = vmatmul.mubr.bf16.gmra.mrb[0].mxu0 %v460
    %v896 = vpop.f32.mrb[0].mxu0
    %v897 = vadd.f32 %v760, %v896
    %v898 = vpop.f32.mrb[0].mxu0
    %v899 = vpop.f32.mrb[0].mxu0
    %v900 = vadd.f32 %v763, %v899
    %v901 = vpop.f32.mrb[0].mxu0
    %902 = vmatprep.mubr.bf16.mxu0 0
    %903 = vmatmul.mubr.bf16.gmra.mrb[0].mxu0 %v463
    %v904 = vpop.f32.mrb[0].mxu0
    %v905 = vadd.f32 %v768, %v904
    %v906 = vpop.f32.mrb[0].mxu0
    %v907 = vpop.f32.mrb[0].mxu0
    %v908 = vadd.f32 %v771, %v907
    %v909 = vpop.f32.mrb[0].mxu0
    %910 = vmatprep.mubr.bf16.mxu0 0
    %911 = vmatmul.mubr.bf16.gmra.mrb[0].mxu0 %v466
    %v912 = vpop.f32.mrb[0].mxu0
    %v913 = vadd.f32 %v776, %v912
    %v914 = vpop.f32.mrb[0].mxu0
    %v915 = vpop.f32.mrb[0].mxu0
    %v916 = vadd.f32 %v779, %v915
    %v917 = vpop.f32.mrb[0].mxu0
    %918 = vmatprep.mubr.bf16.mxu0 0
    %919 = vmatmul.mubr.bf16.gmra.mrb[0].mxu0 %v469
    %v920 = vpop.f32.mrb[0].mxu0
    %v921 = vadd.f32 %v784, %v920
    %v922 = vpop.f32.mrb[0].mxu0
    %v923 = vpop.f32.mrb[0].mxu0
    %v924 = vadd.f32 %v787, %v923
    %v925 = vpop.f32.mrb[0].mxu0
    %926 = vdwg.mxu0
    %v927 = vadd.f32 %v175, %v825
    %v928 = vadd.f32 %v176, %v828
    %v929 = vadd.f32 %v177, %v833
    %v930 = vadd.f32 %v178, %v836
    %v931 = vadd.f32 %v179, %v841
    %v932 = vadd.f32 %v180, %v844
    %v933 = vadd.f32 %v181, %v849
    %v934 = vadd.f32 %v182, %v852
    %v935 = vadd.f32 %v183, %v857
    %v936 = vadd.f32 %v184, %v860
    %v937 = vadd.f32 %v185, %v865
    %v938 = vadd.f32 %v186, %v868
    %v939 = vadd.f32 %v187, %v873
    %v940 = vadd.f32 %v188, %v876
    %v941 = vadd.f32 %v189, %v881
    %v942 = vadd.f32 %v190, %v884
    %v943 = vadd.f32 %v191, %v889
    %v944 = vadd.f32 %v192, %v892
    %v945 = vadd.f32 %v193, %v897
    %v946 = vadd.f32 %v194, %v900
    %v947 = vadd.f32 %v195, %v905
    %v948 = vadd.f32 %v196, %v908
    %v949 = vadd.f32 %v197, %v913
    %v950 = vadd.f32 %v198, %v916
    %v951 = vadd.f32 %v199, %v921
    %v952 = vadd.f32 %v200, %v924
    %953 = vst [vmem:[#allocation2] sm:$0xff] %v927
    %954 = vst [vmem:[#allocation2 + $0x8] sm:$0xff] %v928
    %955 = vst [vmem:[#allocation2 + $0x10] sm:$0xff] %v929
    %956 = vst [vmem:[#allocation2 + $0x18] sm:$0xff] %v930
    %957 = vst [vmem:[#allocation2 + $0x20] sm:$0xff] %v931
    %958 = vst [vmem:[#allocation2 + $0x28] sm:$0xff] %v932
    %959 = vst [vmem:[#allocation2 + $0x30] sm:$0xff] %v933
    %960 = vst [vmem:[#allocation2 + $0x38] sm:$0xff] %v934
    %961 = vst [vmem:[#allocation2 + $0x40] sm:$0xff] %v935
    %962 = vst [vmem:[#allocation2 + $0x48] sm:$0xff] %v936
    %963 = vst [vmem:[#allocation2 + $0x50] sm:$0xff] %v937
    %964 = vst [vmem:[#allocation2 + $0x58] sm:$0xff] %v938
    %965 = vst [vmem:[#allocation2 + $0x60] sm:$0xff] %v939
    %966 = vst [vmem:[#allocation2 + $0x68] sm:$0xff] %v940
    %967 = vst [vmem:[#allocation2 + $0x70] sm:$0xff] %v941
    %968 = vst [vmem:[#allocation2 + $0x78] sm:$0xff] %v942
    %969 = vst [vmem:[#allocation2 + $0x80] sm:$0xff] %v943
    %970 = vst [vmem:[#allocation2 + $0x88] sm:$0xff] %v944
    %971 = vst [vmem:[#allocation2 + $0x90] sm:$0xff] %v945
    %972 = vst [vmem:[#allocation2 + $0x98] sm:$0xff] %v946
    %973 = vst [vmem:[#allocation2 + $0xa0] sm:$0xff] %v947
    %974 = vst [vmem:[#allocation2 + $0xa8] sm:$0xff] %v948
    %975 = vst [vmem:[#allocation2 + $0xb0] sm:$0xff] %v949
    %976 = vst [vmem:[#allocation2 + $0xb8] sm:$0xff] %v950
    %977 = vst [vmem:[#allocation2 + $0xc0] sm:$0xff] %v951
    %978 = vst [vmem:[#allocation2 + $0xc8] sm:$0xff] %v952
    // Predicated region
    $region44: #{dense_fc_forward.19} parent=1 // pred_check
      %p979 = pneg %p145
    $region45: #{dense_fc_forward.19} parent=1 // pred_check_branch
      %981 = sbr.rel (%p979) target = $region47
    $region46: #{dense_fc_forward.19} parent=1 // pred_region
      %v982 = vld [vmem:[#allocation2] sm:$0xff]
      %v983 = vld [vmem:[#allocation2 + $0x8] sm:$0xff]
      %v984 = vld [vmem:[#allocation2 + $0x10] sm:$0xff]
      %v985 = vld [vmem:[#allocation2 + $0x18] sm:$0xff]
      %v986 = vld [vmem:[#allocation2 + $0x20] sm:$0xff]
      %v987 = vld [vmem:[#allocation2 + $0x28] sm:$0xff]
      %v988 = vld [vmem:[#allocation2 + $0x30] sm:$0xff]
      %v989 = vld [vmem:[#allocation2 + $0x38] sm:$0xff]
      %v990 = vld [vmem:[#allocation2 + $0x40] sm:$0xff]
      %v991 = vld [vmem:[#allocation2 + $0x48] sm:$0xff]
      %v992 = vld [vmem:[#allocation2 + $0x50] sm:$0xff]
      %v993 = vld [vmem:[#allocation2 + $0x58] sm:$0xff]
      %v994 = vld [vmem:[#allocation2 + $0x60] sm:$0xff]
      %v995 = vld [vmem:[#allocation2 + $0x68] sm:$0xff]
      %v996 = vld [vmem:[#allocation2 + $0x70] sm:$0xff]
      %v997 = vld [vmem:[#allocation2 + $0x78] sm:$0xff]
      %v998 = vld [vmem:[#allocation2 + $0x80] sm:$0xff]
      %v999 = vld [vmem:[#allocation2 + $0x88] sm:$0xff]
      %v1000 = vld [vmem:[#allocation2 + $0x90] sm:$0xff]
      %v1001 = vld [vmem:[#allocation2 + $0x98] sm:$0xff]
      %v1002 = vld [vmem:[#allocation2 + $0xa0] sm:$0xff]
      %v1003 = vld [vmem:[#allocation2 + $0xa8] sm:$0xff]
      %v1004 = vld [vmem:[#allocation2 + $0xb0] sm:$0xff]
      %v1005 = vld [vmem:[#allocation2 + $0xb8] sm:$0xff]
      %v1006 = vld [vmem:[#allocation2 + $0xc0] sm:$0xff]
      %v1007 = vld [vmem:[#allocation2 + $0xc8] sm:$0xff]
      %v1008 = vld [vmem:[%s2] sm:$0x1]
      %v1010 = vlaneseq
      %v1011 = vshrl.u32 %v1010, 7
      %v1012 = vsub.s32 0, %v1011
      %v1013 = vrot.slane %v1008, %v1012
      %v1015 = vadd.f32 %v982, %v1013
      %v1016 = vadd.f32 %v983, %v1013
      %v1017 = vadd.f32 %v984, %v1013
      %v1018 = vadd.f32 %v985, %v1013
      %v1019 = vadd.f32 %v986, %v1013
      %v1020 = vadd.f32 %v987, %v1013
      %v1021 = vadd.f32 %v988, %v1013
      %v1022 = vadd.f32 %v989, %v1013
      %v1023 = vadd.f32 %v990, %v1013
      %v1024 = vadd.f32 %v991, %v1013
      %v1025 = vadd.f32 %v992, %v1013
      %v1026 = vadd.f32 %v993, %v1013
      %v1027 = vadd.f32 %v994, %v1013
      %v1028 = vadd.f32 %v995, %v1013
      %v1029 = vadd.f32 %v996, %v1013
      %v1030 = vadd.f32 %v997, %v1013
      %v1031 = vadd.f32 %v998, %v1013
      %v1032 = vadd.f32 %v999, %v1013
      %v1033 = vadd.f32 %v1000, %v1013
      %v1034 = vadd.f32 %v1001, %v1013
      %v1035 = vadd.f32 %v1002, %v1013
      %v1036 = vadd.f32 %v1003, %v1013
      %v1037 = vadd.f32 %v1004, %v1013
      %v1038 = vadd.f32 %v1005, %v1013
      %v1039 = vadd.f32 %v1006, %v1013
      %v1040 = vadd.f32 %v1007, %v1013
      %v1041 = vpack.c.bf16 %v1016, %v1015
      %v1042 = vpack.c.bf16 %v1018, %v1017
      %v1043 = vpack.c.bf16 %v1020, %v1019
      %v1044 = vpack.c.bf16 %v1022, %v1021
      %v1045 = vpack.c.bf16 %v1024, %v1023
      %v1046 = vpack.c.bf16 %v1026, %v1025
      %v1047 = vpack.c.bf16 %v1028, %v1027
      %v1048 = vpack.c.bf16 %v1030, %v1029
      %v1049 = vpack.c.bf16 %v1032, %v1031
      %v1050 = vpack.c.bf16 %v1034, %v1033
      %v1051 = vpack.c.bf16 %v1036, %v1035
      %v1052 = vpack.c.bf16 %v1038, %v1037
      %v1053 = vpack.c.bf16 %v1040, %v1039
      %v1067 = vunpack.c.l.b16 %v1041
      %v1068 = vunpack.c.h.b16 %v1041
      %v1069 = vunpack.c.l.b16 %v1042
      %v1070 = vunpack.c.h.b16 %v1042
      %v1071 = vunpack.c.l.b16 %v1043
      %v1072 = vunpack.c.h.b16 %v1043
      %v1073 = vunpack.c.l.b16 %v1044
      %v1074 = vunpack.c.h.b16 %v1044
      %v1075 = vunpack.c.l.b16 %v1045
      %v1076 = vunpack.c.h.b16 %v1045
      %v1077 = vunpack.c.l.b16 %v1046
      %v1078 = vunpack.c.h.b16 %v1046
      %v1079 = vunpack.c.l.b16 %v1047
      %v1080 = vunpack.c.h.b16 %v1047
      %v1081 = vunpack.c.l.b16 %v1048
      %v1082 = vunpack.c.h.b16 %v1048
      %v1083 = vunpack.c.l.b16 %v1049
      %v1084 = vunpack.c.h.b16 %v1049
      %v1085 = vunpack.c.l.b16 %v1050
      %v1086 = vunpack.c.h.b16 %v1050
      %v1087 = vunpack.c.l.b16 %v1051
      %v1088 = vunpack.c.h.b16 %v1051
      %v1089 = vunpack.c.l.b16 %v1052
      %v1090 = vunpack.c.h.b16 %v1052
      %v1091 = vunpack.c.l.b16 %v1053
      %v1092 = vunpack.c.h.b16 %v1053
      %v1093 = vpack.c.b16 %v1067, %v1067
      %v1094 = vpack.c.b16 %v1068, %v1068
      %v1095 = vpack.c.b16 %v1069, %v1069
      %v1096 = vpack.c.b16 %v1070, %v1070
      %v1097 = vpack.c.b16 %v1071, %v1071
      %v1098 = vpack.c.b16 %v1072, %v1072
      %v1099 = vpack.c.b16 %v1073, %v1073
      %v1100 = vpack.c.b16 %v1074, %v1074
      %v1101 = vpack.c.b16 %v1075, %v1075
      %v1102 = vpack.c.b16 %v1076, %v1076
      %v1103 = vpack.c.b16 %v1077, %v1077
      %v1104 = vpack.c.b16 %v1078, %v1078
      %v1105 = vpack.c.b16 %v1079, %v1079
      %v1106 = vpack.c.b16 %v1080, %v1080
      %v1107 = vpack.c.b16 %v1081, %v1081
      %v1108 = vpack.c.b16 %v1082, %v1082
      %v1109 = vpack.c.b16 %v1083, %v1083
      %v1110 = vpack.c.b16 %v1084, %v1084
      %v1111 = vpack.c.b16 %v1085, %v1085
      %v1112 = vpack.c.b16 %v1086, %v1086
      %v1113 = vpack.c.b16 %v1087, %v1087
      %v1114 = vpack.c.b16 %v1088, %v1088
      %v1115 = vpack.c.b16 %v1089, %v1089
      %v1116 = vpack.c.b16 %v1090, %v1090
      %v1117 = vpack.c.b16 %v1091, %v1091
      %v1118 = vpack.c.b16 %v1092, %v1092
      %1145 = vst [vmem:[%s3] sm:$0xf] %v1093
      %1146 = vst [vmem:[%s3 + $0x4] sm:$0xf] %v1094
      %1147 = vst [vmem:[%s3 + $0x8] sm:$0xf] %v1095
      %1148 = vst [vmem:[%s3 + $0xc] sm:$0xf] %v1096
      %1149 = vst [vmem:[%s3 + $0x10] sm:$0xf] %v1097
      %1150 = vst [vmem:[%s3 + $0x14] sm:$0xf] %v1098
      %1151 = vst [vmem:[%s3 + $0x18] sm:$0xf] %v1099
      %1152 = vst [vmem:[%s3 + $0x1c] sm:$0xf] %v1100
      %1153 = vst [vmem:[%s3 + $0x20] sm:$0xf] %v1101
      %1154 = vst [vmem:[%s3 + $0x24] sm:$0xf] %v1102
      %1155 = vst [vmem:[%s3 + $0x28] sm:$0xf] %v1103
      %1156 = vst [vmem:[%s3 + $0x2c] sm:$0xf] %v1104
      %1157 = vst [vmem:[%s3 + $0x30] sm:$0xf] %v1105
      %1158 = vst [vmem:[%s3 + $0x34] sm:$0xf] %v1106
      %1159 = vst [vmem:[%s3 + $0x38] sm:$0xf] %v1107
      %1160 = vst [vmem:[%s3 + $0x3c] sm:$0xf] %v1108
      %1161 = vst [vmem:[%s3 + $0x40] sm:$0xf] %v1109
      %1162 = vst [vmem:[%s3 + $0x44] sm:$0xf] %v1110
      %1163 = vst [vmem:[%s3 + $0x48] sm:$0xf] %v1111
      %1164 = vst [vmem:[%s3 + $0x4c] sm:$0xf] %v1112
      %1165 = vst [vmem:[%s3 + $0x50] sm:$0xf] %v1113
      %1166 = vst [vmem:[%s3 + $0x54] sm:$0xf] %v1114
      %1167 = vst [vmem:[%s3 + $0x58] sm:$0xf] %v1115
      %1168 = vst [vmem:[%s3 + $0x5c] sm:$0xf] %v1116
      %1169 = vst [vmem:[%s3 + $0x60] sm:$0xf] %v1117
      %1170 = vst [vmem:[%s3 + $0x64] sm:$0xf] %v1118
    $region47: #{dense_fc_forward.19} parent=1 // pred_fallthru
      _
    // Predicated region
    $region48: #{dense_fc_forward.19} parent=1 // pred_check
      _
    $region49: #{dense_fc_forward.19} parent=1 // pred_check_branch
      %1172 = sbr.rel (0) target = $region51
    $region50: #{dense_fc_forward.19} parent=1 // pred_region
      _
    $region51: #{dense_fc_forward.19} parent=1 // pred_fallthru
      _
    // Predicated region
    $region52: #{dense_fc_forward.19} parent=1 // pred_check
      _
    $region53: #{dense_fc_forward.19} parent=1 // pred_check_branch
      %1174 = sbr.rel (0) target = $region55
    $region54: #{dense_fc_forward.19} parent=1 // pred_region
      _
    $region55: #{dense_fc_forward.19} parent=1 // pred_fallthru
      _

</llo_original>
